<compile_context>
chip_gen: v7x
topology: tpu7x:2x2x1
jax: 0.10.0
libtpu: 0.0.40
codegen_flags: <defaults>
</compile_context>

<pallas_src>
import numpy as np
import jax
import jax.numpy as jnp
from jax import lax
from jax.experimental import pallas as pl
from jax.experimental.pallas import tpu as pltpu

# ------------------------------ static sizes ----------------------------------
B_TOTAL = 16          # total batch rows per call
TB      = 8           # batch tile = full f32 sublane set of a vreg
L0      = 496         # input length (Flatten must equal 252 -> L in 490..497)
W0      = 512         # lane-padded width of the first conv/pool stage
W1      = 256         # lane-padded width of every later stage

L1 = L0 // 2 + 1      # 249  after pool 1
L2 = L1 // 2 + 1      # 125  after pool 2
L3 = L2 // 2 + 1      # 63   after pool 3
L4 = 2 * L3           # 126  after upsample 1  (Flatten width = 2*L4 = 252)

_HI = lax.Precision.HIGHEST   # exact pass-through for the 0/1 selection matmuls


# --------------------------------- kernel -------------------------------------
def cnnae_kernel(x_ref, cw_ref, cb_ref,
                 w1_ref, b1_ref, w2_ref, b2_ref, w3_ref, b3_ref,
                 w4_ref, b4_ref, w5_ref, b5_ref,
                 out_ref):
    f32 = jnp.float32

    def conv5_relu(h, idx, l_act):
        # Conv1d(1,1,k=5,s=1,p=2) + ReLU on a zero-tailed, lane-padded row.
        # Tap k needs h[i + k - 2]  ->  lane rotation by (2 - k).  Wrapped-in lanes
        # are either zeros (the tail, since l_act <= width-2) or land in lanes
        # >= l_act which are re-zeroed by the tail mask below.
        w = h.shape[1]
        acc = cw_ref[idx, 2] * h                              # centre tap (no roll)
        for k in (0, 1, 3, 4):                                # static unroll
            acc = acc + cw_ref[idx, k] * pltpu.roll(h, shift=(2 - k) % w, axis=1)
        acc = jnp.maximum(acc + cb_ref[idx], 0.0)             # bias broadcast hoisted
        lane = lax.broadcasted_iota(jnp.int32, acc.shape, 1)
        return jnp.where(lane < l_act, acc, 0.0)              # keep zero-tail invariant

    def maxpool2(h, w_out):
        # MaxPool1d(k=2,s=2,pad=1): window j = {h[2j-1], h[2j]}.  Post-ReLU h >= 0,
        # so the zero tail / wrapped zero reproduces PyTorch's -inf padding exactly.
        w_in = h.shape[1]
        m = jnp.maximum(pltpu.roll(h, shift=1, axis=1), h)    # m[2j] = window-j max
        rows = lax.broadcasted_iota(jnp.int32, (w_in, w_out), 0)
        cols = lax.broadcasted_iota(jnp.int32, (w_in, w_out), 1)
        sel = jnp.where(rows == 2 * cols, 1.0, 0.0)           # even-lane compaction
        return jnp.dot(m, sel, precision=_HI, preferred_element_type=f32)

    def upsample2(h):
        # nearest x2: out[j] = h[j // 2]  (0/1 selection matmul built in-kernel).
        w = h.shape[1]
        rows = lax.broadcasted_iota(jnp.int32, (w, w), 0)
        cols = lax.broadcasted_iota(jnp.int32, (w, w), 1)
        sel = jnp.where((cols == 2 * rows) | (cols == 2 * rows + 1), 1.0, 0.0)
        return jnp.dot(h, sel, precision=_HI, preferred_element_type=f32)

    def linear(h, w_ref, b_ref, relu):
        o = jnp.dot(h, w_ref[...], preferred_element_type=f32) + b_ref[...]
        return jnp.maximum(o, 0.0) if relu else o

    h = x_ref[...]                          # (TB, 512): data in lanes [0,496), zero tail
    h = conv5_relu(h, 0, L0)
    h = maxpool2(h, W1)                     # (TB, 256), active 249
    h = conv5_relu(h, 1, L1)
    h = maxpool2(h, W1)                     # active 125
    h = conv5_relu(h, 2, L2)
    h = maxpool2(h, W1)                     # active 63
    h = conv5_relu(h, 3, L3)
    h = upsample2(h)                        # active 126
    h = conv5_relu(h, 4, L4)
    # Upsample#2 + Flatten + Linear(252,128) folded: w1_ref holds W1f[i]=W1[2i]+W1[2i+1]
    # zero-padded to (256,128), so h (126 active lanes) @ w1_ref == up2(h).flatten() @ W1.
    h = linear(h, w1_ref, b1_ref, True)     # (TB, 128)
    h = linear(h, w2_ref, b2_ref, True)     # (TB, 64)
    h = linear(h, w3_ref, b3_ref, True)     # (TB, 32)
    h = linear(h, w4_ref, b4_ref, True)     # (TB, 16)
    out_ref[...] = linear(h, w5_ref, b5_ref, False)   # (TB, 2)


# ------------------------------ wrapper / glue ---------------------------------
def init_params(key):
    """Deterministic synthetic parameters (shapes follow the nn.Module __init__)."""
    ks = jax.random.split(key, 12)
    conv_w = 0.3 * jax.random.normal(ks[0], (5, 5), jnp.float32)   # 5 Conv1d, kernel 5
    conv_b = 0.1 * jax.random.normal(ks[1], (5,), jnp.float32)
    dims = [(252, 128), (128, 64), (64, 32), (32, 16), (16, 2)]
    lin = []
    for n, (din, dout) in enumerate(dims):
        w = jax.random.normal(ks[2 + 2 * n], (din, dout), jnp.float32) / np.sqrt(din)
        b = 0.05 * jax.random.normal(ks[3 + 2 * n], (1, dout), jnp.float32)
        lin.append((w, b))
    return conv_w, conv_b, lin


@jax.jit
def cnnae_forward(x, conv_w, conv_b, lin):
    bsz, l = x.shape
    assert l == L0 and bsz % TB == 0
    xp = jnp.pad(x, ((0, 0), (0, W0 - L0)))                     # zero lane tail -> 512
    (w1, b1), (w2, b2), (w3, b3), (w4, b4), (w5, b5) = lin
    # Fold Upsample(x2, nearest) + Flatten into Linear(252,128): rows 2i, 2i+1 share h[i].
    w1f = jnp.pad(w1[0::2, :] + w1[1::2, :], ((0, W1 - L4), (0, 0)))   # (256, 128)

    smem = pl.BlockSpec(memory_space=pltpu.MemorySpace.SMEM)    # conv taps/bias scalars
    vmem = pl.BlockSpec(memory_space=pltpu.MemorySpace.VMEM)    # resident linear params

    return pl.pallas_call(
        cnnae_kernel,
        out_shape=jax.ShapeDtypeStruct((bsz, 2), jnp.float32),
        grid=(bsz // TB,),
        in_specs=[pl.BlockSpec((TB, W0), lambda b: (b, 0)),     # batch-tiled input
                  smem, smem,
                  vmem, vmem, vmem, vmem, vmem,
                  vmem, vmem, vmem, vmem, vmem],
        out_specs=pl.BlockSpec((TB, 2), lambda b: (b, 0)),
        compiler_params=pltpu.CompilerParams(
            dimension_semantics=("parallel",)),                 # v7x: split tiles over 2 TCs
    )(xp, conv_w, conv_b, w1f, b1, w2, b2, w3, b3, w4, b4, w5, b5)


# ----------------------------- pure-JAX reference ------------------------------
def ref_forward(x, conv_w, conv_b, lin):
    def conv_relu(h, w, b):
        l = h.shape[1]
        hp = jnp.pad(h, ((0, 0), (2, 2)))
        out = sum(w[k] * hp[:, k:k + l] for k in range(5)) + b
        return jnp.maximum(out, 0.0)

    def maxpool(h):
        bsz, l = h.shape
        p = l // 2 + 1
        hp = jnp.pad(h, ((0, 0), (1, 2 * p - (l + 1))), constant_values=-jnp.inf)
        return jnp.max(hp.reshape(bsz, p, 2), axis=-1)

    def up(h):
        return jnp.repeat(h, 2, axis=1)

    h = x
    h = maxpool(conv_relu(h, conv_w[0], conv_b[0]))
    h = maxpool(conv_relu(h, conv_w[1], conv_b[1]))
    h = maxpool(conv_relu(h, conv_w[2], conv_b[2]))
    h = up(conv_relu(h, conv_w[3], conv_b[3]))
    h = up(conv_relu(h, conv_w[4], conv_b[4]))
    for i, (w, b) in enumerate(lin):
        h = jnp.matmul(h, w, precision=lax.Precision.HIGHEST) + b
        if i < 4:
            h = jnp.maximum(h, 0.0)
    return h


if __name__ == "__main__":
    key = jax.random.PRNGKey(0)
    kx, kp = jax.random.split(key)
    # PyTorch input would be (B, 1, 496) (or (B, 496)); forward does x.view(B, 1, -1).
    x = jax.random.normal(kx, (B_TOTAL, L0), jnp.float32)
    conv_w, conv_b, lin = init_params(kp)

    out = jax.block_until_ready(cnnae_forward(x, conv_w, conv_b, lin))
    assert out.shape == (B_TOTAL, 2), out.shape

    ref = np.asarray(ref_forward(x, conv_w, conv_b, lin))
    # Convs and the 0/1 selection dots are exact; only the five Linear layers run at
    # default MXU precision (bf16 passes), so 1e-2 comfortably bounds that rounding.
    np.testing.assert_allclose(np.asarray(out), ref, rtol=1e-2, atol=1e-2)
    print("KERNEL_OK")
</pallas_src>

<mosaic_0001>
module attributes {stable_mosaic.version = 11 : i64} {
  func.func @cnnae_kernel(%arg0: i32, %arg1: memref<8x512xf32, #tpu.memory_space<vmem>>, %arg2: memref<5x5xf32, #tpu.memory_space<smem>>, %arg3: memref<5xf32, #tpu.memory_space<smem>>, %arg4: memref<256x128xf32, #tpu.memory_space<vmem>>, %arg5: memref<1x128xf32, #tpu.memory_space<vmem>>, %arg6: memref<128x64xf32, #tpu.memory_space<vmem>>, %arg7: memref<1x64xf32, #tpu.memory_space<vmem>>, %arg8: memref<64x32xf32, #tpu.memory_space<vmem>>, %arg9: memref<1x32xf32, #tpu.memory_space<vmem>>, %arg10: memref<32x16xf32, #tpu.memory_space<vmem>>, %arg11: memref<1x16xf32, #tpu.memory_space<vmem>>, %arg12: memref<16x2xf32, #tpu.memory_space<vmem>>, %arg13: memref<1x2xf32, #tpu.memory_space<vmem>>, %arg14: memref<8x2xf32, #tpu.memory_space<vmem>>) attributes {dimension_semantics = [#tpu.dimension_semantics<parallel>], iteration_bounds = array<i64: 2>, scalar_prefetch = 0 : i64, scratch_operands = 0 : i64, tpu.core_type = #tpu.core_type<tc>, window_params = [{transform_indices = @transform_0, window_bounds = array<i64: 8, 512>}, {transform_indices = @transform_1, window_bounds = array<i64: 5, 5>}, {transform_indices = @transform_2, window_bounds = array<i64: 5>}, {pipeline_mode = #tpu.pipeline_mode<synchronous>, transform_indices = @transform_3, window_bounds = array<i64: 256, 128>}, {pipeline_mode = #tpu.pipeline_mode<synchronous>, transform_indices = @transform_4, window_bounds = array<i64: 1, 128>}, {pipeline_mode = #tpu.pipeline_mode<synchronous>, transform_indices = @transform_5, window_bounds = array<i64: 128, 64>}, {pipeline_mode = #tpu.pipeline_mode<synchronous>, transform_indices = @transform_6, window_bounds = array<i64: 1, 64>}, {pipeline_mode = #tpu.pipeline_mode<synchronous>, transform_indices = @transform_7, window_bounds = array<i64: 64, 32>}, {pipeline_mode = #tpu.pipeline_mode<synchronous>, transform_indices = @transform_8, window_bounds = array<i64: 1, 32>}, {pipeline_mode = #tpu.pipeline_mode<synchronous>, transform_indices = @transform_9, window_bounds = array<i64: 32, 16>}, {pipeline_mode = #tpu.pipeline_mode<synchronous>, transform_indices = @transform_10, window_bounds = array<i64: 1, 16>}, {pipeline_mode = #tpu.pipeline_mode<synchronous>, transform_indices = @transform_11, window_bounds = array<i64: 16, 2>}, {pipeline_mode = #tpu.pipeline_mode<synchronous>, transform_indices = @transform_12, window_bounds = array<i64: 1, 2>}, {transform_indices = @transform_13, window_bounds = array<i64: 8, 2>}]} {
    %c0 = arith.constant 0 : index
    %c0_0 = arith.constant 0 : index
    %0 = vector.load %arg1[%c0, %c0_0] : memref<8x512xf32, #tpu.memory_space<vmem>>, vector<8x512xf32>
    %c0_1 = arith.constant 0 : index
    %c2 = arith.constant 2 : index
    %1 = memref.load %arg2[%c0_1, %c2] : memref<5x5xf32, #tpu.memory_space<smem>>
    %2 = vector.broadcast %1 : f32 to vector<8x512xf32>
    %3 = arith.mulf %2, %0 : vector<8x512xf32>
    %c0_2 = arith.constant 0 : index
    %c0_3 = arith.constant 0 : index
    %4 = memref.load %arg2[%c0_2, %c0_3] : memref<5x5xf32, #tpu.memory_space<smem>>
    %c2_i32 = arith.constant 2 : i32
    %5 = tpu.dynamic_rotate %0 by %c2_i32 dim 1 : vector<8x512xf32>, i32 -> vector<8x512xf32>
    %6 = vector.broadcast %4 : f32 to vector<8x512xf32>
    %7 = arith.mulf %6, %5 : vector<8x512xf32>
    %8 = arith.addf %3, %7 : vector<8x512xf32>
    %c0_4 = arith.constant 0 : index
    %c1 = arith.constant 1 : index
    %9 = memref.load %arg2[%c0_4, %c1] : memref<5x5xf32, #tpu.memory_space<smem>>
    %c1_i32 = arith.constant 1 : i32
    %10 = tpu.dynamic_rotate %0 by %c1_i32 dim 1 : vector<8x512xf32>, i32 -> vector<8x512xf32>
    %11 = vector.broadcast %9 : f32 to vector<8x512xf32>
    %12 = arith.mulf %11, %10 : vector<8x512xf32>
    %13 = arith.addf %8, %12 : vector<8x512xf32>
    %c0_5 = arith.constant 0 : index
    %c3 = arith.constant 3 : index
    %14 = memref.load %arg2[%c0_5, %c3] : memref<5x5xf32, #tpu.memory_space<smem>>
    %c511_i32 = arith.constant 511 : i32
    %15 = tpu.dynamic_rotate %0 by %c511_i32 dim 1 : vector<8x512xf32>, i32 -> vector<8x512xf32>
    %16 = vector.broadcast %14 : f32 to vector<8x512xf32>
    %17 = arith.mulf %16, %15 : vector<8x512xf32>
    %18 = arith.addf %13, %17 : vector<8x512xf32>
    %c0_6 = arith.constant 0 : index
    %c4 = arith.constant 4 : index
    %19 = memref.load %arg2[%c0_6, %c4] : memref<5x5xf32, #tpu.memory_space<smem>>
    %c510_i32 = arith.constant 510 : i32
    %20 = tpu.dynamic_rotate %0 by %c510_i32 dim 1 : vector<8x512xf32>, i32 -> vector<8x512xf32>
    %21 = vector.broadcast %19 : f32 to vector<8x512xf32>
    %22 = arith.mulf %21, %20 : vector<8x512xf32>
    %23 = arith.addf %18, %22 : vector<8x512xf32>
    %c0_7 = arith.constant 0 : index
    %24 = memref.load %arg3[%c0_7] : memref<5xf32, #tpu.memory_space<smem>>
    %25 = vector.broadcast %24 : f32 to vector<8x512xf32>
    %26 = arith.addf %23, %25 : vector<8x512xf32>
    %cst = arith.constant 0.000000e+00 : f32
    %27 = vector.broadcast %cst : f32 to vector<8x512xf32>
    %28 = arith.maximumf %26, %27 : vector<8x512xf32>
    %29 = tpu.iota {dimensions = array<i32: 1>} : vector<8x512xi32>
    %c496_i32 = arith.constant 496 : i32
    %30 = vector.broadcast %c496_i32 : i32 to vector<8x512xi32>
    %31 = arith.cmpi slt, %29, %30 : vector<8x512xi32>
    %cst_8 = arith.constant 0.000000e+00 : f32
    %32 = vector.broadcast %cst_8 : f32 to vector<8x512xf32>
    %33 = arith.select %31, %28, %32 : vector<8x512xi1>, vector<8x512xf32>
    %c1_i32_9 = arith.constant 1 : i32
    %34 = tpu.dynamic_rotate %33 by %c1_i32_9 dim 1 : vector<8x512xf32>, i32 -> vector<8x512xf32>
    %35 = arith.maximumf %34, %33 : vector<8x512xf32>
    %36 = tpu.iota {dimensions = array<i32: 0>} : vector<512x256xi32>
    %37 = tpu.iota {dimensions = array<i32: 1>} : vector<512x256xi32>
    %c2_i32_10 = arith.constant 2 : i32
    %38 = vector.broadcast %c2_i32_10 : i32 to vector<512x256xi32>
    %39 = arith.muli %38, %37 : vector<512x256xi32>
    %40 = arith.cmpi eq, %36, %39 : vector<512x256xi32>
    %cst_11 = arith.constant 1.000000e+00 : f32
    %cst_12 = arith.constant 0.000000e+00 : f32
    %41 = vector.broadcast %cst_11 : f32 to vector<512x256xf32>
    %42 = vector.broadcast %cst_12 : f32 to vector<512x256xf32>
    %43 = arith.select %40, %41, %42 : vector<512x256xi1>, vector<512x256xf32>
    %cst_13 = arith.constant dense<0.000000e+00> : vector<8x256xf32>
    %44 = tpu.matmul %35, %43, %cst_13 {dimension_numbers = #tpu.dot_dimension_numbers<[1], [0], [0], [1], [0, 0, 1, 1], [], []>, precision = #tpu.contract_precision<fp32>} : vector<8x512xf32>, vector<512x256xf32>, vector<8x256xf32> -> vector<8x256xf32>
    %c1_14 = arith.constant 1 : index
    %c2_15 = arith.constant 2 : index
    %45 = memref.load %arg2[%c1_14, %c2_15] : memref<5x5xf32, #tpu.memory_space<smem>>
    %46 = vector.broadcast %45 : f32 to vector<8x256xf32>
    %47 = arith.mulf %46, %44 : vector<8x256xf32>
    %c1_16 = arith.constant 1 : index
    %c0_17 = arith.constant 0 : index
    %48 = memref.load %arg2[%c1_16, %c0_17] : memref<5x5xf32, #tpu.memory_space<smem>>
    %c2_i32_18 = arith.constant 2 : i32
    %49 = tpu.dynamic_rotate %44 by %c2_i32_18 dim 1 : vector<8x256xf32>, i32 -> vector<8x256xf32>
    %50 = vector.broadcast %48 : f32 to vector<8x256xf32>
    %51 = arith.mulf %50, %49 : vector<8x256xf32>
    %52 = arith.addf %47, %51 : vector<8x256xf32>
    %c1_19 = arith.constant 1 : index
    %c1_20 = arith.constant 1 : index
    %53 = memref.load %arg2[%c1_19, %c1_20] : memref<5x5xf32, #tpu.memory_space<smem>>
    %c1_i32_21 = arith.constant 1 : i32
    %54 = tpu.dynamic_rotate %44 by %c1_i32_21 dim 1 : vector<8x256xf32>, i32 -> vector<8x256xf32>
    %55 = vector.broadcast %53 : f32 to vector<8x256xf32>
    %56 = arith.mulf %55, %54 : vector<8x256xf32>
    %57 = arith.addf %52, %56 : vector<8x256xf32>
    %c1_22 = arith.constant 1 : index
    %c3_23 = arith.constant 3 : index
    %58 = memref.load %arg2[%c1_22, %c3_23] : memref<5x5xf32, #tpu.memory_space<smem>>
    %c255_i32 = arith.constant 255 : i32
    %59 = tpu.dynamic_rotate %44 by %c255_i32 dim 1 : vector<8x256xf32>, i32 -> vector<8x256xf32>
    %60 = vector.broadcast %58 : f32 to vector<8x256xf32>
    %61 = arith.mulf %60, %59 : vector<8x256xf32>
    %62 = arith.addf %57, %61 : vector<8x256xf32>
    %c1_24 = arith.constant 1 : index
    %c4_25 = arith.constant 4 : index
    %63 = memref.load %arg2[%c1_24, %c4_25] : memref<5x5xf32, #tpu.memory_space<smem>>
    %c254_i32 = arith.constant 254 : i32
    %64 = tpu.dynamic_rotate %44 by %c254_i32 dim 1 : vector<8x256xf32>, i32 -> vector<8x256xf32>
    %65 = vector.broadcast %63 : f32 to vector<8x256xf32>
    %66 = arith.mulf %65, %64 : vector<8x256xf32>
    %67 = arith.addf %62, %66 : vector<8x256xf32>
    %c1_26 = arith.constant 1 : index
    %68 = memref.load %arg3[%c1_26] : memref<5xf32, #tpu.memory_space<smem>>
    %69 = vector.broadcast %68 : f32 to vector<8x256xf32>
    %70 = arith.addf %67, %69 : vector<8x256xf32>
    %cst_27 = arith.constant 0.000000e+00 : f32
    %71 = vector.broadcast %cst_27 : f32 to vector<8x256xf32>
    %72 = arith.maximumf %70, %71 : vector<8x256xf32>
    %73 = tpu.iota {dimensions = array<i32: 1>} : vector<8x256xi32>
    %c249_i32 = arith.constant 249 : i32
    %74 = vector.broadcast %c249_i32 : i32 to vector<8x256xi32>
    %75 = arith.cmpi slt, %73, %74 : vector<8x256xi32>
    %cst_28 = arith.constant 0.000000e+00 : f32
    %76 = vector.broadcast %cst_28 : f32 to vector<8x256xf32>
    %77 = arith.select %75, %72, %76 : vector<8x256xi1>, vector<8x256xf32>
    %c1_i32_29 = arith.constant 1 : i32
    %78 = tpu.dynamic_rotate %77 by %c1_i32_29 dim 1 : vector<8x256xf32>, i32 -> vector<8x256xf32>
    %79 = arith.maximumf %78, %77 : vector<8x256xf32>
    %80 = tpu.iota {dimensions = array<i32: 0>} : vector<256x256xi32>
    %81 = tpu.iota {dimensions = array<i32: 1>} : vector<256x256xi32>
    %c2_i32_30 = arith.constant 2 : i32
    %82 = vector.broadcast %c2_i32_30 : i32 to vector<256x256xi32>
    %83 = arith.muli %82, %81 : vector<256x256xi32>
    %84 = arith.cmpi eq, %80, %83 : vector<256x256xi32>
    %cst_31 = arith.constant 1.000000e+00 : f32
    %cst_32 = arith.constant 0.000000e+00 : f32
    %85 = vector.broadcast %cst_31 : f32 to vector<256x256xf32>
    %86 = vector.broadcast %cst_32 : f32 to vector<256x256xf32>
    %87 = arith.select %84, %85, %86 : vector<256x256xi1>, vector<256x256xf32>
    %cst_33 = arith.constant dense<0.000000e+00> : vector<8x256xf32>
    %88 = tpu.matmul %79, %87, %cst_33 {dimension_numbers = #tpu.dot_dimension_numbers<[1], [0], [0], [1], [0, 0, 1, 1], [], []>, precision = #tpu.contract_precision<fp32>} : vector<8x256xf32>, vector<256x256xf32>, vector<8x256xf32> -> vector<8x256xf32>
    %c2_34 = arith.constant 2 : index
    %c2_35 = arith.constant 2 : index
    %89 = memref.load %arg2[%c2_34, %c2_35] : memref<5x5xf32, #tpu.memory_space<smem>>
    %90 = vector.broadcast %89 : f32 to vector<8x256xf32>
    %91 = arith.mulf %90, %88 : vector<8x256xf32>
    %c2_36 = arith.constant 2 : index
    %c0_37 = arith.constant 0 : index
    %92 = memref.load %arg2[%c2_36, %c0_37] : memref<5x5xf32, #tpu.memory_space<smem>>
    %c2_i32_38 = arith.constant 2 : i32
    %93 = tpu.dynamic_rotate %88 by %c2_i32_38 dim 1 : vector<8x256xf32>, i32 -> vector<8x256xf32>
    %94 = vector.broadcast %92 : f32 to vector<8x256xf32>
    %95 = arith.mulf %94, %93 : vector<8x256xf32>
    %96 = arith.addf %91, %95 : vector<8x256xf32>
    %c2_39 = arith.constant 2 : index
    %c1_40 = arith.constant 1 : index
    %97 = memref.load %arg2[%c2_39, %c1_40] : memref<5x5xf32, #tpu.memory_space<smem>>
    %c1_i32_41 = arith.constant 1 : i32
    %98 = tpu.dynamic_rotate %88 by %c1_i32_41 dim 1 : vector<8x256xf32>, i32 -> vector<8x256xf32>
    %99 = vector.broadcast %97 : f32 to vector<8x256xf32>
    %100 = arith.mulf %99, %98 : vector<8x256xf32>
    %101 = arith.addf %96, %100 : vector<8x256xf32>
    %c2_42 = arith.constant 2 : index
    %c3_43 = arith.constant 3 : index
    %102 = memref.load %arg2[%c2_42, %c3_43] : memref<5x5xf32, #tpu.memory_space<smem>>
    %c255_i32_44 = arith.constant 255 : i32
    %103 = tpu.dynamic_rotate %88 by %c255_i32_44 dim 1 : vector<8x256xf32>, i32 -> vector<8x256xf32>
    %104 = vector.broadcast %102 : f32 to vector<8x256xf32>
    %105 = arith.mulf %104, %103 : vector<8x256xf32>
    %106 = arith.addf %101, %105 : vector<8x256xf32>
    %c2_45 = arith.constant 2 : index
    %c4_46 = arith.constant 4 : index
    %107 = memref.load %arg2[%c2_45, %c4_46] : memref<5x5xf32, #tpu.memory_space<smem>>
    %c254_i32_47 = arith.constant 254 : i32
    %108 = tpu.dynamic_rotate %88 by %c254_i32_47 dim 1 : vector<8x256xf32>, i32 -> vector<8x256xf32>
    %109 = vector.broadcast %107 : f32 to vector<8x256xf32>
    %110 = arith.mulf %109, %108 : vector<8x256xf32>
    %111 = arith.addf %106, %110 : vector<8x256xf32>
    %c2_48 = arith.constant 2 : index
    %112 = memref.load %arg3[%c2_48] : memref<5xf32, #tpu.memory_space<smem>>
    %113 = vector.broadcast %112 : f32 to vector<8x256xf32>
    %114 = arith.addf %111, %113 : vector<8x256xf32>
    %cst_49 = arith.constant 0.000000e+00 : f32
    %115 = vector.broadcast %cst_49 : f32 to vector<8x256xf32>
    %116 = arith.maximumf %114, %115 : vector<8x256xf32>
    %117 = tpu.iota {dimensions = array<i32: 1>} : vector<8x256xi32>
    %c125_i32 = arith.constant 125 : i32
    %118 = vector.broadcast %c125_i32 : i32 to vector<8x256xi32>
    %119 = arith.cmpi slt, %117, %118 : vector<8x256xi32>
    %cst_50 = arith.constant 0.000000e+00 : f32
    %120 = vector.broadcast %cst_50 : f32 to vector<8x256xf32>
    %121 = arith.select %119, %116, %120 : vector<8x256xi1>, vector<8x256xf32>
    %c1_i32_51 = arith.constant 1 : i32
    %122 = tpu.dynamic_rotate %121 by %c1_i32_51 dim 1 : vector<8x256xf32>, i32 -> vector<8x256xf32>
    %123 = arith.maximumf %122, %121 : vector<8x256xf32>
    %124 = tpu.iota {dimensions = array<i32: 0>} : vector<256x256xi32>
    %125 = tpu.iota {dimensions = array<i32: 1>} : vector<256x256xi32>
    %c2_i32_52 = arith.constant 2 : i32
    %126 = vector.broadcast %c2_i32_52 : i32 to vector<256x256xi32>
    %127 = arith.muli %126, %125 : vector<256x256xi32>
    %128 = arith.cmpi eq, %124, %127 : vector<256x256xi32>
    %cst_53 = arith.constant 1.000000e+00 : f32
    %cst_54 = arith.constant 0.000000e+00 : f32
    %129 = vector.broadcast %cst_53 : f32 to vector<256x256xf32>
    %130 = vector.broadcast %cst_54 : f32 to vector<256x256xf32>
    %131 = arith.select %128, %129, %130 : vector<256x256xi1>, vector<256x256xf32>
    %cst_55 = arith.constant dense<0.000000e+00> : vector<8x256xf32>
    %132 = tpu.matmul %123, %131, %cst_55 {dimension_numbers = #tpu.dot_dimension_numbers<[1], [0], [0], [1], [0, 0, 1, 1], [], []>, precision = #tpu.contract_precision<fp32>} : vector<8x256xf32>, vector<256x256xf32>, vector<8x256xf32> -> vector<8x256xf32>
    %c3_56 = arith.constant 3 : index
    %c2_57 = arith.constant 2 : index
    %133 = memref.load %arg2[%c3_56, %c2_57] : memref<5x5xf32, #tpu.memory_space<smem>>
    %134 = vector.broadcast %133 : f32 to vector<8x256xf32>
    %135 = arith.mulf %134, %132 : vector<8x256xf32>
    %c3_58 = arith.constant 3 : index
    %c0_59 = arith.constant 0 : index
    %136 = memref.load %arg2[%c3_58, %c0_59] : memref<5x5xf32, #tpu.memory_space<smem>>
    %c2_i32_60 = arith.constant 2 : i32
    %137 = tpu.dynamic_rotate %132 by %c2_i32_60 dim 1 : vector<8x256xf32>, i32 -> vector<8x256xf32>
    %138 = vector.broadcast %136 : f32 to vector<8x256xf32>
    %139 = arith.mulf %138, %137 : vector<8x256xf32>
    %140 = arith.addf %135, %139 : vector<8x256xf32>
    %c3_61 = arith.constant 3 : index
    %c1_62 = arith.constant 1 : index
    %141 = memref.load %arg2[%c3_61, %c1_62] : memref<5x5xf32, #tpu.memory_space<smem>>
    %c1_i32_63 = arith.constant 1 : i32
    %142 = tpu.dynamic_rotate %132 by %c1_i32_63 dim 1 : vector<8x256xf32>, i32 -> vector<8x256xf32>
    %143 = vector.broadcast %141 : f32 to vector<8x256xf32>
    %144 = arith.mulf %143, %142 : vector<8x256xf32>
    %145 = arith.addf %140, %144 : vector<8x256xf32>
    %c3_64 = arith.constant 3 : index
    %c3_65 = arith.constant 3 : index
    %146 = memref.load %arg2[%c3_64, %c3_65] : memref<5x5xf32, #tpu.memory_space<smem>>
    %c255_i32_66 = arith.constant 255 : i32
    %147 = tpu.dynamic_rotate %132 by %c255_i32_66 dim 1 : vector<8x256xf32>, i32 -> vector<8x256xf32>
    %148 = vector.broadcast %146 : f32 to vector<8x256xf32>
    %149 = arith.mulf %148, %147 : vector<8x256xf32>
    %150 = arith.addf %145, %149 : vector<8x256xf32>
    %c3_67 = arith.constant 3 : index
    %c4_68 = arith.constant 4 : index
    %151 = memref.load %arg2[%c3_67, %c4_68] : memref<5x5xf32, #tpu.memory_space<smem>>
    %c254_i32_69 = arith.constant 254 : i32
    %152 = tpu.dynamic_rotate %132 by %c254_i32_69 dim 1 : vector<8x256xf32>, i32 -> vector<8x256xf32>
    %153 = vector.broadcast %151 : f32 to vector<8x256xf32>
    %154 = arith.mulf %153, %152 : vector<8x256xf32>
    %155 = arith.addf %150, %154 : vector<8x256xf32>
    %c3_70 = arith.constant 3 : index
    %156 = memref.load %arg3[%c3_70] : memref<5xf32, #tpu.memory_space<smem>>
    %157 = vector.broadcast %156 : f32 to vector<8x256xf32>
    %158 = arith.addf %155, %157 : vector<8x256xf32>
    %cst_71 = arith.constant 0.000000e+00 : f32
    %159 = vector.broadcast %cst_71 : f32 to vector<8x256xf32>
    %160 = arith.maximumf %158, %159 : vector<8x256xf32>
    %161 = tpu.iota {dimensions = array<i32: 1>} : vector<8x256xi32>
    %c63_i32 = arith.constant 63 : i32
    %162 = vector.broadcast %c63_i32 : i32 to vector<8x256xi32>
    %163 = arith.cmpi slt, %161, %162 : vector<8x256xi32>
    %cst_72 = arith.constant 0.000000e+00 : f32
    %164 = vector.broadcast %cst_72 : f32 to vector<8x256xf32>
    %165 = arith.select %163, %160, %164 : vector<8x256xi1>, vector<8x256xf32>
    %166 = tpu.iota {dimensions = array<i32: 0>} : vector<256x256xi32>
    %167 = tpu.iota {dimensions = array<i32: 1>} : vector<256x256xi32>
    %c2_i32_73 = arith.constant 2 : i32
    %168 = vector.broadcast %c2_i32_73 : i32 to vector<256x256xi32>
    %169 = arith.muli %168, %166 : vector<256x256xi32>
    %170 = arith.cmpi eq, %167, %169 : vector<256x256xi32>
    %c2_i32_74 = arith.constant 2 : i32
    %171 = vector.broadcast %c2_i32_74 : i32 to vector<256x256xi32>
    %172 = arith.muli %171, %166 : vector<256x256xi32>
    %c1_i32_75 = arith.constant 1 : i32
    %173 = vector.broadcast %c1_i32_75 : i32 to vector<256x256xi32>
    %174 = arith.addi %172, %173 : vector<256x256xi32>
    %175 = arith.cmpi eq, %167, %174 : vector<256x256xi32>
    %176 = arith.ori %170, %175 : vector<256x256xi1>
    %cst_76 = arith.constant 1.000000e+00 : f32
    %cst_77 = arith.constant 0.000000e+00 : f32
    %177 = vector.broadcast %cst_76 : f32 to vector<256x256xf32>
    %178 = vector.broadcast %cst_77 : f32 to vector<256x256xf32>
    %179 = arith.select %176, %177, %178 : vector<256x256xi1>, vector<256x256xf32>
    %cst_78 = arith.constant dense<0.000000e+00> : vector<8x256xf32>
    %180 = tpu.matmul %165, %179, %cst_78 {dimension_numbers = #tpu.dot_dimension_numbers<[1], [0], [0], [1], [0, 0, 1, 1], [], []>, precision = #tpu.contract_precision<fp32>} : vector<8x256xf32>, vector<256x256xf32>, vector<8x256xf32> -> vector<8x256xf32>
    %c4_79 = arith.constant 4 : index
    %c2_80 = arith.constant 2 : index
    %181 = memref.load %arg2[%c4_79, %c2_80] : memref<5x5xf32, #tpu.memory_space<smem>>
    %182 = vector.broadcast %181 : f32 to vector<8x256xf32>
    %183 = arith.mulf %182, %180 : vector<8x256xf32>
    %c4_81 = arith.constant 4 : index
    %c0_82 = arith.constant 0 : index
    %184 = memref.load %arg2[%c4_81, %c0_82] : memref<5x5xf32, #tpu.memory_space<smem>>
    %c2_i32_83 = arith.constant 2 : i32
    %185 = tpu.dynamic_rotate %180 by %c2_i32_83 dim 1 : vector<8x256xf32>, i32 -> vector<8x256xf32>
    %186 = vector.broadcast %184 : f32 to vector<8x256xf32>
    %187 = arith.mulf %186, %185 : vector<8x256xf32>
    %188 = arith.addf %183, %187 : vector<8x256xf32>
    %c4_84 = arith.constant 4 : index
    %c1_85 = arith.constant 1 : index
    %189 = memref.load %arg2[%c4_84, %c1_85] : memref<5x5xf32, #tpu.memory_space<smem>>
    %c1_i32_86 = arith.constant 1 : i32
    %190 = tpu.dynamic_rotate %180 by %c1_i32_86 dim 1 : vector<8x256xf32>, i32 -> vector<8x256xf32>
    %191 = vector.broadcast %189 : f32 to vector<8x256xf32>
    %192 = arith.mulf %191, %190 : vector<8x256xf32>
    %193 = arith.addf %188, %192 : vector<8x256xf32>
    %c4_87 = arith.constant 4 : index
    %c3_88 = arith.constant 3 : index
    %194 = memref.load %arg2[%c4_87, %c3_88] : memref<5x5xf32, #tpu.memory_space<smem>>
    %c255_i32_89 = arith.constant 255 : i32
    %195 = tpu.dynamic_rotate %180 by %c255_i32_89 dim 1 : vector<8x256xf32>, i32 -> vector<8x256xf32>
    %196 = vector.broadcast %194 : f32 to vector<8x256xf32>
    %197 = arith.mulf %196, %195 : vector<8x256xf32>
    %198 = arith.addf %193, %197 : vector<8x256xf32>
    %c4_90 = arith.constant 4 : index
    %c4_91 = arith.constant 4 : index
    %199 = memref.load %arg2[%c4_90, %c4_91] : memref<5x5xf32, #tpu.memory_space<smem>>
    %c254_i32_92 = arith.constant 254 : i32
    %200 = tpu.dynamic_rotate %180 by %c254_i32_92 dim 1 : vector<8x256xf32>, i32 -> vector<8x256xf32>
    %201 = vector.broadcast %199 : f32 to vector<8x256xf32>
    %202 = arith.mulf %201, %200 : vector<8x256xf32>
    %203 = arith.addf %198, %202 : vector<8x256xf32>
    %c4_93 = arith.constant 4 : index
    %204 = memref.load %arg3[%c4_93] : memref<5xf32, #tpu.memory_space<smem>>
    %205 = vector.broadcast %204 : f32 to vector<8x256xf32>
    %206 = arith.addf %203, %205 : vector<8x256xf32>
    %cst_94 = arith.constant 0.000000e+00 : f32
    %207 = vector.broadcast %cst_94 : f32 to vector<8x256xf32>
    %208 = arith.maximumf %206, %207 : vector<8x256xf32>
    %209 = tpu.iota {dimensions = array<i32: 1>} : vector<8x256xi32>
    %c126_i32 = arith.constant 126 : i32
    %210 = vector.broadcast %c126_i32 : i32 to vector<8x256xi32>
    %211 = arith.cmpi slt, %209, %210 : vector<8x256xi32>
    %cst_95 = arith.constant 0.000000e+00 : f32
    %212 = vector.broadcast %cst_95 : f32 to vector<8x256xf32>
    %213 = arith.select %211, %208, %212 : vector<8x256xi1>, vector<8x256xf32>
    %c0_96 = arith.constant 0 : index
    %c0_97 = arith.constant 0 : index
    %214 = vector.load %arg4[%c0_96, %c0_97] : memref<256x128xf32, #tpu.memory_space<vmem>>, vector<256x128xf32>
    %cst_98 = arith.constant dense<0.000000e+00> : vector<8x128xf32>
    %215 = tpu.matmul %213, %214, %cst_98 {dimension_numbers = #tpu.dot_dimension_numbers<[1], [0], [0], [1], [0, 0, 1, 1], [], []>} : vector<8x256xf32>, vector<256x128xf32>, vector<8x128xf32> -> vector<8x128xf32>
    %c0_99 = arith.constant 0 : index
    %c0_100 = arith.constant 0 : index
    %216 = vector.load %arg5[%c0_99, %c0_100] : memref<1x128xf32, #tpu.memory_space<vmem>>, vector<1x128xf32>
    %217 = vector.broadcast %216 : vector<1x128xf32> to vector<8x128xf32>
    %218 = arith.addf %215, %217 : vector<8x128xf32>
    %cst_101 = arith.constant 0.000000e+00 : f32
    %219 = vector.broadcast %cst_101 : f32 to vector<8x128xf32>
    %220 = arith.maximumf %218, %219 : vector<8x128xf32>
    %c0_102 = arith.constant 0 : index
    %c0_103 = arith.constant 0 : index
    %221 = vector.load %arg6[%c0_102, %c0_103] : memref<128x64xf32, #tpu.memory_space<vmem>>, vector<128x64xf32>
    %cst_104 = arith.constant dense<0.000000e+00> : vector<8x64xf32>
    %222 = tpu.matmul %220, %221, %cst_104 {dimension_numbers = #tpu.dot_dimension_numbers<[1], [0], [0], [1], [0, 0, 1, 1], [], []>} : vector<8x128xf32>, vector<128x64xf32>, vector<8x64xf32> -> vector<8x64xf32>
    %c0_105 = arith.constant 0 : index
    %c0_106 = arith.constant 0 : index
    %223 = vector.load %arg7[%c0_105, %c0_106] : memref<1x64xf32, #tpu.memory_space<vmem>>, vector<1x64xf32>
    %224 = vector.broadcast %223 : vector<1x64xf32> to vector<8x64xf32>
    %225 = arith.addf %222, %224 : vector<8x64xf32>
    %cst_107 = arith.constant 0.000000e+00 : f32
    %226 = vector.broadcast %cst_107 : f32 to vector<8x64xf32>
    %227 = arith.maximumf %225, %226 : vector<8x64xf32>
    %c0_108 = arith.constant 0 : index
    %c0_109 = arith.constant 0 : index
    %228 = vector.load %arg8[%c0_108, %c0_109] : memref<64x32xf32, #tpu.memory_space<vmem>>, vector<64x32xf32>
    %cst_110 = arith.constant dense<0.000000e+00> : vector<8x32xf32>
    %229 = tpu.matmul %227, %228, %cst_110 {dimension_numbers = #tpu.dot_dimension_numbers<[1], [0], [0], [1], [0, 0, 1, 1], [], []>} : vector<8x64xf32>, vector<64x32xf32>, vector<8x32xf32> -> vector<8x32xf32>
    %c0_111 = arith.constant 0 : index
    %c0_112 = arith.constant 0 : index
    %230 = vector.load %arg9[%c0_111, %c0_112] : memref<1x32xf32, #tpu.memory_space<vmem>>, vector<1x32xf32>
    %231 = vector.broadcast %230 : vector<1x32xf32> to vector<8x32xf32>
    %232 = arith.addf %229, %231 : vector<8x32xf32>
    %cst_113 = arith.constant 0.000000e+00 : f32
    %233 = vector.broadcast %cst_113 : f32 to vector<8x32xf32>
    %234 = arith.maximumf %232, %233 : vector<8x32xf32>
    %c0_114 = arith.constant 0 : index
    %c0_115 = arith.constant 0 : index
    %235 = vector.load %arg10[%c0_114, %c0_115] : memref<32x16xf32, #tpu.memory_space<vmem>>, vector<32x16xf32>
    %cst_116 = arith.constant dense<0.000000e+00> : vector<8x16xf32>
    %236 = tpu.matmul %234, %235, %cst_116 {dimension_numbers = #tpu.dot_dimension_numbers<[1], [0], [0], [1], [0, 0, 1, 1], [], []>} : vector<8x32xf32>, vector<32x16xf32>, vector<8x16xf32> -> vector<8x16xf32>
    %c0_117 = arith.constant 0 : index
    %c0_118 = arith.constant 0 : index
    %237 = vector.load %arg11[%c0_117, %c0_118] : memref<1x16xf32, #tpu.memory_space<vmem>>, vector<1x16xf32>
    %238 = vector.broadcast %237 : vector<1x16xf32> to vector<8x16xf32>
    %239 = arith.addf %236, %238 : vector<8x16xf32>
    %cst_119 = arith.constant 0.000000e+00 : f32
    %240 = vector.broadcast %cst_119 : f32 to vector<8x16xf32>
    %241 = arith.maximumf %239, %240 : vector<8x16xf32>
    %c0_120 = arith.constant 0 : index
    %c0_121 = arith.constant 0 : index
    %242 = vector.load %arg12[%c0_120, %c0_121] : memref<16x2xf32, #tpu.memory_space<vmem>>, vector<16x2xf32>
    %cst_122 = arith.constant dense<0.000000e+00> : vector<8x2xf32>
    %243 = tpu.matmul %241, %242, %cst_122 {dimension_numbers = #tpu.dot_dimension_numbers<[1], [0], [0], [1], [0, 0, 1, 1], [], []>} : vector<8x16xf32>, vector<16x2xf32>, vector<8x2xf32> -> vector<8x2xf32>
    %c0_123 = arith.constant 0 : index
    %c0_124 = arith.constant 0 : index
    %244 = vector.load %arg13[%c0_123, %c0_124] : memref<1x2xf32, #tpu.memory_space<vmem>>, vector<1x2xf32>
    %245 = vector.broadcast %244 : vector<1x2xf32> to vector<8x2xf32>
    %246 = arith.addf %243, %245 : vector<8x2xf32>
    %c0_125 = arith.constant 0 : index
    %c0_126 = arith.constant 0 : index
    %247 = vector.load %arg14[%c0_125, %c0_126] : memref<8x2xf32, #tpu.memory_space<vmem>>, vector<8x2xf32>
    tpu.vector_store %arg14[%c0_125, %c0_126], %246 {strides = array<i32>} : memref<8x2xf32, #tpu.memory_space<vmem>>, vector<8x2xf32>,
    return
  }
  func.func @transform_0(%arg0: i32) -> (i32, i32) {
    %c0_i32 = arith.constant 0 : i32
    %c0_i32_0 = arith.constant 0 : i32
    return %arg0, %c0_i32 : i32, i32
  }
  func.func @transform_1(%arg0: i32) -> (i32, i32) {
    %c0_i32 = arith.constant 0 : i32
    %c0_i32_0 = arith.constant 0 : i32
    %c0_i32_1 = arith.constant 0 : i32
    return %c0_i32, %c0_i32_0 : i32, i32
  }
  func.func @transform_2(%arg0: i32) -> i32 {
    %c0_i32 = arith.constant 0 : i32
    %c0_i32_0 = arith.constant 0 : i32
    return %c0_i32 : i32
  }
  func.func @transform_3(%arg0: i32) -> (i32, i32) {
    %c0_i32 = arith.constant 0 : i32
    %c0_i32_0 = arith.constant 0 : i32
    %c0_i32_1 = arith.constant 0 : i32
    return %c0_i32, %c0_i32_0 : i32, i32
  }
  func.func @transform_4(%arg0: i32) -> (i32, i32) {
    %c0_i32 = arith.constant 0 : i32
    %c0_i32_0 = arith.constant 0 : i32
    %c0_i32_1 = arith.constant 0 : i32
    return %c0_i32, %c0_i32_0 : i32, i32
  }
  func.func @transform_5(%arg0: i32) -> (i32, i32) {
    %c0_i32 = arith.constant 0 : i32
    %c0_i32_0 = arith.constant 0 : i32
    %c0_i32_1 = arith.constant 0 : i32
    return %c0_i32, %c0_i32_0 : i32, i32
  }
  func.func @transform_6(%arg0: i32) -> (i32, i32) {
    %c0_i32 = arith.constant 0 : i32
    %c0_i32_0 = arith.constant 0 : i32
    %c0_i32_1 = arith.constant 0 : i32
    return %c0_i32, %c0_i32_0 : i32, i32
  }
  func.func @transform_7(%arg0: i32) -> (i32, i32) {
    %c0_i32 = arith.constant 0 : i32
    %c0_i32_0 = arith.constant 0 : i32
    %c0_i32_1 = arith.constant 0 : i32
    return %c0_i32, %c0_i32_0 : i32, i32
  }
  func.func @transform_8(%arg0: i32) -> (i32, i32) {
    %c0_i32 = arith.constant 0 : i32
    %c0_i32_0 = arith.constant 0 : i32
    %c0_i32_1 = arith.constant 0 : i32
    return %c0_i32, %c0_i32_0 : i32, i32
  }
  func.func @transform_9(%arg0: i32) -> (i32, i32) {
    %c0_i32 = arith.constant 0 : i32
    %c0_i32_0 = arith.constant 0 : i32
    %c0_i32_1 = arith.constant 0 : i32
    return %c0_i32, %c0_i32_0 : i32, i32
  }
  func.func @transform_10(%arg0: i32) -> (i32, i32) {
    %c0_i32 = arith.constant 0 : i32
    %c0_i32_0 = arith.constant 0 : i32
    %c0_i32_1 = arith.constant 0 : i32
    return %c0_i32, %c0_i32_0 : i32, i32
  }
  func.func @transform_11(%arg0: i32) -> (i32, i32) {
    %c0_i32 = arith.constant 0 : i32
    %c0_i32_0 = arith.constant 0 : i32
    %c0_i32_1 = arith.constant 0 : i32
    return %c0_i32, %c0_i32_0 : i32, i32
  }
  func.func @transform_12(%arg0: i32) -> (i32, i32) {
    %c0_i32 = arith.constant 0 : i32
    %c0_i32_0 = arith.constant 0 : i32
    %c0_i32_1 = arith.constant 0 : i32
    return %c0_i32, %c0_i32_0 : i32, i32
  }
  func.func @transform_13(%arg0: i32) -> (i32, i32) {
    %c0_i32 = arith.constant 0 : i32
    %c0_i32_0 = arith.constant 0 : i32
    return %arg0, %c0_i32 : i32, i32
  }
}

</mosaic_0001>

<llo_original>
// kernel: cnnae_forward.1
$region0: #{cnnae_forward.1}
  #allocation0 [shape = 'u32[]', space=smem, size = 0x4, offset = 0x4, fixed_abs, tag = 'smem constant byte address 0x4 - core index']
  #allocation1 [shape = 'u32[144,128]{1,0:T(1,128)}', space=vmem, size = 0x12000, scoped, tag = 'internal scratch']
  %s0 = inlined_call_operand.vmem [shape: f32[16,512], index: 0, kind: input, shape index: {}]
  %s1 = inlined_call_operand.vmem [shape: f32[5,5], index: 1, kind: input, shape index: {}]
  %s2 = inlined_call_operand.vmem [shape: f32[5], index: 2, kind: input, shape index: {}]
  %s3 = inlined_call_operand.vmem [shape: f32[256,128], index: 3, kind: input, shape index: {}]
  %s4 = inlined_call_operand.vmem [shape: f32[1,128], index: 4, kind: input, shape index: {}]
  %s5 = inlined_call_operand.vmem [shape: f32[128,64], index: 5, kind: input, shape index: {}]
  %s6 = inlined_call_operand.vmem [shape: f32[1,64], index: 6, kind: input, shape index: {}]
  %s7 = inlined_call_operand.vmem [shape: f32[64,32], index: 7, kind: input, shape index: {}]
  %s8 = inlined_call_operand.vmem [shape: f32[1,32], index: 8, kind: input, shape index: {}]
  %s9 = inlined_call_operand.vmem [shape: f32[32,16], index: 9, kind: input, shape index: {}]
  %s10 = inlined_call_operand.vmem [shape: f32[1,16], index: 10, kind: input, shape index: {}]
  %s11 = inlined_call_operand.vmem [shape: f32[16,2], index: 11, kind: input, shape index: {}]
  %s12 = inlined_call_operand.vmem [shape: f32[1,2], index: 12, kind: input, shape index: {}]
  %s13 = inlined_call_operand.vmem [shape: f32[16,2], index: 13, kind: output, shape index: {}]
  %s14 = sld [smem:[#allocation0]]
  $region93: #{cnnae_forward.1} parent=0
    _
  %s16 = ssub.s32 1, %s14
  %s17 = scalar_select 0, %s16, %s14
  $region1: #{cnnae_forward.1} parent=0
    #allocation2 [shape = 'u8[4096]{0}', space=smem, size = 0x1000, scoped, tag = 'input window, operand 1, single buffered']
    #allocation3 [shape = 's32[2]{0}', space=sflag, size = 0x8, scoped, tag = 'scoped memory for cnnae_forward.1']
    #allocation4 [shape = 'u8[512]{0}', space=smem, size = 0x200, scoped, tag = 'input window, operand 2, single buffered']
    #allocation5 [shape = 's32[1]{0}', space=sflag, size = 0x4, scoped, tag = 'scoped memory for cnnae_forward.1']
    %18 = vsyncpa [#allocation3], 0
    %19 = vsyncpa [#allocation5], 0
    loop: start=0, step=1, limit=4
    $region2: #{cnnae_forward.1} parent=1 // loop_pre_header
      _
    $region3: #{cnnae_forward.1} parent=1 // loop_header
      %s21 = sphi 0, %s25
      %p22 = scmp.ge.s32.totalorder %s21, 4
      %s31 = sphi 0, %s33
      %s34 = sphi 0, %s31
      %s35 = sphi 0, %s34
      %s51 = sphi 0, %s35
      %s55 = sphi 0, %s55
      %s57 = sphi 0, %s55
      %s58 = sphi 0, %s57
      %s72 = sphi 0, %s58
      %s76 = sphi 0, %s76
      %s78 = sphi 0, %s76
      %s79 = sphi 0, %s78
      %s93 = sphi 0, %s79
      %s97 = sphi 0, %s97
      %s99 = sphi 0, %s97
      %s100 = sphi 0, %s99
      %s114 = sphi 0, %s100
      %s118 = sphi 0, %s118
      %s120 = sphi 0, %s118
      %s121 = sphi 0, %s120
      %s135 = sphi 0, %s121
      %s139 = sphi 0, %s139
      %s141 = sphi 0, %s139
      %s142 = sphi 0, %s141
      %s156 = sphi 0, %s142
      %s160 = sphi 0, %s160
      %s162 = sphi 0, %s160
      %s163 = sphi 0, %s162
      %s177 = sphi 0, %s163
      %s181 = sphi 0, %s181
      %s183 = sphi 0, %s181
      %s184 = sphi 0, %s183
      %s198 = sphi 0, %s184
      %s202 = sphi 0, %s202
      %s204 = sphi 0, %s202
      %s205 = sphi 0, %s204
      %s219 = sphi 0, %s205
      %s223 = sphi 0, %s223
      %s225 = sphi 0, %s223
      %s226 = sphi 0, %s225
      %s240 = sphi 0, %s226
      %s244 = sphi 0, %s244
      %s246 = sphi 0, %s244
      %s247 = sphi 0, %s246
      %s261 = sphi 0, %s247
      %s265 = sphi 0, %s265
      %s267 = sphi 0, %s265
      %s268 = sphi 0, %s267
      %s282 = sphi 0, %s268
      %s286 = sphi 0, %s286
      %s288 = sphi 0, %s286
      %s289 = sphi 0, %s288
      %s303 = sphi 0, %s289
      %s309 = sphi 0, %s311
      %s312 = sphi 0, %s309
      %s313 = sphi 0, %s312
      %s329 = sphi 0, %s313
    $region4: #{cnnae_forward.1} parent=1 // loop_header_branch
      %24 = sbr.rel (%p22) target = $region8
    $region5: #{cnnae_forward.1} parent=1 // loop_body
      %s26 = ssub.s32 %s21, 1
      %s27 = ssub.s32 %s21, 2
      %s28 = sadd.s32 %s21, 1
      %s29 = ssub.s32 %s21, %s28
      %p30 = scmp.eq.s32.totalorder %s29, 0
      %s32 = sadd.s32 %s31, 1
      %s33 = scalar_select %p30, %s31, %s32
      %p36 = pneg %p30
      %p37 = scmp.eq.s32.totalorder %s21, 1
      %p38 = por %p36, %p37
      %p39 = scmp.ne.s32.totalorder %s31, %s34
      %p40 = scmp.eq.s32.totalorder %s21, 0
      %p41 = por %p39, %p40
      %p42 = scmp.ne.s32.totalorder %s31, %s34
      %p43 = scmp.eq.s32.totalorder %s26, 1
      %p44 = por %p42, %p43
      %p45 = scmp.ne.s32.totalorder %s34, %s35
      %p46 = scmp.eq.s32.totalorder %s26, 0
      %p47 = por %p45, %p46
      %p48 = scmp.ne.s32.totalorder %s34, %s35
      %p49 = scmp.eq.s32.totalorder %s27, 1
      %p50 = por %p48, %p49
      %p52 = scmp.ne.s32.totalorder %s35, %s51
      %p53 = scmp.eq.s32.totalorder %s27, 0
      %p54 = por %p52, %p53
      %s56 = sadd.s32 %s55, 1
      %p59 = scmp.eq.s32.totalorder %s21, 1
      %p60 = scmp.ne.s32.totalorder %s55, %s57
      %p61 = scmp.eq.s32.totalorder %s21, 0
      %p62 = por %p60, %p61
      %p63 = scmp.ne.s32.totalorder %s55, %s57
      %p64 = scmp.eq.s32.totalorder %s26, 1
      %p65 = por %p63, %p64
      %p66 = scmp.ne.s32.totalorder %s57, %s58
      %p67 = scmp.eq.s32.totalorder %s26, 0
      %p68 = por %p66, %p67
      %p69 = scmp.ne.s32.totalorder %s57, %s58
      %p70 = scmp.eq.s32.totalorder %s27, 1
      %p71 = por %p69, %p70
      %p73 = scmp.ne.s32.totalorder %s58, %s72
      %p74 = scmp.eq.s32.totalorder %s27, 0
      %p75 = por %p73, %p74
      %s77 = sadd.s32 %s76, 1
      %p80 = scmp.eq.s32.totalorder %s21, 1
      %p81 = scmp.ne.s32.totalorder %s76, %s78
      %p82 = scmp.eq.s32.totalorder %s21, 0
      %p83 = por %p81, %p82
      %p84 = scmp.ne.s32.totalorder %s76, %s78
      %p85 = scmp.eq.s32.totalorder %s26, 1
      %p86 = por %p84, %p85
      %p87 = scmp.ne.s32.totalorder %s78, %s79
      %p88 = scmp.eq.s32.totalorder %s26, 0
      %p89 = por %p87, %p88
      %p90 = scmp.ne.s32.totalorder %s78, %s79
      %p91 = scmp.eq.s32.totalorder %s27, 1
      %p92 = por %p90, %p91
      %p94 = scmp.ne.s32.totalorder %s79, %s93
      %p95 = scmp.eq.s32.totalorder %s27, 0
      %p96 = por %p94, %p95
      %s98 = sadd.s32 %s97, 1
      %p101 = scmp.eq.s32.totalorder %s21, 1
      %p102 = scmp.ne.s32.totalorder %s97, %s99
      %p103 = scmp.eq.s32.totalorder %s21, 0
      %p104 = por %p102, %p103
      %p105 = scmp.ne.s32.totalorder %s97, %s99
      %p106 = scmp.eq.s32.totalorder %s26, 1
      %p107 = por %p105, %p106
      %p108 = scmp.ne.s32.totalorder %s99, %s100
      %p109 = scmp.eq.s32.totalorder %s26, 0
      %p110 = por %p108, %p109
      %p111 = scmp.ne.s32.totalorder %s99, %s100
      %p112 = scmp.eq.s32.totalorder %s27, 1
      %p113 = por %p111, %p112
      %p115 = scmp.ne.s32.totalorder %s100, %s114
      %p116 = scmp.eq.s32.totalorder %s27, 0
      %p117 = por %p115, %p116
      %s119 = sadd.s32 %s118, 1
      %p122 = scmp.eq.s32.totalorder %s21, 1
      %p123 = scmp.ne.s32.totalorder %s118, %s120
      %p124 = scmp.eq.s32.totalorder %s21, 0
      %p125 = por %p123, %p124
      %p126 = scmp.ne.s32.totalorder %s118, %s120
      %p127 = scmp.eq.s32.totalorder %s26, 1
      %p128 = por %p126, %p127
      %p129 = scmp.ne.s32.totalorder %s120, %s121
      %p130 = scmp.eq.s32.totalorder %s26, 0
      %p131 = por %p129, %p130
      %p132 = scmp.ne.s32.totalorder %s120, %s121
      %p133 = scmp.eq.s32.totalorder %s27, 1
      %p134 = por %p132, %p133
      %p136 = scmp.ne.s32.totalorder %s121, %s135
      %p137 = scmp.eq.s32.totalorder %s27, 0
      %p138 = por %p136, %p137
      %s140 = sadd.s32 %s139, 1
      %p143 = scmp.eq.s32.totalorder %s21, 1
      %p144 = scmp.ne.s32.totalorder %s139, %s141
      %p145 = scmp.eq.s32.totalorder %s21, 0
      %p146 = por %p144, %p145
      %p147 = scmp.ne.s32.totalorder %s139, %s141
      %p148 = scmp.eq.s32.totalorder %s26, 1
      %p149 = por %p147, %p148
      %p150 = scmp.ne.s32.totalorder %s141, %s142
      %p151 = scmp.eq.s32.totalorder %s26, 0
      %p152 = por %p150, %p151
      %p153 = scmp.ne.s32.totalorder %s141, %s142
      %p154 = scmp.eq.s32.totalorder %s27, 1
      %p155 = por %p153, %p154
      %p157 = scmp.ne.s32.totalorder %s142, %s156
      %p158 = scmp.eq.s32.totalorder %s27, 0
      %p159 = por %p157, %p158
      %s161 = sadd.s32 %s160, 1
      %p164 = scmp.eq.s32.totalorder %s21, 1
      %p165 = scmp.ne.s32.totalorder %s160, %s162
      %p166 = scmp.eq.s32.totalorder %s21, 0
      %p167 = por %p165, %p166
      %p168 = scmp.ne.s32.totalorder %s160, %s162
      %p169 = scmp.eq.s32.totalorder %s26, 1
      %p170 = por %p168, %p169
      %p171 = scmp.ne.s32.totalorder %s162, %s163
      %p172 = scmp.eq.s32.totalorder %s26, 0
      %p173 = por %p171, %p172
      %p174 = scmp.ne.s32.totalorder %s162, %s163
      %p175 = scmp.eq.s32.totalorder %s27, 1
      %p176 = por %p174, %p175
      %p178 = scmp.ne.s32.totalorder %s163, %s177
      %p179 = scmp.eq.s32.totalorder %s27, 0
      %p180 = por %p178, %p179
      %s182 = sadd.s32 %s181, 1
      %p185 = scmp.eq.s32.totalorder %s21, 1
      %p186 = scmp.ne.s32.totalorder %s181, %s183
      %p187 = scmp.eq.s32.totalorder %s21, 0
      %p188 = por %p186, %p187
      %p189 = scmp.ne.s32.totalorder %s181, %s183
      %p190 = scmp.eq.s32.totalorder %s26, 1
      %p191 = por %p189, %p190
      %p192 = scmp.ne.s32.totalorder %s183, %s184
      %p193 = scmp.eq.s32.totalorder %s26, 0
      %p194 = por %p192, %p193
      %p195 = scmp.ne.s32.totalorder %s183, %s184
      %p196 = scmp.eq.s32.totalorder %s27, 1
      %p197 = por %p195, %p196
      %p199 = scmp.ne.s32.totalorder %s184, %s198
      %p200 = scmp.eq.s32.totalorder %s27, 0
      %p201 = por %p199, %p200
      %s203 = sadd.s32 %s202, 1
      %p206 = scmp.eq.s32.totalorder %s21, 1
      %p207 = scmp.ne.s32.totalorder %s202, %s204
      %p208 = scmp.eq.s32.totalorder %s21, 0
      %p209 = por %p207, %p208
      %p210 = scmp.ne.s32.totalorder %s202, %s204
      %p211 = scmp.eq.s32.totalorder %s26, 1
      %p212 = por %p210, %p211
      %p213 = scmp.ne.s32.totalorder %s204, %s205
      %p214 = scmp.eq.s32.totalorder %s26, 0
      %p215 = por %p213, %p214
      %p216 = scmp.ne.s32.totalorder %s204, %s205
      %p217 = scmp.eq.s32.totalorder %s27, 1
      %p218 = por %p216, %p217
      %p220 = scmp.ne.s32.totalorder %s205, %s219
      %p221 = scmp.eq.s32.totalorder %s27, 0
      %p222 = por %p220, %p221
      %s224 = sadd.s32 %s223, 1
      %p227 = scmp.eq.s32.totalorder %s21, 1
      %p228 = scmp.ne.s32.totalorder %s223, %s225
      %p229 = scmp.eq.s32.totalorder %s21, 0
      %p230 = por %p228, %p229
      %p231 = scmp.ne.s32.totalorder %s223, %s225
      %p232 = scmp.eq.s32.totalorder %s26, 1
      %p233 = por %p231, %p232
      %p234 = scmp.ne.s32.totalorder %s225, %s226
      %p235 = scmp.eq.s32.totalorder %s26, 0
      %p236 = por %p234, %p235
      %p237 = scmp.ne.s32.totalorder %s225, %s226
      %p238 = scmp.eq.s32.totalorder %s27, 1
      %p239 = por %p237, %p238
      %p241 = scmp.ne.s32.totalorder %s226, %s240
      %p242 = scmp.eq.s32.totalorder %s27, 0
      %p243 = por %p241, %p242
      %s245 = sadd.s32 %s244, 1
      %p248 = scmp.eq.s32.totalorder %s21, 1
      %p249 = scmp.ne.s32.totalorder %s244, %s246
      %p250 = scmp.eq.s32.totalorder %s21, 0
      %p251 = por %p249, %p250
      %p252 = scmp.ne.s32.totalorder %s244, %s246
      %p253 = scmp.eq.s32.totalorder %s26, 1
      %p254 = por %p252, %p253
      %p255 = scmp.ne.s32.totalorder %s246, %s247
      %p256 = scmp.eq.s32.totalorder %s26, 0
      %p257 = por %p255, %p256
      %p258 = scmp.ne.s32.totalorder %s246, %s247
      %p259 = scmp.eq.s32.totalorder %s27, 1
      %p260 = por %p258, %p259
      %p262 = scmp.ne.s32.totalorder %s247, %s261
      %p263 = scmp.eq.s32.totalorder %s27, 0
      %p264 = por %p262, %p263
      %s266 = sadd.s32 %s265, 1
      %p269 = scmp.eq.s32.totalorder %s21, 1
      %p270 = scmp.ne.s32.totalorder %s265, %s267
      %p271 = scmp.eq.s32.totalorder %s21, 0
      %p272 = por %p270, %p271
      %p273 = scmp.ne.s32.totalorder %s265, %s267
      %p274 = scmp.eq.s32.totalorder %s26, 1
      %p275 = por %p273, %p274
      %p276 = scmp.ne.s32.totalorder %s267, %s268
      %p277 = scmp.eq.s32.totalorder %s26, 0
      %p278 = por %p276, %p277
      %p279 = scmp.ne.s32.totalorder %s267, %s268
      %p280 = scmp.eq.s32.totalorder %s27, 1
      %p281 = por %p279, %p280
      %p283 = scmp.ne.s32.totalorder %s268, %s282
      %p284 = scmp.eq.s32.totalorder %s27, 0
      %p285 = por %p283, %p284
      %s287 = sadd.s32 %s286, 1
      %p290 = scmp.eq.s32.totalorder %s21, 1
      %p291 = scmp.ne.s32.totalorder %s286, %s288
      %p292 = scmp.eq.s32.totalorder %s21, 0
      %p293 = por %p291, %p292
      %p294 = scmp.ne.s32.totalorder %s286, %s288
      %p295 = scmp.eq.s32.totalorder %s26, 1
      %p296 = por %p294, %p295
      %p297 = scmp.ne.s32.totalorder %s288, %s289
      %p298 = scmp.eq.s32.totalorder %s26, 0
      %p299 = por %p297, %p298
      %p300 = scmp.ne.s32.totalorder %s288, %s289
      %p301 = scmp.eq.s32.totalorder %s27, 1
      %p302 = por %p300, %p301
      %p304 = scmp.ne.s32.totalorder %s289, %s303
      %p305 = scmp.eq.s32.totalorder %s27, 0
      %p306 = por %p304, %p305
      %s307 = ssub.s32 %s21, %s28
      %p308 = scmp.eq.s32.totalorder %s307, 0
      %s310 = sadd.s32 %s309, 1
      %s311 = scalar_select %p308, %s309, %s310
      %p314 = pneg %p308
      %p315 = scmp.eq.s32.totalorder %s21, 1
      %p316 = por %p314, %p315
      %p317 = scmp.ne.s32.totalorder %s309, %s312
      %p318 = scmp.eq.s32.totalorder %s21, 0
      %p319 = por %p317, %p318
      %p320 = scmp.ne.s32.totalorder %s309, %s312
      %p321 = scmp.eq.s32.totalorder %s26, 1
      %p322 = por %p320, %p321
      %p323 = scmp.ne.s32.totalorder %s312, %s313
      %p324 = scmp.eq.s32.totalorder %s26, 0
      %p325 = por %p323, %p324
      %p326 = scmp.ne.s32.totalorder %s312, %s313
      %p327 = scmp.eq.s32.totalorder %s27, 1
      %p328 = por %p326, %p327
      %p330 = scmp.ne.s32.totalorder %s313, %s329
      %p331 = scmp.eq.s32.totalorder %s27, 0
      %p332 = por %p330, %p331
      %p333 = scmp.le.s32.totalorder 1, %s21
      %p334 = scmp.lt.s32.totalorder %s21, 3
      %p335 = pnand %p333, %p334
      %p336 = pneg %p335
      // Predicated region
      $region9: #{cnnae_forward.1} parent=5 // pred_check
        _
      $region10: #{cnnae_forward.1} parent=5 // pred_check_branch
        %338 = sbr.rel (%p335) target = $region12
      $region11: #{cnnae_forward.1} parent=5 // pred_region
        %s339 = ssub.s32 %s21, 1
        // Predicated region
        $region13: #{cnnae_forward.1} parent=11 // pred_check
          %p340 = pneg %p68
        $region14: #{cnnae_forward.1} parent=11 // pred_check_branch
          %342 = sbr.rel (%p340) target = $region16
        $region15: #{cnnae_forward.1} parent=11 // pred_region
          %s344 = ssub.s32 128, 128
          %345 = vsyncadd [#allocation3], %s344
          %s347 = sshll.u32 %s1, 4
          %s348 = int_to_ptr.vmem [resolvable:$true] %s347
          %350 = dma.vmem_to_smem %s348, 128, [#allocation2], [#allocation3]
        $region16: #{cnnae_forward.1} parent=11 // pred_fallthru
          _
        // Predicated region
        $region17: #{cnnae_forward.1} parent=11 // pred_check
          %p351 = pneg %p89
        $region18: #{cnnae_forward.1} parent=11 // pred_check_branch
          %353 = sbr.rel (%p351) target = $region20
        $region19: #{cnnae_forward.1} parent=11 // pred_region
          %s355 = ssub.s32 16, 16
          %356 = vsyncadd [#allocation5], %s355
          %s358 = sshll.u32 %s2, 4
          %s359 = int_to_ptr.vmem [resolvable:$true] %s358
          %361 = dma.vmem_to_smem %s359, 16, [#allocation4], [#allocation5]
        $region20: #{cnnae_forward.1} parent=11 // pred_fallthru
          _
        // Predicated region
        $region21: #{cnnae_forward.1} parent=11 // pred_check
          %p362 = pneg %p110
        $region22: #{cnnae_forward.1} parent=11 // pred_check_branch
          %364 = sbr.rel (%p362) target = $region24
        $region23: #{cnnae_forward.1} parent=11 // pred_region
          _
        $region24: #{cnnae_forward.1} parent=11 // pred_fallthru
          _
        // Predicated region
        $region25: #{cnnae_forward.1} parent=11 // pred_check
          %p365 = pneg %p131
        $region26: #{cnnae_forward.1} parent=11 // pred_check_branch
          %367 = sbr.rel (%p365) target = $region28
        $region27: #{cnnae_forward.1} parent=11 // pred_region
          _
        $region28: #{cnnae_forward.1} parent=11 // pred_fallthru
          _
        // Predicated region
        $region29: #{cnnae_forward.1} parent=11 // pred_check
          %p368 = pneg %p152
        $region30: #{cnnae_forward.1} parent=11 // pred_check_branch
          %370 = sbr.rel (%p368) target = $region32
        $region31: #{cnnae_forward.1} parent=11 // pred_region
          _
        $region32: #{cnnae_forward.1} parent=11 // pred_fallthru
          _
        // Predicated region
        $region33: #{cnnae_forward.1} parent=11 // pred_check
          %p371 = pneg %p173
        $region34: #{cnnae_forward.1} parent=11 // pred_check_branch
          %373 = sbr.rel (%p371) target = $region36
        $region35: #{cnnae_forward.1} parent=11 // pred_region
          _
        $region36: #{cnnae_forward.1} parent=11 // pred_fallthru
          _
        // Predicated region
        $region37: #{cnnae_forward.1} parent=11 // pred_check
          %p374 = pneg %p194
        $region38: #{cnnae_forward.1} parent=11 // pred_check_branch
          %376 = sbr.rel (%p374) target = $region40
        $region39: #{cnnae_forward.1} parent=11 // pred_region
          _
        $region40: #{cnnae_forward.1} parent=11 // pred_fallthru
          _
        // Predicated region
        $region41: #{cnnae_forward.1} parent=11 // pred_check
          %p377 = pneg %p215
        $region42: #{cnnae_forward.1} parent=11 // pred_check_branch
          %379 = sbr.rel (%p377) target = $region44
        $region43: #{cnnae_forward.1} parent=11 // pred_region
          _
        $region44: #{cnnae_forward.1} parent=11 // pred_fallthru
          _
        // Predicated region
        $region45: #{cnnae_forward.1} parent=11 // pred_check
          %p380 = pneg %p236
        $region46: #{cnnae_forward.1} parent=11 // pred_check_branch
          %382 = sbr.rel (%p380) target = $region48
        $region47: #{cnnae_forward.1} parent=11 // pred_region
          _
        $region48: #{cnnae_forward.1} parent=11 // pred_fallthru
          _
        // Predicated region
        $region49: #{cnnae_forward.1} parent=11 // pred_check
          %p383 = pneg %p257
        $region50: #{cnnae_forward.1} parent=11 // pred_check_branch
          %385 = sbr.rel (%p383) target = $region52
        $region51: #{cnnae_forward.1} parent=11 // pred_region
          _
        $region52: #{cnnae_forward.1} parent=11 // pred_fallthru
          _
        // Predicated region
        $region53: #{cnnae_forward.1} parent=11 // pred_check
          %p386 = pneg %p278
        $region54: #{cnnae_forward.1} parent=11 // pred_check_branch
          %388 = sbr.rel (%p386) target = $region56
        $region55: #{cnnae_forward.1} parent=11 // pred_region
          _
        $region56: #{cnnae_forward.1} parent=11 // pred_fallthru
          _
        // Predicated region
        $region57: #{cnnae_forward.1} parent=11 // pred_check
          %p389 = pneg %p299
        $region58: #{cnnae_forward.1} parent=11 // pred_check_branch
          %391 = sbr.rel (%p389) target = $region60
        $region59: #{cnnae_forward.1} parent=11 // pred_region
          _
        $region60: #{cnnae_forward.1} parent=11 // pred_fallthru
          _
      $region12: #{cnnae_forward.1} parent=5 // pred_fallthru
        _
      %p392 = scmp.lt.s32.totalorder %s21, 2
      // Predicated region
      $region61: #{cnnae_forward.1} parent=5 // pred_check
        %p393 = pneg %p392
      $region62: #{cnnae_forward.1} parent=5 // pred_check_branch
        %395 = sbr.rel (%p393) target = $region64
      $region63: #{cnnae_forward.1} parent=5 // pred_region
        // Predicated region
        $region65: #{cnnae_forward.1} parent=63 // pred_check
          %p396 = pneg %p41
        $region66: #{cnnae_forward.1} parent=63 // pred_check_branch
          %398 = sbr.rel (%p396) target = $region68
        $region67: #{cnnae_forward.1} parent=63 // pred_region
          %p399 = scmp.lt.s32.totalorder %s21, 1
          %s400 = scalar_select %p399, %s21, 1
          %s401 = smul.addr %s400, 4
          %s402 = smul.addr %s401, 8
          %s403 = scalar_lea.vmem %s0, %s402
        $region68: #{cnnae_forward.1} parent=63 // pred_fallthru
          _
      $region64: #{cnnae_forward.1} parent=5 // pred_fallthru
        _
      %p404 = scmp.le.s32.totalorder 1, %s21
      %p405 = scmp.lt.s32.totalorder %s21, 3
      %p406 = pnand %p404, %p405
      %p407 = pneg %p406
      // Predicated region
      $region69: #{cnnae_forward.1} parent=5 // pred_check
        _
      $region70: #{cnnae_forward.1} parent=5 // pred_check_branch
        %409 = sbr.rel (%p406) target = $region72
      $region71: #{cnnae_forward.1} parent=5 // pred_region
        %s410 = ssub.s32 %s21, 1
        // Predicated region
        $region73: #{cnnae_forward.1} parent=71 // pred_check
          %p411 = pneg %p68
        $region74: #{cnnae_forward.1} parent=71 // pred_check_branch
          %413 = sbr.rel (%p411) target = $region76
        $region75: #{cnnae_forward.1} parent=71 // pred_region
          %414 = dma.done [#allocation3], 128
        $region76: #{cnnae_forward.1} parent=71 // pred_fallthru
          _
        // Predicated region
        $region77: #{cnnae_forward.1} parent=71 // pred_check
          %p415 = pneg %p89
        $region78: #{cnnae_forward.1} parent=71 // pred_check_branch
          %417 = sbr.rel (%p415) target = $region80
        $region79: #{cnnae_forward.1} parent=71 // pred_region
          %418 = dma.done [#allocation5], 16
        $region80: #{cnnae_forward.1} parent=71 // pred_fallthru
          _
        %419 = sfence
        %p420 = scmp.lt.s32.totalorder %s26, 1
        %s421 = scalar_select %p420, %s26, 1
        %s422 = smul.addr %s421, 4
        %s423 = smul.addr %s422, 8
        %s424 = scalar_lea.vmem %s0, %s423
        %p425 = pneg %p47
        %p426 = pneg %p44
        %p427 = pneg %p68
        %p428 = pneg %p65
        %p429 = pneg %p89
        %p430 = pneg %p86
        %p431 = pneg %p110
        %p432 = pneg %p107
        %p433 = pneg %p131
        %p434 = pneg %p128
        %p435 = pneg %p152
        %p436 = pneg %p149
        %p437 = pneg %p173
        %p438 = pneg %p170
        %p439 = pneg %p194
        %p440 = pneg %p191
        %p441 = pneg %p215
        %p442 = pneg %p212
        %p443 = pneg %p236
        %p444 = pneg %p233
        %p445 = pneg %p257
        %p446 = pneg %p254
        %p447 = pneg %p278
        %p448 = pneg %p275
        %p449 = pneg %p299
        %p450 = pneg %p296
        %p451 = pneg %p325
        %p452 = pneg %p322
        %p453 = scmp.lt.s32.totalorder %s26, 1
        %s454 = scalar_select %p453, %s26, 1
        %s455 = smul.addr %s454, 8
        %s456 = scalar_lea.vmem %s13, %s455
        %p457 = scmp.lt.s32.totalorder %s26, 1
        %s458 = scalar_select %p457, %s26, 1
        %s459 = smul.addr %s458, 4
        %s460 = smul.addr %s459, 8
        %s461 = scalar_lea.vmem %s0, %s460
        %p462 = scmp.lt.s32.totalorder %s26, 1
        %s463 = scalar_select %p462, %s26, 1
        %s464 = smul.addr %s463, 8
        %s465 = scalar_lea.vmem %s13, %s464
        %v466 = vld [vmem:[%s461] sm:$0xff]
        %v467 = vld [vmem:[%s461 + $0x8] sm:$0xff]
        %v468 = vld [vmem:[%s461 + $0x10] sm:$0xff]
        %v469 = vld [vmem:[%s461 + $0x18] sm:$0xff]
        %s470 = sld [smem:[#allocation2 + $0x2]]
        %v471 = vstv %s470
        %v472 = vmul.f32 %v471, %v466
        %v473 = vmul.f32 %v471, %v467
        %v474 = vmul.f32 %v471, %v468
        %v475 = vmul.f32 %v471, %v469
        %s476 = sld [smem:[#allocation2]]
        %477 = vrot.lane.b32.xlu0 %v466, 2
        %v478 = vpop.permute.xlu0 %477
        %479 = vrot.lane.b32.xlu0 %v467, 2
        %v480 = vpop.permute.xlu0 %479
        %481 = vrot.lane.b32.xlu0 %v468, 2
        %v482 = vpop.permute.xlu0 %481
        %483 = vrot.lane.b32.xlu0 %v469, 2
        %v484 = vpop.permute.xlu0 %483
        %v485 = vlaneseq
        %v486 = vand.u32 %v485, 127
        %vm487 = vcmp.lt.s32.totalorder %v486, 2
        %v488 = vsel %vm487, %v482, %v484
        %v489 = vsel %vm487, %v480, %v482
        %v490 = vsel %vm487, %v478, %v480
        %v491 = vsel %vm487, %v484, %v478
        %v492 = vstv %s476
        %v493 = vmul.f32 %v492, %v491
        %v494 = vmul.f32 %v492, %v490
        %v495 = vmul.f32 %v492, %v489
        %v496 = vmul.f32 %v492, %v488
        %v497 = vadd.f32 %v472, %v493
        %v498 = vadd.f32 %v473, %v494
        %v499 = vadd.f32 %v474, %v495
        %v500 = vadd.f32 %v475, %v496
        %s501 = sld [smem:[#allocation2 + $0x1]]
        %502 = vrot.lane.b32.xlu0 %v466, 1
        %v503 = vpop.permute.xlu0 %502
        %504 = vrot.lane.b32.xlu0 %v467, 1
        %v505 = vpop.permute.xlu0 %504
        %506 = vrot.lane.b32.xlu0 %v468, 1
        %v507 = vpop.permute.xlu0 %506
        %508 = vrot.lane.b32.xlu0 %v469, 1
        %v509 = vpop.permute.xlu0 %508
        %vm510 = vcmp.lt.s32.totalorder %v486, 1
        %v511 = vsel %vm510, %v507, %v509
        %v512 = vsel %vm510, %v505, %v507
        %v513 = vsel %vm510, %v503, %v505
        %v514 = vsel %vm510, %v509, %v503
        %v515 = vstv %s501
        %v516 = vmul.f32 %v515, %v514
        %v517 = vmul.f32 %v515, %v513
        %v518 = vmul.f32 %v515, %v512
        %v519 = vmul.f32 %v515, %v511
        %v520 = vadd.f32 %v497, %v516
        %v521 = vadd.f32 %v498, %v517
        %v522 = vadd.f32 %v499, %v518
        %v523 = vadd.f32 %v500, %v519
        %s524 = sld [smem:[#allocation2 + $0x3]]
        %525 = vrot.lane.b32.xlu0 %v466, 127
        %v526 = vpop.permute.xlu0 %525
        %527 = vrot.lane.b32.xlu0 %v467, 127
        %v528 = vpop.permute.xlu0 %527
        %529 = vrot.lane.b32.xlu0 %v468, 127
        %v530 = vpop.permute.xlu0 %529
        %531 = vrot.lane.b32.xlu0 %v469, 127
        %v532 = vpop.permute.xlu0 %531
        %vm533 = vcmp.lt.s32.totalorder %v486, 127
        %v534 = vsel %vm533, %v530, %v532
        %v535 = vsel %vm533, %v528, %v530
        %v536 = vsel %vm533, %v526, %v528
        %v537 = vsel %vm533, %v532, %v526
        %v538 = vstv %s524
        %v539 = vmul.f32 %v538, %v536
        %v540 = vmul.f32 %v538, %v535
        %v541 = vmul.f32 %v538, %v534
        %v542 = vmul.f32 %v538, %v537
        %v543 = vadd.f32 %v520, %v539
        %v544 = vadd.f32 %v521, %v540
        %v545 = vadd.f32 %v522, %v541
        %v546 = vadd.f32 %v523, %v542
        %s547 = sld [smem:[#allocation2 + $0x4]]
        %548 = vrot.lane.b32.xlu0 %v466, 126
        %v549 = vpop.permute.xlu0 %548
        %550 = vrot.lane.b32.xlu0 %v467, 126
        %v551 = vpop.permute.xlu0 %550
        %552 = vrot.lane.b32.xlu0 %v468, 126
        %v553 = vpop.permute.xlu0 %552
        %554 = vrot.lane.b32.xlu0 %v469, 126
        %v555 = vpop.permute.xlu0 %554
        %vm556 = vcmp.lt.s32.totalorder %v486, 126
        %v557 = vsel %vm556, %v553, %v555
        %v558 = vsel %vm556, %v551, %v553
        %v559 = vsel %vm556, %v549, %v551
        %v560 = vsel %vm556, %v555, %v549
        %v561 = vstv %s547
        %v562 = vmul.f32 %v561, %v559
        %v563 = vmul.f32 %v561, %v558
        %v564 = vmul.f32 %v561, %v557
        %v565 = vmul.f32 %v561, %v560
        %v566 = vadd.f32 %v543, %v562
        %v567 = vadd.f32 %v544, %v563
        %v568 = vadd.f32 %v545, %v564
        %v569 = vadd.f32 %v546, %v565
        %s570 = sld [smem:[#allocation4]]
        %v571 = vstv %s570
        %v572 = vadd.f32 %v566, %v571
        %v573 = vadd.f32 %v567, %v571
        %v574 = vadd.f32 %v568, %v571
        %v575 = vadd.f32 %v569, %v571
        %v576 = vmax.f32 %v572, 0.0
        %v577 = vmax.f32 %v573, 0.0
        %v578 = vmax.f32 %v574, 0.0
        %v579 = vmax.f32 %v575, 0.0
        %v580 = vadd.s32 %v486, 128
        %v581 = vadd.s32 %v486, 256
        %v582 = vadd.s32 %v486, 384
        %vm583 = vcmp.lt.s32.totalorder %v486, 496
        %vm584 = vcmp.lt.s32.totalorder %v580, 496
        %vm585 = vcmp.lt.s32.totalorder %v581, 496
        %vm586 = vcmp.lt.s32.totalorder %v582, 496
        %v587 = vsel %vm583, %v576, 0.0
        %v588 = vsel %vm584, %v577, 0.0
        %v589 = vsel %vm585, %v578, 0.0
        %v590 = vsel %vm586, %v579, 0.0
        %591 = vrot.lane.b32.xlu0 %v587, 1
        %v592 = vpop.permute.xlu0 %591
        %593 = vrot.lane.b32.xlu0 %v588, 1
        %v594 = vpop.permute.xlu0 %593
        %595 = vrot.lane.b32.xlu0 %v589, 1
        %v596 = vpop.permute.xlu0 %595
        %597 = vrot.lane.b32.xlu0 %v590, 1
        %v598 = vpop.permute.xlu0 %597
        %v599 = vsel %vm510, %v596, %v598
        %v600 = vsel %vm510, %v594, %v596
        %v601 = vsel %vm510, %v592, %v594
        %v602 = vsel %vm510, %v598, %v592
        %v603 = vmax.f32 %v602, %v587
        %v604 = vmax.f32 %v601, %v588
        %v605 = vmax.f32 %v600, %v589
        %v606 = vmax.f32 %v599, %v590
        %v607 = vlaneseq
        %v608 = vshrl.u32 %v607, 7
        %v609 = vadd.s32 %v608, 8
        %v610 = vadd.s32 %v608, 16
        %v611 = vadd.s32 %v608, 24
        %v612 = vadd.s32 %v608, 32
        %v613 = vadd.s32 %v608, 40
        %v614 = vadd.s32 %v608, 48
        %v615 = vadd.s32 %v608, 56
        %v616 = vadd.s32 %v608, 64
        %v617 = vadd.s32 %v608, 72
        %v618 = vadd.s32 %v608, 80
        %v619 = vadd.s32 %v608, 88
        %v620 = vadd.s32 %v608, 96
        %v621 = vadd.s32 %v608, 104
        %v622 = vadd.s32 %v608, 112
        %v623 = vadd.s32 %v608, 120
        %v624 = vadd.s32 %v608, 128
        %v625 = vadd.s32 %v608, 136
        %v626 = vadd.s32 %v608, 144
        %v627 = vadd.s32 %v608, 152
        %v628 = vadd.s32 %v608, 160
        %v629 = vadd.s32 %v608, 168
        %v630 = vadd.s32 %v608, 176
        %v631 = vadd.s32 %v608, 184
        %v632 = vadd.s32 %v608, 192
        %v633 = vadd.s32 %v608, 200
        %v634 = vadd.s32 %v608, 208
        %v635 = vadd.s32 %v608, 216
        %v636 = vadd.s32 %v608, 224
        %v637 = vadd.s32 %v608, 232
        %v638 = vadd.s32 %v608, 240
        %v639 = vadd.s32 %v608, 248
        %v640 = vadd.s32 %v608, 256
        %v641 = vadd.s32 %v608, 264
        %v642 = vadd.s32 %v608, 272
        %v643 = vadd.s32 %v608, 280
        %v644 = vadd.s32 %v608, 288
        %v645 = vadd.s32 %v608, 296
        %v646 = vadd.s32 %v608, 304
        %v647 = vadd.s32 %v608, 312
        %v648 = vadd.s32 %v608, 320
        %v649 = vadd.s32 %v608, 328
        %v650 = vadd.s32 %v608, 336
        %v651 = vadd.s32 %v608, 344
        %v652 = vadd.s32 %v608, 352
        %v653 = vadd.s32 %v608, 360
        %v654 = vadd.s32 %v608, 368
        %v655 = vadd.s32 %v608, 376
        %v656 = vadd.s32 %v608, 384
        %v657 = vadd.s32 %v608, 392
        %v658 = vadd.s32 %v608, 400
        %v659 = vadd.s32 %v608, 408
        %v660 = vadd.s32 %v608, 416
        %v661 = vadd.s32 %v608, 424
        %v662 = vadd.s32 %v608, 432
        %v663 = vadd.s32 %v608, 440
        %v664 = vadd.s32 %v608, 448
        %v665 = vadd.s32 %v608, 456
        %v666 = vadd.s32 %v608, 464
        %v667 = vadd.s32 %v608, 472
        %v668 = vadd.s32 %v608, 480
        %v669 = vadd.s32 %v608, 488
        %v670 = vadd.s32 %v608, 496
        %v671 = vadd.s32 %v608, 504
        %v672 = vmul.u32 %v486, 2
        %v673 = vmul.u32 %v580, 2
        %vm674 = vcmp.eq.s32.totalorder %v608, %v672
        %vm675 = vcmp.eq.s32.totalorder %v608, %v673
        %vm676 = vcmp.eq.s32.totalorder %v609, %v672
        %vm677 = vcmp.eq.s32.totalorder %v609, %v673
        %vm678 = vcmp.eq.s32.totalorder %v610, %v672
        %vm679 = vcmp.eq.s32.totalorder %v610, %v673
        %vm680 = vcmp.eq.s32.totalorder %v611, %v672
        %vm681 = vcmp.eq.s32.totalorder %v611, %v673
        %vm682 = vcmp.eq.s32.totalorder %v612, %v672
        %vm683 = vcmp.eq.s32.totalorder %v612, %v673
        %vm684 = vcmp.eq.s32.totalorder %v613, %v672
        %vm685 = vcmp.eq.s32.totalorder %v613, %v673
        %vm686 = vcmp.eq.s32.totalorder %v614, %v672
        %vm687 = vcmp.eq.s32.totalorder %v614, %v673
        %vm688 = vcmp.eq.s32.totalorder %v615, %v672
        %vm689 = vcmp.eq.s32.totalorder %v615, %v673
        %vm690 = vcmp.eq.s32.totalorder %v616, %v672
        %vm691 = vcmp.eq.s32.totalorder %v616, %v673
        %vm692 = vcmp.eq.s32.totalorder %v617, %v672
        %vm693 = vcmp.eq.s32.totalorder %v617, %v673
        %vm694 = vcmp.eq.s32.totalorder %v618, %v672
        %vm695 = vcmp.eq.s32.totalorder %v618, %v673
        %vm696 = vcmp.eq.s32.totalorder %v619, %v672
        %vm697 = vcmp.eq.s32.totalorder %v619, %v673
        %vm698 = vcmp.eq.s32.totalorder %v620, %v672
        %vm699 = vcmp.eq.s32.totalorder %v620, %v673
        %vm700 = vcmp.eq.s32.totalorder %v621, %v672
        %vm701 = vcmp.eq.s32.totalorder %v621, %v673
        %vm702 = vcmp.eq.s32.totalorder %v622, %v672
        %vm703 = vcmp.eq.s32.totalorder %v622, %v673
        %vm704 = vcmp.eq.s32.totalorder %v623, %v672
        %vm705 = vcmp.eq.s32.totalorder %v623, %v673
        %vm706 = vcmp.eq.s32.totalorder %v624, %v672
        %vm707 = vcmp.eq.s32.totalorder %v624, %v673
        %vm708 = vcmp.eq.s32.totalorder %v625, %v672
        %vm709 = vcmp.eq.s32.totalorder %v625, %v673
        %vm710 = vcmp.eq.s32.totalorder %v626, %v672
        %vm711 = vcmp.eq.s32.totalorder %v626, %v673
        %vm712 = vcmp.eq.s32.totalorder %v627, %v672
        %vm713 = vcmp.eq.s32.totalorder %v627, %v673
        %vm714 = vcmp.eq.s32.totalorder %v628, %v672
        %vm715 = vcmp.eq.s32.totalorder %v628, %v673
        %vm716 = vcmp.eq.s32.totalorder %v629, %v672
        %vm717 = vcmp.eq.s32.totalorder %v629, %v673
        %vm718 = vcmp.eq.s32.totalorder %v630, %v672
        %vm719 = vcmp.eq.s32.totalorder %v630, %v673
        %vm720 = vcmp.eq.s32.totalorder %v631, %v672
        %vm721 = vcmp.eq.s32.totalorder %v631, %v673
        %vm722 = vcmp.eq.s32.totalorder %v632, %v672
        %vm723 = vcmp.eq.s32.totalorder %v632, %v673
        %vm724 = vcmp.eq.s32.totalorder %v633, %v672
        %vm725 = vcmp.eq.s32.totalorder %v633, %v673
        %vm726 = vcmp.eq.s32.totalorder %v634, %v672
        %vm727 = vcmp.eq.s32.totalorder %v634, %v673
        %vm728 = vcmp.eq.s32.totalorder %v635, %v672
        %vm729 = vcmp.eq.s32.totalorder %v635, %v673
        %vm730 = vcmp.eq.s32.totalorder %v636, %v672
        %vm731 = vcmp.eq.s32.totalorder %v636, %v673
        %vm732 = vcmp.eq.s32.totalorder %v637, %v672
        %vm733 = vcmp.eq.s32.totalorder %v637, %v673
        %vm734 = vcmp.eq.s32.totalorder %v638, %v672
        %vm735 = vcmp.eq.s32.totalorder %v638, %v673
        %vm736 = vcmp.eq.s32.totalorder %v639, %v672
        %vm737 = vcmp.eq.s32.totalorder %v639, %v673
        %vm738 = vcmp.eq.s32.totalorder %v640, %v672
        %vm739 = vcmp.eq.s32.totalorder %v640, %v673
        %vm740 = vcmp.eq.s32.totalorder %v641, %v672
        %vm741 = vcmp.eq.s32.totalorder %v641, %v673
        %vm742 = vcmp.eq.s32.totalorder %v642, %v672
        %vm743 = vcmp.eq.s32.totalorder %v642, %v673
        %vm744 = vcmp.eq.s32.totalorder %v643, %v672
        %vm745 = vcmp.eq.s32.totalorder %v643, %v673
        %vm746 = vcmp.eq.s32.totalorder %v644, %v672
        %vm747 = vcmp.eq.s32.totalorder %v644, %v673
        %vm748 = vcmp.eq.s32.totalorder %v645, %v672
        %vm749 = vcmp.eq.s32.totalorder %v645, %v673
        %vm750 = vcmp.eq.s32.totalorder %v646, %v672
        %vm751 = vcmp.eq.s32.totalorder %v646, %v673
        %vm752 = vcmp.eq.s32.totalorder %v647, %v672
        %vm753 = vcmp.eq.s32.totalorder %v647, %v673
        %vm754 = vcmp.eq.s32.totalorder %v648, %v672
        %vm755 = vcmp.eq.s32.totalorder %v648, %v673
        %vm756 = vcmp.eq.s32.totalorder %v649, %v672
        %vm757 = vcmp.eq.s32.totalorder %v649, %v673
        %vm758 = vcmp.eq.s32.totalorder %v650, %v672
        %vm759 = vcmp.eq.s32.totalorder %v650, %v673
        %vm760 = vcmp.eq.s32.totalorder %v651, %v672
        %vm761 = vcmp.eq.s32.totalorder %v651, %v673
        %vm762 = vcmp.eq.s32.totalorder %v652, %v672
        %vm763 = vcmp.eq.s32.totalorder %v652, %v673
        %vm764 = vcmp.eq.s32.totalorder %v653, %v672
        %vm765 = vcmp.eq.s32.totalorder %v653, %v673
        %vm766 = vcmp.eq.s32.totalorder %v654, %v672
        %vm767 = vcmp.eq.s32.totalorder %v654, %v673
        %vm768 = vcmp.eq.s32.totalorder %v655, %v672
        %vm769 = vcmp.eq.s32.totalorder %v655, %v673
        %vm770 = vcmp.eq.s32.totalorder %v656, %v672
        %vm771 = vcmp.eq.s32.totalorder %v656, %v673
        %vm772 = vcmp.eq.s32.totalorder %v657, %v672
        %vm773 = vcmp.eq.s32.totalorder %v657, %v673
        %vm774 = vcmp.eq.s32.totalorder %v658, %v672
        %vm775 = vcmp.eq.s32.totalorder %v658, %v673
        %vm776 = vcmp.eq.s32.totalorder %v659, %v672
        %vm777 = vcmp.eq.s32.totalorder %v659, %v673
        %vm778 = vcmp.eq.s32.totalorder %v660, %v672
        %vm779 = vcmp.eq.s32.totalorder %v660, %v673
        %vm780 = vcmp.eq.s32.totalorder %v661, %v672
        %vm781 = vcmp.eq.s32.totalorder %v661, %v673
        %vm782 = vcmp.eq.s32.totalorder %v662, %v672
        %vm783 = vcmp.eq.s32.totalorder %v662, %v673
        %vm784 = vcmp.eq.s32.totalorder %v663, %v672
        %vm785 = vcmp.eq.s32.totalorder %v663, %v673
        %vm786 = vcmp.eq.s32.totalorder %v664, %v672
        %vm787 = vcmp.eq.s32.totalorder %v664, %v673
        %vm788 = vcmp.eq.s32.totalorder %v665, %v672
        %vm789 = vcmp.eq.s32.totalorder %v665, %v673
        %vm790 = vcmp.eq.s32.totalorder %v666, %v672
        %vm791 = vcmp.eq.s32.totalorder %v666, %v673
        %vm792 = vcmp.eq.s32.totalorder %v667, %v672
        %vm793 = vcmp.eq.s32.totalorder %v667, %v673
        %vm794 = vcmp.eq.s32.totalorder %v668, %v672
        %vm795 = vcmp.eq.s32.totalorder %v668, %v673
        %vm796 = vcmp.eq.s32.totalorder %v669, %v672
        %vm797 = vcmp.eq.s32.totalorder %v669, %v673
        %vm798 = vcmp.eq.s32.totalorder %v670, %v672
        %vm799 = vcmp.eq.s32.totalorder %v670, %v673
        %vm800 = vcmp.eq.s32.totalorder %v671, %v672
        %vm801 = vcmp.eq.s32.totalorder %v671, %v673
        %v802 = vsel %vm674, 1.0, 0.0
        %v803 = vsel %vm675, 1.0, 0.0
        %v804 = vsel %vm676, 1.0, 0.0
        %v805 = vsel %vm677, 1.0, 0.0
        %v806 = vsel %vm678, 1.0, 0.0
        %v807 = vsel %vm679, 1.0, 0.0
        %v808 = vsel %vm680, 1.0, 0.0
        %v809 = vsel %vm681, 1.0, 0.0
        %v810 = vsel %vm682, 1.0, 0.0
        %v811 = vsel %vm683, 1.0, 0.0
        %v812 = vsel %vm684, 1.0, 0.0
        %v813 = vsel %vm685, 1.0, 0.0
        %v814 = vsel %vm686, 1.0, 0.0
        %v815 = vsel %vm687, 1.0, 0.0
        %v816 = vsel %vm688, 1.0, 0.0
        %v817 = vsel %vm689, 1.0, 0.0
        %v818 = vsel %vm690, 1.0, 0.0
        %v819 = vsel %vm691, 1.0, 0.0
        %v820 = vsel %vm692, 1.0, 0.0
        %v821 = vsel %vm693, 1.0, 0.0
        %v822 = vsel %vm694, 1.0, 0.0
        %v823 = vsel %vm695, 1.0, 0.0
        %v824 = vsel %vm696, 1.0, 0.0
        %v825 = vsel %vm697, 1.0, 0.0
        %v826 = vsel %vm698, 1.0, 0.0
        %v827 = vsel %vm699, 1.0, 0.0
        %v828 = vsel %vm700, 1.0, 0.0
        %v829 = vsel %vm701, 1.0, 0.0
        %v830 = vsel %vm702, 1.0, 0.0
        %v831 = vsel %vm703, 1.0, 0.0
        %v832 = vsel %vm704, 1.0, 0.0
        %v833 = vsel %vm705, 1.0, 0.0
        %v834 = vsel %vm706, 1.0, 0.0
        %v835 = vsel %vm707, 1.0, 0.0
        %v836 = vsel %vm708, 1.0, 0.0
        %v837 = vsel %vm709, 1.0, 0.0
        %v838 = vsel %vm710, 1.0, 0.0
        %v839 = vsel %vm711, 1.0, 0.0
        %v840 = vsel %vm712, 1.0, 0.0
        %v841 = vsel %vm713, 1.0, 0.0
        %v842 = vsel %vm714, 1.0, 0.0
        %v843 = vsel %vm715, 1.0, 0.0
        %v844 = vsel %vm716, 1.0, 0.0
        %v845 = vsel %vm717, 1.0, 0.0
        %v846 = vsel %vm718, 1.0, 0.0
        %v847 = vsel %vm719, 1.0, 0.0
        %v848 = vsel %vm720, 1.0, 0.0
        %v849 = vsel %vm721, 1.0, 0.0
        %v850 = vsel %vm722, 1.0, 0.0
        %v851 = vsel %vm723, 1.0, 0.0
        %v852 = vsel %vm724, 1.0, 0.0
        %v853 = vsel %vm725, 1.0, 0.0
        %v854 = vsel %vm726, 1.0, 0.0
        %v855 = vsel %vm727, 1.0, 0.0
        %v856 = vsel %vm728, 1.0, 0.0
        %v857 = vsel %vm729, 1.0, 0.0
        %v858 = vsel %vm730, 1.0, 0.0
        %v859 = vsel %vm731, 1.0, 0.0
        %v860 = vsel %vm732, 1.0, 0.0
        %v861 = vsel %vm733, 1.0, 0.0
        %v862 = vsel %vm734, 1.0, 0.0
        %v863 = vsel %vm735, 1.0, 0.0
        %v864 = vsel %vm736, 1.0, 0.0
        %v865 = vsel %vm737, 1.0, 0.0
        %v866 = vsel %vm738, 1.0, 0.0
        %v867 = vsel %vm739, 1.0, 0.0
        %v868 = vsel %vm740, 1.0, 0.0
        %v869 = vsel %vm741, 1.0, 0.0
        %v870 = vsel %vm742, 1.0, 0.0
        %v871 = vsel %vm743, 1.0, 0.0
        %v872 = vsel %vm744, 1.0, 0.0
        %v873 = vsel %vm745, 1.0, 0.0
        %v874 = vsel %vm746, 1.0, 0.0
        %v875 = vsel %vm747, 1.0, 0.0
        %v876 = vsel %vm748, 1.0, 0.0
        %v877 = vsel %vm749, 1.0, 0.0
        %v878 = vsel %vm750, 1.0, 0.0
        %v879 = vsel %vm751, 1.0, 0.0
        %v880 = vsel %vm752, 1.0, 0.0
        %v881 = vsel %vm753, 1.0, 0.0
        %v882 = vsel %vm754, 1.0, 0.0
        %v883 = vsel %vm755, 1.0, 0.0
        %v884 = vsel %vm756, 1.0, 0.0
        %v885 = vsel %vm757, 1.0, 0.0
        %v886 = vsel %vm758, 1.0, 0.0
        %v887 = vsel %vm759, 1.0, 0.0
        %v888 = vsel %vm760, 1.0, 0.0
        %v889 = vsel %vm761, 1.0, 0.0
        %v890 = vsel %vm762, 1.0, 0.0
        %v891 = vsel %vm763, 1.0, 0.0
        %v892 = vsel %vm764, 1.0, 0.0
        %v893 = vsel %vm765, 1.0, 0.0
        %v894 = vsel %vm766, 1.0, 0.0
        %v895 = vsel %vm767, 1.0, 0.0
        %v896 = vsel %vm768, 1.0, 0.0
        %v897 = vsel %vm769, 1.0, 0.0
        %v898 = vsel %vm770, 1.0, 0.0
        %v899 = vsel %vm771, 1.0, 0.0
        %v900 = vsel %vm772, 1.0, 0.0
        %v901 = vsel %vm773, 1.0, 0.0
        %v902 = vsel %vm774, 1.0, 0.0
        %v903 = vsel %vm775, 1.0, 0.0
        %v904 = vsel %vm776, 1.0, 0.0
        %v905 = vsel %vm777, 1.0, 0.0
        %v906 = vsel %vm778, 1.0, 0.0
        %v907 = vsel %vm779, 1.0, 0.0
        %v908 = vsel %vm780, 1.0, 0.0
        %v909 = vsel %vm781, 1.0, 0.0
        %v910 = vsel %vm782, 1.0, 0.0
        %v911 = vsel %vm783, 1.0, 0.0
        %v912 = vsel %vm784, 1.0, 0.0
        %v913 = vsel %vm785, 1.0, 0.0
        %v914 = vsel %vm786, 1.0, 0.0
        %v915 = vsel %vm787, 1.0, 0.0
        %v916 = vsel %vm788, 1.0, 0.0
        %v917 = vsel %vm789, 1.0, 0.0
        %v918 = vsel %vm790, 1.0, 0.0
        %v919 = vsel %vm791, 1.0, 0.0
        %v920 = vsel %vm792, 1.0, 0.0
        %v921 = vsel %vm793, 1.0, 0.0
        %v922 = vsel %vm794, 1.0, 0.0
        %v923 = vsel %vm795, 1.0, 0.0
        %v924 = vsel %vm796, 1.0, 0.0
        %v925 = vsel %vm797, 1.0, 0.0
        %v926 = vsel %vm798, 1.0, 0.0
        %v927 = vsel %vm799, 1.0, 0.0
        %v928 = vsel %vm800, 1.0, 0.0
        %v929 = vsel %vm801, 1.0, 0.0
        %930 = vmatprep.subr.mxu0 %v803
        %931 = vmatpush1.msra.mxu0 %v802
        %932 = vmatprep.subr.mxu0 %v805
        %933 = vmatpush1.msra.mxu0 %v804
        %934 = vmatprep.subr.mxu0 %v807
        %935 = vmatpush1.msra.mxu0 %v806
        %936 = vmatprep.subr.mxu0 %v809
        %937 = vmatpush1.msra.mxu0 %v808
        %938 = vmatprep.subr.mxu0 %v811
        %939 = vmatpush1.msra.mxu0 %v810
        %940 = vmatprep.subr.mxu0 %v813
        %941 = vmatpush1.msra.mxu0 %v812
        %942 = vmatprep.subr.mxu0 %v815
        %943 = vmatpush1.msra.mxu0 %v814
        %944 = vmatprep.subr.mxu0 %v817
        %945 = vmatpush1.msra.mxu0 %v816
        %946 = vmatprep.subr.mxu0 %v819
        %947 = vmatpush1.msra.mxu0 %v818
        %948 = vmatprep.subr.mxu0 %v821
        %949 = vmatpush1.msra.mxu0 %v820
        %950 = vmatprep.subr.mxu0 %v823
        %951 = vmatpush1.msra.mxu0 %v822
        %952 = vmatprep.subr.mxu0 %v825
        %953 = vmatpush1.msra.mxu0 %v824
        %954 = vmatprep.subr.mxu0 %v827
        %955 = vmatpush1.msra.mxu0 %v826
        %956 = vmatprep.subr.mxu0 %v829
        %957 = vmatpush1.msra.mxu0 %v828
        %958 = vmatprep.subr.mxu0 %v831
        %959 = vmatpush1.msra.mxu0 %v830
        %960 = vmatprep.subr.mxu0 %v833
        %961 = vmatpush1.msra.mxu0 %v832
        %962 = vmatprep.subr.mxu0 %v835
        %963 = vmatpush1.msra.mxu0 %v834
        %964 = vmatprep.subr.mxu0 %v837
        %965 = vmatpush1.msra.mxu0 %v836
        %966 = vmatprep.subr.mxu0 %v839
        %967 = vmatpush1.msra.mxu0 %v838
        %968 = vmatprep.subr.mxu0 %v841
        %969 = vmatpush1.msra.mxu0 %v840
        %970 = vmatprep.subr.mxu0 %v843
        %971 = vmatpush1.msra.mxu0 %v842
        %972 = vmatprep.subr.mxu0 %v845
        %973 = vmatpush1.msra.mxu0 %v844
        %974 = vmatprep.subr.mxu0 %v847
        %975 = vmatpush1.msra.mxu0 %v846
        %976 = vmatprep.subr.mxu0 %v849
        %977 = vmatpush1.msra.mxu0 %v848
        %978 = vmatprep.subr.mxu0 %v851
        %979 = vmatpush1.msra.mxu0 %v850
        %980 = vmatprep.subr.mxu0 %v853
        %981 = vmatpush1.msra.mxu0 %v852
        %982 = vmatprep.subr.mxu0 %v855
        %983 = vmatpush1.msra.mxu0 %v854
        %984 = vmatprep.subr.mxu0 %v857
        %985 = vmatpush1.msra.mxu0 %v856
        %986 = vmatprep.subr.mxu0 %v859
        %987 = vmatpush1.msra.mxu0 %v858
        %988 = vmatprep.subr.mxu0 %v861
        %989 = vmatpush1.msra.mxu0 %v860
        %990 = vmatprep.subr.mxu0 %v863
        %991 = vmatpush1.msra.mxu0 %v862
        %992 = vmatprep.subr.mxu0 %v865
        %993 = vmatpush1.msra.mxu0 %v864
        %v994 = vand.u32 %v604, 4294901760
        %v995 = vsub.f32 %v604, %v994
        %v996 = vand.u32 %v995, 4294901760
        %v997 = vsub.f32 %v995, %v996
        %v998 = vand.u32 %v997, 4294901760
        %999 = vmatprep.mubr.f32.mxu0 %v998
        %v1000 = vand.u32 %v603, 4294901760
        %v1001 = vsub.f32 %v603, %v1000
        %v1002 = vand.u32 %v1001, 4294901760
        %v1003 = vsub.f32 %v1001, %v1002
        %v1004 = vand.u32 %v1003, 4294901760
        %1005 = vmatmul.mubr.f32.gmra.mrb[0].mxu0 %v1004
        %v1006 = vpop.f32.mrb[0].mxu0
        %v1007 = vadd.f32 0.0, %v1006
        %v1008 = vpop.f32.mrb[0].mxu0
        %v1009 = vadd.f32 0.0, %v1008
        %1010 = vdwg.mxu0
        %v1011 = vsub.f32 %v803, %v803
        %v1012 = vand.u32 %v1011, 4294901760
        %v1013 = vsub.f32 %v1011, %v1012
        %v1014 = vand.u32 %v1013, 4294901760
        %1015 = vmatprep.subr.mxu0 %v1014
        %v1016 = vsub.f32 %v802, %v802
        %v1017 = vand.u32 %v1016, 4294901760
        %v1018 = vsub.f32 %v1016, %v1017
        %v1019 = vand.u32 %v1018, 4294901760
        %1020 = vmatpush1.msra.mxu0 %v1019
        %v1021 = vsub.f32 %v805, %v805
        %v1022 = vand.u32 %v1021, 4294901760
        %v1023 = vsub.f32 %v1021, %v1022
        %v1024 = vand.u32 %v1023, 4294901760
        %1025 = vmatprep.subr.mxu0 %v1024
        %v1026 = vsub.f32 %v804, %v804
        %v1027 = vand.u32 %v1026, 4294901760
        %v1028 = vsub.f32 %v1026, %v1027
        %v1029 = vand.u32 %v1028, 4294901760
        %1030 = vmatpush1.msra.mxu0 %v1029
        %v1031 = vsub.f32 %v807, %v807
        %v1032 = vand.u32 %v1031, 4294901760
        %v1033 = vsub.f32 %v1031, %v1032
        %v1034 = vand.u32 %v1033, 4294901760
        %1035 = vmatprep.subr.mxu0 %v1034
        %v1036 = vsub.f32 %v806, %v806
        %v1037 = vand.u32 %v1036, 4294901760
        %v1038 = vsub.f32 %v1036, %v1037
        %v1039 = vand.u32 %v1038, 4294901760
        %1040 = vmatpush1.msra.mxu0 %v1039
        %v1041 = vsub.f32 %v809, %v809
        %v1042 = vand.u32 %v1041, 4294901760
        %v1043 = vsub.f32 %v1041, %v1042
        %v1044 = vand.u32 %v1043, 4294901760
        %1045 = vmatprep.subr.mxu0 %v1044
        %v1046 = vsub.f32 %v808, %v808
        %v1047 = vand.u32 %v1046, 4294901760
        %v1048 = vsub.f32 %v1046, %v1047
        %v1049 = vand.u32 %v1048, 4294901760
        %1050 = vmatpush1.msra.mxu0 %v1049
        %v1051 = vsub.f32 %v811, %v811
        %v1052 = vand.u32 %v1051, 4294901760
        %v1053 = vsub.f32 %v1051, %v1052
        %v1054 = vand.u32 %v1053, 4294901760
        %1055 = vmatprep.subr.mxu0 %v1054
        %v1056 = vsub.f32 %v810, %v810
        %v1057 = vand.u32 %v1056, 4294901760
        %v1058 = vsub.f32 %v1056, %v1057
        %v1059 = vand.u32 %v1058, 4294901760
        %1060 = vmatpush1.msra.mxu0 %v1059
        %v1061 = vsub.f32 %v813, %v813
        %v1062 = vand.u32 %v1061, 4294901760
        %v1063 = vsub.f32 %v1061, %v1062
        %v1064 = vand.u32 %v1063, 4294901760
        %1065 = vmatprep.subr.mxu0 %v1064
        %v1066 = vsub.f32 %v812, %v812
        %v1067 = vand.u32 %v1066, 4294901760
        %v1068 = vsub.f32 %v1066, %v1067
        %v1069 = vand.u32 %v1068, 4294901760
        %1070 = vmatpush1.msra.mxu0 %v1069
        %v1071 = vsub.f32 %v815, %v815
        %v1072 = vand.u32 %v1071, 4294901760
        %v1073 = vsub.f32 %v1071, %v1072
        %v1074 = vand.u32 %v1073, 4294901760
        %1075 = vmatprep.subr.mxu0 %v1074
        %v1076 = vsub.f32 %v814, %v814
        %v1077 = vand.u32 %v1076, 4294901760
        %v1078 = vsub.f32 %v1076, %v1077
        %v1079 = vand.u32 %v1078, 4294901760
        %1080 = vmatpush1.msra.mxu0 %v1079
        %v1081 = vsub.f32 %v817, %v817
        %v1082 = vand.u32 %v1081, 4294901760
        %v1083 = vsub.f32 %v1081, %v1082
        %v1084 = vand.u32 %v1083, 4294901760
        %1085 = vmatprep.subr.mxu0 %v1084
        %v1086 = vsub.f32 %v816, %v816
        %v1087 = vand.u32 %v1086, 4294901760
        %v1088 = vsub.f32 %v1086, %v1087
        %v1089 = vand.u32 %v1088, 4294901760
        %1090 = vmatpush1.msra.mxu0 %v1089
        %v1091 = vsub.f32 %v819, %v819
        %v1092 = vand.u32 %v1091, 4294901760
        %v1093 = vsub.f32 %v1091, %v1092
        %v1094 = vand.u32 %v1093, 4294901760
        %1095 = vmatprep.subr.mxu0 %v1094
        %v1096 = vsub.f32 %v818, %v818
        %v1097 = vand.u32 %v1096, 4294901760
        %v1098 = vsub.f32 %v1096, %v1097
        %v1099 = vand.u32 %v1098, 4294901760
        %1100 = vmatpush1.msra.mxu0 %v1099
        %v1101 = vsub.f32 %v821, %v821
        %v1102 = vand.u32 %v1101, 4294901760
        %v1103 = vsub.f32 %v1101, %v1102
        %v1104 = vand.u32 %v1103, 4294901760
        %1105 = vmatprep.subr.mxu0 %v1104
        %v1106 = vsub.f32 %v820, %v820
        %v1107 = vand.u32 %v1106, 4294901760
        %v1108 = vsub.f32 %v1106, %v1107
        %v1109 = vand.u32 %v1108, 4294901760
        %1110 = vmatpush1.msra.mxu0 %v1109
        %v1111 = vsub.f32 %v823, %v823
        %v1112 = vand.u32 %v1111, 4294901760
        %v1113 = vsub.f32 %v1111, %v1112
        %v1114 = vand.u32 %v1113, 4294901760
        %1115 = vmatprep.subr.mxu0 %v1114
        %v1116 = vsub.f32 %v822, %v822
        %v1117 = vand.u32 %v1116, 4294901760
        %v1118 = vsub.f32 %v1116, %v1117
        %v1119 = vand.u32 %v1118, 4294901760
        %1120 = vmatpush1.msra.mxu0 %v1119
        %v1121 = vsub.f32 %v825, %v825
        %v1122 = vand.u32 %v1121, 4294901760
        %v1123 = vsub.f32 %v1121, %v1122
        %v1124 = vand.u32 %v1123, 4294901760
        %1125 = vmatprep.subr.mxu0 %v1124
        %v1126 = vsub.f32 %v824, %v824
        %v1127 = vand.u32 %v1126, 4294901760
        %v1128 = vsub.f32 %v1126, %v1127
        %v1129 = vand.u32 %v1128, 4294901760
        %1130 = vmatpush1.msra.mxu0 %v1129
        %v1131 = vsub.f32 %v827, %v827
        %v1132 = vand.u32 %v1131, 4294901760
        %v1133 = vsub.f32 %v1131, %v1132
        %v1134 = vand.u32 %v1133, 4294901760
        %1135 = vmatprep.subr.mxu0 %v1134
        %v1136 = vsub.f32 %v826, %v826
        %v1137 = vand.u32 %v1136, 4294901760
        %v1138 = vsub.f32 %v1136, %v1137
        %v1139 = vand.u32 %v1138, 4294901760
        %1140 = vmatpush1.msra.mxu0 %v1139
        %v1141 = vsub.f32 %v829, %v829
        %v1142 = vand.u32 %v1141, 4294901760
        %v1143 = vsub.f32 %v1141, %v1142
        %v1144 = vand.u32 %v1143, 4294901760
        %1145 = vmatprep.subr.mxu0 %v1144
        %v1146 = vsub.f32 %v828, %v828
        %v1147 = vand.u32 %v1146, 4294901760
        %v1148 = vsub.f32 %v1146, %v1147
        %v1149 = vand.u32 %v1148, 4294901760
        %1150 = vmatpush1.msra.mxu0 %v1149
        %v1151 = vsub.f32 %v831, %v831
        %v1152 = vand.u32 %v1151, 4294901760
        %v1153 = vsub.f32 %v1151, %v1152
        %v1154 = vand.u32 %v1153, 4294901760
        %1155 = vmatprep.subr.mxu0 %v1154
        %v1156 = vsub.f32 %v830, %v830
        %v1157 = vand.u32 %v1156, 4294901760
        %v1158 = vsub.f32 %v1156, %v1157
        %v1159 = vand.u32 %v1158, 4294901760
        %1160 = vmatpush1.msra.mxu0 %v1159
        %v1161 = vsub.f32 %v833, %v833
        %v1162 = vand.u32 %v1161, 4294901760
        %v1163 = vsub.f32 %v1161, %v1162
        %v1164 = vand.u32 %v1163, 4294901760
        %1165 = vmatprep.subr.mxu0 %v1164
        %v1166 = vsub.f32 %v832, %v832
        %v1167 = vand.u32 %v1166, 4294901760
        %v1168 = vsub.f32 %v1166, %v1167
        %v1169 = vand.u32 %v1168, 4294901760
        %1170 = vmatpush1.msra.mxu0 %v1169
        %v1171 = vsub.f32 %v835, %v835
        %v1172 = vand.u32 %v1171, 4294901760
        %v1173 = vsub.f32 %v1171, %v1172
        %v1174 = vand.u32 %v1173, 4294901760
        %1175 = vmatprep.subr.mxu0 %v1174
        %v1176 = vsub.f32 %v834, %v834
        %v1177 = vand.u32 %v1176, 4294901760
        %v1178 = vsub.f32 %v1176, %v1177
        %v1179 = vand.u32 %v1178, 4294901760
        %1180 = vmatpush1.msra.mxu0 %v1179
        %v1181 = vsub.f32 %v837, %v837
        %v1182 = vand.u32 %v1181, 4294901760
        %v1183 = vsub.f32 %v1181, %v1182
        %v1184 = vand.u32 %v1183, 4294901760
        %1185 = vmatprep.subr.mxu0 %v1184
        %v1186 = vsub.f32 %v836, %v836
        %v1187 = vand.u32 %v1186, 4294901760
        %v1188 = vsub.f32 %v1186, %v1187
        %v1189 = vand.u32 %v1188, 4294901760
        %1190 = vmatpush1.msra.mxu0 %v1189
        %v1191 = vsub.f32 %v839, %v839
        %v1192 = vand.u32 %v1191, 4294901760
        %v1193 = vsub.f32 %v1191, %v1192
        %v1194 = vand.u32 %v1193, 4294901760
        %1195 = vmatprep.subr.mxu0 %v1194
        %v1196 = vsub.f32 %v838, %v838
        %v1197 = vand.u32 %v1196, 4294901760
        %v1198 = vsub.f32 %v1196, %v1197
        %v1199 = vand.u32 %v1198, 4294901760
        %1200 = vmatpush1.msra.mxu0 %v1199
        %v1201 = vsub.f32 %v841, %v841
        %v1202 = vand.u32 %v1201, 4294901760
        %v1203 = vsub.f32 %v1201, %v1202
        %v1204 = vand.u32 %v1203, 4294901760
        %1205 = vmatprep.subr.mxu0 %v1204
        %v1206 = vsub.f32 %v840, %v840
        %v1207 = vand.u32 %v1206, 4294901760
        %v1208 = vsub.f32 %v1206, %v1207
        %v1209 = vand.u32 %v1208, 4294901760
        %1210 = vmatpush1.msra.mxu0 %v1209
        %v1211 = vsub.f32 %v843, %v843
        %v1212 = vand.u32 %v1211, 4294901760
        %v1213 = vsub.f32 %v1211, %v1212
        %v1214 = vand.u32 %v1213, 4294901760
        %1215 = vmatprep.subr.mxu0 %v1214
        %v1216 = vsub.f32 %v842, %v842
        %v1217 = vand.u32 %v1216, 4294901760
        %v1218 = vsub.f32 %v1216, %v1217
        %v1219 = vand.u32 %v1218, 4294901760
        %1220 = vmatpush1.msra.mxu0 %v1219
        %v1221 = vsub.f32 %v845, %v845
        %v1222 = vand.u32 %v1221, 4294901760
        %v1223 = vsub.f32 %v1221, %v1222
        %v1224 = vand.u32 %v1223, 4294901760
        %1225 = vmatprep.subr.mxu0 %v1224
        %v1226 = vsub.f32 %v844, %v844
        %v1227 = vand.u32 %v1226, 4294901760
        %v1228 = vsub.f32 %v1226, %v1227
        %v1229 = vand.u32 %v1228, 4294901760
        %1230 = vmatpush1.msra.mxu0 %v1229
        %v1231 = vsub.f32 %v847, %v847
        %v1232 = vand.u32 %v1231, 4294901760
        %v1233 = vsub.f32 %v1231, %v1232
        %v1234 = vand.u32 %v1233, 4294901760
        %1235 = vmatprep.subr.mxu0 %v1234
        %v1236 = vsub.f32 %v846, %v846
        %v1237 = vand.u32 %v1236, 4294901760
        %v1238 = vsub.f32 %v1236, %v1237
        %v1239 = vand.u32 %v1238, 4294901760
        %1240 = vmatpush1.msra.mxu0 %v1239
        %v1241 = vsub.f32 %v849, %v849
        %v1242 = vand.u32 %v1241, 4294901760
        %v1243 = vsub.f32 %v1241, %v1242
        %v1244 = vand.u32 %v1243, 4294901760
        %1245 = vmatprep.subr.mxu0 %v1244
        %v1246 = vsub.f32 %v848, %v848
        %v1247 = vand.u32 %v1246, 4294901760
        %v1248 = vsub.f32 %v1246, %v1247
        %v1249 = vand.u32 %v1248, 4294901760
        %1250 = vmatpush1.msra.mxu0 %v1249
        %v1251 = vsub.f32 %v851, %v851
        %v1252 = vand.u32 %v1251, 4294901760
        %v1253 = vsub.f32 %v1251, %v1252
        %v1254 = vand.u32 %v1253, 4294901760
        %1255 = vmatprep.subr.mxu0 %v1254
        %v1256 = vsub.f32 %v850, %v850
        %v1257 = vand.u32 %v1256, 4294901760
        %v1258 = vsub.f32 %v1256, %v1257
        %v1259 = vand.u32 %v1258, 4294901760
        %1260 = vmatpush1.msra.mxu0 %v1259
        %v1261 = vsub.f32 %v853, %v853
        %v1262 = vand.u32 %v1261, 4294901760
        %v1263 = vsub.f32 %v1261, %v1262
        %v1264 = vand.u32 %v1263, 4294901760
        %1265 = vmatprep.subr.mxu0 %v1264
        %v1266 = vsub.f32 %v852, %v852
        %v1267 = vand.u32 %v1266, 4294901760
        %v1268 = vsub.f32 %v1266, %v1267
        %v1269 = vand.u32 %v1268, 4294901760
        %1270 = vmatpush1.msra.mxu0 %v1269
        %v1271 = vsub.f32 %v855, %v855
        %v1272 = vand.u32 %v1271, 4294901760
        %v1273 = vsub.f32 %v1271, %v1272
        %v1274 = vand.u32 %v1273, 4294901760
        %1275 = vmatprep.subr.mxu0 %v1274
        %v1276 = vsub.f32 %v854, %v854
        %v1277 = vand.u32 %v1276, 4294901760
        %v1278 = vsub.f32 %v1276, %v1277
        %v1279 = vand.u32 %v1278, 4294901760
        %1280 = vmatpush1.msra.mxu0 %v1279
        %v1281 = vsub.f32 %v857, %v857
        %v1282 = vand.u32 %v1281, 4294901760
        %v1283 = vsub.f32 %v1281, %v1282
        %v1284 = vand.u32 %v1283, 4294901760
        %1285 = vmatprep.subr.mxu0 %v1284
        %v1286 = vsub.f32 %v856, %v856
        %v1287 = vand.u32 %v1286, 4294901760
        %v1288 = vsub.f32 %v1286, %v1287
        %v1289 = vand.u32 %v1288, 4294901760
        %1290 = vmatpush1.msra.mxu0 %v1289
        %v1291 = vsub.f32 %v859, %v859
        %v1292 = vand.u32 %v1291, 4294901760
        %v1293 = vsub.f32 %v1291, %v1292
        %v1294 = vand.u32 %v1293, 4294901760
        %1295 = vmatprep.subr.mxu0 %v1294
        %v1296 = vsub.f32 %v858, %v858
        %v1297 = vand.u32 %v1296, 4294901760
        %v1298 = vsub.f32 %v1296, %v1297
        %v1299 = vand.u32 %v1298, 4294901760
        %1300 = vmatpush1.msra.mxu0 %v1299
        %v1301 = vsub.f32 %v861, %v861
        %v1302 = vand.u32 %v1301, 4294901760
        %v1303 = vsub.f32 %v1301, %v1302
        %v1304 = vand.u32 %v1303, 4294901760
        %1305 = vmatprep.subr.mxu0 %v1304
        %v1306 = vsub.f32 %v860, %v860
        %v1307 = vand.u32 %v1306, 4294901760
        %v1308 = vsub.f32 %v1306, %v1307
        %v1309 = vand.u32 %v1308, 4294901760
        %1310 = vmatpush1.msra.mxu0 %v1309
        %v1311 = vsub.f32 %v863, %v863
        %v1312 = vand.u32 %v1311, 4294901760
        %v1313 = vsub.f32 %v1311, %v1312
        %v1314 = vand.u32 %v1313, 4294901760
        %1315 = vmatprep.subr.mxu0 %v1314
        %v1316 = vsub.f32 %v862, %v862
        %v1317 = vand.u32 %v1316, 4294901760
        %v1318 = vsub.f32 %v1316, %v1317
        %v1319 = vand.u32 %v1318, 4294901760
        %1320 = vmatpush1.msra.mxu0 %v1319
        %v1321 = vsub.f32 %v865, %v865
        %v1322 = vand.u32 %v1321, 4294901760
        %v1323 = vsub.f32 %v1321, %v1322
        %v1324 = vand.u32 %v1323, 4294901760
        %1325 = vmatprep.subr.mxu0 %v1324
        %v1326 = vsub.f32 %v864, %v864
        %v1327 = vand.u32 %v1326, 4294901760
        %v1328 = vsub.f32 %v1326, %v1327
        %v1329 = vand.u32 %v1328, 4294901760
        %1330 = vmatpush1.msra.mxu0 %v1329
        %v1331 = vand.u32 %v604, 4294901760
        %1332 = vmatprep.mubr.f32.mxu0 %v1331
        %v1333 = vand.u32 %v603, 4294901760
        %1334 = vmatmul.mubr.f32.gmra.mrb[0].mxu0 %v1333
        %v1335 = vpop.f32.mrb[0].mxu0
        %v1336 = vadd.f32 %v1007, %v1335
        %v1337 = vpop.f32.mrb[0].mxu0
        %v1338 = vadd.f32 %v1009, %v1337
        %1339 = vdwg.mxu0
        %v1340 = vsub.f32 %v803, %v803
        %1341 = vmatprep.subr.mxu0 %v1340
        %v1342 = vsub.f32 %v802, %v802
        %1343 = vmatpush1.msra.mxu0 %v1342
        %v1344 = vsub.f32 %v805, %v805
        %1345 = vmatprep.subr.mxu0 %v1344
        %v1346 = vsub.f32 %v804, %v804
        %1347 = vmatpush1.msra.mxu0 %v1346
        %v1348 = vsub.f32 %v807, %v807
        %1349 = vmatprep.subr.mxu0 %v1348
        %v1350 = vsub.f32 %v806, %v806
        %1351 = vmatpush1.msra.mxu0 %v1350
        %v1352 = vsub.f32 %v809, %v809
        %1353 = vmatprep.subr.mxu0 %v1352
        %v1354 = vsub.f32 %v808, %v808
        %1355 = vmatpush1.msra.mxu0 %v1354
        %v1356 = vsub.f32 %v811, %v811
        %1357 = vmatprep.subr.mxu0 %v1356
        %v1358 = vsub.f32 %v810, %v810
        %1359 = vmatpush1.msra.mxu0 %v1358
        %v1360 = vsub.f32 %v813, %v813
        %1361 = vmatprep.subr.mxu0 %v1360
        %v1362 = vsub.f32 %v812, %v812
        %1363 = vmatpush1.msra.mxu0 %v1362
        %v1364 = vsub.f32 %v815, %v815
        %1365 = vmatprep.subr.mxu0 %v1364
        %v1366 = vsub.f32 %v814, %v814
        %1367 = vmatpush1.msra.mxu0 %v1366
        %v1368 = vsub.f32 %v817, %v817
        %1369 = vmatprep.subr.mxu0 %v1368
        %v1370 = vsub.f32 %v816, %v816
        %1371 = vmatpush1.msra.mxu0 %v1370
        %v1372 = vsub.f32 %v819, %v819
        %1373 = vmatprep.subr.mxu0 %v1372
        %v1374 = vsub.f32 %v818, %v818
        %1375 = vmatpush1.msra.mxu0 %v1374
        %v1376 = vsub.f32 %v821, %v821
        %1377 = vmatprep.subr.mxu0 %v1376
        %v1378 = vsub.f32 %v820, %v820
        %1379 = vmatpush1.msra.mxu0 %v1378
        %v1380 = vsub.f32 %v823, %v823
        %1381 = vmatprep.subr.mxu0 %v1380
        %v1382 = vsub.f32 %v822, %v822
        %1383 = vmatpush1.msra.mxu0 %v1382
        %v1384 = vsub.f32 %v825, %v825
        %1385 = vmatprep.subr.mxu0 %v1384
        %v1386 = vsub.f32 %v824, %v824
        %1387 = vmatpush1.msra.mxu0 %v1386
        %v1388 = vsub.f32 %v827, %v827
        %1389 = vmatprep.subr.mxu0 %v1388
        %v1390 = vsub.f32 %v826, %v826
        %1391 = vmatpush1.msra.mxu0 %v1390
        %v1392 = vsub.f32 %v829, %v829
        %1393 = vmatprep.subr.mxu0 %v1392
        %v1394 = vsub.f32 %v828, %v828
        %1395 = vmatpush1.msra.mxu0 %v1394
        %v1396 = vsub.f32 %v831, %v831
        %1397 = vmatprep.subr.mxu0 %v1396
        %v1398 = vsub.f32 %v830, %v830
        %1399 = vmatpush1.msra.mxu0 %v1398
        %v1400 = vsub.f32 %v833, %v833
        %1401 = vmatprep.subr.mxu0 %v1400
        %v1402 = vsub.f32 %v832, %v832
        %1403 = vmatpush1.msra.mxu0 %v1402
        %v1404 = vsub.f32 %v835, %v835
        %1405 = vmatprep.subr.mxu0 %v1404
        %v1406 = vsub.f32 %v834, %v834
        %1407 = vmatpush1.msra.mxu0 %v1406
        %v1408 = vsub.f32 %v837, %v837
        %1409 = vmatprep.subr.mxu0 %v1408
        %v1410 = vsub.f32 %v836, %v836
        %1411 = vmatpush1.msra.mxu0 %v1410
        %v1412 = vsub.f32 %v839, %v839
        %1413 = vmatprep.subr.mxu0 %v1412
        %v1414 = vsub.f32 %v838, %v838
        %1415 = vmatpush1.msra.mxu0 %v1414
        %v1416 = vsub.f32 %v841, %v841
        %1417 = vmatprep.subr.mxu0 %v1416
        %v1418 = vsub.f32 %v840, %v840
        %1419 = vmatpush1.msra.mxu0 %v1418
        %v1420 = vsub.f32 %v843, %v843
        %1421 = vmatprep.subr.mxu0 %v1420
        %v1422 = vsub.f32 %v842, %v842
        %1423 = vmatpush1.msra.mxu0 %v1422
        %v1424 = vsub.f32 %v845, %v845
        %1425 = vmatprep.subr.mxu0 %v1424
        %v1426 = vsub.f32 %v844, %v844
        %1427 = vmatpush1.msra.mxu0 %v1426
        %v1428 = vsub.f32 %v847, %v847
        %1429 = vmatprep.subr.mxu0 %v1428
        %v1430 = vsub.f32 %v846, %v846
        %1431 = vmatpush1.msra.mxu0 %v1430
        %v1432 = vsub.f32 %v849, %v849
        %1433 = vmatprep.subr.mxu0 %v1432
        %v1434 = vsub.f32 %v848, %v848
        %1435 = vmatpush1.msra.mxu0 %v1434
        %v1436 = vsub.f32 %v851, %v851
        %1437 = vmatprep.subr.mxu0 %v1436
        %v1438 = vsub.f32 %v850, %v850
        %1439 = vmatpush1.msra.mxu0 %v1438
        %v1440 = vsub.f32 %v853, %v853
        %1441 = vmatprep.subr.mxu0 %v1440
        %v1442 = vsub.f32 %v852, %v852
        %1443 = vmatpush1.msra.mxu0 %v1442
        %v1444 = vsub.f32 %v855, %v855
        %1445 = vmatprep.subr.mxu0 %v1444
        %v1446 = vsub.f32 %v854, %v854
        %1447 = vmatpush1.msra.mxu0 %v1446
        %v1448 = vsub.f32 %v857, %v857
        %1449 = vmatprep.subr.mxu0 %v1448
        %v1450 = vsub.f32 %v856, %v856
        %1451 = vmatpush1.msra.mxu0 %v1450
        %v1452 = vsub.f32 %v859, %v859
        %1453 = vmatprep.subr.mxu0 %v1452
        %v1454 = vsub.f32 %v858, %v858
        %1455 = vmatpush1.msra.mxu0 %v1454
        %v1456 = vsub.f32 %v861, %v861
        %1457 = vmatprep.subr.mxu0 %v1456
        %v1458 = vsub.f32 %v860, %v860
        %1459 = vmatpush1.msra.mxu0 %v1458
        %v1460 = vsub.f32 %v863, %v863
        %1461 = vmatprep.subr.mxu0 %v1460
        %v1462 = vsub.f32 %v862, %v862
        %1463 = vmatpush1.msra.mxu0 %v1462
        %v1464 = vsub.f32 %v865, %v865
        %1465 = vmatprep.subr.mxu0 %v1464
        %v1466 = vsub.f32 %v864, %v864
        %1467 = vmatpush1.msra.mxu0 %v1466
        %v1468 = vand.u32 %v604, 4294901760
        %v1469 = vsub.f32 %v604, %v1468
        %1470 = vmatprep.mubr.f32.mxu0 %v1469
        %v1471 = vand.u32 %v603, 4294901760
        %v1472 = vsub.f32 %v603, %v1471
        %1473 = vmatmul.mubr.f32.gmra.mrb[0].mxu0 %v1472
        %v1474 = vpop.f32.mrb[0].mxu0
        %v1475 = vadd.f32 %v1336, %v1474
        %v1476 = vpop.f32.mrb[0].mxu0
        %v1477 = vadd.f32 %v1338, %v1476
        %1478 = vdwg.mxu0
        %1479 = vmatprep.subr.mxu0 %v803
        %1480 = vmatpush1.msra.mxu0 %v802
        %1481 = vmatprep.subr.mxu0 %v805
        %1482 = vmatpush1.msra.mxu0 %v804
        %1483 = vmatprep.subr.mxu0 %v807
        %1484 = vmatpush1.msra.mxu0 %v806
        %1485 = vmatprep.subr.mxu0 %v809
        %1486 = vmatpush1.msra.mxu0 %v808
        %1487 = vmatprep.subr.mxu0 %v811
        %1488 = vmatpush1.msra.mxu0 %v810
        %1489 = vmatprep.subr.mxu0 %v813
        %1490 = vmatpush1.msra.mxu0 %v812
        %1491 = vmatprep.subr.mxu0 %v815
        %1492 = vmatpush1.msra.mxu0 %v814
        %1493 = vmatprep.subr.mxu0 %v817
        %1494 = vmatpush1.msra.mxu0 %v816
        %1495 = vmatprep.subr.mxu0 %v819
        %1496 = vmatpush1.msra.mxu0 %v818
        %1497 = vmatprep.subr.mxu0 %v821
        %1498 = vmatpush1.msra.mxu0 %v820
        %1499 = vmatprep.subr.mxu0 %v823
        %1500 = vmatpush1.msra.mxu0 %v822
        %1501 = vmatprep.subr.mxu0 %v825
        %1502 = vmatpush1.msra.mxu0 %v824
        %1503 = vmatprep.subr.mxu0 %v827
        %1504 = vmatpush1.msra.mxu0 %v826
        %1505 = vmatprep.subr.mxu0 %v829
        %1506 = vmatpush1.msra.mxu0 %v828
        %1507 = vmatprep.subr.mxu0 %v831
        %1508 = vmatpush1.msra.mxu0 %v830
        %1509 = vmatprep.subr.mxu0 %v833
        %1510 = vmatpush1.msra.mxu0 %v832
        %1511 = vmatprep.subr.mxu0 %v835
        %1512 = vmatpush1.msra.mxu0 %v834
        %1513 = vmatprep.subr.mxu0 %v837
        %1514 = vmatpush1.msra.mxu0 %v836
        %1515 = vmatprep.subr.mxu0 %v839
        %1516 = vmatpush1.msra.mxu0 %v838
        %1517 = vmatprep.subr.mxu0 %v841
        %1518 = vmatpush1.msra.mxu0 %v840
        %1519 = vmatprep.subr.mxu0 %v843
        %1520 = vmatpush1.msra.mxu0 %v842
        %1521 = vmatprep.subr.mxu0 %v845
        %1522 = vmatpush1.msra.mxu0 %v844
        %1523 = vmatprep.subr.mxu0 %v847
        %1524 = vmatpush1.msra.mxu0 %v846
        %1525 = vmatprep.subr.mxu0 %v849
        %1526 = vmatpush1.msra.mxu0 %v848
        %1527 = vmatprep.subr.mxu0 %v851
        %1528 = vmatpush1.msra.mxu0 %v850
        %1529 = vmatprep.subr.mxu0 %v853
        %1530 = vmatpush1.msra.mxu0 %v852
        %1531 = vmatprep.subr.mxu0 %v855
        %1532 = vmatpush1.msra.mxu0 %v854
        %1533 = vmatprep.subr.mxu0 %v857
        %1534 = vmatpush1.msra.mxu0 %v856
        %1535 = vmatprep.subr.mxu0 %v859
        %1536 = vmatpush1.msra.mxu0 %v858
        %1537 = vmatprep.subr.mxu0 %v861
        %1538 = vmatpush1.msra.mxu0 %v860
        %1539 = vmatprep.subr.mxu0 %v863
        %1540 = vmatpush1.msra.mxu0 %v862
        %1541 = vmatprep.subr.mxu0 %v865
        %1542 = vmatpush1.msra.mxu0 %v864
        %v1543 = vand.u32 %v604, 4294901760
        %v1544 = vsub.f32 %v604, %v1543
        %v1545 = vand.u32 %v1544, 4294901760
        %1546 = vmatprep.mubr.f32.mxu0 %v1545
        %v1547 = vand.u32 %v603, 4294901760
        %v1548 = vsub.f32 %v603, %v1547
        %v1549 = vand.u32 %v1548, 4294901760
        %1550 = vmatmul.mubr.f32.gmra.mrb[0].mxu0 %v1549
        %v1551 = vpop.f32.mrb[0].mxu0
        %v1552 = vadd.f32 %v1475, %v1551
        %v1553 = vpop.f32.mrb[0].mxu0
        %v1554 = vadd.f32 %v1477, %v1553
        %1555 = vdwg.mxu0
        %v1556 = vsub.f32 %v803, %v803
        %v1557 = vand.u32 %v1556, 4294901760
        %1558 = vmatprep.subr.mxu0 %v1557
        %v1559 = vsub.f32 %v802, %v802
        %v1560 = vand.u32 %v1559, 4294901760
        %1561 = vmatpush1.msra.mxu0 %v1560
        %v1562 = vsub.f32 %v805, %v805
        %v1563 = vand.u32 %v1562, 4294901760
        %1564 = vmatprep.subr.mxu0 %v1563
        %v1565 = vsub.f32 %v804, %v804
        %v1566 = vand.u32 %v1565, 4294901760
        %1567 = vmatpush1.msra.mxu0 %v1566
        %v1568 = vsub.f32 %v807, %v807
        %v1569 = vand.u32 %v1568, 4294901760
        %1570 = vmatprep.subr.mxu0 %v1569
        %v1571 = vsub.f32 %v806, %v806
        %v1572 = vand.u32 %v1571, 4294901760
        %1573 = vmatpush1.msra.mxu0 %v1572
        %v1574 = vsub.f32 %v809, %v809
        %v1575 = vand.u32 %v1574, 4294901760
        %1576 = vmatprep.subr.mxu0 %v1575
        %v1577 = vsub.f32 %v808, %v808
        %v1578 = vand.u32 %v1577, 4294901760
        %1579 = vmatpush1.msra.mxu0 %v1578
        %v1580 = vsub.f32 %v811, %v811
        %v1581 = vand.u32 %v1580, 4294901760
        %1582 = vmatprep.subr.mxu0 %v1581
        %v1583 = vsub.f32 %v810, %v810
        %v1584 = vand.u32 %v1583, 4294901760
        %1585 = vmatpush1.msra.mxu0 %v1584
        %v1586 = vsub.f32 %v813, %v813
        %v1587 = vand.u32 %v1586, 4294901760
        %1588 = vmatprep.subr.mxu0 %v1587
        %v1589 = vsub.f32 %v812, %v812
        %v1590 = vand.u32 %v1589, 4294901760
        %1591 = vmatpush1.msra.mxu0 %v1590
        %v1592 = vsub.f32 %v815, %v815
        %v1593 = vand.u32 %v1592, 4294901760
        %1594 = vmatprep.subr.mxu0 %v1593
        %v1595 = vsub.f32 %v814, %v814
        %v1596 = vand.u32 %v1595, 4294901760
        %1597 = vmatpush1.msra.mxu0 %v1596
        %v1598 = vsub.f32 %v817, %v817
        %v1599 = vand.u32 %v1598, 4294901760
        %1600 = vmatprep.subr.mxu0 %v1599
        %v1601 = vsub.f32 %v816, %v816
        %v1602 = vand.u32 %v1601, 4294901760
        %1603 = vmatpush1.msra.mxu0 %v1602
        %v1604 = vsub.f32 %v819, %v819
        %v1605 = vand.u32 %v1604, 4294901760
        %1606 = vmatprep.subr.mxu0 %v1605
        %v1607 = vsub.f32 %v818, %v818
        %v1608 = vand.u32 %v1607, 4294901760
        %1609 = vmatpush1.msra.mxu0 %v1608
        %v1610 = vsub.f32 %v821, %v821
        %v1611 = vand.u32 %v1610, 4294901760
        %1612 = vmatprep.subr.mxu0 %v1611
        %v1613 = vsub.f32 %v820, %v820
        %v1614 = vand.u32 %v1613, 4294901760
        %1615 = vmatpush1.msra.mxu0 %v1614
        %v1616 = vsub.f32 %v823, %v823
        %v1617 = vand.u32 %v1616, 4294901760
        %1618 = vmatprep.subr.mxu0 %v1617
        %v1619 = vsub.f32 %v822, %v822
        %v1620 = vand.u32 %v1619, 4294901760
        %1621 = vmatpush1.msra.mxu0 %v1620
        %v1622 = vsub.f32 %v825, %v825
        %v1623 = vand.u32 %v1622, 4294901760
        %1624 = vmatprep.subr.mxu0 %v1623
        %v1625 = vsub.f32 %v824, %v824
        %v1626 = vand.u32 %v1625, 4294901760
        %1627 = vmatpush1.msra.mxu0 %v1626
        %v1628 = vsub.f32 %v827, %v827
        %v1629 = vand.u32 %v1628, 4294901760
        %1630 = vmatprep.subr.mxu0 %v1629
        %v1631 = vsub.f32 %v826, %v826
        %v1632 = vand.u32 %v1631, 4294901760
        %1633 = vmatpush1.msra.mxu0 %v1632
        %v1634 = vsub.f32 %v829, %v829
        %v1635 = vand.u32 %v1634, 4294901760
        %1636 = vmatprep.subr.mxu0 %v1635
        %v1637 = vsub.f32 %v828, %v828
        %v1638 = vand.u32 %v1637, 4294901760
        %1639 = vmatpush1.msra.mxu0 %v1638
        %v1640 = vsub.f32 %v831, %v831
        %v1641 = vand.u32 %v1640, 4294901760
        %1642 = vmatprep.subr.mxu0 %v1641
        %v1643 = vsub.f32 %v830, %v830
        %v1644 = vand.u32 %v1643, 4294901760
        %1645 = vmatpush1.msra.mxu0 %v1644
        %v1646 = vsub.f32 %v833, %v833
        %v1647 = vand.u32 %v1646, 4294901760
        %1648 = vmatprep.subr.mxu0 %v1647
        %v1649 = vsub.f32 %v832, %v832
        %v1650 = vand.u32 %v1649, 4294901760
        %1651 = vmatpush1.msra.mxu0 %v1650
        %v1652 = vsub.f32 %v835, %v835
        %v1653 = vand.u32 %v1652, 4294901760
        %1654 = vmatprep.subr.mxu0 %v1653
        %v1655 = vsub.f32 %v834, %v834
        %v1656 = vand.u32 %v1655, 4294901760
        %1657 = vmatpush1.msra.mxu0 %v1656
        %v1658 = vsub.f32 %v837, %v837
        %v1659 = vand.u32 %v1658, 4294901760
        %1660 = vmatprep.subr.mxu0 %v1659
        %v1661 = vsub.f32 %v836, %v836
        %v1662 = vand.u32 %v1661, 4294901760
        %1663 = vmatpush1.msra.mxu0 %v1662
        %v1664 = vsub.f32 %v839, %v839
        %v1665 = vand.u32 %v1664, 4294901760
        %1666 = vmatprep.subr.mxu0 %v1665
        %v1667 = vsub.f32 %v838, %v838
        %v1668 = vand.u32 %v1667, 4294901760
        %1669 = vmatpush1.msra.mxu0 %v1668
        %v1670 = vsub.f32 %v841, %v841
        %v1671 = vand.u32 %v1670, 4294901760
        %1672 = vmatprep.subr.mxu0 %v1671
        %v1673 = vsub.f32 %v840, %v840
        %v1674 = vand.u32 %v1673, 4294901760
        %1675 = vmatpush1.msra.mxu0 %v1674
        %v1676 = vsub.f32 %v843, %v843
        %v1677 = vand.u32 %v1676, 4294901760
        %1678 = vmatprep.subr.mxu0 %v1677
        %v1679 = vsub.f32 %v842, %v842
        %v1680 = vand.u32 %v1679, 4294901760
        %1681 = vmatpush1.msra.mxu0 %v1680
        %v1682 = vsub.f32 %v845, %v845
        %v1683 = vand.u32 %v1682, 4294901760
        %1684 = vmatprep.subr.mxu0 %v1683
        %v1685 = vsub.f32 %v844, %v844
        %v1686 = vand.u32 %v1685, 4294901760
        %1687 = vmatpush1.msra.mxu0 %v1686
        %v1688 = vsub.f32 %v847, %v847
        %v1689 = vand.u32 %v1688, 4294901760
        %1690 = vmatprep.subr.mxu0 %v1689
        %v1691 = vsub.f32 %v846, %v846
        %v1692 = vand.u32 %v1691, 4294901760
        %1693 = vmatpush1.msra.mxu0 %v1692
        %v1694 = vsub.f32 %v849, %v849
        %v1695 = vand.u32 %v1694, 4294901760
        %1696 = vmatprep.subr.mxu0 %v1695
        %v1697 = vsub.f32 %v848, %v848
        %v1698 = vand.u32 %v1697, 4294901760
        %1699 = vmatpush1.msra.mxu0 %v1698
        %v1700 = vsub.f32 %v851, %v851
        %v1701 = vand.u32 %v1700, 4294901760
        %1702 = vmatprep.subr.mxu0 %v1701
        %v1703 = vsub.f32 %v850, %v850
        %v1704 = vand.u32 %v1703, 4294901760
        %1705 = vmatpush1.msra.mxu0 %v1704
        %v1706 = vsub.f32 %v853, %v853
        %v1707 = vand.u32 %v1706, 4294901760
        %1708 = vmatprep.subr.mxu0 %v1707
        %v1709 = vsub.f32 %v852, %v852
        %v1710 = vand.u32 %v1709, 4294901760
        %1711 = vmatpush1.msra.mxu0 %v1710
        %v1712 = vsub.f32 %v855, %v855
        %v1713 = vand.u32 %v1712, 4294901760
        %1714 = vmatprep.subr.mxu0 %v1713
        %v1715 = vsub.f32 %v854, %v854
        %v1716 = vand.u32 %v1715, 4294901760
        %1717 = vmatpush1.msra.mxu0 %v1716
        %v1718 = vsub.f32 %v857, %v857
        %v1719 = vand.u32 %v1718, 4294901760
        %1720 = vmatprep.subr.mxu0 %v1719
        %v1721 = vsub.f32 %v856, %v856
        %v1722 = vand.u32 %v1721, 4294901760
        %1723 = vmatpush1.msra.mxu0 %v1722
        %v1724 = vsub.f32 %v859, %v859
        %v1725 = vand.u32 %v1724, 4294901760
        %1726 = vmatprep.subr.mxu0 %v1725
        %v1727 = vsub.f32 %v858, %v858
        %v1728 = vand.u32 %v1727, 4294901760
        %1729 = vmatpush1.msra.mxu0 %v1728
        %v1730 = vsub.f32 %v861, %v861
        %v1731 = vand.u32 %v1730, 4294901760
        %1732 = vmatprep.subr.mxu0 %v1731
        %v1733 = vsub.f32 %v860, %v860
        %v1734 = vand.u32 %v1733, 4294901760
        %1735 = vmatpush1.msra.mxu0 %v1734
        %v1736 = vsub.f32 %v863, %v863
        %v1737 = vand.u32 %v1736, 4294901760
        %1738 = vmatprep.subr.mxu0 %v1737
        %v1739 = vsub.f32 %v862, %v862
        %v1740 = vand.u32 %v1739, 4294901760
        %1741 = vmatpush1.msra.mxu0 %v1740
        %v1742 = vsub.f32 %v865, %v865
        %v1743 = vand.u32 %v1742, 4294901760
        %1744 = vmatprep.subr.mxu0 %v1743
        %v1745 = vsub.f32 %v864, %v864
        %v1746 = vand.u32 %v1745, 4294901760
        %1747 = vmatpush1.msra.mxu0 %v1746
        %v1748 = vand.u32 %v604, 4294901760
        %1749 = vmatprep.mubr.f32.mxu0 %v1748
        %v1750 = vand.u32 %v603, 4294901760
        %1751 = vmatmul.mubr.f32.gmra.mrb[0].mxu0 %v1750
        %v1752 = vpop.f32.mrb[0].mxu0
        %v1753 = vadd.f32 %v1552, %v1752
        %v1754 = vpop.f32.mrb[0].mxu0
        %v1755 = vadd.f32 %v1554, %v1754
        %1756 = vdwg.mxu0
        %1757 = vmatprep.subr.mxu0 %v803
        %1758 = vmatpush1.msra.mxu0 %v802
        %1759 = vmatprep.subr.mxu0 %v805
        %1760 = vmatpush1.msra.mxu0 %v804
        %1761 = vmatprep.subr.mxu0 %v807
        %1762 = vmatpush1.msra.mxu0 %v806
        %1763 = vmatprep.subr.mxu0 %v809
        %1764 = vmatpush1.msra.mxu0 %v808
        %1765 = vmatprep.subr.mxu0 %v811
        %1766 = vmatpush1.msra.mxu0 %v810
        %1767 = vmatprep.subr.mxu0 %v813
        %1768 = vmatpush1.msra.mxu0 %v812
        %1769 = vmatprep.subr.mxu0 %v815
        %1770 = vmatpush1.msra.mxu0 %v814
        %1771 = vmatprep.subr.mxu0 %v817
        %1772 = vmatpush1.msra.mxu0 %v816
        %1773 = vmatprep.subr.mxu0 %v819
        %1774 = vmatpush1.msra.mxu0 %v818
        %1775 = vmatprep.subr.mxu0 %v821
        %1776 = vmatpush1.msra.mxu0 %v820
        %1777 = vmatprep.subr.mxu0 %v823
        %1778 = vmatpush1.msra.mxu0 %v822
        %1779 = vmatprep.subr.mxu0 %v825
        %1780 = vmatpush1.msra.mxu0 %v824
        %1781 = vmatprep.subr.mxu0 %v827
        %1782 = vmatpush1.msra.mxu0 %v826
        %1783 = vmatprep.subr.mxu0 %v829
        %1784 = vmatpush1.msra.mxu0 %v828
        %1785 = vmatprep.subr.mxu0 %v831
        %1786 = vmatpush1.msra.mxu0 %v830
        %1787 = vmatprep.subr.mxu0 %v833
        %1788 = vmatpush1.msra.mxu0 %v832
        %1789 = vmatprep.subr.mxu0 %v835
        %1790 = vmatpush1.msra.mxu0 %v834
        %1791 = vmatprep.subr.mxu0 %v837
        %1792 = vmatpush1.msra.mxu0 %v836
        %1793 = vmatprep.subr.mxu0 %v839
        %1794 = vmatpush1.msra.mxu0 %v838
        %1795 = vmatprep.subr.mxu0 %v841
        %1796 = vmatpush1.msra.mxu0 %v840
        %1797 = vmatprep.subr.mxu0 %v843
        %1798 = vmatpush1.msra.mxu0 %v842
        %1799 = vmatprep.subr.mxu0 %v845
        %1800 = vmatpush1.msra.mxu0 %v844
        %1801 = vmatprep.subr.mxu0 %v847
        %1802 = vmatpush1.msra.mxu0 %v846
        %1803 = vmatprep.subr.mxu0 %v849
        %1804 = vmatpush1.msra.mxu0 %v848
        %1805 = vmatprep.subr.mxu0 %v851
        %1806 = vmatpush1.msra.mxu0 %v850
        %1807 = vmatprep.subr.mxu0 %v853
        %1808 = vmatpush1.msra.mxu0 %v852
        %1809 = vmatprep.subr.mxu0 %v855
        %1810 = vmatpush1.msra.mxu0 %v854
        %1811 = vmatprep.subr.mxu0 %v857
        %1812 = vmatpush1.msra.mxu0 %v856
        %1813 = vmatprep.subr.mxu0 %v859
        %1814 = vmatpush1.msra.mxu0 %v858
        %1815 = vmatprep.subr.mxu0 %v861
        %1816 = vmatpush1.msra.mxu0 %v860
        %1817 = vmatprep.subr.mxu0 %v863
        %1818 = vmatpush1.msra.mxu0 %v862
        %1819 = vmatprep.subr.mxu0 %v865
        %1820 = vmatpush1.msra.mxu0 %v864
        %v1821 = vand.u32 %v604, 4294901760
        %1822 = vmatprep.mubr.f32.mxu0 %v1821
        %v1823 = vand.u32 %v603, 4294901760
        %1824 = vmatmul.mubr.f32.gmra.mrb[0].mxu0 %v1823
        %v1825 = vpop.f32.mrb[0].mxu0
        %v1826 = vadd.f32 %v1753, %v1825
        %v1827 = vpop.f32.mrb[0].mxu0
        %v1828 = vadd.f32 %v1755, %v1827
        %1829 = vdwg.mxu0
        %1830 = vmatprep.subr.mxu0 %v867
        %1831 = vmatpush1.msra.mxu0 %v866
        %1832 = vmatprep.subr.mxu0 %v869
        %1833 = vmatpush1.msra.mxu0 %v868
        %1834 = vmatprep.subr.mxu0 %v871
        %1835 = vmatpush1.msra.mxu0 %v870
        %1836 = vmatprep.subr.mxu0 %v873
        %1837 = vmatpush1.msra.mxu0 %v872
        %1838 = vmatprep.subr.mxu0 %v875
        %1839 = vmatpush1.msra.mxu0 %v874
        %1840 = vmatprep.subr.mxu0 %v877
        %1841 = vmatpush1.msra.mxu0 %v876
        %1842 = vmatprep.subr.mxu0 %v879
        %1843 = vmatpush1.msra.mxu0 %v878
        %1844 = vmatprep.subr.mxu0 %v881
        %1845 = vmatpush1.msra.mxu0 %v880
        %1846 = vmatprep.subr.mxu0 %v883
        %1847 = vmatpush1.msra.mxu0 %v882
        %1848 = vmatprep.subr.mxu0 %v885
        %1849 = vmatpush1.msra.mxu0 %v884
        %1850 = vmatprep.subr.mxu0 %v887
        %1851 = vmatpush1.msra.mxu0 %v886
        %1852 = vmatprep.subr.mxu0 %v889
        %1853 = vmatpush1.msra.mxu0 %v888
        %1854 = vmatprep.subr.mxu0 %v891
        %1855 = vmatpush1.msra.mxu0 %v890
        %1856 = vmatprep.subr.mxu0 %v893
        %1857 = vmatpush1.msra.mxu0 %v892
        %1858 = vmatprep.subr.mxu0 %v895
        %1859 = vmatpush1.msra.mxu0 %v894
        %1860 = vmatprep.subr.mxu0 %v897
        %1861 = vmatpush1.msra.mxu0 %v896
        %1862 = vmatprep.subr.mxu0 %v899
        %1863 = vmatpush1.msra.mxu0 %v898
        %1864 = vmatprep.subr.mxu0 %v901
        %1865 = vmatpush1.msra.mxu0 %v900
        %1866 = vmatprep.subr.mxu0 %v903
        %1867 = vmatpush1.msra.mxu0 %v902
        %1868 = vmatprep.subr.mxu0 %v905
        %1869 = vmatpush1.msra.mxu0 %v904
        %1870 = vmatprep.subr.mxu0 %v907
        %1871 = vmatpush1.msra.mxu0 %v906
        %1872 = vmatprep.subr.mxu0 %v909
        %1873 = vmatpush1.msra.mxu0 %v908
        %1874 = vmatprep.subr.mxu0 %v911
        %1875 = vmatpush1.msra.mxu0 %v910
        %1876 = vmatprep.subr.mxu0 %v913
        %1877 = vmatpush1.msra.mxu0 %v912
        %1878 = vmatprep.subr.mxu0 %v915
        %1879 = vmatpush1.msra.mxu0 %v914
        %1880 = vmatprep.subr.mxu0 %v917
        %1881 = vmatpush1.msra.mxu0 %v916
        %1882 = vmatprep.subr.mxu0 %v919
        %1883 = vmatpush1.msra.mxu0 %v918
        %1884 = vmatprep.subr.mxu0 %v921
        %1885 = vmatpush1.msra.mxu0 %v920
        %1886 = vmatprep.subr.mxu0 %v923
        %1887 = vmatpush1.msra.mxu0 %v922
        %1888 = vmatprep.subr.mxu0 %v925
        %1889 = vmatpush1.msra.mxu0 %v924
        %1890 = vmatprep.subr.mxu0 %v927
        %1891 = vmatpush1.msra.mxu0 %v926
        %1892 = vmatprep.subr.mxu0 %v929
        %1893 = vmatpush1.msra.mxu0 %v928
        %v1894 = vand.u32 %v606, 4294901760
        %v1895 = vsub.f32 %v606, %v1894
        %v1896 = vand.u32 %v1895, 4294901760
        %v1897 = vsub.f32 %v1895, %v1896
        %v1898 = vand.u32 %v1897, 4294901760
        %1899 = vmatprep.mubr.f32.mxu0 %v1898
        %v1900 = vand.u32 %v605, 4294901760
        %v1901 = vsub.f32 %v605, %v1900
        %v1902 = vand.u32 %v1901, 4294901760
        %v1903 = vsub.f32 %v1901, %v1902
        %v1904 = vand.u32 %v1903, 4294901760
        %1905 = vmatmul.mubr.f32.gmra.mrb[0].mxu0 %v1904
        %v1906 = vpop.f32.mrb[0].mxu0
        %v1907 = vadd.f32 %v1826, %v1906
        %v1908 = vpop.f32.mrb[0].mxu0
        %v1909 = vadd.f32 %v1828, %v1908
        %1910 = vdwg.mxu0
        %v1911 = vsub.f32 %v867, %v867
        %v1912 = vand.u32 %v1911, 4294901760
        %v1913 = vsub.f32 %v1911, %v1912
        %v1914 = vand.u32 %v1913, 4294901760
        %1915 = vmatprep.subr.mxu0 %v1914
        %v1916 = vsub.f32 %v866, %v866
        %v1917 = vand.u32 %v1916, 4294901760
        %v1918 = vsub.f32 %v1916, %v1917
        %v1919 = vand.u32 %v1918, 4294901760
        %1920 = vmatpush1.msra.mxu0 %v1919
        %v1921 = vsub.f32 %v869, %v869
        %v1922 = vand.u32 %v1921, 4294901760
        %v1923 = vsub.f32 %v1921, %v1922
        %v1924 = vand.u32 %v1923, 4294901760
        %1925 = vmatprep.subr.mxu0 %v1924
        %v1926 = vsub.f32 %v868, %v868
        %v1927 = vand.u32 %v1926, 4294901760
        %v1928 = vsub.f32 %v1926, %v1927
        %v1929 = vand.u32 %v1928, 4294901760
        %1930 = vmatpush1.msra.mxu0 %v1929
        %v1931 = vsub.f32 %v871, %v871
        %v1932 = vand.u32 %v1931, 4294901760
        %v1933 = vsub.f32 %v1931, %v1932
        %v1934 = vand.u32 %v1933, 4294901760
        %1935 = vmatprep.subr.mxu0 %v1934
        %v1936 = vsub.f32 %v870, %v870
        %v1937 = vand.u32 %v1936, 4294901760
        %v1938 = vsub.f32 %v1936, %v1937
        %v1939 = vand.u32 %v1938, 4294901760
        %1940 = vmatpush1.msra.mxu0 %v1939
        %v1941 = vsub.f32 %v873, %v873
        %v1942 = vand.u32 %v1941, 4294901760
        %v1943 = vsub.f32 %v1941, %v1942
        %v1944 = vand.u32 %v1943, 4294901760
        %1945 = vmatprep.subr.mxu0 %v1944
        %v1946 = vsub.f32 %v872, %v872
        %v1947 = vand.u32 %v1946, 4294901760
        %v1948 = vsub.f32 %v1946, %v1947
        %v1949 = vand.u32 %v1948, 4294901760
        %1950 = vmatpush1.msra.mxu0 %v1949
        %v1951 = vsub.f32 %v875, %v875
        %v1952 = vand.u32 %v1951, 4294901760
        %v1953 = vsub.f32 %v1951, %v1952
        %v1954 = vand.u32 %v1953, 4294901760
        %1955 = vmatprep.subr.mxu0 %v1954
        %v1956 = vsub.f32 %v874, %v874
        %v1957 = vand.u32 %v1956, 4294901760
        %v1958 = vsub.f32 %v1956, %v1957
        %v1959 = vand.u32 %v1958, 4294901760
        %1960 = vmatpush1.msra.mxu0 %v1959
        %v1961 = vsub.f32 %v877, %v877
        %v1962 = vand.u32 %v1961, 4294901760
        %v1963 = vsub.f32 %v1961, %v1962
        %v1964 = vand.u32 %v1963, 4294901760
        %1965 = vmatprep.subr.mxu0 %v1964
        %v1966 = vsub.f32 %v876, %v876
        %v1967 = vand.u32 %v1966, 4294901760
        %v1968 = vsub.f32 %v1966, %v1967
        %v1969 = vand.u32 %v1968, 4294901760
        %1970 = vmatpush1.msra.mxu0 %v1969
        %v1971 = vsub.f32 %v879, %v879
        %v1972 = vand.u32 %v1971, 4294901760
        %v1973 = vsub.f32 %v1971, %v1972
        %v1974 = vand.u32 %v1973, 4294901760
        %1975 = vmatprep.subr.mxu0 %v1974
        %v1976 = vsub.f32 %v878, %v878
        %v1977 = vand.u32 %v1976, 4294901760
        %v1978 = vsub.f32 %v1976, %v1977
        %v1979 = vand.u32 %v1978, 4294901760
        %1980 = vmatpush1.msra.mxu0 %v1979
        %v1981 = vsub.f32 %v881, %v881
        %v1982 = vand.u32 %v1981, 4294901760
        %v1983 = vsub.f32 %v1981, %v1982
        %v1984 = vand.u32 %v1983, 4294901760
        %1985 = vmatprep.subr.mxu0 %v1984
        %v1986 = vsub.f32 %v880, %v880
        %v1987 = vand.u32 %v1986, 4294901760
        %v1988 = vsub.f32 %v1986, %v1987
        %v1989 = vand.u32 %v1988, 4294901760
        %1990 = vmatpush1.msra.mxu0 %v1989
        %v1991 = vsub.f32 %v883, %v883
        %v1992 = vand.u32 %v1991, 4294901760
        %v1993 = vsub.f32 %v1991, %v1992
        %v1994 = vand.u32 %v1993, 4294901760
        %1995 = vmatprep.subr.mxu0 %v1994
        %v1996 = vsub.f32 %v882, %v882
        %v1997 = vand.u32 %v1996, 4294901760
        %v1998 = vsub.f32 %v1996, %v1997
        %v1999 = vand.u32 %v1998, 4294901760
        %2000 = vmatpush1.msra.mxu0 %v1999
        %v2001 = vsub.f32 %v885, %v885
        %v2002 = vand.u32 %v2001, 4294901760
        %v2003 = vsub.f32 %v2001, %v2002
        %v2004 = vand.u32 %v2003, 4294901760
        %2005 = vmatprep.subr.mxu0 %v2004
        %v2006 = vsub.f32 %v884, %v884
        %v2007 = vand.u32 %v2006, 4294901760
        %v2008 = vsub.f32 %v2006, %v2007
        %v2009 = vand.u32 %v2008, 4294901760
        %2010 = vmatpush1.msra.mxu0 %v2009
        %v2011 = vsub.f32 %v887, %v887
        %v2012 = vand.u32 %v2011, 4294901760
        %v2013 = vsub.f32 %v2011, %v2012
        %v2014 = vand.u32 %v2013, 4294901760
        %2015 = vmatprep.subr.mxu0 %v2014
        %v2016 = vsub.f32 %v886, %v886
        %v2017 = vand.u32 %v2016, 4294901760
        %v2018 = vsub.f32 %v2016, %v2017
        %v2019 = vand.u32 %v2018, 4294901760
        %2020 = vmatpush1.msra.mxu0 %v2019
        %v2021 = vsub.f32 %v889, %v889
        %v2022 = vand.u32 %v2021, 4294901760
        %v2023 = vsub.f32 %v2021, %v2022
        %v2024 = vand.u32 %v2023, 4294901760
        %2025 = vmatprep.subr.mxu0 %v2024
        %v2026 = vsub.f32 %v888, %v888
        %v2027 = vand.u32 %v2026, 4294901760
        %v2028 = vsub.f32 %v2026, %v2027
        %v2029 = vand.u32 %v2028, 4294901760
        %2030 = vmatpush1.msra.mxu0 %v2029
        %v2031 = vsub.f32 %v891, %v891
        %v2032 = vand.u32 %v2031, 4294901760
        %v2033 = vsub.f32 %v2031, %v2032
        %v2034 = vand.u32 %v2033, 4294901760
        %2035 = vmatprep.subr.mxu0 %v2034
        %v2036 = vsub.f32 %v890, %v890
        %v2037 = vand.u32 %v2036, 4294901760
        %v2038 = vsub.f32 %v2036, %v2037
        %v2039 = vand.u32 %v2038, 4294901760
        %2040 = vmatpush1.msra.mxu0 %v2039
        %v2041 = vsub.f32 %v893, %v893
        %v2042 = vand.u32 %v2041, 4294901760
        %v2043 = vsub.f32 %v2041, %v2042
        %v2044 = vand.u32 %v2043, 4294901760
        %2045 = vmatprep.subr.mxu0 %v2044
        %v2046 = vsub.f32 %v892, %v892
        %v2047 = vand.u32 %v2046, 4294901760
        %v2048 = vsub.f32 %v2046, %v2047
        %v2049 = vand.u32 %v2048, 4294901760
        %2050 = vmatpush1.msra.mxu0 %v2049
        %v2051 = vsub.f32 %v895, %v895
        %v2052 = vand.u32 %v2051, 4294901760
        %v2053 = vsub.f32 %v2051, %v2052
        %v2054 = vand.u32 %v2053, 4294901760
        %2055 = vmatprep.subr.mxu0 %v2054
        %v2056 = vsub.f32 %v894, %v894
        %v2057 = vand.u32 %v2056, 4294901760
        %v2058 = vsub.f32 %v2056, %v2057
        %v2059 = vand.u32 %v2058, 4294901760
        %2060 = vmatpush1.msra.mxu0 %v2059
        %v2061 = vsub.f32 %v897, %v897
        %v2062 = vand.u32 %v2061, 4294901760
        %v2063 = vsub.f32 %v2061, %v2062
        %v2064 = vand.u32 %v2063, 4294901760
        %2065 = vmatprep.subr.mxu0 %v2064
        %v2066 = vsub.f32 %v896, %v896
        %v2067 = vand.u32 %v2066, 4294901760
        %v2068 = vsub.f32 %v2066, %v2067
        %v2069 = vand.u32 %v2068, 4294901760
        %2070 = vmatpush1.msra.mxu0 %v2069
        %v2071 = vsub.f32 %v899, %v899
        %v2072 = vand.u32 %v2071, 4294901760
        %v2073 = vsub.f32 %v2071, %v2072
        %v2074 = vand.u32 %v2073, 4294901760
        %2075 = vmatprep.subr.mxu0 %v2074
        %v2076 = vsub.f32 %v898, %v898
        %v2077 = vand.u32 %v2076, 4294901760
        %v2078 = vsub.f32 %v2076, %v2077
        %v2079 = vand.u32 %v2078, 4294901760
        %2080 = vmatpush1.msra.mxu0 %v2079
        %v2081 = vsub.f32 %v901, %v901
        %v2082 = vand.u32 %v2081, 4294901760
        %v2083 = vsub.f32 %v2081, %v2082
        %v2084 = vand.u32 %v2083, 4294901760
        %2085 = vmatprep.subr.mxu0 %v2084
        %v2086 = vsub.f32 %v900, %v900
        %v2087 = vand.u32 %v2086, 4294901760
        %v2088 = vsub.f32 %v2086, %v2087
        %v2089 = vand.u32 %v2088, 4294901760
        %2090 = vmatpush1.msra.mxu0 %v2089
        %v2091 = vsub.f32 %v903, %v903
        %v2092 = vand.u32 %v2091, 4294901760
        %v2093 = vsub.f32 %v2091, %v2092
        %v2094 = vand.u32 %v2093, 4294901760
        %2095 = vmatprep.subr.mxu0 %v2094
        %v2096 = vsub.f32 %v902, %v902
        %v2097 = vand.u32 %v2096, 4294901760
        %v2098 = vsub.f32 %v2096, %v2097
        %v2099 = vand.u32 %v2098, 4294901760
        %2100 = vmatpush1.msra.mxu0 %v2099
        %v2101 = vsub.f32 %v905, %v905
        %v2102 = vand.u32 %v2101, 4294901760
        %v2103 = vsub.f32 %v2101, %v2102
        %v2104 = vand.u32 %v2103, 4294901760
        %2105 = vmatprep.subr.mxu0 %v2104
        %v2106 = vsub.f32 %v904, %v904
        %v2107 = vand.u32 %v2106, 4294901760
        %v2108 = vsub.f32 %v2106, %v2107
        %v2109 = vand.u32 %v2108, 4294901760
        %2110 = vmatpush1.msra.mxu0 %v2109
        %v2111 = vsub.f32 %v907, %v907
        %v2112 = vand.u32 %v2111, 4294901760
        %v2113 = vsub.f32 %v2111, %v2112
        %v2114 = vand.u32 %v2113, 4294901760
        %2115 = vmatprep.subr.mxu0 %v2114
        %v2116 = vsub.f32 %v906, %v906
        %v2117 = vand.u32 %v2116, 4294901760
        %v2118 = vsub.f32 %v2116, %v2117
        %v2119 = vand.u32 %v2118, 4294901760
        %2120 = vmatpush1.msra.mxu0 %v2119
        %v2121 = vsub.f32 %v909, %v909
        %v2122 = vand.u32 %v2121, 4294901760
        %v2123 = vsub.f32 %v2121, %v2122
        %v2124 = vand.u32 %v2123, 4294901760
        %2125 = vmatprep.subr.mxu0 %v2124
        %v2126 = vsub.f32 %v908, %v908
        %v2127 = vand.u32 %v2126, 4294901760
        %v2128 = vsub.f32 %v2126, %v2127
        %v2129 = vand.u32 %v2128, 4294901760
        %2130 = vmatpush1.msra.mxu0 %v2129
        %v2131 = vsub.f32 %v911, %v911
        %v2132 = vand.u32 %v2131, 4294901760
        %v2133 = vsub.f32 %v2131, %v2132
        %v2134 = vand.u32 %v2133, 4294901760
        %2135 = vmatprep.subr.mxu0 %v2134
        %v2136 = vsub.f32 %v910, %v910
        %v2137 = vand.u32 %v2136, 4294901760
        %v2138 = vsub.f32 %v2136, %v2137
        %v2139 = vand.u32 %v2138, 4294901760
        %2140 = vmatpush1.msra.mxu0 %v2139
        %v2141 = vsub.f32 %v913, %v913
        %v2142 = vand.u32 %v2141, 4294901760
        %v2143 = vsub.f32 %v2141, %v2142
        %v2144 = vand.u32 %v2143, 4294901760
        %2145 = vmatprep.subr.mxu0 %v2144
        %v2146 = vsub.f32 %v912, %v912
        %v2147 = vand.u32 %v2146, 4294901760
        %v2148 = vsub.f32 %v2146, %v2147
        %v2149 = vand.u32 %v2148, 4294901760
        %2150 = vmatpush1.msra.mxu0 %v2149
        %v2151 = vsub.f32 %v915, %v915
        %v2152 = vand.u32 %v2151, 4294901760
        %v2153 = vsub.f32 %v2151, %v2152
        %v2154 = vand.u32 %v2153, 4294901760
        %2155 = vmatprep.subr.mxu0 %v2154
        %v2156 = vsub.f32 %v914, %v914
        %v2157 = vand.u32 %v2156, 4294901760
        %v2158 = vsub.f32 %v2156, %v2157
        %v2159 = vand.u32 %v2158, 4294901760
        %2160 = vmatpush1.msra.mxu0 %v2159
        %v2161 = vsub.f32 %v917, %v917
        %v2162 = vand.u32 %v2161, 4294901760
        %v2163 = vsub.f32 %v2161, %v2162
        %v2164 = vand.u32 %v2163, 4294901760
        %2165 = vmatprep.subr.mxu0 %v2164
        %v2166 = vsub.f32 %v916, %v916
        %v2167 = vand.u32 %v2166, 4294901760
        %v2168 = vsub.f32 %v2166, %v2167
        %v2169 = vand.u32 %v2168, 4294901760
        %2170 = vmatpush1.msra.mxu0 %v2169
        %v2171 = vsub.f32 %v919, %v919
        %v2172 = vand.u32 %v2171, 4294901760
        %v2173 = vsub.f32 %v2171, %v2172
        %v2174 = vand.u32 %v2173, 4294901760
        %2175 = vmatprep.subr.mxu0 %v2174
        %v2176 = vsub.f32 %v918, %v918
        %v2177 = vand.u32 %v2176, 4294901760
        %v2178 = vsub.f32 %v2176, %v2177
        %v2179 = vand.u32 %v2178, 4294901760
        %2180 = vmatpush1.msra.mxu0 %v2179
        %v2181 = vsub.f32 %v921, %v921
        %v2182 = vand.u32 %v2181, 4294901760
        %v2183 = vsub.f32 %v2181, %v2182
        %v2184 = vand.u32 %v2183, 4294901760
        %2185 = vmatprep.subr.mxu0 %v2184
        %v2186 = vsub.f32 %v920, %v920
        %v2187 = vand.u32 %v2186, 4294901760
        %v2188 = vsub.f32 %v2186, %v2187
        %v2189 = vand.u32 %v2188, 4294901760
        %2190 = vmatpush1.msra.mxu0 %v2189
        %v2191 = vsub.f32 %v923, %v923
        %v2192 = vand.u32 %v2191, 4294901760
        %v2193 = vsub.f32 %v2191, %v2192
        %v2194 = vand.u32 %v2193, 4294901760
        %2195 = vmatprep.subr.mxu0 %v2194
        %v2196 = vsub.f32 %v922, %v922
        %v2197 = vand.u32 %v2196, 4294901760
        %v2198 = vsub.f32 %v2196, %v2197
        %v2199 = vand.u32 %v2198, 4294901760
        %2200 = vmatpush1.msra.mxu0 %v2199
        %v2201 = vsub.f32 %v925, %v925
        %v2202 = vand.u32 %v2201, 4294901760
        %v2203 = vsub.f32 %v2201, %v2202
        %v2204 = vand.u32 %v2203, 4294901760
        %2205 = vmatprep.subr.mxu0 %v2204
        %v2206 = vsub.f32 %v924, %v924
        %v2207 = vand.u32 %v2206, 4294901760
        %v2208 = vsub.f32 %v2206, %v2207
        %v2209 = vand.u32 %v2208, 4294901760
        %2210 = vmatpush1.msra.mxu0 %v2209
        %v2211 = vsub.f32 %v927, %v927
        %v2212 = vand.u32 %v2211, 4294901760
        %v2213 = vsub.f32 %v2211, %v2212
        %v2214 = vand.u32 %v2213, 4294901760
        %2215 = vmatprep.subr.mxu0 %v2214
        %v2216 = vsub.f32 %v926, %v926
        %v2217 = vand.u32 %v2216, 4294901760
        %v2218 = vsub.f32 %v2216, %v2217
        %v2219 = vand.u32 %v2218, 4294901760
        %2220 = vmatpush1.msra.mxu0 %v2219
        %v2221 = vsub.f32 %v929, %v929
        %v2222 = vand.u32 %v2221, 4294901760
        %v2223 = vsub.f32 %v2221, %v2222
        %v2224 = vand.u32 %v2223, 4294901760
        %2225 = vmatprep.subr.mxu0 %v2224
        %v2226 = vsub.f32 %v928, %v928
        %v2227 = vand.u32 %v2226, 4294901760
        %v2228 = vsub.f32 %v2226, %v2227
        %v2229 = vand.u32 %v2228, 4294901760
        %2230 = vmatpush1.msra.mxu0 %v2229
        %v2231 = vand.u32 %v606, 4294901760
        %2232 = vmatprep.mubr.f32.mxu0 %v2231
        %v2233 = vand.u32 %v605, 4294901760
        %2234 = vmatmul.mubr.f32.gmra.mrb[0].mxu0 %v2233
        %v2235 = vpop.f32.mrb[0].mxu0
        %v2236 = vadd.f32 %v1907, %v2235
        %v2237 = vpop.f32.mrb[0].mxu0
        %v2238 = vadd.f32 %v1909, %v2237
        %2239 = vdwg.mxu0
        %v2240 = vsub.f32 %v867, %v867
        %2241 = vmatprep.subr.mxu0 %v2240
        %v2242 = vsub.f32 %v866, %v866
        %2243 = vmatpush1.msra.mxu0 %v2242
        %v2244 = vsub.f32 %v869, %v869
        %2245 = vmatprep.subr.mxu0 %v2244
        %v2246 = vsub.f32 %v868, %v868
        %2247 = vmatpush1.msra.mxu0 %v2246
        %v2248 = vsub.f32 %v871, %v871
        %2249 = vmatprep.subr.mxu0 %v2248
        %v2250 = vsub.f32 %v870, %v870
        %2251 = vmatpush1.msra.mxu0 %v2250
        %v2252 = vsub.f32 %v873, %v873
        %2253 = vmatprep.subr.mxu0 %v2252
        %v2254 = vsub.f32 %v872, %v872
        %2255 = vmatpush1.msra.mxu0 %v2254
        %v2256 = vsub.f32 %v875, %v875
        %2257 = vmatprep.subr.mxu0 %v2256
        %v2258 = vsub.f32 %v874, %v874
        %2259 = vmatpush1.msra.mxu0 %v2258
        %v2260 = vsub.f32 %v877, %v877
        %2261 = vmatprep.subr.mxu0 %v2260
        %v2262 = vsub.f32 %v876, %v876
        %2263 = vmatpush1.msra.mxu0 %v2262
        %v2264 = vsub.f32 %v879, %v879
        %2265 = vmatprep.subr.mxu0 %v2264
        %v2266 = vsub.f32 %v878, %v878
        %2267 = vmatpush1.msra.mxu0 %v2266
        %v2268 = vsub.f32 %v881, %v881
        %2269 = vmatprep.subr.mxu0 %v2268
        %v2270 = vsub.f32 %v880, %v880
        %2271 = vmatpush1.msra.mxu0 %v2270
        %v2272 = vsub.f32 %v883, %v883
        %2273 = vmatprep.subr.mxu0 %v2272
        %v2274 = vsub.f32 %v882, %v882
        %2275 = vmatpush1.msra.mxu0 %v2274
        %v2276 = vsub.f32 %v885, %v885
        %2277 = vmatprep.subr.mxu0 %v2276
        %v2278 = vsub.f32 %v884, %v884
        %2279 = vmatpush1.msra.mxu0 %v2278
        %v2280 = vsub.f32 %v887, %v887
        %2281 = vmatprep.subr.mxu0 %v2280
        %v2282 = vsub.f32 %v886, %v886
        %2283 = vmatpush1.msra.mxu0 %v2282
        %v2284 = vsub.f32 %v889, %v889
        %2285 = vmatprep.subr.mxu0 %v2284
        %v2286 = vsub.f32 %v888, %v888
        %2287 = vmatpush1.msra.mxu0 %v2286
        %v2288 = vsub.f32 %v891, %v891
        %2289 = vmatprep.subr.mxu0 %v2288
        %v2290 = vsub.f32 %v890, %v890
        %2291 = vmatpush1.msra.mxu0 %v2290
        %v2292 = vsub.f32 %v893, %v893
        %2293 = vmatprep.subr.mxu0 %v2292
        %v2294 = vsub.f32 %v892, %v892
        %2295 = vmatpush1.msra.mxu0 %v2294
        %v2296 = vsub.f32 %v895, %v895
        %2297 = vmatprep.subr.mxu0 %v2296
        %v2298 = vsub.f32 %v894, %v894
        %2299 = vmatpush1.msra.mxu0 %v2298
        %v2300 = vsub.f32 %v897, %v897
        %2301 = vmatprep.subr.mxu0 %v2300
        %v2302 = vsub.f32 %v896, %v896
        %2303 = vmatpush1.msra.mxu0 %v2302
        %v2304 = vsub.f32 %v899, %v899
        %2305 = vmatprep.subr.mxu0 %v2304
        %v2306 = vsub.f32 %v898, %v898
        %2307 = vmatpush1.msra.mxu0 %v2306
        %v2308 = vsub.f32 %v901, %v901
        %2309 = vmatprep.subr.mxu0 %v2308
        %v2310 = vsub.f32 %v900, %v900
        %2311 = vmatpush1.msra.mxu0 %v2310
        %v2312 = vsub.f32 %v903, %v903
        %2313 = vmatprep.subr.mxu0 %v2312
        %v2314 = vsub.f32 %v902, %v902
        %2315 = vmatpush1.msra.mxu0 %v2314
        %v2316 = vsub.f32 %v905, %v905
        %2317 = vmatprep.subr.mxu0 %v2316
        %v2318 = vsub.f32 %v904, %v904
        %2319 = vmatpush1.msra.mxu0 %v2318
        %v2320 = vsub.f32 %v907, %v907
        %2321 = vmatprep.subr.mxu0 %v2320
        %v2322 = vsub.f32 %v906, %v906
        %2323 = vmatpush1.msra.mxu0 %v2322
        %v2324 = vsub.f32 %v909, %v909
        %2325 = vmatprep.subr.mxu0 %v2324
        %v2326 = vsub.f32 %v908, %v908
        %2327 = vmatpush1.msra.mxu0 %v2326
        %v2328 = vsub.f32 %v911, %v911
        %2329 = vmatprep.subr.mxu0 %v2328
        %v2330 = vsub.f32 %v910, %v910
        %2331 = vmatpush1.msra.mxu0 %v2330
        %v2332 = vsub.f32 %v913, %v913
        %2333 = vmatprep.subr.mxu0 %v2332
        %v2334 = vsub.f32 %v912, %v912
        %2335 = vmatpush1.msra.mxu0 %v2334
        %v2336 = vsub.f32 %v915, %v915
        %2337 = vmatprep.subr.mxu0 %v2336
        %v2338 = vsub.f32 %v914, %v914
        %2339 = vmatpush1.msra.mxu0 %v2338
        %v2340 = vsub.f32 %v917, %v917
        %2341 = vmatprep.subr.mxu0 %v2340
        %v2342 = vsub.f32 %v916, %v916
        %2343 = vmatpush1.msra.mxu0 %v2342
        %v2344 = vsub.f32 %v919, %v919
        %2345 = vmatprep.subr.mxu0 %v2344
        %v2346 = vsub.f32 %v918, %v918
        %2347 = vmatpush1.msra.mxu0 %v2346
        %v2348 = vsub.f32 %v921, %v921
        %2349 = vmatprep.subr.mxu0 %v2348
        %v2350 = vsub.f32 %v920, %v920
        %2351 = vmatpush1.msra.mxu0 %v2350
        %v2352 = vsub.f32 %v923, %v923
        %2353 = vmatprep.subr.mxu0 %v2352
        %v2354 = vsub.f32 %v922, %v922
        %2355 = vmatpush1.msra.mxu0 %v2354
        %v2356 = vsub.f32 %v925, %v925
        %2357 = vmatprep.subr.mxu0 %v2356
        %v2358 = vsub.f32 %v924, %v924
        %2359 = vmatpush1.msra.mxu0 %v2358
        %v2360 = vsub.f32 %v927, %v927
        %2361 = vmatprep.subr.mxu0 %v2360
        %v2362 = vsub.f32 %v926, %v926
        %2363 = vmatpush1.msra.mxu0 %v2362
        %v2364 = vsub.f32 %v929, %v929
        %2365 = vmatprep.subr.mxu0 %v2364
        %v2366 = vsub.f32 %v928, %v928
        %2367 = vmatpush1.msra.mxu0 %v2366
        %v2368 = vand.u32 %v606, 4294901760
        %v2369 = vsub.f32 %v606, %v2368
        %2370 = vmatprep.mubr.f32.mxu0 %v2369
        %v2371 = vand.u32 %v605, 4294901760
        %v2372 = vsub.f32 %v605, %v2371
        %2373 = vmatmul.mubr.f32.gmra.mrb[0].mxu0 %v2372
        %v2374 = vpop.f32.mrb[0].mxu0
        %v2375 = vadd.f32 %v2236, %v2374
        %v2376 = vpop.f32.mrb[0].mxu0
        %v2377 = vadd.f32 %v2238, %v2376
        %2378 = vdwg.mxu0
        %2379 = vmatprep.subr.mxu0 %v867
        %2380 = vmatpush1.msra.mxu0 %v866
        %2381 = vmatprep.subr.mxu0 %v869
        %2382 = vmatpush1.msra.mxu0 %v868
        %2383 = vmatprep.subr.mxu0 %v871
        %2384 = vmatpush1.msra.mxu0 %v870
        %2385 = vmatprep.subr.mxu0 %v873
        %2386 = vmatpush1.msra.mxu0 %v872
        %2387 = vmatprep.subr.mxu0 %v875
        %2388 = vmatpush1.msra.mxu0 %v874
        %2389 = vmatprep.subr.mxu0 %v877
        %2390 = vmatpush1.msra.mxu0 %v876
        %2391 = vmatprep.subr.mxu0 %v879
        %2392 = vmatpush1.msra.mxu0 %v878
        %2393 = vmatprep.subr.mxu0 %v881
        %2394 = vmatpush1.msra.mxu0 %v880
        %2395 = vmatprep.subr.mxu0 %v883
        %2396 = vmatpush1.msra.mxu0 %v882
        %2397 = vmatprep.subr.mxu0 %v885
        %2398 = vmatpush1.msra.mxu0 %v884
        %2399 = vmatprep.subr.mxu0 %v887
        %2400 = vmatpush1.msra.mxu0 %v886
        %2401 = vmatprep.subr.mxu0 %v889
        %2402 = vmatpush1.msra.mxu0 %v888
        %2403 = vmatprep.subr.mxu0 %v891
        %2404 = vmatpush1.msra.mxu0 %v890
        %2405 = vmatprep.subr.mxu0 %v893
        %2406 = vmatpush1.msra.mxu0 %v892
        %2407 = vmatprep.subr.mxu0 %v895
        %2408 = vmatpush1.msra.mxu0 %v894
        %2409 = vmatprep.subr.mxu0 %v897
        %2410 = vmatpush1.msra.mxu0 %v896
        %2411 = vmatprep.subr.mxu0 %v899
        %2412 = vmatpush1.msra.mxu0 %v898
        %2413 = vmatprep.subr.mxu0 %v901
        %2414 = vmatpush1.msra.mxu0 %v900
        %2415 = vmatprep.subr.mxu0 %v903
        %2416 = vmatpush1.msra.mxu0 %v902
        %2417 = vmatprep.subr.mxu0 %v905
        %2418 = vmatpush1.msra.mxu0 %v904
        %2419 = vmatprep.subr.mxu0 %v907
        %2420 = vmatpush1.msra.mxu0 %v906
        %2421 = vmatprep.subr.mxu0 %v909
        %2422 = vmatpush1.msra.mxu0 %v908
        %2423 = vmatprep.subr.mxu0 %v911
        %2424 = vmatpush1.msra.mxu0 %v910
        %2425 = vmatprep.subr.mxu0 %v913
        %2426 = vmatpush1.msra.mxu0 %v912
        %2427 = vmatprep.subr.mxu0 %v915
        %2428 = vmatpush1.msra.mxu0 %v914
        %2429 = vmatprep.subr.mxu0 %v917
        %2430 = vmatpush1.msra.mxu0 %v916
        %2431 = vmatprep.subr.mxu0 %v919
        %2432 = vmatpush1.msra.mxu0 %v918
        %2433 = vmatprep.subr.mxu0 %v921
        %2434 = vmatpush1.msra.mxu0 %v920
        %2435 = vmatprep.subr.mxu0 %v923
        %2436 = vmatpush1.msra.mxu0 %v922
        %2437 = vmatprep.subr.mxu0 %v925
        %2438 = vmatpush1.msra.mxu0 %v924
        %2439 = vmatprep.subr.mxu0 %v927
        %2440 = vmatpush1.msra.mxu0 %v926
        %2441 = vmatprep.subr.mxu0 %v929
        %2442 = vmatpush1.msra.mxu0 %v928
        %v2443 = vand.u32 %v606, 4294901760
        %v2444 = vsub.f32 %v606, %v2443
        %v2445 = vand.u32 %v2444, 4294901760
        %2446 = vmatprep.mubr.f32.mxu0 %v2445
        %v2447 = vand.u32 %v605, 4294901760
        %v2448 = vsub.f32 %v605, %v2447
        %v2449 = vand.u32 %v2448, 4294901760
        %2450 = vmatmul.mubr.f32.gmra.mrb[0].mxu0 %v2449
        %v2451 = vpop.f32.mrb[0].mxu0
        %v2452 = vadd.f32 %v2375, %v2451
        %v2453 = vpop.f32.mrb[0].mxu0
        %v2454 = vadd.f32 %v2377, %v2453
        %2455 = vdwg.mxu0
        %v2456 = vsub.f32 %v867, %v867
        %v2457 = vand.u32 %v2456, 4294901760
        %2458 = vmatprep.subr.mxu0 %v2457
        %v2459 = vsub.f32 %v866, %v866
        %v2460 = vand.u32 %v2459, 4294901760
        %2461 = vmatpush1.msra.mxu0 %v2460
        %v2462 = vsub.f32 %v869, %v869
        %v2463 = vand.u32 %v2462, 4294901760
        %2464 = vmatprep.subr.mxu0 %v2463
        %v2465 = vsub.f32 %v868, %v868
        %v2466 = vand.u32 %v2465, 4294901760
        %2467 = vmatpush1.msra.mxu0 %v2466
        %v2468 = vsub.f32 %v871, %v871
        %v2469 = vand.u32 %v2468, 4294901760
        %2470 = vmatprep.subr.mxu0 %v2469
        %v2471 = vsub.f32 %v870, %v870
        %v2472 = vand.u32 %v2471, 4294901760
        %2473 = vmatpush1.msra.mxu0 %v2472
        %v2474 = vsub.f32 %v873, %v873
        %v2475 = vand.u32 %v2474, 4294901760
        %2476 = vmatprep.subr.mxu0 %v2475
        %v2477 = vsub.f32 %v872, %v872
        %v2478 = vand.u32 %v2477, 4294901760
        %2479 = vmatpush1.msra.mxu0 %v2478
        %v2480 = vsub.f32 %v875, %v875
        %v2481 = vand.u32 %v2480, 4294901760
        %2482 = vmatprep.subr.mxu0 %v2481
        %v2483 = vsub.f32 %v874, %v874
        %v2484 = vand.u32 %v2483, 4294901760
        %2485 = vmatpush1.msra.mxu0 %v2484
        %v2486 = vsub.f32 %v877, %v877
        %v2487 = vand.u32 %v2486, 4294901760
        %2488 = vmatprep.subr.mxu0 %v2487
        %v2489 = vsub.f32 %v876, %v876
        %v2490 = vand.u32 %v2489, 4294901760
        %2491 = vmatpush1.msra.mxu0 %v2490
        %v2492 = vsub.f32 %v879, %v879
        %v2493 = vand.u32 %v2492, 4294901760
        %2494 = vmatprep.subr.mxu0 %v2493
        %v2495 = vsub.f32 %v878, %v878
        %v2496 = vand.u32 %v2495, 4294901760
        %2497 = vmatpush1.msra.mxu0 %v2496
        %v2498 = vsub.f32 %v881, %v881
        %v2499 = vand.u32 %v2498, 4294901760
        %2500 = vmatprep.subr.mxu0 %v2499
        %v2501 = vsub.f32 %v880, %v880
        %v2502 = vand.u32 %v2501, 4294901760
        %2503 = vmatpush1.msra.mxu0 %v2502
        %v2504 = vsub.f32 %v883, %v883
        %v2505 = vand.u32 %v2504, 4294901760
        %2506 = vmatprep.subr.mxu0 %v2505
        %v2507 = vsub.f32 %v882, %v882
        %v2508 = vand.u32 %v2507, 4294901760
        %2509 = vmatpush1.msra.mxu0 %v2508
        %v2510 = vsub.f32 %v885, %v885
        %v2511 = vand.u32 %v2510, 4294901760
        %2512 = vmatprep.subr.mxu0 %v2511
        %v2513 = vsub.f32 %v884, %v884
        %v2514 = vand.u32 %v2513, 4294901760
        %2515 = vmatpush1.msra.mxu0 %v2514
        %v2516 = vsub.f32 %v887, %v887
        %v2517 = vand.u32 %v2516, 4294901760
        %2518 = vmatprep.subr.mxu0 %v2517
        %v2519 = vsub.f32 %v886, %v886
        %v2520 = vand.u32 %v2519, 4294901760
        %2521 = vmatpush1.msra.mxu0 %v2520
        %v2522 = vsub.f32 %v889, %v889
        %v2523 = vand.u32 %v2522, 4294901760
        %2524 = vmatprep.subr.mxu0 %v2523
        %v2525 = vsub.f32 %v888, %v888
        %v2526 = vand.u32 %v2525, 4294901760
        %2527 = vmatpush1.msra.mxu0 %v2526
        %v2528 = vsub.f32 %v891, %v891
        %v2529 = vand.u32 %v2528, 4294901760
        %2530 = vmatprep.subr.mxu0 %v2529
        %v2531 = vsub.f32 %v890, %v890
        %v2532 = vand.u32 %v2531, 4294901760
        %2533 = vmatpush1.msra.mxu0 %v2532
        %v2534 = vsub.f32 %v893, %v893
        %v2535 = vand.u32 %v2534, 4294901760
        %2536 = vmatprep.subr.mxu0 %v2535
        %v2537 = vsub.f32 %v892, %v892
        %v2538 = vand.u32 %v2537, 4294901760
        %2539 = vmatpush1.msra.mxu0 %v2538
        %v2540 = vsub.f32 %v895, %v895
        %v2541 = vand.u32 %v2540, 4294901760
        %2542 = vmatprep.subr.mxu0 %v2541
        %v2543 = vsub.f32 %v894, %v894
        %v2544 = vand.u32 %v2543, 4294901760
        %2545 = vmatpush1.msra.mxu0 %v2544
        %v2546 = vsub.f32 %v897, %v897
        %v2547 = vand.u32 %v2546, 4294901760
        %2548 = vmatprep.subr.mxu0 %v2547
        %v2549 = vsub.f32 %v896, %v896
        %v2550 = vand.u32 %v2549, 4294901760
        %2551 = vmatpush1.msra.mxu0 %v2550
        %v2552 = vsub.f32 %v899, %v899
        %v2553 = vand.u32 %v2552, 4294901760
        %2554 = vmatprep.subr.mxu0 %v2553
        %v2555 = vsub.f32 %v898, %v898
        %v2556 = vand.u32 %v2555, 4294901760
        %2557 = vmatpush1.msra.mxu0 %v2556
        %v2558 = vsub.f32 %v901, %v901
        %v2559 = vand.u32 %v2558, 4294901760
        %2560 = vmatprep.subr.mxu0 %v2559
        %v2561 = vsub.f32 %v900, %v900
        %v2562 = vand.u32 %v2561, 4294901760
        %2563 = vmatpush1.msra.mxu0 %v2562
        %v2564 = vsub.f32 %v903, %v903
        %v2565 = vand.u32 %v2564, 4294901760
        %2566 = vmatprep.subr.mxu0 %v2565
        %v2567 = vsub.f32 %v902, %v902
        %v2568 = vand.u32 %v2567, 4294901760
        %2569 = vmatpush1.msra.mxu0 %v2568
        %v2570 = vsub.f32 %v905, %v905
        %v2571 = vand.u32 %v2570, 4294901760
        %2572 = vmatprep.subr.mxu0 %v2571
        %v2573 = vsub.f32 %v904, %v904
        %v2574 = vand.u32 %v2573, 4294901760
        %2575 = vmatpush1.msra.mxu0 %v2574
        %v2576 = vsub.f32 %v907, %v907
        %v2577 = vand.u32 %v2576, 4294901760
        %2578 = vmatprep.subr.mxu0 %v2577
        %v2579 = vsub.f32 %v906, %v906
        %v2580 = vand.u32 %v2579, 4294901760
        %2581 = vmatpush1.msra.mxu0 %v2580
        %v2582 = vsub.f32 %v909, %v909
        %v2583 = vand.u32 %v2582, 4294901760
        %2584 = vmatprep.subr.mxu0 %v2583
        %v2585 = vsub.f32 %v908, %v908
        %v2586 = vand.u32 %v2585, 4294901760
        %2587 = vmatpush1.msra.mxu0 %v2586
        %v2588 = vsub.f32 %v911, %v911
        %v2589 = vand.u32 %v2588, 4294901760
        %2590 = vmatprep.subr.mxu0 %v2589
        %v2591 = vsub.f32 %v910, %v910
        %v2592 = vand.u32 %v2591, 4294901760
        %2593 = vmatpush1.msra.mxu0 %v2592
        %v2594 = vsub.f32 %v913, %v913
        %v2595 = vand.u32 %v2594, 4294901760
        %2596 = vmatprep.subr.mxu0 %v2595
        %v2597 = vsub.f32 %v912, %v912
        %v2598 = vand.u32 %v2597, 4294901760
        %2599 = vmatpush1.msra.mxu0 %v2598
        %v2600 = vsub.f32 %v915, %v915
        %v2601 = vand.u32 %v2600, 4294901760
        %2602 = vmatprep.subr.mxu0 %v2601
        %v2603 = vsub.f32 %v914, %v914
        %v2604 = vand.u32 %v2603, 4294901760
        %2605 = vmatpush1.msra.mxu0 %v2604
        %v2606 = vsub.f32 %v917, %v917
        %v2607 = vand.u32 %v2606, 4294901760
        %2608 = vmatprep.subr.mxu0 %v2607
        %v2609 = vsub.f32 %v916, %v916
        %v2610 = vand.u32 %v2609, 4294901760
        %2611 = vmatpush1.msra.mxu0 %v2610
        %v2612 = vsub.f32 %v919, %v919
        %v2613 = vand.u32 %v2612, 4294901760
        %2614 = vmatprep.subr.mxu0 %v2613
        %v2615 = vsub.f32 %v918, %v918
        %v2616 = vand.u32 %v2615, 4294901760
        %2617 = vmatpush1.msra.mxu0 %v2616
        %v2618 = vsub.f32 %v921, %v921
        %v2619 = vand.u32 %v2618, 4294901760
        %2620 = vmatprep.subr.mxu0 %v2619
        %v2621 = vsub.f32 %v920, %v920
        %v2622 = vand.u32 %v2621, 4294901760
        %2623 = vmatpush1.msra.mxu0 %v2622
        %v2624 = vsub.f32 %v923, %v923
        %v2625 = vand.u32 %v2624, 4294901760
        %2626 = vmatprep.subr.mxu0 %v2625
        %v2627 = vsub.f32 %v922, %v922
        %v2628 = vand.u32 %v2627, 4294901760
        %2629 = vmatpush1.msra.mxu0 %v2628
        %v2630 = vsub.f32 %v925, %v925
        %v2631 = vand.u32 %v2630, 4294901760
        %2632 = vmatprep.subr.mxu0 %v2631
        %v2633 = vsub.f32 %v924, %v924
        %v2634 = vand.u32 %v2633, 4294901760
        %2635 = vmatpush1.msra.mxu0 %v2634
        %v2636 = vsub.f32 %v927, %v927
        %v2637 = vand.u32 %v2636, 4294901760
        %2638 = vmatprep.subr.mxu0 %v2637
        %v2639 = vsub.f32 %v926, %v926
        %v2640 = vand.u32 %v2639, 4294901760
        %2641 = vmatpush1.msra.mxu0 %v2640
        %v2642 = vsub.f32 %v929, %v929
        %v2643 = vand.u32 %v2642, 4294901760
        %2644 = vmatprep.subr.mxu0 %v2643
        %v2645 = vsub.f32 %v928, %v928
        %v2646 = vand.u32 %v2645, 4294901760
        %2647 = vmatpush1.msra.mxu0 %v2646
        %v2648 = vand.u32 %v606, 4294901760
        %2649 = vmatprep.mubr.f32.mxu0 %v2648
        %v2650 = vand.u32 %v605, 4294901760
        %2651 = vmatmul.mubr.f32.gmra.mrb[0].mxu0 %v2650
        %v2652 = vpop.f32.mrb[0].mxu0
        %v2653 = vadd.f32 %v2452, %v2652
        %v2654 = vpop.f32.mrb[0].mxu0
        %v2655 = vadd.f32 %v2454, %v2654
        %2656 = vdwg.mxu0
        %2657 = vmatprep.subr.mxu0 %v867
        %2658 = vmatpush1.msra.mxu0 %v866
        %2659 = vmatprep.subr.mxu0 %v869
        %2660 = vmatpush1.msra.mxu0 %v868
        %2661 = vmatprep.subr.mxu0 %v871
        %2662 = vmatpush1.msra.mxu0 %v870
        %2663 = vmatprep.subr.mxu0 %v873
        %2664 = vmatpush1.msra.mxu0 %v872
        %2665 = vmatprep.subr.mxu0 %v875
        %2666 = vmatpush1.msra.mxu0 %v874
        %2667 = vmatprep.subr.mxu0 %v877
        %2668 = vmatpush1.msra.mxu0 %v876
        %2669 = vmatprep.subr.mxu0 %v879
        %2670 = vmatpush1.msra.mxu0 %v878
        %2671 = vmatprep.subr.mxu0 %v881
        %2672 = vmatpush1.msra.mxu0 %v880
        %2673 = vmatprep.subr.mxu0 %v883
        %2674 = vmatpush1.msra.mxu0 %v882
        %2675 = vmatprep.subr.mxu0 %v885
        %2676 = vmatpush1.msra.mxu0 %v884
        %2677 = vmatprep.subr.mxu0 %v887
        %2678 = vmatpush1.msra.mxu0 %v886
        %2679 = vmatprep.subr.mxu0 %v889
        %2680 = vmatpush1.msra.mxu0 %v888
        %2681 = vmatprep.subr.mxu0 %v891
        %2682 = vmatpush1.msra.mxu0 %v890
        %2683 = vmatprep.subr.mxu0 %v893
        %2684 = vmatpush1.msra.mxu0 %v892
        %2685 = vmatprep.subr.mxu0 %v895
        %2686 = vmatpush1.msra.mxu0 %v894
        %2687 = vmatprep.subr.mxu0 %v897
        %2688 = vmatpush1.msra.mxu0 %v896
        %2689 = vmatprep.subr.mxu0 %v899
        %2690 = vmatpush1.msra.mxu0 %v898
        %2691 = vmatprep.subr.mxu0 %v901
        %2692 = vmatpush1.msra.mxu0 %v900
        %2693 = vmatprep.subr.mxu0 %v903
        %2694 = vmatpush1.msra.mxu0 %v902
        %2695 = vmatprep.subr.mxu0 %v905
        %2696 = vmatpush1.msra.mxu0 %v904
        %2697 = vmatprep.subr.mxu0 %v907
        %2698 = vmatpush1.msra.mxu0 %v906
        %2699 = vmatprep.subr.mxu0 %v909
        %2700 = vmatpush1.msra.mxu0 %v908
        %2701 = vmatprep.subr.mxu0 %v911
        %2702 = vmatpush1.msra.mxu0 %v910
        %2703 = vmatprep.subr.mxu0 %v913
        %2704 = vmatpush1.msra.mxu0 %v912
        %2705 = vmatprep.subr.mxu0 %v915
        %2706 = vmatpush1.msra.mxu0 %v914
        %2707 = vmatprep.subr.mxu0 %v917
        %2708 = vmatpush1.msra.mxu0 %v916
        %2709 = vmatprep.subr.mxu0 %v919
        %2710 = vmatpush1.msra.mxu0 %v918
        %2711 = vmatprep.subr.mxu0 %v921
        %2712 = vmatpush1.msra.mxu0 %v920
        %2713 = vmatprep.subr.mxu0 %v923
        %2714 = vmatpush1.msra.mxu0 %v922
        %2715 = vmatprep.subr.mxu0 %v925
        %2716 = vmatpush1.msra.mxu0 %v924
        %2717 = vmatprep.subr.mxu0 %v927
        %2718 = vmatpush1.msra.mxu0 %v926
        %2719 = vmatprep.subr.mxu0 %v929
        %2720 = vmatpush1.msra.mxu0 %v928
        %v2721 = vand.u32 %v606, 4294901760
        %2722 = vmatprep.mubr.f32.mxu0 %v2721
        %v2723 = vand.u32 %v605, 4294901760
        %2724 = vmatmul.mubr.f32.gmra.mrb[0].mxu0 %v2723
        %v2725 = vpop.f32.mrb[0].mxu0
        %v2726 = vadd.f32 %v2653, %v2725
        %v2727 = vpop.f32.mrb[0].mxu0
        %v2728 = vadd.f32 %v2655, %v2727
        %2729 = vdwg.mxu0
        %s2730 = sld [smem:[#allocation2 + $0x82]]
        %v2731 = vstv %s2730
        %v2732 = vmul.f32 %v2731, %v2726
        %v2733 = vmul.f32 %v2731, %v2728
        %s2734 = sld [smem:[#allocation2 + $0x80]]
        %2735 = vrot.lane.b32.xlu0 %v2726, 2
        %v2736 = vpop.permute.xlu0 %2735
        %2737 = vrot.lane.b32.xlu0 %v2728, 2
        %v2738 = vpop.permute.xlu0 %2737
        %v2739 = vsel %vm487, %v2736, %v2738
        %v2740 = vsel %vm487, %v2738, %v2736
        %v2741 = vstv %s2734
        %v2742 = vmul.f32 %v2741, %v2740
        %v2743 = vmul.f32 %v2741, %v2739
        %v2744 = vadd.f32 %v2732, %v2742
        %v2745 = vadd.f32 %v2733, %v2743
        %s2746 = sld [smem:[#allocation2 + $0x81]]
        %2747 = vrot.lane.b32.xlu0 %v2726, 1
        %v2748 = vpop.permute.xlu0 %2747
        %2749 = vrot.lane.b32.xlu0 %v2728, 1
        %v2750 = vpop.permute.xlu0 %2749
        %v2751 = vsel %vm510, %v2748, %v2750
        %v2752 = vsel %vm510, %v2750, %v2748
        %v2753 = vstv %s2746
        %v2754 = vmul.f32 %v2753, %v2752
        %v2755 = vmul.f32 %v2753, %v2751
        %v2756 = vadd.f32 %v2744, %v2754
        %v2757 = vadd.f32 %v2745, %v2755
        %s2758 = sld [smem:[#allocation2 + $0x83]]
        %2759 = vrot.lane.b32.xlu0 %v2726, 127
        %v2760 = vpop.permute.xlu0 %2759
        %2761 = vrot.lane.b32.xlu0 %v2728, 127
        %v2762 = vpop.permute.xlu0 %2761
        %v2763 = vsel %vm533, %v2760, %v2762
        %v2764 = vsel %vm533, %v2762, %v2760
        %v2765 = vstv %s2758
        %v2766 = vmul.f32 %v2765, %v2763
        %v2767 = vmul.f32 %v2765, %v2764
        %v2768 = vadd.f32 %v2756, %v2766
        %v2769 = vadd.f32 %v2757, %v2767
        %s2770 = sld [smem:[#allocation2 + $0x84]]
        %2771 = vrot.lane.b32.xlu0 %v2726, 126
        %v2772 = vpop.permute.xlu0 %2771
        %2773 = vrot.lane.b32.xlu0 %v2728, 126
        %v2774 = vpop.permute.xlu0 %2773
        %v2775 = vsel %vm556, %v2772, %v2774
        %v2776 = vsel %vm556, %v2774, %v2772
        %v2777 = vstv %s2770
        %v2778 = vmul.f32 %v2777, %v2775
        %v2779 = vmul.f32 %v2777, %v2776
        %v2780 = vadd.f32 %v2768, %v2778
        %v2781 = vadd.f32 %v2769, %v2779
        %s2782 = sld [smem:[#allocation4 + $0x1]]
        %v2783 = vstv %s2782
        %v2784 = vadd.f32 %v2780, %v2783
        %v2785 = vadd.f32 %v2781, %v2783
        %v2786 = vmax.f32 %v2784, 0.0
        %v2787 = vmax.f32 %v2785, 0.0
        %vm2788 = vcmp.lt.s32.totalorder %v486, 249
        %vm2789 = vcmp.lt.s32.totalorder %v580, 249
        %v2790 = vsel %vm2788, %v2786, 0.0
        %v2791 = vsel %vm2789, %v2787, 0.0
        %2792 = vrot.lane.b32.xlu0 %v2790, 1
        %v2793 = vpop.permute.xlu0 %2792
        %2794 = vrot.lane.b32.xlu0 %v2791, 1
        %v2795 = vpop.permute.xlu0 %2794
        %v2796 = vsel %vm510, %v2793, %v2795
        %v2797 = vsel %vm510, %v2795, %v2793
        %v2798 = vmax.f32 %v2797, %v2790
        %v2799 = vmax.f32 %v2796, %v2791
        %2800 = vmatprep.subr.mxu0 %v803
        %2801 = vmatpush1.msra.mxu0 %v802
        %2802 = vmatprep.subr.mxu0 %v805
        %2803 = vmatpush1.msra.mxu0 %v804
        %2804 = vmatprep.subr.mxu0 %v807
        %2805 = vmatpush1.msra.mxu0 %v806
        %2806 = vmatprep.subr.mxu0 %v809
        %2807 = vmatpush1.msra.mxu0 %v808
        %2808 = vmatprep.subr.mxu0 %v811
        %2809 = vmatpush1.msra.mxu0 %v810
        %2810 = vmatprep.subr.mxu0 %v813
        %2811 = vmatpush1.msra.mxu0 %v812
        %2812 = vmatprep.subr.mxu0 %v815
        %2813 = vmatpush1.msra.mxu0 %v814
        %2814 = vmatprep.subr.mxu0 %v817
        %2815 = vmatpush1.msra.mxu0 %v816
        %2816 = vmatprep.subr.mxu0 %v819
        %2817 = vmatpush1.msra.mxu0 %v818
        %2818 = vmatprep.subr.mxu0 %v821
        %2819 = vmatpush1.msra.mxu0 %v820
        %2820 = vmatprep.subr.mxu0 %v823
        %2821 = vmatpush1.msra.mxu0 %v822
        %2822 = vmatprep.subr.mxu0 %v825
        %2823 = vmatpush1.msra.mxu0 %v824
        %2824 = vmatprep.subr.mxu0 %v827
        %2825 = vmatpush1.msra.mxu0 %v826
        %2826 = vmatprep.subr.mxu0 %v829
        %2827 = vmatpush1.msra.mxu0 %v828
        %2828 = vmatprep.subr.mxu0 %v831
        %2829 = vmatpush1.msra.mxu0 %v830
        %2830 = vmatprep.subr.mxu0 %v833
        %2831 = vmatpush1.msra.mxu0 %v832
        %2832 = vmatprep.subr.mxu0 %v835
        %2833 = vmatpush1.msra.mxu0 %v834
        %2834 = vmatprep.subr.mxu0 %v837
        %2835 = vmatpush1.msra.mxu0 %v836
        %2836 = vmatprep.subr.mxu0 %v839
        %2837 = vmatpush1.msra.mxu0 %v838
        %2838 = vmatprep.subr.mxu0 %v841
        %2839 = vmatpush1.msra.mxu0 %v840
        %2840 = vmatprep.subr.mxu0 %v843
        %2841 = vmatpush1.msra.mxu0 %v842
        %2842 = vmatprep.subr.mxu0 %v845
        %2843 = vmatpush1.msra.mxu0 %v844
        %2844 = vmatprep.subr.mxu0 %v847
        %2845 = vmatpush1.msra.mxu0 %v846
        %2846 = vmatprep.subr.mxu0 %v849
        %2847 = vmatpush1.msra.mxu0 %v848
        %2848 = vmatprep.subr.mxu0 %v851
        %2849 = vmatpush1.msra.mxu0 %v850
        %2850 = vmatprep.subr.mxu0 %v853
        %2851 = vmatpush1.msra.mxu0 %v852
        %2852 = vmatprep.subr.mxu0 %v855
        %2853 = vmatpush1.msra.mxu0 %v854
        %2854 = vmatprep.subr.mxu0 %v857
        %2855 = vmatpush1.msra.mxu0 %v856
        %2856 = vmatprep.subr.mxu0 %v859
        %2857 = vmatpush1.msra.mxu0 %v858
        %2858 = vmatprep.subr.mxu0 %v861
        %2859 = vmatpush1.msra.mxu0 %v860
        %2860 = vmatprep.subr.mxu0 %v863
        %2861 = vmatpush1.msra.mxu0 %v862
        %2862 = vmatprep.subr.mxu0 %v865
        %2863 = vmatpush1.msra.mxu0 %v864
        %v2864 = vand.u32 %v2799, 4294901760
        %v2865 = vsub.f32 %v2799, %v2864
        %v2866 = vand.u32 %v2865, 4294901760
        %v2867 = vsub.f32 %v2865, %v2866
        %v2868 = vand.u32 %v2867, 4294901760
        %2869 = vmatprep.mubr.f32.mxu0 %v2868
        %v2870 = vand.u32 %v2798, 4294901760
        %v2871 = vsub.f32 %v2798, %v2870
        %v2872 = vand.u32 %v2871, 4294901760
        %v2873 = vsub.f32 %v2871, %v2872
        %v2874 = vand.u32 %v2873, 4294901760
        %2875 = vmatmul.mubr.f32.gmra.mrb[0].mxu0 %v2874
        %v2876 = vpop.f32.mrb[0].mxu0
        %v2877 = vadd.f32 0.0, %v2876
        %v2878 = vpop.f32.mrb[0].mxu0
        %v2879 = vadd.f32 0.0, %v2878
        %2880 = vdwg.mxu0
        %v2881 = vsub.f32 %v803, %v803
        %v2882 = vand.u32 %v2881, 4294901760
        %v2883 = vsub.f32 %v2881, %v2882
        %v2884 = vand.u32 %v2883, 4294901760
        %2885 = vmatprep.subr.mxu0 %v2884
        %v2886 = vsub.f32 %v802, %v802
        %v2887 = vand.u32 %v2886, 4294901760
        %v2888 = vsub.f32 %v2886, %v2887
        %v2889 = vand.u32 %v2888, 4294901760
        %2890 = vmatpush1.msra.mxu0 %v2889
        %v2891 = vsub.f32 %v805, %v805
        %v2892 = vand.u32 %v2891, 4294901760
        %v2893 = vsub.f32 %v2891, %v2892
        %v2894 = vand.u32 %v2893, 4294901760
        %2895 = vmatprep.subr.mxu0 %v2894
        %v2896 = vsub.f32 %v804, %v804
        %v2897 = vand.u32 %v2896, 4294901760
        %v2898 = vsub.f32 %v2896, %v2897
        %v2899 = vand.u32 %v2898, 4294901760
        %2900 = vmatpush1.msra.mxu0 %v2899
        %v2901 = vsub.f32 %v807, %v807
        %v2902 = vand.u32 %v2901, 4294901760
        %v2903 = vsub.f32 %v2901, %v2902
        %v2904 = vand.u32 %v2903, 4294901760
        %2905 = vmatprep.subr.mxu0 %v2904
        %v2906 = vsub.f32 %v806, %v806
        %v2907 = vand.u32 %v2906, 4294901760
        %v2908 = vsub.f32 %v2906, %v2907
        %v2909 = vand.u32 %v2908, 4294901760
        %2910 = vmatpush1.msra.mxu0 %v2909
        %v2911 = vsub.f32 %v809, %v809
        %v2912 = vand.u32 %v2911, 4294901760
        %v2913 = vsub.f32 %v2911, %v2912
        %v2914 = vand.u32 %v2913, 4294901760
        %2915 = vmatprep.subr.mxu0 %v2914
        %v2916 = vsub.f32 %v808, %v808
        %v2917 = vand.u32 %v2916, 4294901760
        %v2918 = vsub.f32 %v2916, %v2917
        %v2919 = vand.u32 %v2918, 4294901760
        %2920 = vmatpush1.msra.mxu0 %v2919
        %v2921 = vsub.f32 %v811, %v811
        %v2922 = vand.u32 %v2921, 4294901760
        %v2923 = vsub.f32 %v2921, %v2922
        %v2924 = vand.u32 %v2923, 4294901760
        %2925 = vmatprep.subr.mxu0 %v2924
        %v2926 = vsub.f32 %v810, %v810
        %v2927 = vand.u32 %v2926, 4294901760
        %v2928 = vsub.f32 %v2926, %v2927
        %v2929 = vand.u32 %v2928, 4294901760
        %2930 = vmatpush1.msra.mxu0 %v2929
        %v2931 = vsub.f32 %v813, %v813
        %v2932 = vand.u32 %v2931, 4294901760
        %v2933 = vsub.f32 %v2931, %v2932
        %v2934 = vand.u32 %v2933, 4294901760
        %2935 = vmatprep.subr.mxu0 %v2934
        %v2936 = vsub.f32 %v812, %v812
        %v2937 = vand.u32 %v2936, 4294901760
        %v2938 = vsub.f32 %v2936, %v2937
        %v2939 = vand.u32 %v2938, 4294901760
        %2940 = vmatpush1.msra.mxu0 %v2939
        %v2941 = vsub.f32 %v815, %v815
        %v2942 = vand.u32 %v2941, 4294901760
        %v2943 = vsub.f32 %v2941, %v2942
        %v2944 = vand.u32 %v2943, 4294901760
        %2945 = vmatprep.subr.mxu0 %v2944
        %v2946 = vsub.f32 %v814, %v814
        %v2947 = vand.u32 %v2946, 4294901760
        %v2948 = vsub.f32 %v2946, %v2947
        %v2949 = vand.u32 %v2948, 4294901760
        %2950 = vmatpush1.msra.mxu0 %v2949
        %v2951 = vsub.f32 %v817, %v817
        %v2952 = vand.u32 %v2951, 4294901760
        %v2953 = vsub.f32 %v2951, %v2952
        %v2954 = vand.u32 %v2953, 4294901760
        %2955 = vmatprep.subr.mxu0 %v2954
        %v2956 = vsub.f32 %v816, %v816
        %v2957 = vand.u32 %v2956, 4294901760
        %v2958 = vsub.f32 %v2956, %v2957
        %v2959 = vand.u32 %v2958, 4294901760
        %2960 = vmatpush1.msra.mxu0 %v2959
        %v2961 = vsub.f32 %v819, %v819
        %v2962 = vand.u32 %v2961, 4294901760
        %v2963 = vsub.f32 %v2961, %v2962
        %v2964 = vand.u32 %v2963, 4294901760
        %2965 = vmatprep.subr.mxu0 %v2964
        %v2966 = vsub.f32 %v818, %v818
        %v2967 = vand.u32 %v2966, 4294901760
        %v2968 = vsub.f32 %v2966, %v2967
        %v2969 = vand.u32 %v2968, 4294901760
        %2970 = vmatpush1.msra.mxu0 %v2969
        %v2971 = vsub.f32 %v821, %v821
        %v2972 = vand.u32 %v2971, 4294901760
        %v2973 = vsub.f32 %v2971, %v2972
        %v2974 = vand.u32 %v2973, 4294901760
        %2975 = vmatprep.subr.mxu0 %v2974
        %v2976 = vsub.f32 %v820, %v820
        %v2977 = vand.u32 %v2976, 4294901760
        %v2978 = vsub.f32 %v2976, %v2977
        %v2979 = vand.u32 %v2978, 4294901760
        %2980 = vmatpush1.msra.mxu0 %v2979
        %v2981 = vsub.f32 %v823, %v823
        %v2982 = vand.u32 %v2981, 4294901760
        %v2983 = vsub.f32 %v2981, %v2982
        %v2984 = vand.u32 %v2983, 4294901760
        %2985 = vmatprep.subr.mxu0 %v2984
        %v2986 = vsub.f32 %v822, %v822
        %v2987 = vand.u32 %v2986, 4294901760
        %v2988 = vsub.f32 %v2986, %v2987
        %v2989 = vand.u32 %v2988, 4294901760
        %2990 = vmatpush1.msra.mxu0 %v2989
        %v2991 = vsub.f32 %v825, %v825
        %v2992 = vand.u32 %v2991, 4294901760
        %v2993 = vsub.f32 %v2991, %v2992
        %v2994 = vand.u32 %v2993, 4294901760
        %2995 = vmatprep.subr.mxu0 %v2994
        %v2996 = vsub.f32 %v824, %v824
        %v2997 = vand.u32 %v2996, 4294901760
        %v2998 = vsub.f32 %v2996, %v2997
        %v2999 = vand.u32 %v2998, 4294901760
        %3000 = vmatpush1.msra.mxu0 %v2999
        %v3001 = vsub.f32 %v827, %v827
        %v3002 = vand.u32 %v3001, 4294901760
        %v3003 = vsub.f32 %v3001, %v3002
        %v3004 = vand.u32 %v3003, 4294901760
        %3005 = vmatprep.subr.mxu0 %v3004
        %v3006 = vsub.f32 %v826, %v826
        %v3007 = vand.u32 %v3006, 4294901760
        %v3008 = vsub.f32 %v3006, %v3007
        %v3009 = vand.u32 %v3008, 4294901760
        %3010 = vmatpush1.msra.mxu0 %v3009
        %v3011 = vsub.f32 %v829, %v829
        %v3012 = vand.u32 %v3011, 4294901760
        %v3013 = vsub.f32 %v3011, %v3012
        %v3014 = vand.u32 %v3013, 4294901760
        %3015 = vmatprep.subr.mxu0 %v3014
        %v3016 = vsub.f32 %v828, %v828
        %v3017 = vand.u32 %v3016, 4294901760
        %v3018 = vsub.f32 %v3016, %v3017
        %v3019 = vand.u32 %v3018, 4294901760
        %3020 = vmatpush1.msra.mxu0 %v3019
        %v3021 = vsub.f32 %v831, %v831
        %v3022 = vand.u32 %v3021, 4294901760
        %v3023 = vsub.f32 %v3021, %v3022
        %v3024 = vand.u32 %v3023, 4294901760
        %3025 = vmatprep.subr.mxu0 %v3024
        %v3026 = vsub.f32 %v830, %v830
        %v3027 = vand.u32 %v3026, 4294901760
        %v3028 = vsub.f32 %v3026, %v3027
        %v3029 = vand.u32 %v3028, 4294901760
        %3030 = vmatpush1.msra.mxu0 %v3029
        %v3031 = vsub.f32 %v833, %v833
        %v3032 = vand.u32 %v3031, 4294901760
        %v3033 = vsub.f32 %v3031, %v3032
        %v3034 = vand.u32 %v3033, 4294901760
        %3035 = vmatprep.subr.mxu0 %v3034
        %v3036 = vsub.f32 %v832, %v832
        %v3037 = vand.u32 %v3036, 4294901760
        %v3038 = vsub.f32 %v3036, %v3037
        %v3039 = vand.u32 %v3038, 4294901760
        %3040 = vmatpush1.msra.mxu0 %v3039
        %v3041 = vsub.f32 %v835, %v835
        %v3042 = vand.u32 %v3041, 4294901760
        %v3043 = vsub.f32 %v3041, %v3042
        %v3044 = vand.u32 %v3043, 4294901760
        %3045 = vmatprep.subr.mxu0 %v3044
        %v3046 = vsub.f32 %v834, %v834
        %v3047 = vand.u32 %v3046, 4294901760
        %v3048 = vsub.f32 %v3046, %v3047
        %v3049 = vand.u32 %v3048, 4294901760
        %3050 = vmatpush1.msra.mxu0 %v3049
        %v3051 = vsub.f32 %v837, %v837
        %v3052 = vand.u32 %v3051, 4294901760
        %v3053 = vsub.f32 %v3051, %v3052
        %v3054 = vand.u32 %v3053, 4294901760
        %3055 = vmatprep.subr.mxu0 %v3054
        %v3056 = vsub.f32 %v836, %v836
        %v3057 = vand.u32 %v3056, 4294901760
        %v3058 = vsub.f32 %v3056, %v3057
        %v3059 = vand.u32 %v3058, 4294901760
        %3060 = vmatpush1.msra.mxu0 %v3059
        %v3061 = vsub.f32 %v839, %v839
        %v3062 = vand.u32 %v3061, 4294901760
        %v3063 = vsub.f32 %v3061, %v3062
        %v3064 = vand.u32 %v3063, 4294901760
        %3065 = vmatprep.subr.mxu0 %v3064
        %v3066 = vsub.f32 %v838, %v838
        %v3067 = vand.u32 %v3066, 4294901760
        %v3068 = vsub.f32 %v3066, %v3067
        %v3069 = vand.u32 %v3068, 4294901760
        %3070 = vmatpush1.msra.mxu0 %v3069
        %v3071 = vsub.f32 %v841, %v841
        %v3072 = vand.u32 %v3071, 4294901760
        %v3073 = vsub.f32 %v3071, %v3072
        %v3074 = vand.u32 %v3073, 4294901760
        %3075 = vmatprep.subr.mxu0 %v3074
        %v3076 = vsub.f32 %v840, %v840
        %v3077 = vand.u32 %v3076, 4294901760
        %v3078 = vsub.f32 %v3076, %v3077
        %v3079 = vand.u32 %v3078, 4294901760
        %3080 = vmatpush1.msra.mxu0 %v3079
        %v3081 = vsub.f32 %v843, %v843
        %v3082 = vand.u32 %v3081, 4294901760
        %v3083 = vsub.f32 %v3081, %v3082
        %v3084 = vand.u32 %v3083, 4294901760
        %3085 = vmatprep.subr.mxu0 %v3084
        %v3086 = vsub.f32 %v842, %v842
        %v3087 = vand.u32 %v3086, 4294901760
        %v3088 = vsub.f32 %v3086, %v3087
        %v3089 = vand.u32 %v3088, 4294901760
        %3090 = vmatpush1.msra.mxu0 %v3089
        %v3091 = vsub.f32 %v845, %v845
        %v3092 = vand.u32 %v3091, 4294901760
        %v3093 = vsub.f32 %v3091, %v3092
        %v3094 = vand.u32 %v3093, 4294901760
        %3095 = vmatprep.subr.mxu0 %v3094
        %v3096 = vsub.f32 %v844, %v844
        %v3097 = vand.u32 %v3096, 4294901760
        %v3098 = vsub.f32 %v3096, %v3097
        %v3099 = vand.u32 %v3098, 4294901760
        %3100 = vmatpush1.msra.mxu0 %v3099
        %v3101 = vsub.f32 %v847, %v847
        %v3102 = vand.u32 %v3101, 4294901760
        %v3103 = vsub.f32 %v3101, %v3102
        %v3104 = vand.u32 %v3103, 4294901760
        %3105 = vmatprep.subr.mxu0 %v3104
        %v3106 = vsub.f32 %v846, %v846
        %v3107 = vand.u32 %v3106, 4294901760
        %v3108 = vsub.f32 %v3106, %v3107
        %v3109 = vand.u32 %v3108, 4294901760
        %3110 = vmatpush1.msra.mxu0 %v3109
        %v3111 = vsub.f32 %v849, %v849
        %v3112 = vand.u32 %v3111, 4294901760
        %v3113 = vsub.f32 %v3111, %v3112
        %v3114 = vand.u32 %v3113, 4294901760
        %3115 = vmatprep.subr.mxu0 %v3114
        %v3116 = vsub.f32 %v848, %v848
        %v3117 = vand.u32 %v3116, 4294901760
        %v3118 = vsub.f32 %v3116, %v3117
        %v3119 = vand.u32 %v3118, 4294901760
        %3120 = vmatpush1.msra.mxu0 %v3119
        %v3121 = vsub.f32 %v851, %v851
        %v3122 = vand.u32 %v3121, 4294901760
        %v3123 = vsub.f32 %v3121, %v3122
        %v3124 = vand.u32 %v3123, 4294901760
        %3125 = vmatprep.subr.mxu0 %v3124
        %v3126 = vsub.f32 %v850, %v850
        %v3127 = vand.u32 %v3126, 4294901760
        %v3128 = vsub.f32 %v3126, %v3127
        %v3129 = vand.u32 %v3128, 4294901760
        %3130 = vmatpush1.msra.mxu0 %v3129
        %v3131 = vsub.f32 %v853, %v853
        %v3132 = vand.u32 %v3131, 4294901760
        %v3133 = vsub.f32 %v3131, %v3132
        %v3134 = vand.u32 %v3133, 4294901760
        %3135 = vmatprep.subr.mxu0 %v3134
        %v3136 = vsub.f32 %v852, %v852
        %v3137 = vand.u32 %v3136, 4294901760
        %v3138 = vsub.f32 %v3136, %v3137
        %v3139 = vand.u32 %v3138, 4294901760
        %3140 = vmatpush1.msra.mxu0 %v3139
        %v3141 = vsub.f32 %v855, %v855
        %v3142 = vand.u32 %v3141, 4294901760
        %v3143 = vsub.f32 %v3141, %v3142
        %v3144 = vand.u32 %v3143, 4294901760
        %3145 = vmatprep.subr.mxu0 %v3144
        %v3146 = vsub.f32 %v854, %v854
        %v3147 = vand.u32 %v3146, 4294901760
        %v3148 = vsub.f32 %v3146, %v3147
        %v3149 = vand.u32 %v3148, 4294901760
        %3150 = vmatpush1.msra.mxu0 %v3149
        %v3151 = vsub.f32 %v857, %v857
        %v3152 = vand.u32 %v3151, 4294901760
        %v3153 = vsub.f32 %v3151, %v3152
        %v3154 = vand.u32 %v3153, 4294901760
        %3155 = vmatprep.subr.mxu0 %v3154
        %v3156 = vsub.f32 %v856, %v856
        %v3157 = vand.u32 %v3156, 4294901760
        %v3158 = vsub.f32 %v3156, %v3157
        %v3159 = vand.u32 %v3158, 4294901760
        %3160 = vmatpush1.msra.mxu0 %v3159
        %v3161 = vsub.f32 %v859, %v859
        %v3162 = vand.u32 %v3161, 4294901760
        %v3163 = vsub.f32 %v3161, %v3162
        %v3164 = vand.u32 %v3163, 4294901760
        %3165 = vmatprep.subr.mxu0 %v3164
        %v3166 = vsub.f32 %v858, %v858
        %v3167 = vand.u32 %v3166, 4294901760
        %v3168 = vsub.f32 %v3166, %v3167
        %v3169 = vand.u32 %v3168, 4294901760
        %3170 = vmatpush1.msra.mxu0 %v3169
        %v3171 = vsub.f32 %v861, %v861
        %v3172 = vand.u32 %v3171, 4294901760
        %v3173 = vsub.f32 %v3171, %v3172
        %v3174 = vand.u32 %v3173, 4294901760
        %3175 = vmatprep.subr.mxu0 %v3174
        %v3176 = vsub.f32 %v860, %v860
        %v3177 = vand.u32 %v3176, 4294901760
        %v3178 = vsub.f32 %v3176, %v3177
        %v3179 = vand.u32 %v3178, 4294901760
        %3180 = vmatpush1.msra.mxu0 %v3179
        %v3181 = vsub.f32 %v863, %v863
        %v3182 = vand.u32 %v3181, 4294901760
        %v3183 = vsub.f32 %v3181, %v3182
        %v3184 = vand.u32 %v3183, 4294901760
        %3185 = vmatprep.subr.mxu0 %v3184
        %v3186 = vsub.f32 %v862, %v862
        %v3187 = vand.u32 %v3186, 4294901760
        %v3188 = vsub.f32 %v3186, %v3187
        %v3189 = vand.u32 %v3188, 4294901760
        %3190 = vmatpush1.msra.mxu0 %v3189
        %v3191 = vsub.f32 %v865, %v865
        %v3192 = vand.u32 %v3191, 4294901760
        %v3193 = vsub.f32 %v3191, %v3192
        %v3194 = vand.u32 %v3193, 4294901760
        %3195 = vmatprep.subr.mxu0 %v3194
        %v3196 = vsub.f32 %v864, %v864
        %v3197 = vand.u32 %v3196, 4294901760
        %v3198 = vsub.f32 %v3196, %v3197
        %v3199 = vand.u32 %v3198, 4294901760
        %3200 = vmatpush1.msra.mxu0 %v3199
        %v3201 = vand.u32 %v2799, 4294901760
        %3202 = vmatprep.mubr.f32.mxu0 %v3201
        %v3203 = vand.u32 %v2798, 4294901760
        %3204 = vmatmul.mubr.f32.gmra.mrb[0].mxu0 %v3203
        %v3205 = vpop.f32.mrb[0].mxu0
        %v3206 = vadd.f32 %v2877, %v3205
        %v3207 = vpop.f32.mrb[0].mxu0
        %v3208 = vadd.f32 %v2879, %v3207
        %3209 = vdwg.mxu0
        %v3210 = vsub.f32 %v803, %v803
        %3211 = vmatprep.subr.mxu0 %v3210
        %v3212 = vsub.f32 %v802, %v802
        %3213 = vmatpush1.msra.mxu0 %v3212
        %v3214 = vsub.f32 %v805, %v805
        %3215 = vmatprep.subr.mxu0 %v3214
        %v3216 = vsub.f32 %v804, %v804
        %3217 = vmatpush1.msra.mxu0 %v3216
        %v3218 = vsub.f32 %v807, %v807
        %3219 = vmatprep.subr.mxu0 %v3218
        %v3220 = vsub.f32 %v806, %v806
        %3221 = vmatpush1.msra.mxu0 %v3220
        %v3222 = vsub.f32 %v809, %v809
        %3223 = vmatprep.subr.mxu0 %v3222
        %v3224 = vsub.f32 %v808, %v808
        %3225 = vmatpush1.msra.mxu0 %v3224
        %v3226 = vsub.f32 %v811, %v811
        %3227 = vmatprep.subr.mxu0 %v3226
        %v3228 = vsub.f32 %v810, %v810
        %3229 = vmatpush1.msra.mxu0 %v3228
        %v3230 = vsub.f32 %v813, %v813
        %3231 = vmatprep.subr.mxu0 %v3230
        %v3232 = vsub.f32 %v812, %v812
        %3233 = vmatpush1.msra.mxu0 %v3232
        %v3234 = vsub.f32 %v815, %v815
        %3235 = vmatprep.subr.mxu0 %v3234
        %v3236 = vsub.f32 %v814, %v814
        %3237 = vmatpush1.msra.mxu0 %v3236
        %v3238 = vsub.f32 %v817, %v817
        %3239 = vmatprep.subr.mxu0 %v3238
        %v3240 = vsub.f32 %v816, %v816
        %3241 = vmatpush1.msra.mxu0 %v3240
        %v3242 = vsub.f32 %v819, %v819
        %3243 = vmatprep.subr.mxu0 %v3242
        %v3244 = vsub.f32 %v818, %v818
        %3245 = vmatpush1.msra.mxu0 %v3244
        %v3246 = vsub.f32 %v821, %v821
        %3247 = vmatprep.subr.mxu0 %v3246
        %v3248 = vsub.f32 %v820, %v820
        %3249 = vmatpush1.msra.mxu0 %v3248
        %v3250 = vsub.f32 %v823, %v823
        %3251 = vmatprep.subr.mxu0 %v3250
        %v3252 = vsub.f32 %v822, %v822
        %3253 = vmatpush1.msra.mxu0 %v3252
        %v3254 = vsub.f32 %v825, %v825
        %3255 = vmatprep.subr.mxu0 %v3254
        %v3256 = vsub.f32 %v824, %v824
        %3257 = vmatpush1.msra.mxu0 %v3256
        %v3258 = vsub.f32 %v827, %v827
        %3259 = vmatprep.subr.mxu0 %v3258
        %v3260 = vsub.f32 %v826, %v826
        %3261 = vmatpush1.msra.mxu0 %v3260
        %v3262 = vsub.f32 %v829, %v829
        %3263 = vmatprep.subr.mxu0 %v3262
        %v3264 = vsub.f32 %v828, %v828
        %3265 = vmatpush1.msra.mxu0 %v3264
        %v3266 = vsub.f32 %v831, %v831
        %3267 = vmatprep.subr.mxu0 %v3266
        %v3268 = vsub.f32 %v830, %v830
        %3269 = vmatpush1.msra.mxu0 %v3268
        %v3270 = vsub.f32 %v833, %v833
        %3271 = vmatprep.subr.mxu0 %v3270
        %v3272 = vsub.f32 %v832, %v832
        %3273 = vmatpush1.msra.mxu0 %v3272
        %v3274 = vsub.f32 %v835, %v835
        %3275 = vmatprep.subr.mxu0 %v3274
        %v3276 = vsub.f32 %v834, %v834
        %3277 = vmatpush1.msra.mxu0 %v3276
        %v3278 = vsub.f32 %v837, %v837
        %3279 = vmatprep.subr.mxu0 %v3278
        %v3280 = vsub.f32 %v836, %v836
        %3281 = vmatpush1.msra.mxu0 %v3280
        %v3282 = vsub.f32 %v839, %v839
        %3283 = vmatprep.subr.mxu0 %v3282
        %v3284 = vsub.f32 %v838, %v838
        %3285 = vmatpush1.msra.mxu0 %v3284
        %v3286 = vsub.f32 %v841, %v841
        %3287 = vmatprep.subr.mxu0 %v3286
        %v3288 = vsub.f32 %v840, %v840
        %3289 = vmatpush1.msra.mxu0 %v3288
        %v3290 = vsub.f32 %v843, %v843
        %3291 = vmatprep.subr.mxu0 %v3290
        %v3292 = vsub.f32 %v842, %v842
        %3293 = vmatpush1.msra.mxu0 %v3292
        %v3294 = vsub.f32 %v845, %v845
        %3295 = vmatprep.subr.mxu0 %v3294
        %v3296 = vsub.f32 %v844, %v844
        %3297 = vmatpush1.msra.mxu0 %v3296
        %v3298 = vsub.f32 %v847, %v847
        %3299 = vmatprep.subr.mxu0 %v3298
        %v3300 = vsub.f32 %v846, %v846
        %3301 = vmatpush1.msra.mxu0 %v3300
        %v3302 = vsub.f32 %v849, %v849
        %3303 = vmatprep.subr.mxu0 %v3302
        %v3304 = vsub.f32 %v848, %v848
        %3305 = vmatpush1.msra.mxu0 %v3304
        %v3306 = vsub.f32 %v851, %v851
        %3307 = vmatprep.subr.mxu0 %v3306
        %v3308 = vsub.f32 %v850, %v850
        %3309 = vmatpush1.msra.mxu0 %v3308
        %v3310 = vsub.f32 %v853, %v853
        %3311 = vmatprep.subr.mxu0 %v3310
        %v3312 = vsub.f32 %v852, %v852
        %3313 = vmatpush1.msra.mxu0 %v3312
        %v3314 = vsub.f32 %v855, %v855
        %3315 = vmatprep.subr.mxu0 %v3314
        %v3316 = vsub.f32 %v854, %v854
        %3317 = vmatpush1.msra.mxu0 %v3316
        %v3318 = vsub.f32 %v857, %v857
        %3319 = vmatprep.subr.mxu0 %v3318
        %v3320 = vsub.f32 %v856, %v856
        %3321 = vmatpush1.msra.mxu0 %v3320
        %v3322 = vsub.f32 %v859, %v859
        %3323 = vmatprep.subr.mxu0 %v3322
        %v3324 = vsub.f32 %v858, %v858
        %3325 = vmatpush1.msra.mxu0 %v3324
        %v3326 = vsub.f32 %v861, %v861
        %3327 = vmatprep.subr.mxu0 %v3326
        %v3328 = vsub.f32 %v860, %v860
        %3329 = vmatpush1.msra.mxu0 %v3328
        %v3330 = vsub.f32 %v863, %v863
        %3331 = vmatprep.subr.mxu0 %v3330
        %v3332 = vsub.f32 %v862, %v862
        %3333 = vmatpush1.msra.mxu0 %v3332
        %v3334 = vsub.f32 %v865, %v865
        %3335 = vmatprep.subr.mxu0 %v3334
        %v3336 = vsub.f32 %v864, %v864
        %3337 = vmatpush1.msra.mxu0 %v3336
        %v3338 = vand.u32 %v2799, 4294901760
        %v3339 = vsub.f32 %v2799, %v3338
        %3340 = vmatprep.mubr.f32.mxu0 %v3339
        %v3341 = vand.u32 %v2798, 4294901760
        %v3342 = vsub.f32 %v2798, %v3341
        %3343 = vmatmul.mubr.f32.gmra.mrb[0].mxu0 %v3342
        %v3344 = vpop.f32.mrb[0].mxu0
        %v3345 = vadd.f32 %v3206, %v3344
        %v3346 = vpop.f32.mrb[0].mxu0
        %v3347 = vadd.f32 %v3208, %v3346
        %3348 = vdwg.mxu0
        %3349 = vmatprep.subr.mxu0 %v803
        %3350 = vmatpush1.msra.mxu0 %v802
        %3351 = vmatprep.subr.mxu0 %v805
        %3352 = vmatpush1.msra.mxu0 %v804
        %3353 = vmatprep.subr.mxu0 %v807
        %3354 = vmatpush1.msra.mxu0 %v806
        %3355 = vmatprep.subr.mxu0 %v809
        %3356 = vmatpush1.msra.mxu0 %v808
        %3357 = vmatprep.subr.mxu0 %v811
        %3358 = vmatpush1.msra.mxu0 %v810
        %3359 = vmatprep.subr.mxu0 %v813
        %3360 = vmatpush1.msra.mxu0 %v812
        %3361 = vmatprep.subr.mxu0 %v815
        %3362 = vmatpush1.msra.mxu0 %v814
        %3363 = vmatprep.subr.mxu0 %v817
        %3364 = vmatpush1.msra.mxu0 %v816
        %3365 = vmatprep.subr.mxu0 %v819
        %3366 = vmatpush1.msra.mxu0 %v818
        %3367 = vmatprep.subr.mxu0 %v821
        %3368 = vmatpush1.msra.mxu0 %v820
        %3369 = vmatprep.subr.mxu0 %v823
        %3370 = vmatpush1.msra.mxu0 %v822
        %3371 = vmatprep.subr.mxu0 %v825
        %3372 = vmatpush1.msra.mxu0 %v824
        %3373 = vmatprep.subr.mxu0 %v827
        %3374 = vmatpush1.msra.mxu0 %v826
        %3375 = vmatprep.subr.mxu0 %v829
        %3376 = vmatpush1.msra.mxu0 %v828
        %3377 = vmatprep.subr.mxu0 %v831
        %3378 = vmatpush1.msra.mxu0 %v830
        %3379 = vmatprep.subr.mxu0 %v833
        %3380 = vmatpush1.msra.mxu0 %v832
        %3381 = vmatprep.subr.mxu0 %v835
        %3382 = vmatpush1.msra.mxu0 %v834
        %3383 = vmatprep.subr.mxu0 %v837
        %3384 = vmatpush1.msra.mxu0 %v836
        %3385 = vmatprep.subr.mxu0 %v839
        %3386 = vmatpush1.msra.mxu0 %v838
        %3387 = vmatprep.subr.mxu0 %v841
        %3388 = vmatpush1.msra.mxu0 %v840
        %3389 = vmatprep.subr.mxu0 %v843
        %3390 = vmatpush1.msra.mxu0 %v842
        %3391 = vmatprep.subr.mxu0 %v845
        %3392 = vmatpush1.msra.mxu0 %v844
        %3393 = vmatprep.subr.mxu0 %v847
        %3394 = vmatpush1.msra.mxu0 %v846
        %3395 = vmatprep.subr.mxu0 %v849
        %3396 = vmatpush1.msra.mxu0 %v848
        %3397 = vmatprep.subr.mxu0 %v851
        %3398 = vmatpush1.msra.mxu0 %v850
        %3399 = vmatprep.subr.mxu0 %v853
        %3400 = vmatpush1.msra.mxu0 %v852
        %3401 = vmatprep.subr.mxu0 %v855
        %3402 = vmatpush1.msra.mxu0 %v854
        %3403 = vmatprep.subr.mxu0 %v857
        %3404 = vmatpush1.msra.mxu0 %v856
        %3405 = vmatprep.subr.mxu0 %v859
        %3406 = vmatpush1.msra.mxu0 %v858
        %3407 = vmatprep.subr.mxu0 %v861
        %3408 = vmatpush1.msra.mxu0 %v860
        %3409 = vmatprep.subr.mxu0 %v863
        %3410 = vmatpush1.msra.mxu0 %v862
        %3411 = vmatprep.subr.mxu0 %v865
        %3412 = vmatpush1.msra.mxu0 %v864
        %v3413 = vand.u32 %v2799, 4294901760
        %v3414 = vsub.f32 %v2799, %v3413
        %v3415 = vand.u32 %v3414, 4294901760
        %3416 = vmatprep.mubr.f32.mxu0 %v3415
        %v3417 = vand.u32 %v2798, 4294901760
        %v3418 = vsub.f32 %v2798, %v3417
        %v3419 = vand.u32 %v3418, 4294901760
        %3420 = vmatmul.mubr.f32.gmra.mrb[0].mxu0 %v3419
        %v3421 = vpop.f32.mrb[0].mxu0
        %v3422 = vadd.f32 %v3345, %v3421
        %v3423 = vpop.f32.mrb[0].mxu0
        %v3424 = vadd.f32 %v3347, %v3423
        %3425 = vdwg.mxu0
        %v3426 = vsub.f32 %v803, %v803
        %v3427 = vand.u32 %v3426, 4294901760
        %3428 = vmatprep.subr.mxu0 %v3427
        %v3429 = vsub.f32 %v802, %v802
        %v3430 = vand.u32 %v3429, 4294901760
        %3431 = vmatpush1.msra.mxu0 %v3430
        %v3432 = vsub.f32 %v805, %v805
        %v3433 = vand.u32 %v3432, 4294901760
        %3434 = vmatprep.subr.mxu0 %v3433
        %v3435 = vsub.f32 %v804, %v804
        %v3436 = vand.u32 %v3435, 4294901760
        %3437 = vmatpush1.msra.mxu0 %v3436
        %v3438 = vsub.f32 %v807, %v807
        %v3439 = vand.u32 %v3438, 4294901760
        %3440 = vmatprep.subr.mxu0 %v3439
        %v3441 = vsub.f32 %v806, %v806
        %v3442 = vand.u32 %v3441, 4294901760
        %3443 = vmatpush1.msra.mxu0 %v3442
        %v3444 = vsub.f32 %v809, %v809
        %v3445 = vand.u32 %v3444, 4294901760
        %3446 = vmatprep.subr.mxu0 %v3445
        %v3447 = vsub.f32 %v808, %v808
        %v3448 = vand.u32 %v3447, 4294901760
        %3449 = vmatpush1.msra.mxu0 %v3448
        %v3450 = vsub.f32 %v811, %v811
        %v3451 = vand.u32 %v3450, 4294901760
        %3452 = vmatprep.subr.mxu0 %v3451
        %v3453 = vsub.f32 %v810, %v810
        %v3454 = vand.u32 %v3453, 4294901760
        %3455 = vmatpush1.msra.mxu0 %v3454
        %v3456 = vsub.f32 %v813, %v813
        %v3457 = vand.u32 %v3456, 4294901760
        %3458 = vmatprep.subr.mxu0 %v3457
        %v3459 = vsub.f32 %v812, %v812
        %v3460 = vand.u32 %v3459, 4294901760
        %3461 = vmatpush1.msra.mxu0 %v3460
        %v3462 = vsub.f32 %v815, %v815
        %v3463 = vand.u32 %v3462, 4294901760
        %3464 = vmatprep.subr.mxu0 %v3463
        %v3465 = vsub.f32 %v814, %v814
        %v3466 = vand.u32 %v3465, 4294901760
        %3467 = vmatpush1.msra.mxu0 %v3466
        %v3468 = vsub.f32 %v817, %v817
        %v3469 = vand.u32 %v3468, 4294901760
        %3470 = vmatprep.subr.mxu0 %v3469
        %v3471 = vsub.f32 %v816, %v816
        %v3472 = vand.u32 %v3471, 4294901760
        %3473 = vmatpush1.msra.mxu0 %v3472
        %v3474 = vsub.f32 %v819, %v819
        %v3475 = vand.u32 %v3474, 4294901760
        %3476 = vmatprep.subr.mxu0 %v3475
        %v3477 = vsub.f32 %v818, %v818
        %v3478 = vand.u32 %v3477, 4294901760
        %3479 = vmatpush1.msra.mxu0 %v3478
        %v3480 = vsub.f32 %v821, %v821
        %v3481 = vand.u32 %v3480, 4294901760
        %3482 = vmatprep.subr.mxu0 %v3481
        %v3483 = vsub.f32 %v820, %v820
        %v3484 = vand.u32 %v3483, 4294901760
        %3485 = vmatpush1.msra.mxu0 %v3484
        %v3486 = vsub.f32 %v823, %v823
        %v3487 = vand.u32 %v3486, 4294901760
        %3488 = vmatprep.subr.mxu0 %v3487
        %v3489 = vsub.f32 %v822, %v822
        %v3490 = vand.u32 %v3489, 4294901760
        %3491 = vmatpush1.msra.mxu0 %v3490
        %v3492 = vsub.f32 %v825, %v825
        %v3493 = vand.u32 %v3492, 4294901760
        %3494 = vmatprep.subr.mxu0 %v3493
        %v3495 = vsub.f32 %v824, %v824
        %v3496 = vand.u32 %v3495, 4294901760
        %3497 = vmatpush1.msra.mxu0 %v3496
        %v3498 = vsub.f32 %v827, %v827
        %v3499 = vand.u32 %v3498, 4294901760
        %3500 = vmatprep.subr.mxu0 %v3499
        %v3501 = vsub.f32 %v826, %v826
        %v3502 = vand.u32 %v3501, 4294901760
        %3503 = vmatpush1.msra.mxu0 %v3502
        %v3504 = vsub.f32 %v829, %v829
        %v3505 = vand.u32 %v3504, 4294901760
        %3506 = vmatprep.subr.mxu0 %v3505
        %v3507 = vsub.f32 %v828, %v828
        %v3508 = vand.u32 %v3507, 4294901760
        %3509 = vmatpush1.msra.mxu0 %v3508
        %v3510 = vsub.f32 %v831, %v831
        %v3511 = vand.u32 %v3510, 4294901760
        %3512 = vmatprep.subr.mxu0 %v3511
        %v3513 = vsub.f32 %v830, %v830
        %v3514 = vand.u32 %v3513, 4294901760
        %3515 = vmatpush1.msra.mxu0 %v3514
        %v3516 = vsub.f32 %v833, %v833
        %v3517 = vand.u32 %v3516, 4294901760
        %3518 = vmatprep.subr.mxu0 %v3517
        %v3519 = vsub.f32 %v832, %v832
        %v3520 = vand.u32 %v3519, 4294901760
        %3521 = vmatpush1.msra.mxu0 %v3520
        %v3522 = vsub.f32 %v835, %v835
        %v3523 = vand.u32 %v3522, 4294901760
        %3524 = vmatprep.subr.mxu0 %v3523
        %v3525 = vsub.f32 %v834, %v834
        %v3526 = vand.u32 %v3525, 4294901760
        %3527 = vmatpush1.msra.mxu0 %v3526
        %v3528 = vsub.f32 %v837, %v837
        %v3529 = vand.u32 %v3528, 4294901760
        %3530 = vmatprep.subr.mxu0 %v3529
        %v3531 = vsub.f32 %v836, %v836
        %v3532 = vand.u32 %v3531, 4294901760
        %3533 = vmatpush1.msra.mxu0 %v3532
        %v3534 = vsub.f32 %v839, %v839
        %v3535 = vand.u32 %v3534, 4294901760
        %3536 = vmatprep.subr.mxu0 %v3535
        %v3537 = vsub.f32 %v838, %v838
        %v3538 = vand.u32 %v3537, 4294901760
        %3539 = vmatpush1.msra.mxu0 %v3538
        %v3540 = vsub.f32 %v841, %v841
        %v3541 = vand.u32 %v3540, 4294901760
        %3542 = vmatprep.subr.mxu0 %v3541
        %v3543 = vsub.f32 %v840, %v840
        %v3544 = vand.u32 %v3543, 4294901760
        %3545 = vmatpush1.msra.mxu0 %v3544
        %v3546 = vsub.f32 %v843, %v843
        %v3547 = vand.u32 %v3546, 4294901760
        %3548 = vmatprep.subr.mxu0 %v3547
        %v3549 = vsub.f32 %v842, %v842
        %v3550 = vand.u32 %v3549, 4294901760
        %3551 = vmatpush1.msra.mxu0 %v3550
        %v3552 = vsub.f32 %v845, %v845
        %v3553 = vand.u32 %v3552, 4294901760
        %3554 = vmatprep.subr.mxu0 %v3553
        %v3555 = vsub.f32 %v844, %v844
        %v3556 = vand.u32 %v3555, 4294901760
        %3557 = vmatpush1.msra.mxu0 %v3556
        %v3558 = vsub.f32 %v847, %v847
        %v3559 = vand.u32 %v3558, 4294901760
        %3560 = vmatprep.subr.mxu0 %v3559
        %v3561 = vsub.f32 %v846, %v846
        %v3562 = vand.u32 %v3561, 4294901760
        %3563 = vmatpush1.msra.mxu0 %v3562
        %v3564 = vsub.f32 %v849, %v849
        %v3565 = vand.u32 %v3564, 4294901760
        %3566 = vmatprep.subr.mxu0 %v3565
        %v3567 = vsub.f32 %v848, %v848
        %v3568 = vand.u32 %v3567, 4294901760
        %3569 = vmatpush1.msra.mxu0 %v3568
        %v3570 = vsub.f32 %v851, %v851
        %v3571 = vand.u32 %v3570, 4294901760
        %3572 = vmatprep.subr.mxu0 %v3571
        %v3573 = vsub.f32 %v850, %v850
        %v3574 = vand.u32 %v3573, 4294901760
        %3575 = vmatpush1.msra.mxu0 %v3574
        %v3576 = vsub.f32 %v853, %v853
        %v3577 = vand.u32 %v3576, 4294901760
        %3578 = vmatprep.subr.mxu0 %v3577
        %v3579 = vsub.f32 %v852, %v852
        %v3580 = vand.u32 %v3579, 4294901760
        %3581 = vmatpush1.msra.mxu0 %v3580
        %v3582 = vsub.f32 %v855, %v855
        %v3583 = vand.u32 %v3582, 4294901760
        %3584 = vmatprep.subr.mxu0 %v3583
        %v3585 = vsub.f32 %v854, %v854
        %v3586 = vand.u32 %v3585, 4294901760
        %3587 = vmatpush1.msra.mxu0 %v3586
        %v3588 = vsub.f32 %v857, %v857
        %v3589 = vand.u32 %v3588, 4294901760
        %3590 = vmatprep.subr.mxu0 %v3589
        %v3591 = vsub.f32 %v856, %v856
        %v3592 = vand.u32 %v3591, 4294901760
        %3593 = vmatpush1.msra.mxu0 %v3592
        %v3594 = vsub.f32 %v859, %v859
        %v3595 = vand.u32 %v3594, 4294901760
        %3596 = vmatprep.subr.mxu0 %v3595
        %v3597 = vsub.f32 %v858, %v858
        %v3598 = vand.u32 %v3597, 4294901760
        %3599 = vmatpush1.msra.mxu0 %v3598
        %v3600 = vsub.f32 %v861, %v861
        %v3601 = vand.u32 %v3600, 4294901760
        %3602 = vmatprep.subr.mxu0 %v3601
        %v3603 = vsub.f32 %v860, %v860
        %v3604 = vand.u32 %v3603, 4294901760
        %3605 = vmatpush1.msra.mxu0 %v3604
        %v3606 = vsub.f32 %v863, %v863
        %v3607 = vand.u32 %v3606, 4294901760
        %3608 = vmatprep.subr.mxu0 %v3607
        %v3609 = vsub.f32 %v862, %v862
        %v3610 = vand.u32 %v3609, 4294901760
        %3611 = vmatpush1.msra.mxu0 %v3610
        %v3612 = vsub.f32 %v865, %v865
        %v3613 = vand.u32 %v3612, 4294901760
        %3614 = vmatprep.subr.mxu0 %v3613
        %v3615 = vsub.f32 %v864, %v864
        %v3616 = vand.u32 %v3615, 4294901760
        %3617 = vmatpush1.msra.mxu0 %v3616
        %v3618 = vand.u32 %v2799, 4294901760
        %3619 = vmatprep.mubr.f32.mxu0 %v3618
        %v3620 = vand.u32 %v2798, 4294901760
        %3621 = vmatmul.mubr.f32.gmra.mrb[0].mxu0 %v3620
        %v3622 = vpop.f32.mrb[0].mxu0
        %v3623 = vadd.f32 %v3422, %v3622
        %v3624 = vpop.f32.mrb[0].mxu0
        %v3625 = vadd.f32 %v3424, %v3624
        %3626 = vdwg.mxu0
        %3627 = vmatprep.subr.mxu0 %v803
        %3628 = vmatpush1.msra.mxu0 %v802
        %3629 = vmatprep.subr.mxu0 %v805
        %3630 = vmatpush1.msra.mxu0 %v804
        %3631 = vmatprep.subr.mxu0 %v807
        %3632 = vmatpush1.msra.mxu0 %v806
        %3633 = vmatprep.subr.mxu0 %v809
        %3634 = vmatpush1.msra.mxu0 %v808
        %3635 = vmatprep.subr.mxu0 %v811
        %3636 = vmatpush1.msra.mxu0 %v810
        %3637 = vmatprep.subr.mxu0 %v813
        %3638 = vmatpush1.msra.mxu0 %v812
        %3639 = vmatprep.subr.mxu0 %v815
        %3640 = vmatpush1.msra.mxu0 %v814
        %3641 = vmatprep.subr.mxu0 %v817
        %3642 = vmatpush1.msra.mxu0 %v816
        %3643 = vmatprep.subr.mxu0 %v819
        %3644 = vmatpush1.msra.mxu0 %v818
        %3645 = vmatprep.subr.mxu0 %v821
        %3646 = vmatpush1.msra.mxu0 %v820
        %3647 = vmatprep.subr.mxu0 %v823
        %3648 = vmatpush1.msra.mxu0 %v822
        %3649 = vmatprep.subr.mxu0 %v825
        %3650 = vmatpush1.msra.mxu0 %v824
        %3651 = vmatprep.subr.mxu0 %v827
        %3652 = vmatpush1.msra.mxu0 %v826
        %3653 = vmatprep.subr.mxu0 %v829
        %3654 = vmatpush1.msra.mxu0 %v828
        %3655 = vmatprep.subr.mxu0 %v831
        %3656 = vmatpush1.msra.mxu0 %v830
        %3657 = vmatprep.subr.mxu0 %v833
        %3658 = vmatpush1.msra.mxu0 %v832
        %3659 = vmatprep.subr.mxu0 %v835
        %3660 = vmatpush1.msra.mxu0 %v834
        %3661 = vmatprep.subr.mxu0 %v837
        %3662 = vmatpush1.msra.mxu0 %v836
        %3663 = vmatprep.subr.mxu0 %v839
        %3664 = vmatpush1.msra.mxu0 %v838
        %3665 = vmatprep.subr.mxu0 %v841
        %3666 = vmatpush1.msra.mxu0 %v840
        %3667 = vmatprep.subr.mxu0 %v843
        %3668 = vmatpush1.msra.mxu0 %v842
        %3669 = vmatprep.subr.mxu0 %v845
        %3670 = vmatpush1.msra.mxu0 %v844
        %3671 = vmatprep.subr.mxu0 %v847
        %3672 = vmatpush1.msra.mxu0 %v846
        %3673 = vmatprep.subr.mxu0 %v849
        %3674 = vmatpush1.msra.mxu0 %v848
        %3675 = vmatprep.subr.mxu0 %v851
        %3676 = vmatpush1.msra.mxu0 %v850
        %3677 = vmatprep.subr.mxu0 %v853
        %3678 = vmatpush1.msra.mxu0 %v852
        %3679 = vmatprep.subr.mxu0 %v855
        %3680 = vmatpush1.msra.mxu0 %v854
        %3681 = vmatprep.subr.mxu0 %v857
        %3682 = vmatpush1.msra.mxu0 %v856
        %3683 = vmatprep.subr.mxu0 %v859
        %3684 = vmatpush1.msra.mxu0 %v858
        %3685 = vmatprep.subr.mxu0 %v861
        %3686 = vmatpush1.msra.mxu0 %v860
        %3687 = vmatprep.subr.mxu0 %v863
        %3688 = vmatpush1.msra.mxu0 %v862
        %3689 = vmatprep.subr.mxu0 %v865
        %3690 = vmatpush1.msra.mxu0 %v864
        %v3691 = vand.u32 %v2799, 4294901760
        %3692 = vmatprep.mubr.f32.mxu0 %v3691
        %v3693 = vand.u32 %v2798, 4294901760
        %3694 = vmatmul.mubr.f32.gmra.mrb[0].mxu0 %v3693
        %v3695 = vpop.f32.mrb[0].mxu0
        %v3696 = vadd.f32 %v3623, %v3695
        %v3697 = vpop.f32.mrb[0].mxu0
        %v3698 = vadd.f32 %v3625, %v3697
        %3699 = vdwg.mxu0
        %s3700 = sld [smem:[#allocation2 + $0x102]]
        %v3701 = vstv %s3700
        %v3702 = vmul.f32 %v3701, %v3696
        %v3703 = vmul.f32 %v3701, %v3698
        %s3704 = sld [smem:[#allocation2 + $0x100]]
        %3705 = vrot.lane.b32.xlu0 %v3696, 2
        %v3706 = vpop.permute.xlu0 %3705
        %3707 = vrot.lane.b32.xlu0 %v3698, 2
        %v3708 = vpop.permute.xlu0 %3707
        %v3709 = vsel %vm487, %v3706, %v3708
        %v3710 = vsel %vm487, %v3708, %v3706
        %v3711 = vstv %s3704
        %v3712 = vmul.f32 %v3711, %v3710
        %v3713 = vmul.f32 %v3711, %v3709
        %v3714 = vadd.f32 %v3702, %v3712
        %v3715 = vadd.f32 %v3703, %v3713
        %s3716 = sld [smem:[#allocation2 + $0x101]]
        %3717 = vrot.lane.b32.xlu0 %v3696, 1
        %v3718 = vpop.permute.xlu0 %3717
        %3719 = vrot.lane.b32.xlu0 %v3698, 1
        %v3720 = vpop.permute.xlu0 %3719
        %v3721 = vsel %vm510, %v3718, %v3720
        %v3722 = vsel %vm510, %v3720, %v3718
        %v3723 = vstv %s3716
        %v3724 = vmul.f32 %v3723, %v3722
        %v3725 = vmul.f32 %v3723, %v3721
        %v3726 = vadd.f32 %v3714, %v3724
        %v3727 = vadd.f32 %v3715, %v3725
        %s3728 = sld [smem:[#allocation2 + $0x103]]
        %3729 = vrot.lane.b32.xlu0 %v3696, 127
        %v3730 = vpop.permute.xlu0 %3729
        %3731 = vrot.lane.b32.xlu0 %v3698, 127
        %v3732 = vpop.permute.xlu0 %3731
        %v3733 = vsel %vm533, %v3730, %v3732
        %v3734 = vsel %vm533, %v3732, %v3730
        %v3735 = vstv %s3728
        %v3736 = vmul.f32 %v3735, %v3733
        %v3737 = vmul.f32 %v3735, %v3734
        %v3738 = vadd.f32 %v3726, %v3736
        %v3739 = vadd.f32 %v3727, %v3737
        %s3740 = sld [smem:[#allocation2 + $0x104]]
        %3741 = vrot.lane.b32.xlu0 %v3696, 126
        %v3742 = vpop.permute.xlu0 %3741
        %3743 = vrot.lane.b32.xlu0 %v3698, 126
        %v3744 = vpop.permute.xlu0 %3743
        %v3745 = vsel %vm556, %v3742, %v3744
        %v3746 = vsel %vm556, %v3744, %v3742
        %v3747 = vstv %s3740
        %v3748 = vmul.f32 %v3747, %v3745
        %v3749 = vmul.f32 %v3747, %v3746
        %v3750 = vadd.f32 %v3738, %v3748
        %v3751 = vadd.f32 %v3739, %v3749
        %s3752 = sld [smem:[#allocation4 + $0x2]]
        %v3753 = vstv %s3752
        %v3754 = vadd.f32 %v3750, %v3753
        %v3755 = vadd.f32 %v3751, %v3753
        %v3756 = vmax.f32 %v3754, 0.0
        %v3757 = vmax.f32 %v3755, 0.0
        %vm3758 = vcmp.lt.s32.totalorder %v486, 125
        %vm3759 = vcmp.lt.s32.totalorder %v580, 125
        %v3760 = vsel %vm3758, %v3756, 0.0
        %v3761 = vsel %vm3759, %v3757, 0.0
        %3762 = vrot.lane.b32.xlu0 %v3760, 1
        %v3763 = vpop.permute.xlu0 %3762
        %3764 = vrot.lane.b32.xlu0 %v3761, 1
        %v3765 = vpop.permute.xlu0 %3764
        %v3766 = vsel %vm510, %v3763, %v3765
        %v3767 = vsel %vm510, %v3765, %v3763
        %v3768 = vmax.f32 %v3767, %v3760
        %v3769 = vmax.f32 %v3766, %v3761
        %3770 = vmatprep.subr.mxu0 %v803
        %3771 = vmatpush1.msra.mxu0 %v802
        %3772 = vmatprep.subr.mxu0 %v805
        %3773 = vmatpush1.msra.mxu0 %v804
        %3774 = vmatprep.subr.mxu0 %v807
        %3775 = vmatpush1.msra.mxu0 %v806
        %3776 = vmatprep.subr.mxu0 %v809
        %3777 = vmatpush1.msra.mxu0 %v808
        %3778 = vmatprep.subr.mxu0 %v811
        %3779 = vmatpush1.msra.mxu0 %v810
        %3780 = vmatprep.subr.mxu0 %v813
        %3781 = vmatpush1.msra.mxu0 %v812
        %3782 = vmatprep.subr.mxu0 %v815
        %3783 = vmatpush1.msra.mxu0 %v814
        %3784 = vmatprep.subr.mxu0 %v817
        %3785 = vmatpush1.msra.mxu0 %v816
        %3786 = vmatprep.subr.mxu0 %v819
        %3787 = vmatpush1.msra.mxu0 %v818
        %3788 = vmatprep.subr.mxu0 %v821
        %3789 = vmatpush1.msra.mxu0 %v820
        %3790 = vmatprep.subr.mxu0 %v823
        %3791 = vmatpush1.msra.mxu0 %v822
        %3792 = vmatprep.subr.mxu0 %v825
        %3793 = vmatpush1.msra.mxu0 %v824
        %3794 = vmatprep.subr.mxu0 %v827
        %3795 = vmatpush1.msra.mxu0 %v826
        %3796 = vmatprep.subr.mxu0 %v829
        %3797 = vmatpush1.msra.mxu0 %v828
        %3798 = vmatprep.subr.mxu0 %v831
        %3799 = vmatpush1.msra.mxu0 %v830
        %3800 = vmatprep.subr.mxu0 %v833
        %3801 = vmatpush1.msra.mxu0 %v832
        %3802 = vmatprep.subr.mxu0 %v835
        %3803 = vmatpush1.msra.mxu0 %v834
        %3804 = vmatprep.subr.mxu0 %v837
        %3805 = vmatpush1.msra.mxu0 %v836
        %3806 = vmatprep.subr.mxu0 %v839
        %3807 = vmatpush1.msra.mxu0 %v838
        %3808 = vmatprep.subr.mxu0 %v841
        %3809 = vmatpush1.msra.mxu0 %v840
        %3810 = vmatprep.subr.mxu0 %v843
        %3811 = vmatpush1.msra.mxu0 %v842
        %3812 = vmatprep.subr.mxu0 %v845
        %3813 = vmatpush1.msra.mxu0 %v844
        %3814 = vmatprep.subr.mxu0 %v847
        %3815 = vmatpush1.msra.mxu0 %v846
        %3816 = vmatprep.subr.mxu0 %v849
        %3817 = vmatpush1.msra.mxu0 %v848
        %3818 = vmatprep.subr.mxu0 %v851
        %3819 = vmatpush1.msra.mxu0 %v850
        %3820 = vmatprep.subr.mxu0 %v853
        %3821 = vmatpush1.msra.mxu0 %v852
        %3822 = vmatprep.subr.mxu0 %v855
        %3823 = vmatpush1.msra.mxu0 %v854
        %3824 = vmatprep.subr.mxu0 %v857
        %3825 = vmatpush1.msra.mxu0 %v856
        %3826 = vmatprep.subr.mxu0 %v859
        %3827 = vmatpush1.msra.mxu0 %v858
        %3828 = vmatprep.subr.mxu0 %v861
        %3829 = vmatpush1.msra.mxu0 %v860
        %3830 = vmatprep.subr.mxu0 %v863
        %3831 = vmatpush1.msra.mxu0 %v862
        %3832 = vmatprep.subr.mxu0 %v865
        %3833 = vmatpush1.msra.mxu0 %v864
        %v3834 = vand.u32 %v3769, 4294901760
        %v3835 = vsub.f32 %v3769, %v3834
        %v3836 = vand.u32 %v3835, 4294901760
        %v3837 = vsub.f32 %v3835, %v3836
        %v3838 = vand.u32 %v3837, 4294901760
        %3839 = vmatprep.mubr.f32.mxu0 %v3838
        %v3840 = vand.u32 %v3768, 4294901760
        %v3841 = vsub.f32 %v3768, %v3840
        %v3842 = vand.u32 %v3841, 4294901760
        %v3843 = vsub.f32 %v3841, %v3842
        %v3844 = vand.u32 %v3843, 4294901760
        %3845 = vmatmul.mubr.f32.gmra.mrb[0].mxu0 %v3844
        %v3846 = vpop.f32.mrb[0].mxu0
        %v3847 = vadd.f32 0.0, %v3846
        %v3848 = vpop.f32.mrb[0].mxu0
        %v3849 = vadd.f32 0.0, %v3848
        %3850 = vdwg.mxu0
        %v3851 = vsub.f32 %v803, %v803
        %v3852 = vand.u32 %v3851, 4294901760
        %v3853 = vsub.f32 %v3851, %v3852
        %v3854 = vand.u32 %v3853, 4294901760
        %3855 = vmatprep.subr.mxu0 %v3854
        %v3856 = vsub.f32 %v802, %v802
        %v3857 = vand.u32 %v3856, 4294901760
        %v3858 = vsub.f32 %v3856, %v3857
        %v3859 = vand.u32 %v3858, 4294901760
        %3860 = vmatpush1.msra.mxu0 %v3859
        %v3861 = vsub.f32 %v805, %v805
        %v3862 = vand.u32 %v3861, 4294901760
        %v3863 = vsub.f32 %v3861, %v3862
        %v3864 = vand.u32 %v3863, 4294901760
        %3865 = vmatprep.subr.mxu0 %v3864
        %v3866 = vsub.f32 %v804, %v804
        %v3867 = vand.u32 %v3866, 4294901760
        %v3868 = vsub.f32 %v3866, %v3867
        %v3869 = vand.u32 %v3868, 4294901760
        %3870 = vmatpush1.msra.mxu0 %v3869
        %v3871 = vsub.f32 %v807, %v807
        %v3872 = vand.u32 %v3871, 4294901760
        %v3873 = vsub.f32 %v3871, %v3872
        %v3874 = vand.u32 %v3873, 4294901760
        %3875 = vmatprep.subr.mxu0 %v3874
        %v3876 = vsub.f32 %v806, %v806
        %v3877 = vand.u32 %v3876, 4294901760
        %v3878 = vsub.f32 %v3876, %v3877
        %v3879 = vand.u32 %v3878, 4294901760
        %3880 = vmatpush1.msra.mxu0 %v3879
        %v3881 = vsub.f32 %v809, %v809
        %v3882 = vand.u32 %v3881, 4294901760
        %v3883 = vsub.f32 %v3881, %v3882
        %v3884 = vand.u32 %v3883, 4294901760
        %3885 = vmatprep.subr.mxu0 %v3884
        %v3886 = vsub.f32 %v808, %v808
        %v3887 = vand.u32 %v3886, 4294901760
        %v3888 = vsub.f32 %v3886, %v3887
        %v3889 = vand.u32 %v3888, 4294901760
        %3890 = vmatpush1.msra.mxu0 %v3889
        %v3891 = vsub.f32 %v811, %v811
        %v3892 = vand.u32 %v3891, 4294901760
        %v3893 = vsub.f32 %v3891, %v3892
        %v3894 = vand.u32 %v3893, 4294901760
        %3895 = vmatprep.subr.mxu0 %v3894
        %v3896 = vsub.f32 %v810, %v810
        %v3897 = vand.u32 %v3896, 4294901760
        %v3898 = vsub.f32 %v3896, %v3897
        %v3899 = vand.u32 %v3898, 4294901760
        %3900 = vmatpush1.msra.mxu0 %v3899
        %v3901 = vsub.f32 %v813, %v813
        %v3902 = vand.u32 %v3901, 4294901760
        %v3903 = vsub.f32 %v3901, %v3902
        %v3904 = vand.u32 %v3903, 4294901760
        %3905 = vmatprep.subr.mxu0 %v3904
        %v3906 = vsub.f32 %v812, %v812
        %v3907 = vand.u32 %v3906, 4294901760
        %v3908 = vsub.f32 %v3906, %v3907
        %v3909 = vand.u32 %v3908, 4294901760
        %3910 = vmatpush1.msra.mxu0 %v3909
        %v3911 = vsub.f32 %v815, %v815
        %v3912 = vand.u32 %v3911, 4294901760
        %v3913 = vsub.f32 %v3911, %v3912
        %v3914 = vand.u32 %v3913, 4294901760
        %3915 = vmatprep.subr.mxu0 %v3914
        %v3916 = vsub.f32 %v814, %v814
        %v3917 = vand.u32 %v3916, 4294901760
        %v3918 = vsub.f32 %v3916, %v3917
        %v3919 = vand.u32 %v3918, 4294901760
        %3920 = vmatpush1.msra.mxu0 %v3919
        %v3921 = vsub.f32 %v817, %v817
        %v3922 = vand.u32 %v3921, 4294901760
        %v3923 = vsub.f32 %v3921, %v3922
        %v3924 = vand.u32 %v3923, 4294901760
        %3925 = vmatprep.subr.mxu0 %v3924
        %v3926 = vsub.f32 %v816, %v816
        %v3927 = vand.u32 %v3926, 4294901760
        %v3928 = vsub.f32 %v3926, %v3927
        %v3929 = vand.u32 %v3928, 4294901760
        %3930 = vmatpush1.msra.mxu0 %v3929
        %v3931 = vsub.f32 %v819, %v819
        %v3932 = vand.u32 %v3931, 4294901760
        %v3933 = vsub.f32 %v3931, %v3932
        %v3934 = vand.u32 %v3933, 4294901760
        %3935 = vmatprep.subr.mxu0 %v3934
        %v3936 = vsub.f32 %v818, %v818
        %v3937 = vand.u32 %v3936, 4294901760
        %v3938 = vsub.f32 %v3936, %v3937
        %v3939 = vand.u32 %v3938, 4294901760
        %3940 = vmatpush1.msra.mxu0 %v3939
        %v3941 = vsub.f32 %v821, %v821
        %v3942 = vand.u32 %v3941, 4294901760
        %v3943 = vsub.f32 %v3941, %v3942
        %v3944 = vand.u32 %v3943, 4294901760
        %3945 = vmatprep.subr.mxu0 %v3944
        %v3946 = vsub.f32 %v820, %v820
        %v3947 = vand.u32 %v3946, 4294901760
        %v3948 = vsub.f32 %v3946, %v3947
        %v3949 = vand.u32 %v3948, 4294901760
        %3950 = vmatpush1.msra.mxu0 %v3949
        %v3951 = vsub.f32 %v823, %v823
        %v3952 = vand.u32 %v3951, 4294901760
        %v3953 = vsub.f32 %v3951, %v3952
        %v3954 = vand.u32 %v3953, 4294901760
        %3955 = vmatprep.subr.mxu0 %v3954
        %v3956 = vsub.f32 %v822, %v822
        %v3957 = vand.u32 %v3956, 4294901760
        %v3958 = vsub.f32 %v3956, %v3957
        %v3959 = vand.u32 %v3958, 4294901760
        %3960 = vmatpush1.msra.mxu0 %v3959
        %v3961 = vsub.f32 %v825, %v825
        %v3962 = vand.u32 %v3961, 4294901760
        %v3963 = vsub.f32 %v3961, %v3962
        %v3964 = vand.u32 %v3963, 4294901760
        %3965 = vmatprep.subr.mxu0 %v3964
        %v3966 = vsub.f32 %v824, %v824
        %v3967 = vand.u32 %v3966, 4294901760
        %v3968 = vsub.f32 %v3966, %v3967
        %v3969 = vand.u32 %v3968, 4294901760
        %3970 = vmatpush1.msra.mxu0 %v3969
        %v3971 = vsub.f32 %v827, %v827
        %v3972 = vand.u32 %v3971, 4294901760
        %v3973 = vsub.f32 %v3971, %v3972
        %v3974 = vand.u32 %v3973, 4294901760
        %3975 = vmatprep.subr.mxu0 %v3974
        %v3976 = vsub.f32 %v826, %v826
        %v3977 = vand.u32 %v3976, 4294901760
        %v3978 = vsub.f32 %v3976, %v3977
        %v3979 = vand.u32 %v3978, 4294901760
        %3980 = vmatpush1.msra.mxu0 %v3979
        %v3981 = vsub.f32 %v829, %v829
        %v3982 = vand.u32 %v3981, 4294901760
        %v3983 = vsub.f32 %v3981, %v3982
        %v3984 = vand.u32 %v3983, 4294901760
        %3985 = vmatprep.subr.mxu0 %v3984
        %v3986 = vsub.f32 %v828, %v828
        %v3987 = vand.u32 %v3986, 4294901760
        %v3988 = vsub.f32 %v3986, %v3987
        %v3989 = vand.u32 %v3988, 4294901760
        %3990 = vmatpush1.msra.mxu0 %v3989
        %v3991 = vsub.f32 %v831, %v831
        %v3992 = vand.u32 %v3991, 4294901760
        %v3993 = vsub.f32 %v3991, %v3992
        %v3994 = vand.u32 %v3993, 4294901760
        %3995 = vmatprep.subr.mxu0 %v3994
        %v3996 = vsub.f32 %v830, %v830
        %v3997 = vand.u32 %v3996, 4294901760
        %v3998 = vsub.f32 %v3996, %v3997
        %v3999 = vand.u32 %v3998, 4294901760
        %4000 = vmatpush1.msra.mxu0 %v3999
        %v4001 = vsub.f32 %v833, %v833
        %v4002 = vand.u32 %v4001, 4294901760
        %v4003 = vsub.f32 %v4001, %v4002
        %v4004 = vand.u32 %v4003, 4294901760
        %4005 = vmatprep.subr.mxu0 %v4004
        %v4006 = vsub.f32 %v832, %v832
        %v4007 = vand.u32 %v4006, 4294901760
        %v4008 = vsub.f32 %v4006, %v4007
        %v4009 = vand.u32 %v4008, 4294901760
        %4010 = vmatpush1.msra.mxu0 %v4009
        %v4011 = vsub.f32 %v835, %v835
        %v4012 = vand.u32 %v4011, 4294901760
        %v4013 = vsub.f32 %v4011, %v4012
        %v4014 = vand.u32 %v4013, 4294901760
        %4015 = vmatprep.subr.mxu0 %v4014
        %v4016 = vsub.f32 %v834, %v834
        %v4017 = vand.u32 %v4016, 4294901760
        %v4018 = vsub.f32 %v4016, %v4017
        %v4019 = vand.u32 %v4018, 4294901760
        %4020 = vmatpush1.msra.mxu0 %v4019
        %v4021 = vsub.f32 %v837, %v837
        %v4022 = vand.u32 %v4021, 4294901760
        %v4023 = vsub.f32 %v4021, %v4022
        %v4024 = vand.u32 %v4023, 4294901760
        %4025 = vmatprep.subr.mxu0 %v4024
        %v4026 = vsub.f32 %v836, %v836
        %v4027 = vand.u32 %v4026, 4294901760
        %v4028 = vsub.f32 %v4026, %v4027
        %v4029 = vand.u32 %v4028, 4294901760
        %4030 = vmatpush1.msra.mxu0 %v4029
        %v4031 = vsub.f32 %v839, %v839
        %v4032 = vand.u32 %v4031, 4294901760
        %v4033 = vsub.f32 %v4031, %v4032
        %v4034 = vand.u32 %v4033, 4294901760
        %4035 = vmatprep.subr.mxu0 %v4034
        %v4036 = vsub.f32 %v838, %v838
        %v4037 = vand.u32 %v4036, 4294901760
        %v4038 = vsub.f32 %v4036, %v4037
        %v4039 = vand.u32 %v4038, 4294901760
        %4040 = vmatpush1.msra.mxu0 %v4039
        %v4041 = vsub.f32 %v841, %v841
        %v4042 = vand.u32 %v4041, 4294901760
        %v4043 = vsub.f32 %v4041, %v4042
        %v4044 = vand.u32 %v4043, 4294901760
        %4045 = vmatprep.subr.mxu0 %v4044
        %v4046 = vsub.f32 %v840, %v840
        %v4047 = vand.u32 %v4046, 4294901760
        %v4048 = vsub.f32 %v4046, %v4047
        %v4049 = vand.u32 %v4048, 4294901760
        %4050 = vmatpush1.msra.mxu0 %v4049
        %v4051 = vsub.f32 %v843, %v843
        %v4052 = vand.u32 %v4051, 4294901760
        %v4053 = vsub.f32 %v4051, %v4052
        %v4054 = vand.u32 %v4053, 4294901760
        %4055 = vmatprep.subr.mxu0 %v4054
        %v4056 = vsub.f32 %v842, %v842
        %v4057 = vand.u32 %v4056, 4294901760
        %v4058 = vsub.f32 %v4056, %v4057
        %v4059 = vand.u32 %v4058, 4294901760
        %4060 = vmatpush1.msra.mxu0 %v4059
        %v4061 = vsub.f32 %v845, %v845
        %v4062 = vand.u32 %v4061, 4294901760
        %v4063 = vsub.f32 %v4061, %v4062
        %v4064 = vand.u32 %v4063, 4294901760
        %4065 = vmatprep.subr.mxu0 %v4064
        %v4066 = vsub.f32 %v844, %v844
        %v4067 = vand.u32 %v4066, 4294901760
        %v4068 = vsub.f32 %v4066, %v4067
        %v4069 = vand.u32 %v4068, 4294901760
        %4070 = vmatpush1.msra.mxu0 %v4069
        %v4071 = vsub.f32 %v847, %v847
        %v4072 = vand.u32 %v4071, 4294901760
        %v4073 = vsub.f32 %v4071, %v4072
        %v4074 = vand.u32 %v4073, 4294901760
        %4075 = vmatprep.subr.mxu0 %v4074
        %v4076 = vsub.f32 %v846, %v846
        %v4077 = vand.u32 %v4076, 4294901760
        %v4078 = vsub.f32 %v4076, %v4077
        %v4079 = vand.u32 %v4078, 4294901760
        %4080 = vmatpush1.msra.mxu0 %v4079
        %v4081 = vsub.f32 %v849, %v849
        %v4082 = vand.u32 %v4081, 4294901760
        %v4083 = vsub.f32 %v4081, %v4082
        %v4084 = vand.u32 %v4083, 4294901760
        %4085 = vmatprep.subr.mxu0 %v4084
        %v4086 = vsub.f32 %v848, %v848
        %v4087 = vand.u32 %v4086, 4294901760
        %v4088 = vsub.f32 %v4086, %v4087
        %v4089 = vand.u32 %v4088, 4294901760
        %4090 = vmatpush1.msra.mxu0 %v4089
        %v4091 = vsub.f32 %v851, %v851
        %v4092 = vand.u32 %v4091, 4294901760
        %v4093 = vsub.f32 %v4091, %v4092
        %v4094 = vand.u32 %v4093, 4294901760
        %4095 = vmatprep.subr.mxu0 %v4094
        %v4096 = vsub.f32 %v850, %v850
        %v4097 = vand.u32 %v4096, 4294901760
        %v4098 = vsub.f32 %v4096, %v4097
        %v4099 = vand.u32 %v4098, 4294901760
        %4100 = vmatpush1.msra.mxu0 %v4099
        %v4101 = vsub.f32 %v853, %v853
        %v4102 = vand.u32 %v4101, 4294901760
        %v4103 = vsub.f32 %v4101, %v4102
        %v4104 = vand.u32 %v4103, 4294901760
        %4105 = vmatprep.subr.mxu0 %v4104
        %v4106 = vsub.f32 %v852, %v852
        %v4107 = vand.u32 %v4106, 4294901760
        %v4108 = vsub.f32 %v4106, %v4107
        %v4109 = vand.u32 %v4108, 4294901760
        %4110 = vmatpush1.msra.mxu0 %v4109
        %v4111 = vsub.f32 %v855, %v855
        %v4112 = vand.u32 %v4111, 4294901760
        %v4113 = vsub.f32 %v4111, %v4112
        %v4114 = vand.u32 %v4113, 4294901760
        %4115 = vmatprep.subr.mxu0 %v4114
        %v4116 = vsub.f32 %v854, %v854
        %v4117 = vand.u32 %v4116, 4294901760
        %v4118 = vsub.f32 %v4116, %v4117
        %v4119 = vand.u32 %v4118, 4294901760
        %4120 = vmatpush1.msra.mxu0 %v4119
        %v4121 = vsub.f32 %v857, %v857
        %v4122 = vand.u32 %v4121, 4294901760
        %v4123 = vsub.f32 %v4121, %v4122
        %v4124 = vand.u32 %v4123, 4294901760
        %4125 = vmatprep.subr.mxu0 %v4124
        %v4126 = vsub.f32 %v856, %v856
        %v4127 = vand.u32 %v4126, 4294901760
        %v4128 = vsub.f32 %v4126, %v4127
        %v4129 = vand.u32 %v4128, 4294901760
        %4130 = vmatpush1.msra.mxu0 %v4129
        %v4131 = vsub.f32 %v859, %v859
        %v4132 = vand.u32 %v4131, 4294901760
        %v4133 = vsub.f32 %v4131, %v4132
        %v4134 = vand.u32 %v4133, 4294901760
        %4135 = vmatprep.subr.mxu0 %v4134
        %v4136 = vsub.f32 %v858, %v858
        %v4137 = vand.u32 %v4136, 4294901760
        %v4138 = vsub.f32 %v4136, %v4137
        %v4139 = vand.u32 %v4138, 4294901760
        %4140 = vmatpush1.msra.mxu0 %v4139
        %v4141 = vsub.f32 %v861, %v861
        %v4142 = vand.u32 %v4141, 4294901760
        %v4143 = vsub.f32 %v4141, %v4142
        %v4144 = vand.u32 %v4143, 4294901760
        %4145 = vmatprep.subr.mxu0 %v4144
        %v4146 = vsub.f32 %v860, %v860
        %v4147 = vand.u32 %v4146, 4294901760
        %v4148 = vsub.f32 %v4146, %v4147
        %v4149 = vand.u32 %v4148, 4294901760
        %4150 = vmatpush1.msra.mxu0 %v4149
        %v4151 = vsub.f32 %v863, %v863
        %v4152 = vand.u32 %v4151, 4294901760
        %v4153 = vsub.f32 %v4151, %v4152
        %v4154 = vand.u32 %v4153, 4294901760
        %4155 = vmatprep.subr.mxu0 %v4154
        %v4156 = vsub.f32 %v862, %v862
        %v4157 = vand.u32 %v4156, 4294901760
        %v4158 = vsub.f32 %v4156, %v4157
        %v4159 = vand.u32 %v4158, 4294901760
        %4160 = vmatpush1.msra.mxu0 %v4159
        %v4161 = vsub.f32 %v865, %v865
        %v4162 = vand.u32 %v4161, 4294901760
        %v4163 = vsub.f32 %v4161, %v4162
        %v4164 = vand.u32 %v4163, 4294901760
        %4165 = vmatprep.subr.mxu0 %v4164
        %v4166 = vsub.f32 %v864, %v864
        %v4167 = vand.u32 %v4166, 4294901760
        %v4168 = vsub.f32 %v4166, %v4167
        %v4169 = vand.u32 %v4168, 4294901760
        %4170 = vmatpush1.msra.mxu0 %v4169
        %v4171 = vand.u32 %v3769, 4294901760
        %4172 = vmatprep.mubr.f32.mxu0 %v4171
        %v4173 = vand.u32 %v3768, 4294901760
        %4174 = vmatmul.mubr.f32.gmra.mrb[0].mxu0 %v4173
        %v4175 = vpop.f32.mrb[0].mxu0
        %v4176 = vadd.f32 %v3847, %v4175
        %v4177 = vpop.f32.mrb[0].mxu0
        %v4178 = vadd.f32 %v3849, %v4177
        %4179 = vdwg.mxu0
        %v4180 = vsub.f32 %v803, %v803
        %4181 = vmatprep.subr.mxu0 %v4180
        %v4182 = vsub.f32 %v802, %v802
        %4183 = vmatpush1.msra.mxu0 %v4182
        %v4184 = vsub.f32 %v805, %v805
        %4185 = vmatprep.subr.mxu0 %v4184
        %v4186 = vsub.f32 %v804, %v804
        %4187 = vmatpush1.msra.mxu0 %v4186
        %v4188 = vsub.f32 %v807, %v807
        %4189 = vmatprep.subr.mxu0 %v4188
        %v4190 = vsub.f32 %v806, %v806
        %4191 = vmatpush1.msra.mxu0 %v4190
        %v4192 = vsub.f32 %v809, %v809
        %4193 = vmatprep.subr.mxu0 %v4192
        %v4194 = vsub.f32 %v808, %v808
        %4195 = vmatpush1.msra.mxu0 %v4194
        %v4196 = vsub.f32 %v811, %v811
        %4197 = vmatprep.subr.mxu0 %v4196
        %v4198 = vsub.f32 %v810, %v810
        %4199 = vmatpush1.msra.mxu0 %v4198
        %v4200 = vsub.f32 %v813, %v813
        %4201 = vmatprep.subr.mxu0 %v4200
        %v4202 = vsub.f32 %v812, %v812
        %4203 = vmatpush1.msra.mxu0 %v4202
        %v4204 = vsub.f32 %v815, %v815
        %4205 = vmatprep.subr.mxu0 %v4204
        %v4206 = vsub.f32 %v814, %v814
        %4207 = vmatpush1.msra.mxu0 %v4206
        %v4208 = vsub.f32 %v817, %v817
        %4209 = vmatprep.subr.mxu0 %v4208
        %v4210 = vsub.f32 %v816, %v816
        %4211 = vmatpush1.msra.mxu0 %v4210
        %v4212 = vsub.f32 %v819, %v819
        %4213 = vmatprep.subr.mxu0 %v4212
        %v4214 = vsub.f32 %v818, %v818
        %4215 = vmatpush1.msra.mxu0 %v4214
        %v4216 = vsub.f32 %v821, %v821
        %4217 = vmatprep.subr.mxu0 %v4216
        %v4218 = vsub.f32 %v820, %v820
        %4219 = vmatpush1.msra.mxu0 %v4218
        %v4220 = vsub.f32 %v823, %v823
        %4221 = vmatprep.subr.mxu0 %v4220
        %v4222 = vsub.f32 %v822, %v822
        %4223 = vmatpush1.msra.mxu0 %v4222
        %v4224 = vsub.f32 %v825, %v825
        %4225 = vmatprep.subr.mxu0 %v4224
        %v4226 = vsub.f32 %v824, %v824
        %4227 = vmatpush1.msra.mxu0 %v4226
        %v4228 = vsub.f32 %v827, %v827
        %4229 = vmatprep.subr.mxu0 %v4228
        %v4230 = vsub.f32 %v826, %v826
        %4231 = vmatpush1.msra.mxu0 %v4230
        %v4232 = vsub.f32 %v829, %v829
        %4233 = vmatprep.subr.mxu0 %v4232
        %v4234 = vsub.f32 %v828, %v828
        %4235 = vmatpush1.msra.mxu0 %v4234
        %v4236 = vsub.f32 %v831, %v831
        %4237 = vmatprep.subr.mxu0 %v4236
        %v4238 = vsub.f32 %v830, %v830
        %4239 = vmatpush1.msra.mxu0 %v4238
        %v4240 = vsub.f32 %v833, %v833
        %4241 = vmatprep.subr.mxu0 %v4240
        %v4242 = vsub.f32 %v832, %v832
        %4243 = vmatpush1.msra.mxu0 %v4242
        %v4244 = vsub.f32 %v835, %v835
        %4245 = vmatprep.subr.mxu0 %v4244
        %v4246 = vsub.f32 %v834, %v834
        %4247 = vmatpush1.msra.mxu0 %v4246
        %v4248 = vsub.f32 %v837, %v837
        %4249 = vmatprep.subr.mxu0 %v4248
        %v4250 = vsub.f32 %v836, %v836
        %4251 = vmatpush1.msra.mxu0 %v4250
        %v4252 = vsub.f32 %v839, %v839
        %4253 = vmatprep.subr.mxu0 %v4252
        %v4254 = vsub.f32 %v838, %v838
        %4255 = vmatpush1.msra.mxu0 %v4254
        %v4256 = vsub.f32 %v841, %v841
        %4257 = vmatprep.subr.mxu0 %v4256
        %v4258 = vsub.f32 %v840, %v840
        %4259 = vmatpush1.msra.mxu0 %v4258
        %v4260 = vsub.f32 %v843, %v843
        %4261 = vmatprep.subr.mxu0 %v4260
        %v4262 = vsub.f32 %v842, %v842
        %4263 = vmatpush1.msra.mxu0 %v4262
        %v4264 = vsub.f32 %v845, %v845
        %4265 = vmatprep.subr.mxu0 %v4264
        %v4266 = vsub.f32 %v844, %v844
        %4267 = vmatpush1.msra.mxu0 %v4266
        %v4268 = vsub.f32 %v847, %v847
        %4269 = vmatprep.subr.mxu0 %v4268
        %v4270 = vsub.f32 %v846, %v846
        %4271 = vmatpush1.msra.mxu0 %v4270
        %v4272 = vsub.f32 %v849, %v849
        %4273 = vmatprep.subr.mxu0 %v4272
        %v4274 = vsub.f32 %v848, %v848
        %4275 = vmatpush1.msra.mxu0 %v4274
        %v4276 = vsub.f32 %v851, %v851
        %4277 = vmatprep.subr.mxu0 %v4276
        %v4278 = vsub.f32 %v850, %v850
        %4279 = vmatpush1.msra.mxu0 %v4278
        %v4280 = vsub.f32 %v853, %v853
        %4281 = vmatprep.subr.mxu0 %v4280
        %v4282 = vsub.f32 %v852, %v852
        %4283 = vmatpush1.msra.mxu0 %v4282
        %v4284 = vsub.f32 %v855, %v855
        %4285 = vmatprep.subr.mxu0 %v4284
        %v4286 = vsub.f32 %v854, %v854
        %4287 = vmatpush1.msra.mxu0 %v4286
        %v4288 = vsub.f32 %v857, %v857
        %4289 = vmatprep.subr.mxu0 %v4288
        %v4290 = vsub.f32 %v856, %v856
        %4291 = vmatpush1.msra.mxu0 %v4290
        %v4292 = vsub.f32 %v859, %v859
        %4293 = vmatprep.subr.mxu0 %v4292
        %v4294 = vsub.f32 %v858, %v858
        %4295 = vmatpush1.msra.mxu0 %v4294
        %v4296 = vsub.f32 %v861, %v861
        %4297 = vmatprep.subr.mxu0 %v4296
        %v4298 = vsub.f32 %v860, %v860
        %4299 = vmatpush1.msra.mxu0 %v4298
        %v4300 = vsub.f32 %v863, %v863
        %4301 = vmatprep.subr.mxu0 %v4300
        %v4302 = vsub.f32 %v862, %v862
        %4303 = vmatpush1.msra.mxu0 %v4302
        %v4304 = vsub.f32 %v865, %v865
        %4305 = vmatprep.subr.mxu0 %v4304
        %v4306 = vsub.f32 %v864, %v864
        %4307 = vmatpush1.msra.mxu0 %v4306
        %v4308 = vand.u32 %v3769, 4294901760
        %v4309 = vsub.f32 %v3769, %v4308
        %4310 = vmatprep.mubr.f32.mxu0 %v4309
        %v4311 = vand.u32 %v3768, 4294901760
        %v4312 = vsub.f32 %v3768, %v4311
        %4313 = vmatmul.mubr.f32.gmra.mrb[0].mxu0 %v4312
        %v4314 = vpop.f32.mrb[0].mxu0
        %v4315 = vadd.f32 %v4176, %v4314
        %v4316 = vpop.f32.mrb[0].mxu0
        %v4317 = vadd.f32 %v4178, %v4316
        %4318 = vdwg.mxu0
        %4319 = vmatprep.subr.mxu0 %v803
        %4320 = vmatpush1.msra.mxu0 %v802
        %4321 = vmatprep.subr.mxu0 %v805
        %4322 = vmatpush1.msra.mxu0 %v804
        %4323 = vmatprep.subr.mxu0 %v807
        %4324 = vmatpush1.msra.mxu0 %v806
        %4325 = vmatprep.subr.mxu0 %v809
        %4326 = vmatpush1.msra.mxu0 %v808
        %4327 = vmatprep.subr.mxu0 %v811
        %4328 = vmatpush1.msra.mxu0 %v810
        %4329 = vmatprep.subr.mxu0 %v813
        %4330 = vmatpush1.msra.mxu0 %v812
        %4331 = vmatprep.subr.mxu0 %v815
        %4332 = vmatpush1.msra.mxu0 %v814
        %4333 = vmatprep.subr.mxu0 %v817
        %4334 = vmatpush1.msra.mxu0 %v816
        %4335 = vmatprep.subr.mxu0 %v819
        %4336 = vmatpush1.msra.mxu0 %v818
        %4337 = vmatprep.subr.mxu0 %v821
        %4338 = vmatpush1.msra.mxu0 %v820
        %4339 = vmatprep.subr.mxu0 %v823
        %4340 = vmatpush1.msra.mxu0 %v822
        %4341 = vmatprep.subr.mxu0 %v825
        %4342 = vmatpush1.msra.mxu0 %v824
        %4343 = vmatprep.subr.mxu0 %v827
        %4344 = vmatpush1.msra.mxu0 %v826
        %4345 = vmatprep.subr.mxu0 %v829
        %4346 = vmatpush1.msra.mxu0 %v828
        %4347 = vmatprep.subr.mxu0 %v831
        %4348 = vmatpush1.msra.mxu0 %v830
        %4349 = vmatprep.subr.mxu0 %v833
        %4350 = vmatpush1.msra.mxu0 %v832
        %4351 = vmatprep.subr.mxu0 %v835
        %4352 = vmatpush1.msra.mxu0 %v834
        %4353 = vmatprep.subr.mxu0 %v837
        %4354 = vmatpush1.msra.mxu0 %v836
        %4355 = vmatprep.subr.mxu0 %v839
        %4356 = vmatpush1.msra.mxu0 %v838
        %4357 = vmatprep.subr.mxu0 %v841
        %4358 = vmatpush1.msra.mxu0 %v840
        %4359 = vmatprep.subr.mxu0 %v843
        %4360 = vmatpush1.msra.mxu0 %v842
        %4361 = vmatprep.subr.mxu0 %v845
        %4362 = vmatpush1.msra.mxu0 %v844
        %4363 = vmatprep.subr.mxu0 %v847
        %4364 = vmatpush1.msra.mxu0 %v846
        %4365 = vmatprep.subr.mxu0 %v849
        %4366 = vmatpush1.msra.mxu0 %v848
        %4367 = vmatprep.subr.mxu0 %v851
        %4368 = vmatpush1.msra.mxu0 %v850
        %4369 = vmatprep.subr.mxu0 %v853
        %4370 = vmatpush1.msra.mxu0 %v852
        %4371 = vmatprep.subr.mxu0 %v855
        %4372 = vmatpush1.msra.mxu0 %v854
        %4373 = vmatprep.subr.mxu0 %v857
        %4374 = vmatpush1.msra.mxu0 %v856
        %4375 = vmatprep.subr.mxu0 %v859
        %4376 = vmatpush1.msra.mxu0 %v858
        %4377 = vmatprep.subr.mxu0 %v861
        %4378 = vmatpush1.msra.mxu0 %v860
        %4379 = vmatprep.subr.mxu0 %v863
        %4380 = vmatpush1.msra.mxu0 %v862
        %4381 = vmatprep.subr.mxu0 %v865
        %4382 = vmatpush1.msra.mxu0 %v864
        %v4383 = vand.u32 %v3769, 4294901760
        %v4384 = vsub.f32 %v3769, %v4383
        %v4385 = vand.u32 %v4384, 4294901760
        %4386 = vmatprep.mubr.f32.mxu0 %v4385
        %v4387 = vand.u32 %v3768, 4294901760
        %v4388 = vsub.f32 %v3768, %v4387
        %v4389 = vand.u32 %v4388, 4294901760
        %4390 = vmatmul.mubr.f32.gmra.mrb[0].mxu0 %v4389
        %v4391 = vpop.f32.mrb[0].mxu0
        %v4392 = vadd.f32 %v4315, %v4391
        %v4393 = vpop.f32.mrb[0].mxu0
        %v4394 = vadd.f32 %v4317, %v4393
        %4395 = vdwg.mxu0
        %v4396 = vsub.f32 %v803, %v803
        %v4397 = vand.u32 %v4396, 4294901760
        %4398 = vmatprep.subr.mxu0 %v4397
        %v4399 = vsub.f32 %v802, %v802
        %v4400 = vand.u32 %v4399, 4294901760
        %4401 = vmatpush1.msra.mxu0 %v4400
        %v4402 = vsub.f32 %v805, %v805
        %v4403 = vand.u32 %v4402, 4294901760
        %4404 = vmatprep.subr.mxu0 %v4403
        %v4405 = vsub.f32 %v804, %v804
        %v4406 = vand.u32 %v4405, 4294901760
        %4407 = vmatpush1.msra.mxu0 %v4406
        %v4408 = vsub.f32 %v807, %v807
        %v4409 = vand.u32 %v4408, 4294901760
        %4410 = vmatprep.subr.mxu0 %v4409
        %v4411 = vsub.f32 %v806, %v806
        %v4412 = vand.u32 %v4411, 4294901760
        %4413 = vmatpush1.msra.mxu0 %v4412
        %v4414 = vsub.f32 %v809, %v809
        %v4415 = vand.u32 %v4414, 4294901760
        %4416 = vmatprep.subr.mxu0 %v4415
        %v4417 = vsub.f32 %v808, %v808
        %v4418 = vand.u32 %v4417, 4294901760
        %4419 = vmatpush1.msra.mxu0 %v4418
        %v4420 = vsub.f32 %v811, %v811
        %v4421 = vand.u32 %v4420, 4294901760
        %4422 = vmatprep.subr.mxu0 %v4421
        %v4423 = vsub.f32 %v810, %v810
        %v4424 = vand.u32 %v4423, 4294901760
        %4425 = vmatpush1.msra.mxu0 %v4424
        %v4426 = vsub.f32 %v813, %v813
        %v4427 = vand.u32 %v4426, 4294901760
        %4428 = vmatprep.subr.mxu0 %v4427
        %v4429 = vsub.f32 %v812, %v812
        %v4430 = vand.u32 %v4429, 4294901760
        %4431 = vmatpush1.msra.mxu0 %v4430
        %v4432 = vsub.f32 %v815, %v815
        %v4433 = vand.u32 %v4432, 4294901760
        %4434 = vmatprep.subr.mxu0 %v4433
        %v4435 = vsub.f32 %v814, %v814
        %v4436 = vand.u32 %v4435, 4294901760
        %4437 = vmatpush1.msra.mxu0 %v4436
        %v4438 = vsub.f32 %v817, %v817
        %v4439 = vand.u32 %v4438, 4294901760
        %4440 = vmatprep.subr.mxu0 %v4439
        %v4441 = vsub.f32 %v816, %v816
        %v4442 = vand.u32 %v4441, 4294901760
        %4443 = vmatpush1.msra.mxu0 %v4442
        %v4444 = vsub.f32 %v819, %v819
        %v4445 = vand.u32 %v4444, 4294901760
        %4446 = vmatprep.subr.mxu0 %v4445
        %v4447 = vsub.f32 %v818, %v818
        %v4448 = vand.u32 %v4447, 4294901760
        %4449 = vmatpush1.msra.mxu0 %v4448
        %v4450 = vsub.f32 %v821, %v821
        %v4451 = vand.u32 %v4450, 4294901760
        %4452 = vmatprep.subr.mxu0 %v4451
        %v4453 = vsub.f32 %v820, %v820
        %v4454 = vand.u32 %v4453, 4294901760
        %4455 = vmatpush1.msra.mxu0 %v4454
        %v4456 = vsub.f32 %v823, %v823
        %v4457 = vand.u32 %v4456, 4294901760
        %4458 = vmatprep.subr.mxu0 %v4457
        %v4459 = vsub.f32 %v822, %v822
        %v4460 = vand.u32 %v4459, 4294901760
        %4461 = vmatpush1.msra.mxu0 %v4460
        %v4462 = vsub.f32 %v825, %v825
        %v4463 = vand.u32 %v4462, 4294901760
        %4464 = vmatprep.subr.mxu0 %v4463
        %v4465 = vsub.f32 %v824, %v824
        %v4466 = vand.u32 %v4465, 4294901760
        %4467 = vmatpush1.msra.mxu0 %v4466
        %v4468 = vsub.f32 %v827, %v827
        %v4469 = vand.u32 %v4468, 4294901760
        %4470 = vmatprep.subr.mxu0 %v4469
        %v4471 = vsub.f32 %v826, %v826
        %v4472 = vand.u32 %v4471, 4294901760
        %4473 = vmatpush1.msra.mxu0 %v4472
        %v4474 = vsub.f32 %v829, %v829
        %v4475 = vand.u32 %v4474, 4294901760
        %4476 = vmatprep.subr.mxu0 %v4475
        %v4477 = vsub.f32 %v828, %v828
        %v4478 = vand.u32 %v4477, 4294901760
        %4479 = vmatpush1.msra.mxu0 %v4478
        %v4480 = vsub.f32 %v831, %v831
        %v4481 = vand.u32 %v4480, 4294901760
        %4482 = vmatprep.subr.mxu0 %v4481
        %v4483 = vsub.f32 %v830, %v830
        %v4484 = vand.u32 %v4483, 4294901760
        %4485 = vmatpush1.msra.mxu0 %v4484
        %v4486 = vsub.f32 %v833, %v833
        %v4487 = vand.u32 %v4486, 4294901760
        %4488 = vmatprep.subr.mxu0 %v4487
        %v4489 = vsub.f32 %v832, %v832
        %v4490 = vand.u32 %v4489, 4294901760
        %4491 = vmatpush1.msra.mxu0 %v4490
        %v4492 = vsub.f32 %v835, %v835
        %v4493 = vand.u32 %v4492, 4294901760
        %4494 = vmatprep.subr.mxu0 %v4493
        %v4495 = vsub.f32 %v834, %v834
        %v4496 = vand.u32 %v4495, 4294901760
        %4497 = vmatpush1.msra.mxu0 %v4496
        %v4498 = vsub.f32 %v837, %v837
        %v4499 = vand.u32 %v4498, 4294901760
        %4500 = vmatprep.subr.mxu0 %v4499
        %v4501 = vsub.f32 %v836, %v836
        %v4502 = vand.u32 %v4501, 4294901760
        %4503 = vmatpush1.msra.mxu0 %v4502
        %v4504 = vsub.f32 %v839, %v839
        %v4505 = vand.u32 %v4504, 4294901760
        %4506 = vmatprep.subr.mxu0 %v4505
        %v4507 = vsub.f32 %v838, %v838
        %v4508 = vand.u32 %v4507, 4294901760
        %4509 = vmatpush1.msra.mxu0 %v4508
        %v4510 = vsub.f32 %v841, %v841
        %v4511 = vand.u32 %v4510, 4294901760
        %4512 = vmatprep.subr.mxu0 %v4511
        %v4513 = vsub.f32 %v840, %v840
        %v4514 = vand.u32 %v4513, 4294901760
        %4515 = vmatpush1.msra.mxu0 %v4514
        %v4516 = vsub.f32 %v843, %v843
        %v4517 = vand.u32 %v4516, 4294901760
        %4518 = vmatprep.subr.mxu0 %v4517
        %v4519 = vsub.f32 %v842, %v842
        %v4520 = vand.u32 %v4519, 4294901760
        %4521 = vmatpush1.msra.mxu0 %v4520
        %v4522 = vsub.f32 %v845, %v845
        %v4523 = vand.u32 %v4522, 4294901760
        %4524 = vmatprep.subr.mxu0 %v4523
        %v4525 = vsub.f32 %v844, %v844
        %v4526 = vand.u32 %v4525, 4294901760
        %4527 = vmatpush1.msra.mxu0 %v4526
        %v4528 = vsub.f32 %v847, %v847
        %v4529 = vand.u32 %v4528, 4294901760
        %4530 = vmatprep.subr.mxu0 %v4529
        %v4531 = vsub.f32 %v846, %v846
        %v4532 = vand.u32 %v4531, 4294901760
        %4533 = vmatpush1.msra.mxu0 %v4532
        %v4534 = vsub.f32 %v849, %v849
        %v4535 = vand.u32 %v4534, 4294901760
        %4536 = vmatprep.subr.mxu0 %v4535
        %v4537 = vsub.f32 %v848, %v848
        %v4538 = vand.u32 %v4537, 4294901760
        %4539 = vmatpush1.msra.mxu0 %v4538
        %v4540 = vsub.f32 %v851, %v851
        %v4541 = vand.u32 %v4540, 4294901760
        %4542 = vmatprep.subr.mxu0 %v4541
        %v4543 = vsub.f32 %v850, %v850
        %v4544 = vand.u32 %v4543, 4294901760
        %4545 = vmatpush1.msra.mxu0 %v4544
        %v4546 = vsub.f32 %v853, %v853
        %v4547 = vand.u32 %v4546, 4294901760
        %4548 = vmatprep.subr.mxu0 %v4547
        %v4549 = vsub.f32 %v852, %v852
        %v4550 = vand.u32 %v4549, 4294901760
        %4551 = vmatpush1.msra.mxu0 %v4550
        %v4552 = vsub.f32 %v855, %v855
        %v4553 = vand.u32 %v4552, 4294901760
        %4554 = vmatprep.subr.mxu0 %v4553
        %v4555 = vsub.f32 %v854, %v854
        %v4556 = vand.u32 %v4555, 4294901760
        %4557 = vmatpush1.msra.mxu0 %v4556
        %v4558 = vsub.f32 %v857, %v857
        %v4559 = vand.u32 %v4558, 4294901760
        %4560 = vmatprep.subr.mxu0 %v4559
        %v4561 = vsub.f32 %v856, %v856
        %v4562 = vand.u32 %v4561, 4294901760
        %4563 = vmatpush1.msra.mxu0 %v4562
        %v4564 = vsub.f32 %v859, %v859
        %v4565 = vand.u32 %v4564, 4294901760
        %4566 = vmatprep.subr.mxu0 %v4565
        %v4567 = vsub.f32 %v858, %v858
        %v4568 = vand.u32 %v4567, 4294901760
        %4569 = vmatpush1.msra.mxu0 %v4568
        %v4570 = vsub.f32 %v861, %v861
        %v4571 = vand.u32 %v4570, 4294901760
        %4572 = vmatprep.subr.mxu0 %v4571
        %v4573 = vsub.f32 %v860, %v860
        %v4574 = vand.u32 %v4573, 4294901760
        %4575 = vmatpush1.msra.mxu0 %v4574
        %v4576 = vsub.f32 %v863, %v863
        %v4577 = vand.u32 %v4576, 4294901760
        %4578 = vmatprep.subr.mxu0 %v4577
        %v4579 = vsub.f32 %v862, %v862
        %v4580 = vand.u32 %v4579, 4294901760
        %4581 = vmatpush1.msra.mxu0 %v4580
        %v4582 = vsub.f32 %v865, %v865
        %v4583 = vand.u32 %v4582, 4294901760
        %4584 = vmatprep.subr.mxu0 %v4583
        %v4585 = vsub.f32 %v864, %v864
        %v4586 = vand.u32 %v4585, 4294901760
        %4587 = vmatpush1.msra.mxu0 %v4586
        %v4588 = vand.u32 %v3769, 4294901760
        %4589 = vmatprep.mubr.f32.mxu0 %v4588
        %v4590 = vand.u32 %v3768, 4294901760
        %4591 = vmatmul.mubr.f32.gmra.mrb[0].mxu0 %v4590
        %v4592 = vpop.f32.mrb[0].mxu0
        %v4593 = vadd.f32 %v4392, %v4592
        %v4594 = vpop.f32.mrb[0].mxu0
        %v4595 = vadd.f32 %v4394, %v4594
        %4596 = vdwg.mxu0
        %4597 = vmatprep.subr.mxu0 %v803
        %4598 = vmatpush1.msra.mxu0 %v802
        %4599 = vmatprep.subr.mxu0 %v805
        %4600 = vmatpush1.msra.mxu0 %v804
        %4601 = vmatprep.subr.mxu0 %v807
        %4602 = vmatpush1.msra.mxu0 %v806
        %4603 = vmatprep.subr.mxu0 %v809
        %4604 = vmatpush1.msra.mxu0 %v808
        %4605 = vmatprep.subr.mxu0 %v811
        %4606 = vmatpush1.msra.mxu0 %v810
        %4607 = vmatprep.subr.mxu0 %v813
        %4608 = vmatpush1.msra.mxu0 %v812
        %4609 = vmatprep.subr.mxu0 %v815
        %4610 = vmatpush1.msra.mxu0 %v814
        %4611 = vmatprep.subr.mxu0 %v817
        %4612 = vmatpush1.msra.mxu0 %v816
        %4613 = vmatprep.subr.mxu0 %v819
        %4614 = vmatpush1.msra.mxu0 %v818
        %4615 = vmatprep.subr.mxu0 %v821
        %4616 = vmatpush1.msra.mxu0 %v820
        %4617 = vmatprep.subr.mxu0 %v823
        %4618 = vmatpush1.msra.mxu0 %v822
        %4619 = vmatprep.subr.mxu0 %v825
        %4620 = vmatpush1.msra.mxu0 %v824
        %4621 = vmatprep.subr.mxu0 %v827
        %4622 = vmatpush1.msra.mxu0 %v826
        %4623 = vmatprep.subr.mxu0 %v829
        %4624 = vmatpush1.msra.mxu0 %v828
        %4625 = vmatprep.subr.mxu0 %v831
        %4626 = vmatpush1.msra.mxu0 %v830
        %4627 = vmatprep.subr.mxu0 %v833
        %4628 = vmatpush1.msra.mxu0 %v832
        %4629 = vmatprep.subr.mxu0 %v835
        %4630 = vmatpush1.msra.mxu0 %v834
        %4631 = vmatprep.subr.mxu0 %v837
        %4632 = vmatpush1.msra.mxu0 %v836
        %4633 = vmatprep.subr.mxu0 %v839
        %4634 = vmatpush1.msra.mxu0 %v838
        %4635 = vmatprep.subr.mxu0 %v841
        %4636 = vmatpush1.msra.mxu0 %v840
        %4637 = vmatprep.subr.mxu0 %v843
        %4638 = vmatpush1.msra.mxu0 %v842
        %4639 = vmatprep.subr.mxu0 %v845
        %4640 = vmatpush1.msra.mxu0 %v844
        %4641 = vmatprep.subr.mxu0 %v847
        %4642 = vmatpush1.msra.mxu0 %v846
        %4643 = vmatprep.subr.mxu0 %v849
        %4644 = vmatpush1.msra.mxu0 %v848
        %4645 = vmatprep.subr.mxu0 %v851
        %4646 = vmatpush1.msra.mxu0 %v850
        %4647 = vmatprep.subr.mxu0 %v853
        %4648 = vmatpush1.msra.mxu0 %v852
        %4649 = vmatprep.subr.mxu0 %v855
        %4650 = vmatpush1.msra.mxu0 %v854
        %4651 = vmatprep.subr.mxu0 %v857
        %4652 = vmatpush1.msra.mxu0 %v856
        %4653 = vmatprep.subr.mxu0 %v859
        %4654 = vmatpush1.msra.mxu0 %v858
        %4655 = vmatprep.subr.mxu0 %v861
        %4656 = vmatpush1.msra.mxu0 %v860
        %4657 = vmatprep.subr.mxu0 %v863
        %4658 = vmatpush1.msra.mxu0 %v862
        %4659 = vmatprep.subr.mxu0 %v865
        %4660 = vmatpush1.msra.mxu0 %v864
        %v4661 = vand.u32 %v3769, 4294901760
        %4662 = vmatprep.mubr.f32.mxu0 %v4661
        %v4663 = vand.u32 %v3768, 4294901760
        %4664 = vmatmul.mubr.f32.gmra.mrb[0].mxu0 %v4663
        %v4665 = vpop.f32.mrb[0].mxu0
        %v4666 = vadd.f32 %v4593, %v4665
        %v4667 = vpop.f32.mrb[0].mxu0
        %v4668 = vadd.f32 %v4595, %v4667
        %4669 = vdwg.mxu0
        %s4670 = sld [smem:[#allocation2 + $0x182]]
        %v4671 = vstv %s4670
        %v4672 = vmul.f32 %v4671, %v4666
        %v4673 = vmul.f32 %v4671, %v4668
        %s4674 = sld [smem:[#allocation2 + $0x180]]
        %4675 = vrot.lane.b32.xlu0 %v4666, 2
        %v4676 = vpop.permute.xlu0 %4675
        %4677 = vrot.lane.b32.xlu0 %v4668, 2
        %v4678 = vpop.permute.xlu0 %4677
        %v4679 = vsel %vm487, %v4676, %v4678
        %v4680 = vsel %vm487, %v4678, %v4676
        %v4681 = vstv %s4674
        %v4682 = vmul.f32 %v4681, %v4680
        %v4683 = vmul.f32 %v4681, %v4679
        %v4684 = vadd.f32 %v4672, %v4682
        %v4685 = vadd.f32 %v4673, %v4683
        %s4686 = sld [smem:[#allocation2 + $0x181]]
        %4687 = vrot.lane.b32.xlu0 %v4666, 1
        %v4688 = vpop.permute.xlu0 %4687
        %4689 = vrot.lane.b32.xlu0 %v4668, 1
        %v4690 = vpop.permute.xlu0 %4689
        %v4691 = vsel %vm510, %v4688, %v4690
        %v4692 = vsel %vm510, %v4690, %v4688
        %v4693 = vstv %s4686
        %v4694 = vmul.f32 %v4693, %v4692
        %v4695 = vmul.f32 %v4693, %v4691
        %v4696 = vadd.f32 %v4684, %v4694
        %v4697 = vadd.f32 %v4685, %v4695
        %s4698 = sld [smem:[#allocation2 + $0x183]]
        %4699 = vrot.lane.b32.xlu0 %v4666, 127
        %v4700 = vpop.permute.xlu0 %4699
        %4701 = vrot.lane.b32.xlu0 %v4668, 127
        %v4702 = vpop.permute.xlu0 %4701
        %v4703 = vsel %vm533, %v4700, %v4702
        %v4704 = vsel %vm533, %v4702, %v4700
        %v4705 = vstv %s4698
        %v4706 = vmul.f32 %v4705, %v4703
        %v4707 = vmul.f32 %v4705, %v4704
        %v4708 = vadd.f32 %v4696, %v4706
        %v4709 = vadd.f32 %v4697, %v4707
        %s4710 = sld [smem:[#allocation2 + $0x184]]
        %4711 = vrot.lane.b32.xlu0 %v4666, 126
        %v4712 = vpop.permute.xlu0 %4711
        %4713 = vrot.lane.b32.xlu0 %v4668, 126
        %v4714 = vpop.permute.xlu0 %4713
        %v4715 = vsel %vm556, %v4712, %v4714
        %v4716 = vsel %vm556, %v4714, %v4712
        %v4717 = vstv %s4710
        %v4718 = vmul.f32 %v4717, %v4715
        %v4719 = vmul.f32 %v4717, %v4716
        %v4720 = vadd.f32 %v4708, %v4718
        %v4721 = vadd.f32 %v4709, %v4719
        %s4722 = sld [smem:[#allocation4 + $0x3]]
        %v4723 = vstv %s4722
        %v4724 = vadd.f32 %v4720, %v4723
        %v4725 = vadd.f32 %v4721, %v4723
        %v4726 = vmax.f32 %v4724, 0.0
        %v4727 = vmax.f32 %v4725, 0.0
        %vm4728 = vcmp.lt.s32.totalorder %v486, 63
        %vm4729 = vcmp.lt.s32.totalorder %v580, 63
        %v4730 = vsel %vm4728, %v4726, 0.0
        %v4731 = vsel %vm4729, %v4727, 0.0
        %v4732 = vmul.u32 %v608, 2
        %v4733 = vmul.u32 %v609, 2
        %v4734 = vmul.u32 %v610, 2
        %v4735 = vmul.u32 %v611, 2
        %v4736 = vmul.u32 %v612, 2
        %v4737 = vmul.u32 %v613, 2
        %v4738 = vmul.u32 %v614, 2
        %v4739 = vmul.u32 %v615, 2
        %v4740 = vmul.u32 %v616, 2
        %v4741 = vmul.u32 %v617, 2
        %v4742 = vmul.u32 %v618, 2
        %v4743 = vmul.u32 %v619, 2
        %v4744 = vmul.u32 %v620, 2
        %v4745 = vmul.u32 %v621, 2
        %v4746 = vmul.u32 %v622, 2
        %v4747 = vmul.u32 %v623, 2
        %v4748 = vmul.u32 %v624, 2
        %v4749 = vmul.u32 %v625, 2
        %v4750 = vmul.u32 %v626, 2
        %v4751 = vmul.u32 %v627, 2
        %v4752 = vmul.u32 %v628, 2
        %v4753 = vmul.u32 %v629, 2
        %v4754 = vmul.u32 %v630, 2
        %v4755 = vmul.u32 %v631, 2
        %v4756 = vmul.u32 %v632, 2
        %v4757 = vmul.u32 %v633, 2
        %v4758 = vmul.u32 %v634, 2
        %v4759 = vmul.u32 %v635, 2
        %v4760 = vmul.u32 %v636, 2
        %v4761 = vmul.u32 %v637, 2
        %v4762 = vmul.u32 %v638, 2
        %v4763 = vmul.u32 %v639, 2
        %vm4764 = vcmp.eq.s32.totalorder %v486, %v4732
        %vm4765 = vcmp.eq.s32.totalorder %v580, %v4732
        %vm4766 = vcmp.eq.s32.totalorder %v486, %v4733
        %vm4767 = vcmp.eq.s32.totalorder %v580, %v4733
        %vm4768 = vcmp.eq.s32.totalorder %v486, %v4734
        %vm4769 = vcmp.eq.s32.totalorder %v580, %v4734
        %vm4770 = vcmp.eq.s32.totalorder %v486, %v4735
        %vm4771 = vcmp.eq.s32.totalorder %v580, %v4735
        %vm4772 = vcmp.eq.s32.totalorder %v486, %v4736
        %vm4773 = vcmp.eq.s32.totalorder %v580, %v4736
        %vm4774 = vcmp.eq.s32.totalorder %v486, %v4737
        %vm4775 = vcmp.eq.s32.totalorder %v580, %v4737
        %vm4776 = vcmp.eq.s32.totalorder %v486, %v4738
        %vm4777 = vcmp.eq.s32.totalorder %v580, %v4738
        %vm4778 = vcmp.eq.s32.totalorder %v486, %v4739
        %vm4779 = vcmp.eq.s32.totalorder %v580, %v4739
        %vm4780 = vcmp.eq.s32.totalorder %v486, %v4740
        %vm4781 = vcmp.eq.s32.totalorder %v580, %v4740
        %vm4782 = vcmp.eq.s32.totalorder %v486, %v4741
        %vm4783 = vcmp.eq.s32.totalorder %v580, %v4741
        %vm4784 = vcmp.eq.s32.totalorder %v486, %v4742
        %vm4785 = vcmp.eq.s32.totalorder %v580, %v4742
        %vm4786 = vcmp.eq.s32.totalorder %v486, %v4743
        %vm4787 = vcmp.eq.s32.totalorder %v580, %v4743
        %vm4788 = vcmp.eq.s32.totalorder %v486, %v4744
        %vm4789 = vcmp.eq.s32.totalorder %v580, %v4744
        %vm4790 = vcmp.eq.s32.totalorder %v486, %v4745
        %vm4791 = vcmp.eq.s32.totalorder %v580, %v4745
        %vm4792 = vcmp.eq.s32.totalorder %v486, %v4746
        %vm4793 = vcmp.eq.s32.totalorder %v580, %v4746
        %vm4794 = vcmp.eq.s32.totalorder %v486, %v4747
        %vm4795 = vcmp.eq.s32.totalorder %v580, %v4747
        %vm4796 = vcmp.eq.s32.totalorder %v486, %v4748
        %vm4797 = vcmp.eq.s32.totalorder %v580, %v4748
        %vm4798 = vcmp.eq.s32.totalorder %v486, %v4749
        %vm4799 = vcmp.eq.s32.totalorder %v580, %v4749
        %vm4800 = vcmp.eq.s32.totalorder %v486, %v4750
        %vm4801 = vcmp.eq.s32.totalorder %v580, %v4750
        %vm4802 = vcmp.eq.s32.totalorder %v486, %v4751
        %vm4803 = vcmp.eq.s32.totalorder %v580, %v4751
        %vm4804 = vcmp.eq.s32.totalorder %v486, %v4752
        %vm4805 = vcmp.eq.s32.totalorder %v580, %v4752
        %vm4806 = vcmp.eq.s32.totalorder %v486, %v4753
        %vm4807 = vcmp.eq.s32.totalorder %v580, %v4753
        %vm4808 = vcmp.eq.s32.totalorder %v486, %v4754
        %vm4809 = vcmp.eq.s32.totalorder %v580, %v4754
        %vm4810 = vcmp.eq.s32.totalorder %v486, %v4755
        %vm4811 = vcmp.eq.s32.totalorder %v580, %v4755
        %vm4812 = vcmp.eq.s32.totalorder %v486, %v4756
        %vm4813 = vcmp.eq.s32.totalorder %v580, %v4756
        %vm4814 = vcmp.eq.s32.totalorder %v486, %v4757
        %vm4815 = vcmp.eq.s32.totalorder %v580, %v4757
        %vm4816 = vcmp.eq.s32.totalorder %v486, %v4758
        %vm4817 = vcmp.eq.s32.totalorder %v580, %v4758
        %vm4818 = vcmp.eq.s32.totalorder %v486, %v4759
        %vm4819 = vcmp.eq.s32.totalorder %v580, %v4759
        %vm4820 = vcmp.eq.s32.totalorder %v486, %v4760
        %vm4821 = vcmp.eq.s32.totalorder %v580, %v4760
        %vm4822 = vcmp.eq.s32.totalorder %v486, %v4761
        %vm4823 = vcmp.eq.s32.totalorder %v580, %v4761
        %vm4824 = vcmp.eq.s32.totalorder %v486, %v4762
        %vm4825 = vcmp.eq.s32.totalorder %v580, %v4762
        %vm4826 = vcmp.eq.s32.totalorder %v486, %v4763
        %vm4827 = vcmp.eq.s32.totalorder %v580, %v4763
        %v4828 = vadd.s32 %v4732, 1
        %v4829 = vadd.s32 %v4733, 1
        %v4830 = vadd.s32 %v4734, 1
        %v4831 = vadd.s32 %v4735, 1
        %v4832 = vadd.s32 %v4736, 1
        %v4833 = vadd.s32 %v4737, 1
        %v4834 = vadd.s32 %v4738, 1
        %v4835 = vadd.s32 %v4739, 1
        %v4836 = vadd.s32 %v4740, 1
        %v4837 = vadd.s32 %v4741, 1
        %v4838 = vadd.s32 %v4742, 1
        %v4839 = vadd.s32 %v4743, 1
        %v4840 = vadd.s32 %v4744, 1
        %v4841 = vadd.s32 %v4745, 1
        %v4842 = vadd.s32 %v4746, 1
        %v4843 = vadd.s32 %v4747, 1
        %v4844 = vadd.s32 %v4748, 1
        %v4845 = vadd.s32 %v4749, 1
        %v4846 = vadd.s32 %v4750, 1
        %v4847 = vadd.s32 %v4751, 1
        %v4848 = vadd.s32 %v4752, 1
        %v4849 = vadd.s32 %v4753, 1
        %v4850 = vadd.s32 %v4754, 1
        %v4851 = vadd.s32 %v4755, 1
        %v4852 = vadd.s32 %v4756, 1
        %v4853 = vadd.s32 %v4757, 1
        %v4854 = vadd.s32 %v4758, 1
        %v4855 = vadd.s32 %v4759, 1
        %v4856 = vadd.s32 %v4760, 1
        %v4857 = vadd.s32 %v4761, 1
        %v4858 = vadd.s32 %v4762, 1
        %v4859 = vadd.s32 %v4763, 1
        %vm4860 = vcmp.eq.s32.totalorder %v486, %v4828
        %vm4861 = vcmp.eq.s32.totalorder %v580, %v4828
        %vm4862 = vcmp.eq.s32.totalorder %v486, %v4829
        %vm4863 = vcmp.eq.s32.totalorder %v580, %v4829
        %vm4864 = vcmp.eq.s32.totalorder %v486, %v4830
        %vm4865 = vcmp.eq.s32.totalorder %v580, %v4830
        %vm4866 = vcmp.eq.s32.totalorder %v486, %v4831
        %vm4867 = vcmp.eq.s32.totalorder %v580, %v4831
        %vm4868 = vcmp.eq.s32.totalorder %v486, %v4832
        %vm4869 = vcmp.eq.s32.totalorder %v580, %v4832
        %vm4870 = vcmp.eq.s32.totalorder %v486, %v4833
        %vm4871 = vcmp.eq.s32.totalorder %v580, %v4833
        %vm4872 = vcmp.eq.s32.totalorder %v486, %v4834
        %vm4873 = vcmp.eq.s32.totalorder %v580, %v4834
        %vm4874 = vcmp.eq.s32.totalorder %v486, %v4835
        %vm4875 = vcmp.eq.s32.totalorder %v580, %v4835
        %vm4876 = vcmp.eq.s32.totalorder %v486, %v4836
        %vm4877 = vcmp.eq.s32.totalorder %v580, %v4836
        %vm4878 = vcmp.eq.s32.totalorder %v486, %v4837
        %vm4879 = vcmp.eq.s32.totalorder %v580, %v4837
        %vm4880 = vcmp.eq.s32.totalorder %v486, %v4838
        %vm4881 = vcmp.eq.s32.totalorder %v580, %v4838
        %vm4882 = vcmp.eq.s32.totalorder %v486, %v4839
        %vm4883 = vcmp.eq.s32.totalorder %v580, %v4839
        %vm4884 = vcmp.eq.s32.totalorder %v486, %v4840
        %vm4885 = vcmp.eq.s32.totalorder %v580, %v4840
        %vm4886 = vcmp.eq.s32.totalorder %v486, %v4841
        %vm4887 = vcmp.eq.s32.totalorder %v580, %v4841
        %vm4888 = vcmp.eq.s32.totalorder %v486, %v4842
        %vm4889 = vcmp.eq.s32.totalorder %v580, %v4842
        %vm4890 = vcmp.eq.s32.totalorder %v486, %v4843
        %vm4891 = vcmp.eq.s32.totalorder %v580, %v4843
        %vm4892 = vcmp.eq.s32.totalorder %v486, %v4844
        %vm4893 = vcmp.eq.s32.totalorder %v580, %v4844
        %vm4894 = vcmp.eq.s32.totalorder %v486, %v4845
        %vm4895 = vcmp.eq.s32.totalorder %v580, %v4845
        %vm4896 = vcmp.eq.s32.totalorder %v486, %v4846
        %vm4897 = vcmp.eq.s32.totalorder %v580, %v4846
        %vm4898 = vcmp.eq.s32.totalorder %v486, %v4847
        %vm4899 = vcmp.eq.s32.totalorder %v580, %v4847
        %vm4900 = vcmp.eq.s32.totalorder %v486, %v4848
        %vm4901 = vcmp.eq.s32.totalorder %v580, %v4848
        %vm4902 = vcmp.eq.s32.totalorder %v486, %v4849
        %vm4903 = vcmp.eq.s32.totalorder %v580, %v4849
        %vm4904 = vcmp.eq.s32.totalorder %v486, %v4850
        %vm4905 = vcmp.eq.s32.totalorder %v580, %v4850
        %vm4906 = vcmp.eq.s32.totalorder %v486, %v4851
        %vm4907 = vcmp.eq.s32.totalorder %v580, %v4851
        %vm4908 = vcmp.eq.s32.totalorder %v486, %v4852
        %vm4909 = vcmp.eq.s32.totalorder %v580, %v4852
        %vm4910 = vcmp.eq.s32.totalorder %v486, %v4853
        %vm4911 = vcmp.eq.s32.totalorder %v580, %v4853
        %vm4912 = vcmp.eq.s32.totalorder %v486, %v4854
        %vm4913 = vcmp.eq.s32.totalorder %v580, %v4854
        %vm4914 = vcmp.eq.s32.totalorder %v486, %v4855
        %vm4915 = vcmp.eq.s32.totalorder %v580, %v4855
        %vm4916 = vcmp.eq.s32.totalorder %v486, %v4856
        %vm4917 = vcmp.eq.s32.totalorder %v580, %v4856
        %vm4918 = vcmp.eq.s32.totalorder %v486, %v4857
        %vm4919 = vcmp.eq.s32.totalorder %v580, %v4857
        %vm4920 = vcmp.eq.s32.totalorder %v486, %v4858
        %vm4921 = vcmp.eq.s32.totalorder %v580, %v4858
        %vm4922 = vcmp.eq.s32.totalorder %v486, %v4859
        %vm4923 = vcmp.eq.s32.totalorder %v580, %v4859
        %vm4924 = vmor %vm4764, %vm4860
        %vm4925 = vmor %vm4765, %vm4861
        %vm4926 = vmor %vm4766, %vm4862
        %vm4927 = vmor %vm4767, %vm4863
        %vm4928 = vmor %vm4768, %vm4864
        %vm4929 = vmor %vm4769, %vm4865
        %vm4930 = vmor %vm4770, %vm4866
        %vm4931 = vmor %vm4771, %vm4867
        %vm4932 = vmor %vm4772, %vm4868
        %vm4933 = vmor %vm4773, %vm4869
        %vm4934 = vmor %vm4774, %vm4870
        %vm4935 = vmor %vm4775, %vm4871
        %vm4936 = vmor %vm4776, %vm4872
        %vm4937 = vmor %vm4777, %vm4873
        %vm4938 = vmor %vm4778, %vm4874
        %vm4939 = vmor %vm4779, %vm4875
        %vm4940 = vmor %vm4780, %vm4876
        %vm4941 = vmor %vm4781, %vm4877
        %vm4942 = vmor %vm4782, %vm4878
        %vm4943 = vmor %vm4783, %vm4879
        %vm4944 = vmor %vm4784, %vm4880
        %vm4945 = vmor %vm4785, %vm4881
        %vm4946 = vmor %vm4786, %vm4882
        %vm4947 = vmor %vm4787, %vm4883
        %vm4948 = vmor %vm4788, %vm4884
        %vm4949 = vmor %vm4789, %vm4885
        %vm4950 = vmor %vm4790, %vm4886
        %vm4951 = vmor %vm4791, %vm4887
        %vm4952 = vmor %vm4792, %vm4888
        %vm4953 = vmor %vm4793, %vm4889
        %vm4954 = vmor %vm4794, %vm4890
        %vm4955 = vmor %vm4795, %vm4891
        %vm4956 = vmor %vm4796, %vm4892
        %vm4957 = vmor %vm4797, %vm4893
        %vm4958 = vmor %vm4798, %vm4894
        %vm4959 = vmor %vm4799, %vm4895
        %vm4960 = vmor %vm4800, %vm4896
        %vm4961 = vmor %vm4801, %vm4897
        %vm4962 = vmor %vm4802, %vm4898
        %vm4963 = vmor %vm4803, %vm4899
        %vm4964 = vmor %vm4804, %vm4900
        %vm4965 = vmor %vm4805, %vm4901
        %vm4966 = vmor %vm4806, %vm4902
        %vm4967 = vmor %vm4807, %vm4903
        %vm4968 = vmor %vm4808, %vm4904
        %vm4969 = vmor %vm4809, %vm4905
        %vm4970 = vmor %vm4810, %vm4906
        %vm4971 = vmor %vm4811, %vm4907
        %vm4972 = vmor %vm4812, %vm4908
        %vm4973 = vmor %vm4813, %vm4909
        %vm4974 = vmor %vm4814, %vm4910
        %vm4975 = vmor %vm4815, %vm4911
        %vm4976 = vmor %vm4816, %vm4912
        %vm4977 = vmor %vm4817, %vm4913
        %vm4978 = vmor %vm4818, %vm4914
        %vm4979 = vmor %vm4819, %vm4915
        %vm4980 = vmor %vm4820, %vm4916
        %vm4981 = vmor %vm4821, %vm4917
        %vm4982 = vmor %vm4822, %vm4918
        %vm4983 = vmor %vm4823, %vm4919
        %vm4984 = vmor %vm4824, %vm4920
        %vm4985 = vmor %vm4825, %vm4921
        %vm4986 = vmor %vm4826, %vm4922
        %vm4987 = vmor %vm4827, %vm4923
        %v4988 = vsel %vm4924, 1.0, 0.0
        %v4989 = vsel %vm4925, 1.0, 0.0
        %v4990 = vsel %vm4926, 1.0, 0.0
        %v4991 = vsel %vm4927, 1.0, 0.0
        %v4992 = vsel %vm4928, 1.0, 0.0
        %v4993 = vsel %vm4929, 1.0, 0.0
        %v4994 = vsel %vm4930, 1.0, 0.0
        %v4995 = vsel %vm4931, 1.0, 0.0
        %v4996 = vsel %vm4932, 1.0, 0.0
        %v4997 = vsel %vm4933, 1.0, 0.0
        %v4998 = vsel %vm4934, 1.0, 0.0
        %v4999 = vsel %vm4935, 1.0, 0.0
        %v5000 = vsel %vm4936, 1.0, 0.0
        %v5001 = vsel %vm4937, 1.0, 0.0
        %v5002 = vsel %vm4938, 1.0, 0.0
        %v5003 = vsel %vm4939, 1.0, 0.0
        %v5004 = vsel %vm4940, 1.0, 0.0
        %v5005 = vsel %vm4941, 1.0, 0.0
        %v5006 = vsel %vm4942, 1.0, 0.0
        %v5007 = vsel %vm4943, 1.0, 0.0
        %v5008 = vsel %vm4944, 1.0, 0.0
        %v5009 = vsel %vm4945, 1.0, 0.0
        %v5010 = vsel %vm4946, 1.0, 0.0
        %v5011 = vsel %vm4947, 1.0, 0.0
        %v5012 = vsel %vm4948, 1.0, 0.0
        %v5013 = vsel %vm4949, 1.0, 0.0
        %v5014 = vsel %vm4950, 1.0, 0.0
        %v5015 = vsel %vm4951, 1.0, 0.0
        %v5016 = vsel %vm4952, 1.0, 0.0
        %v5017 = vsel %vm4953, 1.0, 0.0
        %v5018 = vsel %vm4954, 1.0, 0.0
        %v5019 = vsel %vm4955, 1.0, 0.0
        %v5020 = vsel %vm4956, 1.0, 0.0
        %v5021 = vsel %vm4957, 1.0, 0.0
        %v5022 = vsel %vm4958, 1.0, 0.0
        %v5023 = vsel %vm4959, 1.0, 0.0
        %v5024 = vsel %vm4960, 1.0, 0.0
        %v5025 = vsel %vm4961, 1.0, 0.0
        %v5026 = vsel %vm4962, 1.0, 0.0
        %v5027 = vsel %vm4963, 1.0, 0.0
        %v5028 = vsel %vm4964, 1.0, 0.0
        %v5029 = vsel %vm4965, 1.0, 0.0
        %v5030 = vsel %vm4966, 1.0, 0.0
        %v5031 = vsel %vm4967, 1.0, 0.0
        %v5032 = vsel %vm4968, 1.0, 0.0
        %v5033 = vsel %vm4969, 1.0, 0.0
        %v5034 = vsel %vm4970, 1.0, 0.0
        %v5035 = vsel %vm4971, 1.0, 0.0
        %v5036 = vsel %vm4972, 1.0, 0.0
        %v5037 = vsel %vm4973, 1.0, 0.0
        %v5038 = vsel %vm4974, 1.0, 0.0
        %v5039 = vsel %vm4975, 1.0, 0.0
        %v5040 = vsel %vm4976, 1.0, 0.0
        %v5041 = vsel %vm4977, 1.0, 0.0
        %v5042 = vsel %vm4978, 1.0, 0.0
        %v5043 = vsel %vm4979, 1.0, 0.0
        %v5044 = vsel %vm4980, 1.0, 0.0
        %v5045 = vsel %vm4981, 1.0, 0.0
        %v5046 = vsel %vm4982, 1.0, 0.0
        %v5047 = vsel %vm4983, 1.0, 0.0
        %v5048 = vsel %vm4984, 1.0, 0.0
        %v5049 = vsel %vm4985, 1.0, 0.0
        %v5050 = vsel %vm4986, 1.0, 0.0
        %v5051 = vsel %vm4987, 1.0, 0.0
        %5052 = vmatprep.subr.mxu0 %v4989
        %5053 = vmatpush1.msra.mxu0 %v4988
        %5054 = vmatprep.subr.mxu0 %v4991
        %5055 = vmatpush1.msra.mxu0 %v4990
        %5056 = vmatprep.subr.mxu0 %v4993
        %5057 = vmatpush1.msra.mxu0 %v4992
        %5058 = vmatprep.subr.mxu0 %v4995
        %5059 = vmatpush1.msra.mxu0 %v4994
        %5060 = vmatprep.subr.mxu0 %v4997
        %5061 = vmatpush1.msra.mxu0 %v4996
        %5062 = vmatprep.subr.mxu0 %v4999
        %5063 = vmatpush1.msra.mxu0 %v4998
        %5064 = vmatprep.subr.mxu0 %v5001
        %5065 = vmatpush1.msra.mxu0 %v5000
        %5066 = vmatprep.subr.mxu0 %v5003
        %5067 = vmatpush1.msra.mxu0 %v5002
        %5068 = vmatprep.subr.mxu0 %v5005
        %5069 = vmatpush1.msra.mxu0 %v5004
        %5070 = vmatprep.subr.mxu0 %v5007
        %5071 = vmatpush1.msra.mxu0 %v5006
        %5072 = vmatprep.subr.mxu0 %v5009
        %5073 = vmatpush1.msra.mxu0 %v5008
        %5074 = vmatprep.subr.mxu0 %v5011
        %5075 = vmatpush1.msra.mxu0 %v5010
        %5076 = vmatprep.subr.mxu0 %v5013
        %5077 = vmatpush1.msra.mxu0 %v5012
        %5078 = vmatprep.subr.mxu0 %v5015
        %5079 = vmatpush1.msra.mxu0 %v5014
        %5080 = vmatprep.subr.mxu0 %v5017
        %5081 = vmatpush1.msra.mxu0 %v5016
        %5082 = vmatprep.subr.mxu0 %v5019
        %5083 = vmatpush1.msra.mxu0 %v5018
        %5084 = vmatprep.subr.mxu0 %v5021
        %5085 = vmatpush1.msra.mxu0 %v5020
        %5086 = vmatprep.subr.mxu0 %v5023
        %5087 = vmatpush1.msra.mxu0 %v5022
        %5088 = vmatprep.subr.mxu0 %v5025
        %5089 = vmatpush1.msra.mxu0 %v5024
        %5090 = vmatprep.subr.mxu0 %v5027
        %5091 = vmatpush1.msra.mxu0 %v5026
        %5092 = vmatprep.subr.mxu0 %v5029
        %5093 = vmatpush1.msra.mxu0 %v5028
        %5094 = vmatprep.subr.mxu0 %v5031
        %5095 = vmatpush1.msra.mxu0 %v5030
        %5096 = vmatprep.subr.mxu0 %v5033
        %5097 = vmatpush1.msra.mxu0 %v5032
        %5098 = vmatprep.subr.mxu0 %v5035
        %5099 = vmatpush1.msra.mxu0 %v5034
        %5100 = vmatprep.subr.mxu0 %v5037
        %5101 = vmatpush1.msra.mxu0 %v5036
        %5102 = vmatprep.subr.mxu0 %v5039
        %5103 = vmatpush1.msra.mxu0 %v5038
        %5104 = vmatprep.subr.mxu0 %v5041
        %5105 = vmatpush1.msra.mxu0 %v5040
        %5106 = vmatprep.subr.mxu0 %v5043
        %5107 = vmatpush1.msra.mxu0 %v5042
        %5108 = vmatprep.subr.mxu0 %v5045
        %5109 = vmatpush1.msra.mxu0 %v5044
        %5110 = vmatprep.subr.mxu0 %v5047
        %5111 = vmatpush1.msra.mxu0 %v5046
        %5112 = vmatprep.subr.mxu0 %v5049
        %5113 = vmatpush1.msra.mxu0 %v5048
        %5114 = vmatprep.subr.mxu0 %v5051
        %5115 = vmatpush1.msra.mxu0 %v5050
        %v5116 = vand.u32 %v4731, 4294901760
        %v5117 = vsub.f32 %v4731, %v5116
        %v5118 = vand.u32 %v5117, 4294901760
        %v5119 = vsub.f32 %v5117, %v5118
        %v5120 = vand.u32 %v5119, 4294901760
        %5121 = vmatprep.mubr.f32.mxu0 %v5120
        %v5122 = vand.u32 %v4730, 4294901760
        %v5123 = vsub.f32 %v4730, %v5122
        %v5124 = vand.u32 %v5123, 4294901760
        %v5125 = vsub.f32 %v5123, %v5124
        %v5126 = vand.u32 %v5125, 4294901760
        %5127 = vmatmul.mubr.f32.gmra.mrb[0].mxu0 %v5126
        %v5128 = vpop.f32.mrb[0].mxu0
        %v5129 = vadd.f32 0.0, %v5128
        %v5130 = vpop.f32.mrb[0].mxu0
        %v5131 = vadd.f32 0.0, %v5130
        %5132 = vdwg.mxu0
        %v5133 = vsub.f32 %v4989, %v4989
        %v5134 = vand.u32 %v5133, 4294901760
        %v5135 = vsub.f32 %v5133, %v5134
        %v5136 = vand.u32 %v5135, 4294901760
        %5137 = vmatprep.subr.mxu0 %v5136
        %v5138 = vsub.f32 %v4988, %v4988
        %v5139 = vand.u32 %v5138, 4294901760
        %v5140 = vsub.f32 %v5138, %v5139
        %v5141 = vand.u32 %v5140, 4294901760
        %5142 = vmatpush1.msra.mxu0 %v5141
        %v5143 = vsub.f32 %v4991, %v4991
        %v5144 = vand.u32 %v5143, 4294901760
        %v5145 = vsub.f32 %v5143, %v5144
        %v5146 = vand.u32 %v5145, 4294901760
        %5147 = vmatprep.subr.mxu0 %v5146
        %v5148 = vsub.f32 %v4990, %v4990
        %v5149 = vand.u32 %v5148, 4294901760
        %v5150 = vsub.f32 %v5148, %v5149
        %v5151 = vand.u32 %v5150, 4294901760
        %5152 = vmatpush1.msra.mxu0 %v5151
        %v5153 = vsub.f32 %v4993, %v4993
        %v5154 = vand.u32 %v5153, 4294901760
        %v5155 = vsub.f32 %v5153, %v5154
        %v5156 = vand.u32 %v5155, 4294901760
        %5157 = vmatprep.subr.mxu0 %v5156
        %v5158 = vsub.f32 %v4992, %v4992
        %v5159 = vand.u32 %v5158, 4294901760
        %v5160 = vsub.f32 %v5158, %v5159
        %v5161 = vand.u32 %v5160, 4294901760
        %5162 = vmatpush1.msra.mxu0 %v5161
        %v5163 = vsub.f32 %v4995, %v4995
        %v5164 = vand.u32 %v5163, 4294901760
        %v5165 = vsub.f32 %v5163, %v5164
        %v5166 = vand.u32 %v5165, 4294901760
        %5167 = vmatprep.subr.mxu0 %v5166
        %v5168 = vsub.f32 %v4994, %v4994
        %v5169 = vand.u32 %v5168, 4294901760
        %v5170 = vsub.f32 %v5168, %v5169
        %v5171 = vand.u32 %v5170, 4294901760
        %5172 = vmatpush1.msra.mxu0 %v5171
        %v5173 = vsub.f32 %v4997, %v4997
        %v5174 = vand.u32 %v5173, 4294901760
        %v5175 = vsub.f32 %v5173, %v5174
        %v5176 = vand.u32 %v5175, 4294901760
        %5177 = vmatprep.subr.mxu0 %v5176
        %v5178 = vsub.f32 %v4996, %v4996
        %v5179 = vand.u32 %v5178, 4294901760
        %v5180 = vsub.f32 %v5178, %v5179
        %v5181 = vand.u32 %v5180, 4294901760
        %5182 = vmatpush1.msra.mxu0 %v5181
        %v5183 = vsub.f32 %v4999, %v4999
        %v5184 = vand.u32 %v5183, 4294901760
        %v5185 = vsub.f32 %v5183, %v5184
        %v5186 = vand.u32 %v5185, 4294901760
        %5187 = vmatprep.subr.mxu0 %v5186
        %v5188 = vsub.f32 %v4998, %v4998
        %v5189 = vand.u32 %v5188, 4294901760
        %v5190 = vsub.f32 %v5188, %v5189
        %v5191 = vand.u32 %v5190, 4294901760
        %5192 = vmatpush1.msra.mxu0 %v5191
        %v5193 = vsub.f32 %v5001, %v5001
        %v5194 = vand.u32 %v5193, 4294901760
        %v5195 = vsub.f32 %v5193, %v5194
        %v5196 = vand.u32 %v5195, 4294901760
        %5197 = vmatprep.subr.mxu0 %v5196
        %v5198 = vsub.f32 %v5000, %v5000
        %v5199 = vand.u32 %v5198, 4294901760
        %v5200 = vsub.f32 %v5198, %v5199
        %v5201 = vand.u32 %v5200, 4294901760
        %5202 = vmatpush1.msra.mxu0 %v5201
        %v5203 = vsub.f32 %v5003, %v5003
        %v5204 = vand.u32 %v5203, 4294901760
        %v5205 = vsub.f32 %v5203, %v5204
        %v5206 = vand.u32 %v5205, 4294901760
        %5207 = vmatprep.subr.mxu0 %v5206
        %v5208 = vsub.f32 %v5002, %v5002
        %v5209 = vand.u32 %v5208, 4294901760
        %v5210 = vsub.f32 %v5208, %v5209
        %v5211 = vand.u32 %v5210, 4294901760
        %5212 = vmatpush1.msra.mxu0 %v5211
        %v5213 = vsub.f32 %v5005, %v5005
        %v5214 = vand.u32 %v5213, 4294901760
        %v5215 = vsub.f32 %v5213, %v5214
        %v5216 = vand.u32 %v5215, 4294901760
        %5217 = vmatprep.subr.mxu0 %v5216
        %v5218 = vsub.f32 %v5004, %v5004
        %v5219 = vand.u32 %v5218, 4294901760
        %v5220 = vsub.f32 %v5218, %v5219
        %v5221 = vand.u32 %v5220, 4294901760
        %5222 = vmatpush1.msra.mxu0 %v5221
        %v5223 = vsub.f32 %v5007, %v5007
        %v5224 = vand.u32 %v5223, 4294901760
        %v5225 = vsub.f32 %v5223, %v5224
        %v5226 = vand.u32 %v5225, 4294901760
        %5227 = vmatprep.subr.mxu0 %v5226
        %v5228 = vsub.f32 %v5006, %v5006
        %v5229 = vand.u32 %v5228, 4294901760
        %v5230 = vsub.f32 %v5228, %v5229
        %v5231 = vand.u32 %v5230, 4294901760
        %5232 = vmatpush1.msra.mxu0 %v5231
        %v5233 = vsub.f32 %v5009, %v5009
        %v5234 = vand.u32 %v5233, 4294901760
        %v5235 = vsub.f32 %v5233, %v5234
        %v5236 = vand.u32 %v5235, 4294901760
        %5237 = vmatprep.subr.mxu0 %v5236
        %v5238 = vsub.f32 %v5008, %v5008
        %v5239 = vand.u32 %v5238, 4294901760
        %v5240 = vsub.f32 %v5238, %v5239
        %v5241 = vand.u32 %v5240, 4294901760
        %5242 = vmatpush1.msra.mxu0 %v5241
        %v5243 = vsub.f32 %v5011, %v5011
        %v5244 = vand.u32 %v5243, 4294901760
        %v5245 = vsub.f32 %v5243, %v5244
        %v5246 = vand.u32 %v5245, 4294901760
        %5247 = vmatprep.subr.mxu0 %v5246
        %v5248 = vsub.f32 %v5010, %v5010
        %v5249 = vand.u32 %v5248, 4294901760
        %v5250 = vsub.f32 %v5248, %v5249
        %v5251 = vand.u32 %v5250, 4294901760
        %5252 = vmatpush1.msra.mxu0 %v5251
        %v5253 = vsub.f32 %v5013, %v5013
        %v5254 = vand.u32 %v5253, 4294901760
        %v5255 = vsub.f32 %v5253, %v5254
        %v5256 = vand.u32 %v5255, 4294901760
        %5257 = vmatprep.subr.mxu0 %v5256
        %v5258 = vsub.f32 %v5012, %v5012
        %v5259 = vand.u32 %v5258, 4294901760
        %v5260 = vsub.f32 %v5258, %v5259
        %v5261 = vand.u32 %v5260, 4294901760
        %5262 = vmatpush1.msra.mxu0 %v5261
        %v5263 = vsub.f32 %v5015, %v5015
        %v5264 = vand.u32 %v5263, 4294901760
        %v5265 = vsub.f32 %v5263, %v5264
        %v5266 = vand.u32 %v5265, 4294901760
        %5267 = vmatprep.subr.mxu0 %v5266
        %v5268 = vsub.f32 %v5014, %v5014
        %v5269 = vand.u32 %v5268, 4294901760
        %v5270 = vsub.f32 %v5268, %v5269
        %v5271 = vand.u32 %v5270, 4294901760
        %5272 = vmatpush1.msra.mxu0 %v5271
        %v5273 = vsub.f32 %v5017, %v5017
        %v5274 = vand.u32 %v5273, 4294901760
        %v5275 = vsub.f32 %v5273, %v5274
        %v5276 = vand.u32 %v5275, 4294901760
        %5277 = vmatprep.subr.mxu0 %v5276
        %v5278 = vsub.f32 %v5016, %v5016
        %v5279 = vand.u32 %v5278, 4294901760
        %v5280 = vsub.f32 %v5278, %v5279
        %v5281 = vand.u32 %v5280, 4294901760
        %5282 = vmatpush1.msra.mxu0 %v5281
        %v5283 = vsub.f32 %v5019, %v5019
        %v5284 = vand.u32 %v5283, 4294901760
        %v5285 = vsub.f32 %v5283, %v5284
        %v5286 = vand.u32 %v5285, 4294901760
        %5287 = vmatprep.subr.mxu0 %v5286
        %v5288 = vsub.f32 %v5018, %v5018
        %v5289 = vand.u32 %v5288, 4294901760
        %v5290 = vsub.f32 %v5288, %v5289
        %v5291 = vand.u32 %v5290, 4294901760
        %5292 = vmatpush1.msra.mxu0 %v5291
        %v5293 = vsub.f32 %v5021, %v5021
        %v5294 = vand.u32 %v5293, 4294901760
        %v5295 = vsub.f32 %v5293, %v5294
        %v5296 = vand.u32 %v5295, 4294901760
        %5297 = vmatprep.subr.mxu0 %v5296
        %v5298 = vsub.f32 %v5020, %v5020
        %v5299 = vand.u32 %v5298, 4294901760
        %v5300 = vsub.f32 %v5298, %v5299
        %v5301 = vand.u32 %v5300, 4294901760
        %5302 = vmatpush1.msra.mxu0 %v5301
        %v5303 = vsub.f32 %v5023, %v5023
        %v5304 = vand.u32 %v5303, 4294901760
        %v5305 = vsub.f32 %v5303, %v5304
        %v5306 = vand.u32 %v5305, 4294901760
        %5307 = vmatprep.subr.mxu0 %v5306
        %v5308 = vsub.f32 %v5022, %v5022
        %v5309 = vand.u32 %v5308, 4294901760
        %v5310 = vsub.f32 %v5308, %v5309
        %v5311 = vand.u32 %v5310, 4294901760
        %5312 = vmatpush1.msra.mxu0 %v5311
        %v5313 = vsub.f32 %v5025, %v5025
        %v5314 = vand.u32 %v5313, 4294901760
        %v5315 = vsub.f32 %v5313, %v5314
        %v5316 = vand.u32 %v5315, 4294901760
        %5317 = vmatprep.subr.mxu0 %v5316
        %v5318 = vsub.f32 %v5024, %v5024
        %v5319 = vand.u32 %v5318, 4294901760
        %v5320 = vsub.f32 %v5318, %v5319
        %v5321 = vand.u32 %v5320, 4294901760
        %5322 = vmatpush1.msra.mxu0 %v5321
        %v5323 = vsub.f32 %v5027, %v5027
        %v5324 = vand.u32 %v5323, 4294901760
        %v5325 = vsub.f32 %v5323, %v5324
        %v5326 = vand.u32 %v5325, 4294901760
        %5327 = vmatprep.subr.mxu0 %v5326
        %v5328 = vsub.f32 %v5026, %v5026
        %v5329 = vand.u32 %v5328, 4294901760
        %v5330 = vsub.f32 %v5328, %v5329
        %v5331 = vand.u32 %v5330, 4294901760
        %5332 = vmatpush1.msra.mxu0 %v5331
        %v5333 = vsub.f32 %v5029, %v5029
        %v5334 = vand.u32 %v5333, 4294901760
        %v5335 = vsub.f32 %v5333, %v5334
        %v5336 = vand.u32 %v5335, 4294901760
        %5337 = vmatprep.subr.mxu0 %v5336
        %v5338 = vsub.f32 %v5028, %v5028
        %v5339 = vand.u32 %v5338, 4294901760
        %v5340 = vsub.f32 %v5338, %v5339
        %v5341 = vand.u32 %v5340, 4294901760
        %5342 = vmatpush1.msra.mxu0 %v5341
        %v5343 = vsub.f32 %v5031, %v5031
        %v5344 = vand.u32 %v5343, 4294901760
        %v5345 = vsub.f32 %v5343, %v5344
        %v5346 = vand.u32 %v5345, 4294901760
        %5347 = vmatprep.subr.mxu0 %v5346
        %v5348 = vsub.f32 %v5030, %v5030
        %v5349 = vand.u32 %v5348, 4294901760
        %v5350 = vsub.f32 %v5348, %v5349
        %v5351 = vand.u32 %v5350, 4294901760
        %5352 = vmatpush1.msra.mxu0 %v5351
        %v5353 = vsub.f32 %v5033, %v5033
        %v5354 = vand.u32 %v5353, 4294901760
        %v5355 = vsub.f32 %v5353, %v5354
        %v5356 = vand.u32 %v5355, 4294901760
        %5357 = vmatprep.subr.mxu0 %v5356
        %v5358 = vsub.f32 %v5032, %v5032
        %v5359 = vand.u32 %v5358, 4294901760
        %v5360 = vsub.f32 %v5358, %v5359
        %v5361 = vand.u32 %v5360, 4294901760
        %5362 = vmatpush1.msra.mxu0 %v5361
        %v5363 = vsub.f32 %v5035, %v5035
        %v5364 = vand.u32 %v5363, 4294901760
        %v5365 = vsub.f32 %v5363, %v5364
        %v5366 = vand.u32 %v5365, 4294901760
        %5367 = vmatprep.subr.mxu0 %v5366
        %v5368 = vsub.f32 %v5034, %v5034
        %v5369 = vand.u32 %v5368, 4294901760
        %v5370 = vsub.f32 %v5368, %v5369
        %v5371 = vand.u32 %v5370, 4294901760
        %5372 = vmatpush1.msra.mxu0 %v5371
        %v5373 = vsub.f32 %v5037, %v5037
        %v5374 = vand.u32 %v5373, 4294901760
        %v5375 = vsub.f32 %v5373, %v5374
        %v5376 = vand.u32 %v5375, 4294901760
        %5377 = vmatprep.subr.mxu0 %v5376
        %v5378 = vsub.f32 %v5036, %v5036
        %v5379 = vand.u32 %v5378, 4294901760
        %v5380 = vsub.f32 %v5378, %v5379
        %v5381 = vand.u32 %v5380, 4294901760
        %5382 = vmatpush1.msra.mxu0 %v5381
        %v5383 = vsub.f32 %v5039, %v5039
        %v5384 = vand.u32 %v5383, 4294901760
        %v5385 = vsub.f32 %v5383, %v5384
        %v5386 = vand.u32 %v5385, 4294901760
        %5387 = vmatprep.subr.mxu0 %v5386
        %v5388 = vsub.f32 %v5038, %v5038
        %v5389 = vand.u32 %v5388, 4294901760
        %v5390 = vsub.f32 %v5388, %v5389
        %v5391 = vand.u32 %v5390, 4294901760
        %5392 = vmatpush1.msra.mxu0 %v5391
        %v5393 = vsub.f32 %v5041, %v5041
        %v5394 = vand.u32 %v5393, 4294901760
        %v5395 = vsub.f32 %v5393, %v5394
        %v5396 = vand.u32 %v5395, 4294901760
        %5397 = vmatprep.subr.mxu0 %v5396
        %v5398 = vsub.f32 %v5040, %v5040
        %v5399 = vand.u32 %v5398, 4294901760
        %v5400 = vsub.f32 %v5398, %v5399
        %v5401 = vand.u32 %v5400, 4294901760
        %5402 = vmatpush1.msra.mxu0 %v5401
        %v5403 = vsub.f32 %v5043, %v5043
        %v5404 = vand.u32 %v5403, 4294901760
        %v5405 = vsub.f32 %v5403, %v5404
        %v5406 = vand.u32 %v5405, 4294901760
        %5407 = vmatprep.subr.mxu0 %v5406
        %v5408 = vsub.f32 %v5042, %v5042
        %v5409 = vand.u32 %v5408, 4294901760
        %v5410 = vsub.f32 %v5408, %v5409
        %v5411 = vand.u32 %v5410, 4294901760
        %5412 = vmatpush1.msra.mxu0 %v5411
        %v5413 = vsub.f32 %v5045, %v5045
        %v5414 = vand.u32 %v5413, 4294901760
        %v5415 = vsub.f32 %v5413, %v5414
        %v5416 = vand.u32 %v5415, 4294901760
        %5417 = vmatprep.subr.mxu0 %v5416
        %v5418 = vsub.f32 %v5044, %v5044
        %v5419 = vand.u32 %v5418, 4294901760
        %v5420 = vsub.f32 %v5418, %v5419
        %v5421 = vand.u32 %v5420, 4294901760
        %5422 = vmatpush1.msra.mxu0 %v5421
        %v5423 = vsub.f32 %v5047, %v5047
        %v5424 = vand.u32 %v5423, 4294901760
        %v5425 = vsub.f32 %v5423, %v5424
        %v5426 = vand.u32 %v5425, 4294901760
        %5427 = vmatprep.subr.mxu0 %v5426
        %v5428 = vsub.f32 %v5046, %v5046
        %v5429 = vand.u32 %v5428, 4294901760
        %v5430 = vsub.f32 %v5428, %v5429
        %v5431 = vand.u32 %v5430, 4294901760
        %5432 = vmatpush1.msra.mxu0 %v5431
        %v5433 = vsub.f32 %v5049, %v5049
        %v5434 = vand.u32 %v5433, 4294901760
        %v5435 = vsub.f32 %v5433, %v5434
        %v5436 = vand.u32 %v5435, 4294901760
        %5437 = vmatprep.subr.mxu0 %v5436
        %v5438 = vsub.f32 %v5048, %v5048
        %v5439 = vand.u32 %v5438, 4294901760
        %v5440 = vsub.f32 %v5438, %v5439
        %v5441 = vand.u32 %v5440, 4294901760
        %5442 = vmatpush1.msra.mxu0 %v5441
        %v5443 = vsub.f32 %v5051, %v5051
        %v5444 = vand.u32 %v5443, 4294901760
        %v5445 = vsub.f32 %v5443, %v5444
        %v5446 = vand.u32 %v5445, 4294901760
        %5447 = vmatprep.subr.mxu0 %v5446
        %v5448 = vsub.f32 %v5050, %v5050
        %v5449 = vand.u32 %v5448, 4294901760
        %v5450 = vsub.f32 %v5448, %v5449
        %v5451 = vand.u32 %v5450, 4294901760
        %5452 = vmatpush1.msra.mxu0 %v5451
        %v5453 = vand.u32 %v4731, 4294901760
        %5454 = vmatprep.mubr.f32.mxu0 %v5453
        %v5455 = vand.u32 %v4730, 4294901760
        %5456 = vmatmul.mubr.f32.gmra.mrb[0].mxu0 %v5455
        %v5457 = vpop.f32.mrb[0].mxu0
        %v5458 = vadd.f32 %v5129, %v5457
        %v5459 = vpop.f32.mrb[0].mxu0
        %v5460 = vadd.f32 %v5131, %v5459
        %5461 = vdwg.mxu0
        %v5462 = vsub.f32 %v4989, %v4989
        %5463 = vmatprep.subr.mxu0 %v5462
        %v5464 = vsub.f32 %v4988, %v4988
        %5465 = vmatpush1.msra.mxu0 %v5464
        %v5466 = vsub.f32 %v4991, %v4991
        %5467 = vmatprep.subr.mxu0 %v5466
        %v5468 = vsub.f32 %v4990, %v4990
        %5469 = vmatpush1.msra.mxu0 %v5468
        %v5470 = vsub.f32 %v4993, %v4993
        %5471 = vmatprep.subr.mxu0 %v5470
        %v5472 = vsub.f32 %v4992, %v4992
        %5473 = vmatpush1.msra.mxu0 %v5472
        %v5474 = vsub.f32 %v4995, %v4995
        %5475 = vmatprep.subr.mxu0 %v5474
        %v5476 = vsub.f32 %v4994, %v4994
        %5477 = vmatpush1.msra.mxu0 %v5476
        %v5478 = vsub.f32 %v4997, %v4997
        %5479 = vmatprep.subr.mxu0 %v5478
        %v5480 = vsub.f32 %v4996, %v4996
        %5481 = vmatpush1.msra.mxu0 %v5480
        %v5482 = vsub.f32 %v4999, %v4999
        %5483 = vmatprep.subr.mxu0 %v5482
        %v5484 = vsub.f32 %v4998, %v4998
        %5485 = vmatpush1.msra.mxu0 %v5484
        %v5486 = vsub.f32 %v5001, %v5001
        %5487 = vmatprep.subr.mxu0 %v5486
        %v5488 = vsub.f32 %v5000, %v5000
        %5489 = vmatpush1.msra.mxu0 %v5488
        %v5490 = vsub.f32 %v5003, %v5003
        %5491 = vmatprep.subr.mxu0 %v5490
        %v5492 = vsub.f32 %v5002, %v5002
        %5493 = vmatpush1.msra.mxu0 %v5492
        %v5494 = vsub.f32 %v5005, %v5005
        %5495 = vmatprep.subr.mxu0 %v5494
        %v5496 = vsub.f32 %v5004, %v5004
        %5497 = vmatpush1.msra.mxu0 %v5496
        %v5498 = vsub.f32 %v5007, %v5007
        %5499 = vmatprep.subr.mxu0 %v5498
        %v5500 = vsub.f32 %v5006, %v5006
        %5501 = vmatpush1.msra.mxu0 %v5500
        %v5502 = vsub.f32 %v5009, %v5009
        %5503 = vmatprep.subr.mxu0 %v5502
        %v5504 = vsub.f32 %v5008, %v5008
        %5505 = vmatpush1.msra.mxu0 %v5504
        %v5506 = vsub.f32 %v5011, %v5011
        %5507 = vmatprep.subr.mxu0 %v5506
        %v5508 = vsub.f32 %v5010, %v5010
        %5509 = vmatpush1.msra.mxu0 %v5508
        %v5510 = vsub.f32 %v5013, %v5013
        %5511 = vmatprep.subr.mxu0 %v5510
        %v5512 = vsub.f32 %v5012, %v5012
        %5513 = vmatpush1.msra.mxu0 %v5512
        %v5514 = vsub.f32 %v5015, %v5015
        %5515 = vmatprep.subr.mxu0 %v5514
        %v5516 = vsub.f32 %v5014, %v5014
        %5517 = vmatpush1.msra.mxu0 %v5516
        %v5518 = vsub.f32 %v5017, %v5017
        %5519 = vmatprep.subr.mxu0 %v5518
        %v5520 = vsub.f32 %v5016, %v5016
        %5521 = vmatpush1.msra.mxu0 %v5520
        %v5522 = vsub.f32 %v5019, %v5019
        %5523 = vmatprep.subr.mxu0 %v5522
        %v5524 = vsub.f32 %v5018, %v5018
        %5525 = vmatpush1.msra.mxu0 %v5524
        %v5526 = vsub.f32 %v5021, %v5021
        %5527 = vmatprep.subr.mxu0 %v5526
        %v5528 = vsub.f32 %v5020, %v5020
        %5529 = vmatpush1.msra.mxu0 %v5528
        %v5530 = vsub.f32 %v5023, %v5023
        %5531 = vmatprep.subr.mxu0 %v5530
        %v5532 = vsub.f32 %v5022, %v5022
        %5533 = vmatpush1.msra.mxu0 %v5532
        %v5534 = vsub.f32 %v5025, %v5025
        %5535 = vmatprep.subr.mxu0 %v5534
        %v5536 = vsub.f32 %v5024, %v5024
        %5537 = vmatpush1.msra.mxu0 %v5536
        %v5538 = vsub.f32 %v5027, %v5027
        %5539 = vmatprep.subr.mxu0 %v5538
        %v5540 = vsub.f32 %v5026, %v5026
        %5541 = vmatpush1.msra.mxu0 %v5540
        %v5542 = vsub.f32 %v5029, %v5029
        %5543 = vmatprep.subr.mxu0 %v5542
        %v5544 = vsub.f32 %v5028, %v5028
        %5545 = vmatpush1.msra.mxu0 %v5544
        %v5546 = vsub.f32 %v5031, %v5031
        %5547 = vmatprep.subr.mxu0 %v5546
        %v5548 = vsub.f32 %v5030, %v5030
        %5549 = vmatpush1.msra.mxu0 %v5548
        %v5550 = vsub.f32 %v5033, %v5033
        %5551 = vmatprep.subr.mxu0 %v5550
        %v5552 = vsub.f32 %v5032, %v5032
        %5553 = vmatpush1.msra.mxu0 %v5552
        %v5554 = vsub.f32 %v5035, %v5035
        %5555 = vmatprep.subr.mxu0 %v5554
        %v5556 = vsub.f32 %v5034, %v5034
        %5557 = vmatpush1.msra.mxu0 %v5556
        %v5558 = vsub.f32 %v5037, %v5037
        %5559 = vmatprep.subr.mxu0 %v5558
        %v5560 = vsub.f32 %v5036, %v5036
        %5561 = vmatpush1.msra.mxu0 %v5560
        %v5562 = vsub.f32 %v5039, %v5039
        %5563 = vmatprep.subr.mxu0 %v5562
        %v5564 = vsub.f32 %v5038, %v5038
        %5565 = vmatpush1.msra.mxu0 %v5564
        %v5566 = vsub.f32 %v5041, %v5041
        %5567 = vmatprep.subr.mxu0 %v5566
        %v5568 = vsub.f32 %v5040, %v5040
        %5569 = vmatpush1.msra.mxu0 %v5568
        %v5570 = vsub.f32 %v5043, %v5043
        %5571 = vmatprep.subr.mxu0 %v5570
        %v5572 = vsub.f32 %v5042, %v5042
        %5573 = vmatpush1.msra.mxu0 %v5572
        %v5574 = vsub.f32 %v5045, %v5045
        %5575 = vmatprep.subr.mxu0 %v5574
        %v5576 = vsub.f32 %v5044, %v5044
        %5577 = vmatpush1.msra.mxu0 %v5576
        %v5578 = vsub.f32 %v5047, %v5047
        %5579 = vmatprep.subr.mxu0 %v5578
        %v5580 = vsub.f32 %v5046, %v5046
        %5581 = vmatpush1.msra.mxu0 %v5580
        %v5582 = vsub.f32 %v5049, %v5049
        %5583 = vmatprep.subr.mxu0 %v5582
        %v5584 = vsub.f32 %v5048, %v5048
        %5585 = vmatpush1.msra.mxu0 %v5584
        %v5586 = vsub.f32 %v5051, %v5051
        %5587 = vmatprep.subr.mxu0 %v5586
        %v5588 = vsub.f32 %v5050, %v5050
        %5589 = vmatpush1.msra.mxu0 %v5588
        %v5590 = vand.u32 %v4731, 4294901760
        %v5591 = vsub.f32 %v4731, %v5590
        %5592 = vmatprep.mubr.f32.mxu0 %v5591
        %v5593 = vand.u32 %v4730, 4294901760
        %v5594 = vsub.f32 %v4730, %v5593
        %5595 = vmatmul.mubr.f32.gmra.mrb[0].mxu0 %v5594
        %v5596 = vpop.f32.mrb[0].mxu0
        %v5597 = vadd.f32 %v5458, %v5596
        %v5598 = vpop.f32.mrb[0].mxu0
        %v5599 = vadd.f32 %v5460, %v5598
        %5600 = vdwg.mxu0
        %5601 = vmatprep.subr.mxu0 %v4989
        %5602 = vmatpush1.msra.mxu0 %v4988
        %5603 = vmatprep.subr.mxu0 %v4991
        %5604 = vmatpush1.msra.mxu0 %v4990
        %5605 = vmatprep.subr.mxu0 %v4993
        %5606 = vmatpush1.msra.mxu0 %v4992
        %5607 = vmatprep.subr.mxu0 %v4995
        %5608 = vmatpush1.msra.mxu0 %v4994
        %5609 = vmatprep.subr.mxu0 %v4997
        %5610 = vmatpush1.msra.mxu0 %v4996
        %5611 = vmatprep.subr.mxu0 %v4999
        %5612 = vmatpush1.msra.mxu0 %v4998
        %5613 = vmatprep.subr.mxu0 %v5001
        %5614 = vmatpush1.msra.mxu0 %v5000
        %5615 = vmatprep.subr.mxu0 %v5003
        %5616 = vmatpush1.msra.mxu0 %v5002
        %5617 = vmatprep.subr.mxu0 %v5005
        %5618 = vmatpush1.msra.mxu0 %v5004
        %5619 = vmatprep.subr.mxu0 %v5007
        %5620 = vmatpush1.msra.mxu0 %v5006
        %5621 = vmatprep.subr.mxu0 %v5009
        %5622 = vmatpush1.msra.mxu0 %v5008
        %5623 = vmatprep.subr.mxu0 %v5011
        %5624 = vmatpush1.msra.mxu0 %v5010
        %5625 = vmatprep.subr.mxu0 %v5013
        %5626 = vmatpush1.msra.mxu0 %v5012
        %5627 = vmatprep.subr.mxu0 %v5015
        %5628 = vmatpush1.msra.mxu0 %v5014
        %5629 = vmatprep.subr.mxu0 %v5017
        %5630 = vmatpush1.msra.mxu0 %v5016
        %5631 = vmatprep.subr.mxu0 %v5019
        %5632 = vmatpush1.msra.mxu0 %v5018
        %5633 = vmatprep.subr.mxu0 %v5021
        %5634 = vmatpush1.msra.mxu0 %v5020
        %5635 = vmatprep.subr.mxu0 %v5023
        %5636 = vmatpush1.msra.mxu0 %v5022
        %5637 = vmatprep.subr.mxu0 %v5025
        %5638 = vmatpush1.msra.mxu0 %v5024
        %5639 = vmatprep.subr.mxu0 %v5027
        %5640 = vmatpush1.msra.mxu0 %v5026
        %5641 = vmatprep.subr.mxu0 %v5029
        %5642 = vmatpush1.msra.mxu0 %v5028
        %5643 = vmatprep.subr.mxu0 %v5031
        %5644 = vmatpush1.msra.mxu0 %v5030
        %5645 = vmatprep.subr.mxu0 %v5033
        %5646 = vmatpush1.msra.mxu0 %v5032
        %5647 = vmatprep.subr.mxu0 %v5035
        %5648 = vmatpush1.msra.mxu0 %v5034
        %5649 = vmatprep.subr.mxu0 %v5037
        %5650 = vmatpush1.msra.mxu0 %v5036
        %5651 = vmatprep.subr.mxu0 %v5039
        %5652 = vmatpush1.msra.mxu0 %v5038
        %5653 = vmatprep.subr.mxu0 %v5041
        %5654 = vmatpush1.msra.mxu0 %v5040
        %5655 = vmatprep.subr.mxu0 %v5043
        %5656 = vmatpush1.msra.mxu0 %v5042
        %5657 = vmatprep.subr.mxu0 %v5045
        %5658 = vmatpush1.msra.mxu0 %v5044
        %5659 = vmatprep.subr.mxu0 %v5047
        %5660 = vmatpush1.msra.mxu0 %v5046
        %5661 = vmatprep.subr.mxu0 %v5049
        %5662 = vmatpush1.msra.mxu0 %v5048
        %5663 = vmatprep.subr.mxu0 %v5051
        %5664 = vmatpush1.msra.mxu0 %v5050
        %v5665 = vand.u32 %v4731, 4294901760
        %v5666 = vsub.f32 %v4731, %v5665
        %v5667 = vand.u32 %v5666, 4294901760
        %5668 = vmatprep.mubr.f32.mxu0 %v5667
        %v5669 = vand.u32 %v4730, 4294901760
        %v5670 = vsub.f32 %v4730, %v5669
        %v5671 = vand.u32 %v5670, 4294901760
        %5672 = vmatmul.mubr.f32.gmra.mrb[0].mxu0 %v5671
        %v5673 = vpop.f32.mrb[0].mxu0
        %v5674 = vadd.f32 %v5597, %v5673
        %v5675 = vpop.f32.mrb[0].mxu0
        %v5676 = vadd.f32 %v5599, %v5675
        %5677 = vdwg.mxu0
        %v5678 = vsub.f32 %v4989, %v4989
        %v5679 = vand.u32 %v5678, 4294901760
        %5680 = vmatprep.subr.mxu0 %v5679
        %v5681 = vsub.f32 %v4988, %v4988
        %v5682 = vand.u32 %v5681, 4294901760
        %5683 = vmatpush1.msra.mxu0 %v5682
        %v5684 = vsub.f32 %v4991, %v4991
        %v5685 = vand.u32 %v5684, 4294901760
        %5686 = vmatprep.subr.mxu0 %v5685
        %v5687 = vsub.f32 %v4990, %v4990
        %v5688 = vand.u32 %v5687, 4294901760
        %5689 = vmatpush1.msra.mxu0 %v5688
        %v5690 = vsub.f32 %v4993, %v4993
        %v5691 = vand.u32 %v5690, 4294901760
        %5692 = vmatprep.subr.mxu0 %v5691
        %v5693 = vsub.f32 %v4992, %v4992
        %v5694 = vand.u32 %v5693, 4294901760
        %5695 = vmatpush1.msra.mxu0 %v5694
        %v5696 = vsub.f32 %v4995, %v4995
        %v5697 = vand.u32 %v5696, 4294901760
        %5698 = vmatprep.subr.mxu0 %v5697
        %v5699 = vsub.f32 %v4994, %v4994
        %v5700 = vand.u32 %v5699, 4294901760
        %5701 = vmatpush1.msra.mxu0 %v5700
        %v5702 = vsub.f32 %v4997, %v4997
        %v5703 = vand.u32 %v5702, 4294901760
        %5704 = vmatprep.subr.mxu0 %v5703
        %v5705 = vsub.f32 %v4996, %v4996
        %v5706 = vand.u32 %v5705, 4294901760
        %5707 = vmatpush1.msra.mxu0 %v5706
        %v5708 = vsub.f32 %v4999, %v4999
        %v5709 = vand.u32 %v5708, 4294901760
        %5710 = vmatprep.subr.mxu0 %v5709
        %v5711 = vsub.f32 %v4998, %v4998
        %v5712 = vand.u32 %v5711, 4294901760
        %5713 = vmatpush1.msra.mxu0 %v5712
        %v5714 = vsub.f32 %v5001, %v5001
        %v5715 = vand.u32 %v5714, 4294901760
        %5716 = vmatprep.subr.mxu0 %v5715
        %v5717 = vsub.f32 %v5000, %v5000
        %v5718 = vand.u32 %v5717, 4294901760
        %5719 = vmatpush1.msra.mxu0 %v5718
        %v5720 = vsub.f32 %v5003, %v5003
        %v5721 = vand.u32 %v5720, 4294901760
        %5722 = vmatprep.subr.mxu0 %v5721
        %v5723 = vsub.f32 %v5002, %v5002
        %v5724 = vand.u32 %v5723, 4294901760
        %5725 = vmatpush1.msra.mxu0 %v5724
        %v5726 = vsub.f32 %v5005, %v5005
        %v5727 = vand.u32 %v5726, 4294901760
        %5728 = vmatprep.subr.mxu0 %v5727
        %v5729 = vsub.f32 %v5004, %v5004
        %v5730 = vand.u32 %v5729, 4294901760
        %5731 = vmatpush1.msra.mxu0 %v5730
        %v5732 = vsub.f32 %v5007, %v5007
        %v5733 = vand.u32 %v5732, 4294901760
        %5734 = vmatprep.subr.mxu0 %v5733
        %v5735 = vsub.f32 %v5006, %v5006
        %v5736 = vand.u32 %v5735, 4294901760
        %5737 = vmatpush1.msra.mxu0 %v5736
        %v5738 = vsub.f32 %v5009, %v5009
        %v5739 = vand.u32 %v5738, 4294901760
        %5740 = vmatprep.subr.mxu0 %v5739
        %v5741 = vsub.f32 %v5008, %v5008
        %v5742 = vand.u32 %v5741, 4294901760
        %5743 = vmatpush1.msra.mxu0 %v5742
        %v5744 = vsub.f32 %v5011, %v5011
        %v5745 = vand.u32 %v5744, 4294901760
        %5746 = vmatprep.subr.mxu0 %v5745
        %v5747 = vsub.f32 %v5010, %v5010
        %v5748 = vand.u32 %v5747, 4294901760
        %5749 = vmatpush1.msra.mxu0 %v5748
        %v5750 = vsub.f32 %v5013, %v5013
        %v5751 = vand.u32 %v5750, 4294901760
        %5752 = vmatprep.subr.mxu0 %v5751
        %v5753 = vsub.f32 %v5012, %v5012
        %v5754 = vand.u32 %v5753, 4294901760
        %5755 = vmatpush1.msra.mxu0 %v5754
        %v5756 = vsub.f32 %v5015, %v5015
        %v5757 = vand.u32 %v5756, 4294901760
        %5758 = vmatprep.subr.mxu0 %v5757
        %v5759 = vsub.f32 %v5014, %v5014
        %v5760 = vand.u32 %v5759, 4294901760
        %5761 = vmatpush1.msra.mxu0 %v5760
        %v5762 = vsub.f32 %v5017, %v5017
        %v5763 = vand.u32 %v5762, 4294901760
        %5764 = vmatprep.subr.mxu0 %v5763
        %v5765 = vsub.f32 %v5016, %v5016
        %v5766 = vand.u32 %v5765, 4294901760
        %5767 = vmatpush1.msra.mxu0 %v5766
        %v5768 = vsub.f32 %v5019, %v5019
        %v5769 = vand.u32 %v5768, 4294901760
        %5770 = vmatprep.subr.mxu0 %v5769
        %v5771 = vsub.f32 %v5018, %v5018
        %v5772 = vand.u32 %v5771, 4294901760
        %5773 = vmatpush1.msra.mxu0 %v5772
        %v5774 = vsub.f32 %v5021, %v5021
        %v5775 = vand.u32 %v5774, 4294901760
        %5776 = vmatprep.subr.mxu0 %v5775
        %v5777 = vsub.f32 %v5020, %v5020
        %v5778 = vand.u32 %v5777, 4294901760
        %5779 = vmatpush1.msra.mxu0 %v5778
        %v5780 = vsub.f32 %v5023, %v5023
        %v5781 = vand.u32 %v5780, 4294901760
        %5782 = vmatprep.subr.mxu0 %v5781
        %v5783 = vsub.f32 %v5022, %v5022
        %v5784 = vand.u32 %v5783, 4294901760
        %5785 = vmatpush1.msra.mxu0 %v5784
        %v5786 = vsub.f32 %v5025, %v5025
        %v5787 = vand.u32 %v5786, 4294901760
        %5788 = vmatprep.subr.mxu0 %v5787
        %v5789 = vsub.f32 %v5024, %v5024
        %v5790 = vand.u32 %v5789, 4294901760
        %5791 = vmatpush1.msra.mxu0 %v5790
        %v5792 = vsub.f32 %v5027, %v5027
        %v5793 = vand.u32 %v5792, 4294901760
        %5794 = vmatprep.subr.mxu0 %v5793
        %v5795 = vsub.f32 %v5026, %v5026
        %v5796 = vand.u32 %v5795, 4294901760
        %5797 = vmatpush1.msra.mxu0 %v5796
        %v5798 = vsub.f32 %v5029, %v5029
        %v5799 = vand.u32 %v5798, 4294901760
        %5800 = vmatprep.subr.mxu0 %v5799
        %v5801 = vsub.f32 %v5028, %v5028
        %v5802 = vand.u32 %v5801, 4294901760
        %5803 = vmatpush1.msra.mxu0 %v5802
        %v5804 = vsub.f32 %v5031, %v5031
        %v5805 = vand.u32 %v5804, 4294901760
        %5806 = vmatprep.subr.mxu0 %v5805
        %v5807 = vsub.f32 %v5030, %v5030
        %v5808 = vand.u32 %v5807, 4294901760
        %5809 = vmatpush1.msra.mxu0 %v5808
        %v5810 = vsub.f32 %v5033, %v5033
        %v5811 = vand.u32 %v5810, 4294901760
        %5812 = vmatprep.subr.mxu0 %v5811
        %v5813 = vsub.f32 %v5032, %v5032
        %v5814 = vand.u32 %v5813, 4294901760
        %5815 = vmatpush1.msra.mxu0 %v5814
        %v5816 = vsub.f32 %v5035, %v5035
        %v5817 = vand.u32 %v5816, 4294901760
        %5818 = vmatprep.subr.mxu0 %v5817
        %v5819 = vsub.f32 %v5034, %v5034
        %v5820 = vand.u32 %v5819, 4294901760
        %5821 = vmatpush1.msra.mxu0 %v5820
        %v5822 = vsub.f32 %v5037, %v5037
        %v5823 = vand.u32 %v5822, 4294901760
        %5824 = vmatprep.subr.mxu0 %v5823
        %v5825 = vsub.f32 %v5036, %v5036
        %v5826 = vand.u32 %v5825, 4294901760
        %5827 = vmatpush1.msra.mxu0 %v5826
        %v5828 = vsub.f32 %v5039, %v5039
        %v5829 = vand.u32 %v5828, 4294901760
        %5830 = vmatprep.subr.mxu0 %v5829
        %v5831 = vsub.f32 %v5038, %v5038
        %v5832 = vand.u32 %v5831, 4294901760
        %5833 = vmatpush1.msra.mxu0 %v5832
        %v5834 = vsub.f32 %v5041, %v5041
        %v5835 = vand.u32 %v5834, 4294901760
        %5836 = vmatprep.subr.mxu0 %v5835
        %v5837 = vsub.f32 %v5040, %v5040
        %v5838 = vand.u32 %v5837, 4294901760
        %5839 = vmatpush1.msra.mxu0 %v5838
        %v5840 = vsub.f32 %v5043, %v5043
        %v5841 = vand.u32 %v5840, 4294901760
        %5842 = vmatprep.subr.mxu0 %v5841
        %v5843 = vsub.f32 %v5042, %v5042
        %v5844 = vand.u32 %v5843, 4294901760
        %5845 = vmatpush1.msra.mxu0 %v5844
        %v5846 = vsub.f32 %v5045, %v5045
        %v5847 = vand.u32 %v5846, 4294901760
        %5848 = vmatprep.subr.mxu0 %v5847
        %v5849 = vsub.f32 %v5044, %v5044
        %v5850 = vand.u32 %v5849, 4294901760
        %5851 = vmatpush1.msra.mxu0 %v5850
        %v5852 = vsub.f32 %v5047, %v5047
        %v5853 = vand.u32 %v5852, 4294901760
        %5854 = vmatprep.subr.mxu0 %v5853
        %v5855 = vsub.f32 %v5046, %v5046
        %v5856 = vand.u32 %v5855, 4294901760
        %5857 = vmatpush1.msra.mxu0 %v5856
        %v5858 = vsub.f32 %v5049, %v5049
        %v5859 = vand.u32 %v5858, 4294901760
        %5860 = vmatprep.subr.mxu0 %v5859
        %v5861 = vsub.f32 %v5048, %v5048
        %v5862 = vand.u32 %v5861, 4294901760
        %5863 = vmatpush1.msra.mxu0 %v5862
        %v5864 = vsub.f32 %v5051, %v5051
        %v5865 = vand.u32 %v5864, 4294901760
        %5866 = vmatprep.subr.mxu0 %v5865
        %v5867 = vsub.f32 %v5050, %v5050
        %v5868 = vand.u32 %v5867, 4294901760
        %5869 = vmatpush1.msra.mxu0 %v5868
        %v5870 = vand.u32 %v4731, 4294901760
        %5871 = vmatprep.mubr.f32.mxu0 %v5870
        %v5872 = vand.u32 %v4730, 4294901760
        %5873 = vmatmul.mubr.f32.gmra.mrb[0].mxu0 %v5872
        %v5874 = vpop.f32.mrb[0].mxu0
        %v5875 = vadd.f32 %v5674, %v5874
        %v5876 = vpop.f32.mrb[0].mxu0
        %v5877 = vadd.f32 %v5676, %v5876
        %5878 = vdwg.mxu0
        %5879 = vmatprep.subr.mxu0 %v4989
        %5880 = vmatpush1.msra.mxu0 %v4988
        %5881 = vmatprep.subr.mxu0 %v4991
        %5882 = vmatpush1.msra.mxu0 %v4990
        %5883 = vmatprep.subr.mxu0 %v4993
        %5884 = vmatpush1.msra.mxu0 %v4992
        %5885 = vmatprep.subr.mxu0 %v4995
        %5886 = vmatpush1.msra.mxu0 %v4994
        %5887 = vmatprep.subr.mxu0 %v4997
        %5888 = vmatpush1.msra.mxu0 %v4996
        %5889 = vmatprep.subr.mxu0 %v4999
        %5890 = vmatpush1.msra.mxu0 %v4998
        %5891 = vmatprep.subr.mxu0 %v5001
        %5892 = vmatpush1.msra.mxu0 %v5000
        %5893 = vmatprep.subr.mxu0 %v5003
        %5894 = vmatpush1.msra.mxu0 %v5002
        %5895 = vmatprep.subr.mxu0 %v5005
        %5896 = vmatpush1.msra.mxu0 %v5004
        %5897 = vmatprep.subr.mxu0 %v5007
        %5898 = vmatpush1.msra.mxu0 %v5006
        %5899 = vmatprep.subr.mxu0 %v5009
        %5900 = vmatpush1.msra.mxu0 %v5008
        %5901 = vmatprep.subr.mxu0 %v5011
        %5902 = vmatpush1.msra.mxu0 %v5010
        %5903 = vmatprep.subr.mxu0 %v5013
        %5904 = vmatpush1.msra.mxu0 %v5012
        %5905 = vmatprep.subr.mxu0 %v5015
        %5906 = vmatpush1.msra.mxu0 %v5014
        %5907 = vmatprep.subr.mxu0 %v5017
        %5908 = vmatpush1.msra.mxu0 %v5016
        %5909 = vmatprep.subr.mxu0 %v5019
        %5910 = vmatpush1.msra.mxu0 %v5018
        %5911 = vmatprep.subr.mxu0 %v5021
        %5912 = vmatpush1.msra.mxu0 %v5020
        %5913 = vmatprep.subr.mxu0 %v5023
        %5914 = vmatpush1.msra.mxu0 %v5022
        %5915 = vmatprep.subr.mxu0 %v5025
        %5916 = vmatpush1.msra.mxu0 %v5024
        %5917 = vmatprep.subr.mxu0 %v5027
        %5918 = vmatpush1.msra.mxu0 %v5026
        %5919 = vmatprep.subr.mxu0 %v5029
        %5920 = vmatpush1.msra.mxu0 %v5028
        %5921 = vmatprep.subr.mxu0 %v5031
        %5922 = vmatpush1.msra.mxu0 %v5030
        %5923 = vmatprep.subr.mxu0 %v5033
        %5924 = vmatpush1.msra.mxu0 %v5032
        %5925 = vmatprep.subr.mxu0 %v5035
        %5926 = vmatpush1.msra.mxu0 %v5034
        %5927 = vmatprep.subr.mxu0 %v5037
        %5928 = vmatpush1.msra.mxu0 %v5036
        %5929 = vmatprep.subr.mxu0 %v5039
        %5930 = vmatpush1.msra.mxu0 %v5038
        %5931 = vmatprep.subr.mxu0 %v5041
        %5932 = vmatpush1.msra.mxu0 %v5040
        %5933 = vmatprep.subr.mxu0 %v5043
        %5934 = vmatpush1.msra.mxu0 %v5042
        %5935 = vmatprep.subr.mxu0 %v5045
        %5936 = vmatpush1.msra.mxu0 %v5044
        %5937 = vmatprep.subr.mxu0 %v5047
        %5938 = vmatpush1.msra.mxu0 %v5046
        %5939 = vmatprep.subr.mxu0 %v5049
        %5940 = vmatpush1.msra.mxu0 %v5048
        %5941 = vmatprep.subr.mxu0 %v5051
        %5942 = vmatpush1.msra.mxu0 %v5050
        %v5943 = vand.u32 %v4731, 4294901760
        %5944 = vmatprep.mubr.f32.mxu0 %v5943
        %v5945 = vand.u32 %v4730, 4294901760
        %5946 = vmatmul.mubr.f32.gmra.mrb[0].mxu0 %v5945
        %v5947 = vpop.f32.mrb[0].mxu0
        %v5948 = vadd.f32 %v5875, %v5947
        %v5949 = vpop.f32.mrb[0].mxu0
        %v5950 = vadd.f32 %v5877, %v5949
        %5951 = vdwg.mxu0
        %s5952 = sld [smem:[#allocation2 + $0x202]]
        %v5953 = vstv %s5952
        %v5954 = vmul.f32 %v5953, %v5948
        %v5955 = vmul.f32 %v5953, %v5950
        %s5956 = sld [smem:[#allocation2 + $0x200]]
        %5957 = vrot.lane.b32.xlu0 %v5948, 2
        %v5958 = vpop.permute.xlu0 %5957
        %5959 = vrot.lane.b32.xlu0 %v5950, 2
        %v5960 = vpop.permute.xlu0 %5959
        %v5961 = vsel %vm487, %v5958, %v5960
        %v5962 = vsel %vm487, %v5960, %v5958
        %v5963 = vstv %s5956
        %v5964 = vmul.f32 %v5963, %v5962
        %v5965 = vmul.f32 %v5963, %v5961
        %v5966 = vadd.f32 %v5954, %v5964
        %v5967 = vadd.f32 %v5955, %v5965
        %s5968 = sld [smem:[#allocation2 + $0x201]]
        %5969 = vrot.lane.b32.xlu0 %v5948, 1
        %v5970 = vpop.permute.xlu0 %5969
        %5971 = vrot.lane.b32.xlu0 %v5950, 1
        %v5972 = vpop.permute.xlu0 %5971
        %v5973 = vsel %vm510, %v5970, %v5972
        %v5974 = vsel %vm510, %v5972, %v5970
        %v5975 = vstv %s5968
        %v5976 = vmul.f32 %v5975, %v5974
        %v5977 = vmul.f32 %v5975, %v5973
        %v5978 = vadd.f32 %v5966, %v5976
        %v5979 = vadd.f32 %v5967, %v5977
        %s5980 = sld [smem:[#allocation2 + $0x203]]
        %5981 = vrot.lane.b32.xlu0 %v5948, 127
        %v5982 = vpop.permute.xlu0 %5981
        %5983 = vrot.lane.b32.xlu0 %v5950, 127
        %v5984 = vpop.permute.xlu0 %5983
        %v5985 = vsel %vm533, %v5982, %v5984
        %v5986 = vsel %vm533, %v5984, %v5982
        %v5987 = vstv %s5980
        %v5988 = vmul.f32 %v5987, %v5985
        %v5989 = vmul.f32 %v5987, %v5986
        %v5990 = vadd.f32 %v5978, %v5988
        %v5991 = vadd.f32 %v5979, %v5989
        %s5992 = sld [smem:[#allocation2 + $0x204]]
        %5993 = vrot.lane.b32.xlu0 %v5948, 126
        %v5994 = vpop.permute.xlu0 %5993
        %5995 = vrot.lane.b32.xlu0 %v5950, 126
        %v5996 = vpop.permute.xlu0 %5995
        %v5997 = vsel %vm556, %v5994, %v5996
        %v5998 = vsel %vm556, %v5996, %v5994
        %v5999 = vstv %s5992
        %v6000 = vmul.f32 %v5999, %v5997
        %v6001 = vmul.f32 %v5999, %v5998
        %v6002 = vadd.f32 %v5990, %v6000
        %v6003 = vadd.f32 %v5991, %v6001
        %s6004 = sld [smem:[#allocation4 + $0x4]]
        %v6005 = vstv %s6004
        %v6006 = vadd.f32 %v6002, %v6005
        %v6007 = vadd.f32 %v6003, %v6005
        %v6008 = vmax.f32 %v6006, 0.0
        %v6009 = vmax.f32 %v6007, 0.0
        %vm6010 = vcmp.lt.s32.totalorder %v580, 126
        %v6011 = vsel %vm556, %v6008, 0.0
        %v6012 = vsel %vm6010, %v6009, 0.0
        %v6013 = vld [vmem:[%s3] sm:$0xff]
        %v6014 = vld [vmem:[%s3 + $0x8] sm:$0xff]
        %v6015 = vld [vmem:[%s3 + $0x10] sm:$0xff]
        %v6016 = vld [vmem:[%s3 + $0x18] sm:$0xff]
        %v6017 = vld [vmem:[%s3 + $0x20] sm:$0xff]
        %v6018 = vld [vmem:[%s3 + $0x28] sm:$0xff]
        %v6019 = vld [vmem:[%s3 + $0x30] sm:$0xff]
        %v6020 = vld [vmem:[%s3 + $0x38] sm:$0xff]
        %v6021 = vld [vmem:[%s3 + $0x40] sm:$0xff]
        %v6022 = vld [vmem:[%s3 + $0x48] sm:$0xff]
        %v6023 = vld [vmem:[%s3 + $0x50] sm:$0xff]
        %v6024 = vld [vmem:[%s3 + $0x58] sm:$0xff]
        %v6025 = vld [vmem:[%s3 + $0x60] sm:$0xff]
        %v6026 = vld [vmem:[%s3 + $0x68] sm:$0xff]
        %v6027 = vld [vmem:[%s3 + $0x70] sm:$0xff]
        %v6028 = vld [vmem:[%s3 + $0x78] sm:$0xff]
        %v6029 = vld [vmem:[%s3 + $0x80] sm:$0xff]
        %v6030 = vld [vmem:[%s3 + $0x88] sm:$0xff]
        %v6031 = vld [vmem:[%s3 + $0x90] sm:$0xff]
        %v6032 = vld [vmem:[%s3 + $0x98] sm:$0xff]
        %v6033 = vld [vmem:[%s3 + $0xa0] sm:$0xff]
        %v6034 = vld [vmem:[%s3 + $0xa8] sm:$0xff]
        %v6035 = vld [vmem:[%s3 + $0xb0] sm:$0xff]
        %v6036 = vld [vmem:[%s3 + $0xb8] sm:$0xff]
        %v6037 = vld [vmem:[%s3 + $0xc0] sm:$0xff]
        %v6038 = vld [vmem:[%s3 + $0xc8] sm:$0xff]
        %v6039 = vld [vmem:[%s3 + $0xd0] sm:$0xff]
        %v6040 = vld [vmem:[%s3 + $0xd8] sm:$0xff]
        %v6041 = vld [vmem:[%s3 + $0xe0] sm:$0xff]
        %v6042 = vld [vmem:[%s3 + $0xe8] sm:$0xff]
        %v6043 = vld [vmem:[%s3 + $0xf0] sm:$0xff]
        %v6044 = vld [vmem:[%s3 + $0xf8] sm:$0xff]
        %v6045 = vld [vmem:[%s4] sm:$0x1]
        %v6047 = vlaneseq
        %v6048 = vshrl.u32 %v6047, 7
        %v6049 = vsub.s32 0, %v6048
        %v6050 = vrot.slane %v6045, %v6049
        %6052 = vmatprep.subr.mxu0 0.0
        %6053 = vmatpush1.msra.mxu0 %v6013
        %6054 = vmatprep.subr.mxu0 0.0
        %6055 = vmatpush1.msra.mxu0 %v6014
        %6056 = vmatprep.subr.mxu0 0.0
        %6057 = vmatpush1.msra.mxu0 %v6015
        %6058 = vmatprep.subr.mxu0 0.0
        %6059 = vmatpush1.msra.mxu0 %v6016
        %6060 = vmatprep.subr.mxu0 0.0
        %6061 = vmatpush1.msra.mxu0 %v6017
        %6062 = vmatprep.subr.mxu0 0.0
        %6063 = vmatpush1.msra.mxu0 %v6018
        %6064 = vmatprep.subr.mxu0 0.0
        %6065 = vmatpush1.msra.mxu0 %v6019
        %6066 = vmatprep.subr.mxu0 0.0
        %6067 = vmatpush1.msra.mxu0 %v6020
        %6068 = vmatprep.subr.mxu0 0.0
        %6069 = vmatpush1.msra.mxu0 %v6021
        %6070 = vmatprep.subr.mxu0 0.0
        %6071 = vmatpush1.msra.mxu0 %v6022
        %6072 = vmatprep.subr.mxu0 0.0
        %6073 = vmatpush1.msra.mxu0 %v6023
        %6074 = vmatprep.subr.mxu0 0.0
        %6075 = vmatpush1.msra.mxu0 %v6024
        %6076 = vmatprep.subr.mxu0 0.0
        %6077 = vmatpush1.msra.mxu0 %v6025
        %6078 = vmatprep.subr.mxu0 0.0
        %6079 = vmatpush1.msra.mxu0 %v6026
        %6080 = vmatprep.subr.mxu0 0.0
        %6081 = vmatpush1.msra.mxu0 %v6027
        %6082 = vmatprep.subr.mxu0 0.0
        %6083 = vmatpush1.msra.mxu0 %v6028
        %6084 = vmatprep.subr.mxu0 0.0
        %6085 = vmatpush1.msra.mxu0 %v6029
        %6086 = vmatprep.subr.mxu0 0.0
        %6087 = vmatpush1.msra.mxu0 %v6030
        %6088 = vmatprep.subr.mxu0 0.0
        %6089 = vmatpush1.msra.mxu0 %v6031
        %6090 = vmatprep.subr.mxu0 0.0
        %6091 = vmatpush1.msra.mxu0 %v6032
        %6092 = vmatprep.subr.mxu0 0.0
        %6093 = vmatpush1.msra.mxu0 %v6033
        %6094 = vmatprep.subr.mxu0 0.0
        %6095 = vmatpush1.msra.mxu0 %v6034
        %6096 = vmatprep.subr.mxu0 0.0
        %6097 = vmatpush1.msra.mxu0 %v6035
        %6098 = vmatprep.subr.mxu0 0.0
        %6099 = vmatpush1.msra.mxu0 %v6036
        %6100 = vmatprep.subr.mxu0 0.0
        %6101 = vmatpush1.msra.mxu0 %v6037
        %6102 = vmatprep.subr.mxu0 0.0
        %6103 = vmatpush1.msra.mxu0 %v6038
        %6104 = vmatprep.subr.mxu0 0.0
        %6105 = vmatpush1.msra.mxu0 %v6039
        %6106 = vmatprep.subr.mxu0 0.0
        %6107 = vmatpush1.msra.mxu0 %v6040
        %6108 = vmatprep.subr.mxu0 0.0
        %6109 = vmatpush1.msra.mxu0 %v6041
        %6110 = vmatprep.subr.mxu0 0.0
        %6111 = vmatpush1.msra.mxu0 %v6042
        %6112 = vmatprep.subr.mxu0 0.0
        %6113 = vmatpush1.msra.mxu0 %v6043
        %6114 = vmatprep.subr.mxu0 0.0
        %6115 = vmatpush1.msra.mxu0 %v6044
        %6116 = vmatprep.mubr.f32.mxu0 %v6012
        %6117 = vmatmul.mubr.f32.gmra.mrb[0].mxu0 %v6011
        %v6118 = vpop.f32.mrb[0].mxu0
        %v6119 = vadd.f32 %v6050, %v6118
        %v6120 = vpop.f32.mrb[0].mxu0
        %6121 = vdwg.mxu0
        %v6122 = vmax.f32 %v6119, 0.0
        %v6123 = vld [vmem:[%s5] sm:$0xff]
        %v6124 = vld [vmem:[%s5 + $0x8] sm:$0xff]
        %v6125 = vld [vmem:[%s5 + $0x10] sm:$0xff]
        %v6126 = vld [vmem:[%s5 + $0x18] sm:$0xff]
        %v6127 = vld [vmem:[%s5 + $0x20] sm:$0xff]
        %v6128 = vld [vmem:[%s5 + $0x28] sm:$0xff]
        %v6129 = vld [vmem:[%s5 + $0x30] sm:$0xff]
        %v6130 = vld [vmem:[%s5 + $0x38] sm:$0xff]
        %v6131 = vld [vmem:[%s5 + $0x40] sm:$0xff]
        %v6132 = vld [vmem:[%s5 + $0x48] sm:$0xff]
        %v6133 = vld [vmem:[%s5 + $0x50] sm:$0xff]
        %v6134 = vld [vmem:[%s5 + $0x58] sm:$0xff]
        %v6135 = vld [vmem:[%s5 + $0x60] sm:$0xff]
        %v6136 = vld [vmem:[%s5 + $0x68] sm:$0xff]
        %v6137 = vld [vmem:[%s5 + $0x70] sm:$0xff]
        %v6138 = vld [vmem:[%s5 + $0x78] sm:$0xff]
        %v6139 = vld [vmem:[%s6] sm:$0x1]
        %v6141 = vlaneseq
        %v6142 = vshrl.u32 %v6141, 7
        %v6143 = vsub.s32 0, %v6142
        %v6144 = vrot.slane %v6139, %v6143
        %6146 = vmatprep.subr.mxu0 0.0
        %6147 = vmatpush1.msra.mxu0 %v6123
        %6148 = vmatprep.subr.mxu0 0.0
        %6149 = vmatpush1.msra.mxu0 %v6124
        %6150 = vmatprep.subr.mxu0 0.0
        %6151 = vmatpush1.msra.mxu0 %v6125
        %6152 = vmatprep.subr.mxu0 0.0
        %6153 = vmatpush1.msra.mxu0 %v6126
        %6154 = vmatprep.subr.mxu0 0.0
        %6155 = vmatpush1.msra.mxu0 %v6127
        %6156 = vmatprep.subr.mxu0 0.0
        %6157 = vmatpush1.msra.mxu0 %v6128
        %6158 = vmatprep.subr.mxu0 0.0
        %6159 = vmatpush1.msra.mxu0 %v6129
        %6160 = vmatprep.subr.mxu0 0.0
        %6161 = vmatpush1.msra.mxu0 %v6130
        %6162 = vmatprep.subr.mxu0 0.0
        %6163 = vmatpush1.msra.mxu0 %v6131
        %6164 = vmatprep.subr.mxu0 0.0
        %6165 = vmatpush1.msra.mxu0 %v6132
        %6166 = vmatprep.subr.mxu0 0.0
        %6167 = vmatpush1.msra.mxu0 %v6133
        %6168 = vmatprep.subr.mxu0 0.0
        %6169 = vmatpush1.msra.mxu0 %v6134
        %6170 = vmatprep.subr.mxu0 0.0
        %6171 = vmatpush1.msra.mxu0 %v6135
        %6172 = vmatprep.subr.mxu0 0.0
        %6173 = vmatpush1.msra.mxu0 %v6136
        %6174 = vmatprep.subr.mxu0 0.0
        %6175 = vmatpush1.msra.mxu0 %v6137
        %6176 = vmatprep.subr.mxu0 0.0
        %6177 = vmatpush1.msra.mxu0 %v6138
        %6178 = vmatprep.subr.mxu0 0.0
        %6179 = vmatpush1.msra.mxu0 0.0
        %6180 = vmatprep.subr.mxu0 0.0
        %6181 = vmatpush1.msra.mxu0 0.0
        %6182 = vmatprep.subr.mxu0 0.0
        %6183 = vmatpush1.msra.mxu0 0.0
        %6184 = vmatprep.subr.mxu0 0.0
        %6185 = vmatpush1.msra.mxu0 0.0
        %6186 = vmatprep.subr.mxu0 0.0
        %6187 = vmatpush1.msra.mxu0 0.0
        %6188 = vmatprep.subr.mxu0 0.0
        %6189 = vmatpush1.msra.mxu0 0.0
        %6190 = vmatprep.subr.mxu0 0.0
        %6191 = vmatpush1.msra.mxu0 0.0
        %6192 = vmatprep.subr.mxu0 0.0
        %6193 = vmatpush1.msra.mxu0 0.0
        %6194 = vmatprep.subr.mxu0 0.0
        %6195 = vmatpush1.msra.mxu0 0.0
        %6196 = vmatprep.subr.mxu0 0.0
        %6197 = vmatpush1.msra.mxu0 0.0
        %6198 = vmatprep.subr.mxu0 0.0
        %6199 = vmatpush1.msra.mxu0 0.0
        %6200 = vmatprep.subr.mxu0 0.0
        %6201 = vmatpush1.msra.mxu0 0.0
        %6202 = vmatprep.subr.mxu0 0.0
        %6203 = vmatpush1.msra.mxu0 0.0
        %6204 = vmatprep.subr.mxu0 0.0
        %6205 = vmatpush1.msra.mxu0 0.0
        %6206 = vmatprep.subr.mxu0 0.0
        %6207 = vmatpush1.msra.mxu0 0.0
        %6208 = vmatprep.subr.mxu0 0.0
        %6209 = vmatpush1.msra.mxu0 0.0
        %6210 = vmatprep.mubr.f32.mxu0 0.0
        %6211 = vmatmul.mubr.f32.gmra.mrb[0].mxu0 %v6122
        %v6212 = vpop.f32.mrb[0].mxu0
        %v6213 = vadd.f32 %v6144, %v6212
        %v6214 = vpop.f32.mrb[0].mxu0
        %6215 = vdwg.mxu0
        %v6216 = vmax.f32 %v6213, 0.0
        %v6217 = vld [vmem:[%s7] sm:$0xff]
        %v6218 = vld [vmem:[%s7 + $0x8] sm:$0xff]
        %v6219 = vld [vmem:[%s7 + $0x10] sm:$0xff]
        %v6220 = vld [vmem:[%s7 + $0x18] sm:$0xff]
        %v6221 = vld [vmem:[%s7 + $0x20] sm:$0xff]
        %v6222 = vld [vmem:[%s7 + $0x28] sm:$0xff]
        %v6223 = vld [vmem:[%s7 + $0x30] sm:$0xff]
        %v6224 = vld [vmem:[%s7 + $0x38] sm:$0xff]
        %v6225 = vld [vmem:[%s8] sm:$0x1]
        %v6227 = vlaneseq
        %v6228 = vshrl.u32 %v6227, 7
        %v6229 = vsub.s32 0, %v6228
        %v6230 = vrot.slane %v6225, %v6229
        %vm6232 = vcmask 523264
        %v6234 = vsel %vm6232, %v6216, 0
        %6236 = vmatprep.subr.mxu0 0.0
        %6237 = vmatpush1.msra.mxu0 %v6217
        %6238 = vmatprep.subr.mxu0 0.0
        %6239 = vmatpush1.msra.mxu0 %v6218
        %6240 = vmatprep.subr.mxu0 0.0
        %6241 = vmatpush1.msra.mxu0 %v6219
        %6242 = vmatprep.subr.mxu0 0.0
        %6243 = vmatpush1.msra.mxu0 %v6220
        %6244 = vmatprep.subr.mxu0 0.0
        %6245 = vmatpush1.msra.mxu0 %v6221
        %6246 = vmatprep.subr.mxu0 0.0
        %6247 = vmatpush1.msra.mxu0 %v6222
        %6248 = vmatprep.subr.mxu0 0.0
        %6249 = vmatpush1.msra.mxu0 %v6223
        %6250 = vmatprep.subr.mxu0 0.0
        %6251 = vmatpush1.msra.mxu0 %v6224
        %6252 = vmatprep.subr.mxu0 0.0
        %6253 = vmatpush1.msra.mxu0 0.0
        %6254 = vmatprep.subr.mxu0 0.0
        %6255 = vmatpush1.msra.mxu0 0.0
        %6256 = vmatprep.subr.mxu0 0.0
        %6257 = vmatpush1.msra.mxu0 0.0
        %6258 = vmatprep.subr.mxu0 0.0
        %6259 = vmatpush1.msra.mxu0 0.0
        %6260 = vmatprep.subr.mxu0 0.0
        %6261 = vmatpush1.msra.mxu0 0.0
        %6262 = vmatprep.subr.mxu0 0.0
        %6263 = vmatpush1.msra.mxu0 0.0
        %6264 = vmatprep.subr.mxu0 0.0
        %6265 = vmatpush1.msra.mxu0 0.0
        %6266 = vmatprep.subr.mxu0 0.0
        %6267 = vmatpush1.msra.mxu0 0.0
        %6268 = vmatprep.subr.mxu0 0.0
        %6269 = vmatpush1.msra.mxu0 0.0
        %6270 = vmatprep.subr.mxu0 0.0
        %6271 = vmatpush1.msra.mxu0 0.0
        %6272 = vmatprep.subr.mxu0 0.0
        %6273 = vmatpush1.msra.mxu0 0.0
        %6274 = vmatprep.subr.mxu0 0.0
        %6275 = vmatpush1.msra.mxu0 0.0
        %6276 = vmatprep.subr.mxu0 0.0
        %6277 = vmatpush1.msra.mxu0 0.0
        %6278 = vmatprep.subr.mxu0 0.0
        %6279 = vmatpush1.msra.mxu0 0.0
        %6280 = vmatprep.subr.mxu0 0.0
        %6281 = vmatpush1.msra.mxu0 0.0
        %6282 = vmatprep.subr.mxu0 0.0
        %6283 = vmatpush1.msra.mxu0 0.0
        %6284 = vmatprep.subr.mxu0 0.0
        %6285 = vmatpush1.msra.mxu0 0.0
        %6286 = vmatprep.subr.mxu0 0.0
        %6287 = vmatpush1.msra.mxu0 0.0
        %6288 = vmatprep.subr.mxu0 0.0
        %6289 = vmatpush1.msra.mxu0 0.0
        %6290 = vmatprep.subr.mxu0 0.0
        %6291 = vmatpush1.msra.mxu0 0.0
        %6292 = vmatprep.subr.mxu0 0.0
        %6293 = vmatpush1.msra.mxu0 0.0
        %6294 = vmatprep.subr.mxu0 0.0
        %6295 = vmatpush1.msra.mxu0 0.0
        %6296 = vmatprep.subr.mxu0 0.0
        %6297 = vmatpush1.msra.mxu0 0.0
        %6298 = vmatprep.subr.mxu0 0.0
        %6299 = vmatpush1.msra.mxu0 0.0
        %6300 = vmatprep.mubr.f32.mxu0 0.0
        %6301 = vmatmul.mubr.f32.gmra.mrb[0].mxu0 %v6234
        %v6302 = vpop.f32.mrb[0].mxu0
        %v6303 = vadd.f32 %v6230, %v6302
        %v6304 = vpop.f32.mrb[0].mxu0
        %6305 = vdwg.mxu0
        %v6306 = vmax.f32 %v6303, 0.0
        %v6307 = vld [vmem:[%s9] sm:$0xff]
        %v6308 = vld [vmem:[%s9 + $0x8] sm:$0xff]
        %v6309 = vld [vmem:[%s9 + $0x10] sm:$0xff]
        %v6310 = vld [vmem:[%s9 + $0x18] sm:$0xff]
        %v6311 = vld [vmem:[%s10] sm:$0x1]
        %v6313 = vlaneseq
        %v6314 = vshrl.u32 %v6313, 7
        %v6315 = vsub.s32 0, %v6314
        %v6316 = vrot.slane %v6311, %v6315
        %vm6318 = vcmask 261120
        %v6320 = vsel %vm6318, %v6306, 0
        %6322 = vmatprep.subr.mxu0 0.0
        %6323 = vmatpush1.msra.mxu0 %v6307
        %6324 = vmatprep.subr.mxu0 0.0
        %6325 = vmatpush1.msra.mxu0 %v6308
        %6326 = vmatprep.subr.mxu0 0.0
        %6327 = vmatpush1.msra.mxu0 %v6309
        %6328 = vmatprep.subr.mxu0 0.0
        %6329 = vmatpush1.msra.mxu0 %v6310
        %6330 = vmatprep.subr.mxu0 0.0
        %6331 = vmatpush1.msra.mxu0 0.0
        %6332 = vmatprep.subr.mxu0 0.0
        %6333 = vmatpush1.msra.mxu0 0.0
        %6334 = vmatprep.subr.mxu0 0.0
        %6335 = vmatpush1.msra.mxu0 0.0
        %6336 = vmatprep.subr.mxu0 0.0
        %6337 = vmatpush1.msra.mxu0 0.0
        %6338 = vmatprep.subr.mxu0 0.0
        %6339 = vmatpush1.msra.mxu0 0.0
        %6340 = vmatprep.subr.mxu0 0.0
        %6341 = vmatpush1.msra.mxu0 0.0
        %6342 = vmatprep.subr.mxu0 0.0
        %6343 = vmatpush1.msra.mxu0 0.0
        %6344 = vmatprep.subr.mxu0 0.0
        %6345 = vmatpush1.msra.mxu0 0.0
        %6346 = vmatprep.subr.mxu0 0.0
        %6347 = vmatpush1.msra.mxu0 0.0
        %6348 = vmatprep.subr.mxu0 0.0
        %6349 = vmatpush1.msra.mxu0 0.0
        %6350 = vmatprep.subr.mxu0 0.0
        %6351 = vmatpush1.msra.mxu0 0.0
        %6352 = vmatprep.subr.mxu0 0.0
        %6353 = vmatpush1.msra.mxu0 0.0
        %6354 = vmatprep.subr.mxu0 0.0
        %6355 = vmatpush1.msra.mxu0 0.0
        %6356 = vmatprep.subr.mxu0 0.0
        %6357 = vmatpush1.msra.mxu0 0.0
        %6358 = vmatprep.subr.mxu0 0.0
        %6359 = vmatpush1.msra.mxu0 0.0
        %6360 = vmatprep.subr.mxu0 0.0
        %6361 = vmatpush1.msra.mxu0 0.0
        %6362 = vmatprep.subr.mxu0 0.0
        %6363 = vmatpush1.msra.mxu0 0.0
        %6364 = vmatprep.subr.mxu0 0.0
        %6365 = vmatpush1.msra.mxu0 0.0
        %6366 = vmatprep.subr.mxu0 0.0
        %6367 = vmatpush1.msra.mxu0 0.0
        %6368 = vmatprep.subr.mxu0 0.0
        %6369 = vmatpush1.msra.mxu0 0.0
        %6370 = vmatprep.subr.mxu0 0.0
        %6371 = vmatpush1.msra.mxu0 0.0
        %6372 = vmatprep.subr.mxu0 0.0
        %6373 = vmatpush1.msra.mxu0 0.0
        %6374 = vmatprep.subr.mxu0 0.0
        %6375 = vmatpush1.msra.mxu0 0.0
        %6376 = vmatprep.subr.mxu0 0.0
        %6377 = vmatpush1.msra.mxu0 0.0
        %6378 = vmatprep.subr.mxu0 0.0
        %6379 = vmatpush1.msra.mxu0 0.0
        %6380 = vmatprep.subr.mxu0 0.0
        %6381 = vmatpush1.msra.mxu0 0.0
        %6382 = vmatprep.subr.mxu0 0.0
        %6383 = vmatpush1.msra.mxu0 0.0
        %6384 = vmatprep.subr.mxu0 0.0
        %6385 = vmatpush1.msra.mxu0 0.0
        %6386 = vmatprep.mubr.f32.mxu0 0.0
        %6387 = vmatmul.mubr.f32.gmra.mrb[0].mxu0 %v6320
        %v6388 = vpop.f32.mrb[0].mxu0
        %v6389 = vadd.f32 %v6316, %v6388
        %v6390 = vpop.f32.mrb[0].mxu0
        %6391 = vdwg.mxu0
        %v6392 = vmax.f32 %v6389, 0.0
        %v6393 = vld [vmem:[%s11] sm:$0xff]
        %v6394 = vld [vmem:[%s11 + $0x8] sm:$0xff]
        %v6395 = vld [vmem:[%s12] sm:$0x1]
        %v6397 = vlaneseq
        %v6398 = vshrl.u32 %v6397, 7
        %v6399 = vsub.s32 0, %v6398
        %v6400 = vrot.slane %v6395, %v6399
        %vm6402 = vcmask 130048
        %v6404 = vsel %vm6402, %v6392, 0
        %6406 = vmatprep.subr.mxu0 0.0
        %6407 = vmatpush1.msra.mxu0 %v6393
        %6408 = vmatprep.subr.mxu0 0.0
        %6409 = vmatpush1.msra.mxu0 %v6394
        %6410 = vmatprep.subr.mxu0 0.0
        %6411 = vmatpush1.msra.mxu0 0.0
        %6412 = vmatprep.subr.mxu0 0.0
        %6413 = vmatpush1.msra.mxu0 0.0
        %6414 = vmatprep.subr.mxu0 0.0
        %6415 = vmatpush1.msra.mxu0 0.0
        %6416 = vmatprep.subr.mxu0 0.0
        %6417 = vmatpush1.msra.mxu0 0.0
        %6418 = vmatprep.subr.mxu0 0.0
        %6419 = vmatpush1.msra.mxu0 0.0
        %6420 = vmatprep.subr.mxu0 0.0
        %6421 = vmatpush1.msra.mxu0 0.0
        %6422 = vmatprep.subr.mxu0 0.0
        %6423 = vmatpush1.msra.mxu0 0.0
        %6424 = vmatprep.subr.mxu0 0.0
        %6425 = vmatpush1.msra.mxu0 0.0
        %6426 = vmatprep.subr.mxu0 0.0
        %6427 = vmatpush1.msra.mxu0 0.0
        %6428 = vmatprep.subr.mxu0 0.0
        %6429 = vmatpush1.msra.mxu0 0.0
        %6430 = vmatprep.subr.mxu0 0.0
        %6431 = vmatpush1.msra.mxu0 0.0
        %6432 = vmatprep.subr.mxu0 0.0
        %6433 = vmatpush1.msra.mxu0 0.0
        %6434 = vmatprep.subr.mxu0 0.0
        %6435 = vmatpush1.msra.mxu0 0.0
        %6436 = vmatprep.subr.mxu0 0.0
        %6437 = vmatpush1.msra.mxu0 0.0
        %6438 = vmatprep.subr.mxu0 0.0
        %6439 = vmatpush1.msra.mxu0 0.0
        %6440 = vmatprep.subr.mxu0 0.0
        %6441 = vmatpush1.msra.mxu0 0.0
        %6442 = vmatprep.subr.mxu0 0.0
        %6443 = vmatpush1.msra.mxu0 0.0
        %6444 = vmatprep.subr.mxu0 0.0
        %6445 = vmatpush1.msra.mxu0 0.0
        %6446 = vmatprep.subr.mxu0 0.0
        %6447 = vmatpush1.msra.mxu0 0.0
        %6448 = vmatprep.subr.mxu0 0.0
        %6449 = vmatpush1.msra.mxu0 0.0
        %6450 = vmatprep.subr.mxu0 0.0
        %6451 = vmatpush1.msra.mxu0 0.0
        %6452 = vmatprep.subr.mxu0 0.0
        %6453 = vmatpush1.msra.mxu0 0.0
        %6454 = vmatprep.subr.mxu0 0.0
        %6455 = vmatpush1.msra.mxu0 0.0
        %6456 = vmatprep.subr.mxu0 0.0
        %6457 = vmatpush1.msra.mxu0 0.0
        %6458 = vmatprep.subr.mxu0 0.0
        %6459 = vmatpush1.msra.mxu0 0.0
        %6460 = vmatprep.subr.mxu0 0.0
        %6461 = vmatpush1.msra.mxu0 0.0
        %6462 = vmatprep.subr.mxu0 0.0
        %6463 = vmatpush1.msra.mxu0 0.0
        %6464 = vmatprep.subr.mxu0 0.0
        %6465 = vmatpush1.msra.mxu0 0.0
        %6466 = vmatprep.subr.mxu0 0.0
        %6467 = vmatpush1.msra.mxu0 0.0
        %6468 = vmatprep.subr.mxu0 0.0
        %6469 = vmatpush1.msra.mxu0 0.0
        %6470 = vmatprep.mubr.f32.mxu0 0.0
        %6471 = vmatmul.mubr.f32.gmra.mrb[0].mxu0 %v6404
        %v6472 = vpop.f32.mrb[0].mxu0
        %v6473 = vadd.f32 %v6400, %v6472
        %v6474 = vpop.f32.mrb[0].mxu0
        %6475 = vdwg.mxu0
        %vm6476 = vcmask 15360
        %6477 = vst.msk [vmem:[%s465] sm:$0xff] %vm6476, %v6473
        %p6478 = scmp.lt.s32.totalorder %s26, 1
        %s6479 = scalar_select %p6478, %s26, 1
        %s6480 = smul.addr %s6479, 8
        %s6481 = scalar_lea.vmem %s13, %s6480
        // Predicated region
        $region81: #{cnnae_forward.1} parent=71 // pred_check
          %p6482 = pneg %p322
        $region82: #{cnnae_forward.1} parent=71 // pred_check_branch
          %6484 = sbr.rel (%p6482) target = $region84
        $region83: #{cnnae_forward.1} parent=71 // pred_region
          _
        $region84: #{cnnae_forward.1} parent=71 // pred_fallthru
          _
      $region72: #{cnnae_forward.1} parent=5 // pred_fallthru
        _
      %p6485 = scmp.le.s32.totalorder 2, %s21
      // Predicated region
      $region85: #{cnnae_forward.1} parent=5 // pred_check
        %p6486 = pneg %p6485
      $region86: #{cnnae_forward.1} parent=5 // pred_check_branch
        %6488 = sbr.rel (%p6486) target = $region88
      $region87: #{cnnae_forward.1} parent=5 // pred_region
        %s6489 = ssub.s32 %s21, 2
        // Predicated region
        $region89: #{cnnae_forward.1} parent=87 // pred_check
          %p6490 = pneg %p328
        $region90: #{cnnae_forward.1} parent=87 // pred_check_branch
          %6492 = sbr.rel (%p6490) target = $region92
        $region91: #{cnnae_forward.1} parent=87 // pred_region
          %p6493 = scmp.lt.s32.totalorder %s27, 1
          %s6494 = scalar_select %p6493, %s27, 1
          %s6495 = smul.addr %s6494, 8
          %s6496 = scalar_lea.vmem %s13, %s6495
        $region92: #{cnnae_forward.1} parent=87 // pred_fallthru
          _
      $region88: #{cnnae_forward.1} parent=5 // pred_fallthru
        _
    $region6: #{cnnae_forward.1} parent=1 // loop_footer
      %s25 = sadd.s32 1, %s21
    $region7: #{cnnae_forward.1} parent=1 // loop_footer_branch
      %20 = sbr.rel target = $region3
    $region8: #{cnnae_forward.1} parent=1 // loop_exit
      _
    %6497 = vsyncpa [#allocation3], 1
    %s6498 = scalar_lea.sflag [#allocation3], 1
    %6499 = vsyncpa %s6498, 1
    %6500 = vsyncpa [#allocation5], 1

</llo_original>
